<compile_context>
chip_gen: v7x
topology: tpu7x:2x2x1
jax: 0.10.0
libtpu: 0.0.40
codegen_flags: <defaults>
</compile_context>

<pallas_src>
import functools

import jax
import jax.numpy as jnp
from jax.experimental import pallas as pl
from jax.experimental.pallas import tpu as pltpu


def _conv3x3(h, scr_ref, w_ref, b_ref, notl, notr, *, W, apron):
    """3x3 'same' conv as 9 per-tap bf16 MXU matmuls accumulated in f32.

    h:       (H*W, Cin) f32 activation, rows in row-major (y*W + x) order.
    scr_ref: (2*apron + H*W, maxC) f32 VMEM scratch; the two aprons are zero,
             so out-of-image y taps read zeros.
    w_ref:   (9, Cin, Cout) bf16 weights, taps in (dy, dx) row-major order.
    b_ref:   (1, Cout) f32 bias.
    notl/notr: (H*W, 1) f32 masks; 0 where x == 0 / x == W-1.
    """
    HW, cin = h.shape
    cout = w_ref.shape[-1]

    # Aligned interior store (offset `apron` is a multiple of 8, lanes [0, cin)).
    scr_ref[pl.ds(apron, HW), :cin] = h

    acc = jnp.zeros((HW, cout), jnp.float32)
    t = 0
    for dy in (-1, 0, 1):
        for dx in (-1, 0, 1):
            if dy == 0 and dx == 0:
                tap = h                                       # centre tap: reuse value
            else:
                # Static offset; the aprons supply zero padding in y.
                tap = scr_ref[pl.ds(apron + dy * W + dx, HW), :cin]
                if dx == -1:                                  # x-1 invalid at x == 0
                    tap = tap * notl
                elif dx == 1:                                 # x+1 invalid at x == W-1
                    tap = tap * notr
            acc = acc + jnp.dot(tap.astype(jnp.bfloat16), w_ref[t],
                                preferred_element_type=jnp.float32)
            t += 1
    return acc + b_ref[...]


def combined_cnn_kernel(
    W, apron,
    mask_ref, x_ref,
    wh_ref, bh_ref,
    w1_ref, b1_ref, s1_ref, t1_ref,
    w2_ref, b2_ref, s2_ref, t2_ref,
    w3_ref, b3_ref, s3_ref, t3_ref,
    w4_ref, b4_ref,
    out_ref,
    scr_ref,
):
    HW = x_ref.shape[0]
    maxw = scr_ref.shape[-1]

    # Zero the two y-padding aprons once per grid step; interior stores never
    # touch them, so they stay zero for all three conv layers.
    zeros_apron = jnp.zeros((apron, maxw), jnp.float32)
    scr_ref[pl.ds(0, apron), :] = zeros_apron
    scr_ref[pl.ds(apron + HW, apron), :] = zeros_apron

    notl = mask_ref[:, 0:1]                                   # (HW, 1) f32
    notr = mask_ref[:, 1:2]

    # Fused surrogate UNet/SAN heads + torch.cat(dim=1)  ==  one bf16 matmul.
    h = jnp.dot(x_ref[...], wh_ref[...],
                preferred_element_type=jnp.float32) + bh_ref[...]

    for w_r, b_r, s_r, t_r in (
        (w1_ref, b1_ref, s1_ref, t1_ref),
        (w2_ref, b2_ref, s2_ref, t2_ref),
        (w3_ref, b3_ref, s3_ref, t3_ref),
    ):
        z = _conv3x3(h, scr_ref, w_r, b_r, notl, notr, W=W, apron=apron)
        # ReLU -> BatchNorm2d (eval, folded scale/shift) -> Dropout2d (identity).
        h = jnp.maximum(z, 0.0) * s_r[...] + t_r[...]

    # Final Conv2d(kernel_size=1) to num_classes.
    out = jnp.dot(h.astype(jnp.bfloat16), w4_ref[...],
                  preferred_element_type=jnp.float32) + b4_ref[...]
    out_ref[...] = out.astype(out_ref.dtype)


def combined_model_cnn_forward(x, params, *, num_classes, cnn_channels):
    assert len(cnn_channels) == 3, "kernel is specialized for 3 CNN merger layers"
    B, H, W, in_dim = x.shape
    HW = H * W
    apron = pl.cdiv(W + 1, 8) * 8        # zero apron >= W+1 rows, sublane aligned

    # --- trace-time parameter prep: head fusion + bf16 MXU operands ---
    wh = jnp.concatenate([params["wu"], params["ws"]], axis=1).astype(jnp.bfloat16)
    bh = jnp.concatenate([params["bu"], params["bs"]], axis=1)           # f32
    plist = [wh, bh]
    cin = 2 * num_classes
    for i, cout in enumerate(cnn_channels, start=1):
        plist += [
            params[f"w{i}"].astype(jnp.bfloat16),      # (9, Cin, Cout), (dy, dx) tap-major
            params[f"b{i}"], params[f"s{i}"], params[f"t{i}"],
        ]
        cin = cout
    plist += [params["w4"].astype(jnp.bfloat16), params["b4"]]

    # x-edge validity masks, built at trace time (no in-kernel iota/reshape).
    xc = jnp.tile(jnp.arange(W, dtype=jnp.int32), H)
    masks = jnp.stack([xc > 0, xc < W - 1], axis=1).astype(jnp.float32)  # (HW, 2)

    x_flat = x.reshape(B, HW, in_dim).astype(jnp.bfloat16)   # contiguous per batch

    in_specs = [pl.BlockSpec((HW, 2), lambda b: (0, 0)),
                pl.BlockSpec((None, HW, in_dim), lambda b: (b, 0, 0))]
    for p in plist:
        in_specs.append(pl.BlockSpec(p.shape, lambda b, n=p.ndim: (0,) * n))
    out_spec = pl.BlockSpec((None, HW, num_classes), lambda b: (b, 0, 0))

    # One shared zero-apron scratch, wide enough for every conv layer's input.
    maxw = max(2 * num_classes, *cnn_channels[:-1]) if len(cnn_channels) > 1 \
        else 2 * num_classes
    scratch = [pltpu.VMEM((2 * apron + HW, maxw), jnp.float32)]

    # Per-generation VMEM budget: generous on v5e/v6e (128 MiB physical),
    # capped on v7x (64 MiB physical per TensorCore).
    try:
        cap = int(pltpu.get_tpu_info().vmem_capacity_bytes)
        vmem_limit = max(32 * 1024 * 1024, min(100 * 1024 * 1024, (3 * cap) // 4))
    except Exception:
        vmem_limit = 48 * 1024 * 1024

    out = pl.pallas_call(
        functools.partial(combined_cnn_kernel, W, apron),
        out_shape=jax.ShapeDtypeStruct((B, HW, num_classes), jnp.float32),
        grid_spec=pltpu.PrefetchScalarGridSpec(
            num_scalar_prefetch=0,
            grid=(B,),
            in_specs=in_specs,
            out_specs=out_spec,
            scratch_shapes=scratch,
        ),
        compiler_params=pltpu.CompilerParams(
            dimension_semantics=("parallel",),
            vmem_limit_bytes=vmem_limit),
    )(masks, x_flat, *plist)
    return out.reshape(B, H, W, num_classes)


def init_params(key, in_dim, num_classes, cnn_channels):
    """Deterministic synthetic parameters (shapes match the PyTorch module)."""
    eps = 1e-5
    keys = iter(jax.random.split(key, 32))
    p = {}
    # Surrogate frozen UNet / SAN heads (pointwise -> num_classes).
    p["wu"] = jax.random.normal(next(keys), (in_dim, num_classes), jnp.float32) / jnp.sqrt(in_dim)
    p["bu"] = 0.1 * jax.random.normal(next(keys), (1, num_classes), jnp.float32)
    p["ws"] = jax.random.normal(next(keys), (in_dim, num_classes), jnp.float32) / jnp.sqrt(in_dim)
    p["bs"] = 0.1 * jax.random.normal(next(keys), (1, num_classes), jnp.float32)
    # CNN merger: [Conv3x3 -> ReLU -> BN -> Dropout] * len(cnn_channels) + Conv1x1.
    cin = 2 * num_classes
    for i, cout in enumerate(cnn_channels, start=1):
        fan_in = cin * 9
        p[f"w{i}"] = jax.random.normal(next(keys), (9, cin, cout), jnp.float32) / jnp.sqrt(fan_in)
        p[f"b{i}"] = 0.05 * jax.random.normal(next(keys), (1, cout), jnp.float32)
        gamma = 1.0 + 0.05 * jax.random.normal(next(keys), (1, cout), jnp.float32)
        beta = 0.05 * jax.random.normal(next(keys), (1, cout), jnp.float32)
        rmean = 0.02 * jax.random.normal(next(keys), (1, cout), jnp.float32)
        rvar = 1.0 + 0.1 * jax.random.uniform(next(keys), (1, cout), jnp.float32)
        scale = gamma / jnp.sqrt(rvar + eps)
        p[f"s{i}"] = scale
        p[f"t{i}"] = beta - rmean * scale
        cin = cout
    p["w4"] = jax.random.normal(next(keys), (cin, num_classes), jnp.float32) / jnp.sqrt(cin)
    p["b4"] = 0.05 * jax.random.normal(next(keys), (1, num_classes), jnp.float32)
    return p


def reference_forward(x, params, *, num_classes, cnn_channels,
                      matmul_dtype=jnp.float32):
    """Pure-JAX reference (lax.conv).  matmul_dtype=bfloat16 mirrors the
    kernel's bf16 MXU operands (f32 accumulation) for a tight structural
    check; matmul_dtype=float32 is the true full-precision module."""
    B, H, W, in_dim = x.shape
    md = matmul_dtype
    prec = jax.lax.Precision.HIGHEST if md == jnp.float32 else None
    xf = x.reshape(B, H * W, in_dim).astype(md)
    unet = jnp.matmul(xf, params["wu"].astype(md), precision=prec,
                      preferred_element_type=jnp.float32) + params["bu"]
    san = jnp.matmul(xf, params["ws"].astype(md), precision=prec,
                     preferred_element_type=jnp.float32) + params["bs"]
    h = jnp.concatenate([unet, san], axis=-1).reshape(B, H, W, 2 * num_classes)
    cin = 2 * num_classes
    for i, cout in enumerate(cnn_channels, start=1):
        w = params[f"w{i}"].reshape(3, 3, cin, cout).astype(md)   # HWIO
        h = jax.lax.conv_general_dilated(
            h.astype(md), w, window_strides=(1, 1), padding="SAME",
            dimension_numbers=("NHWC", "HWIO", "NHWC"),
            preferred_element_type=jnp.float32, precision=prec)
        h = h + params[f"b{i}"]
        h = jnp.maximum(h, 0.0)
        h = h * params[f"s{i}"] + params[f"t{i}"]
        cin = cout
    hf = h.reshape(B, H * W, cin).astype(md)
    out = jnp.matmul(hf, params["w4"].astype(md), precision=prec,
                     preferred_element_type=jnp.float32) + params["b4"]
    return out.reshape(B, H, W, num_classes)


if __name__ == "__main__":
    B, H, W = 2, 16, 16
    in_dim, num_classes = 4, 4
    cnn_channels = [64, 32, 16]

    key = jax.random.PRNGKey(0)
    kx, kp = jax.random.split(key)
    x = jax.random.normal(kx, (B, H, W, in_dim), jnp.float32)   # module takes (B, H, W, C)
    params = init_params(kp, in_dim, num_classes, cnn_channels)

    out = combined_model_cnn_forward(
        x, params, num_classes=num_classes, cnn_channels=cnn_channels)
    out = jax.block_until_ready(out)
    assert out.shape == (B, H, W, num_classes)

    # Structural check: a reference using the SAME bf16 MXU-operand
    # quantization must match tightly (only f32 accumulation order differs).
    ref_m = reference_forward(x, params, num_classes=num_classes,
                              cnn_channels=cnn_channels,
                              matmul_dtype=jnp.bfloat16)
    err_m = float(jnp.max(jnp.abs(out - ref_m)))
    assert err_m < 2e-3, f"bf16-matched max abs err {err_m}"

    # End-to-end check against the full-f32 reference; the bound reflects
    # bf16 operand rounding accumulated across the five matmul stages.
    ref_f = reference_forward(x, params, num_classes=num_classes,
                              cnn_channels=cnn_channels,
                              matmul_dtype=jnp.float32)
    err_f = float(jnp.max(jnp.abs(out - ref_f)))
    assert err_f < 5e-2, f"f32 max abs err {err_f}"
    print("KERNEL_OK")
</pallas_src>

<mosaic_0001>
module attributes {stable_mosaic.version = 11 : i64} {
  func.func @combined_cnn_kernel(%arg0: i32, %arg1: memref<256x2xf32, #tpu.memory_space<vmem>>, %arg2: memref<1x256x4xbf16, #tpu.memory_space<vmem>>, %arg3: memref<4x8xbf16, #tpu.memory_space<vmem>>, %arg4: memref<1x8xf32, #tpu.memory_space<vmem>>, %arg5: memref<9x8x64xbf16, #tpu.memory_space<vmem>>, %arg6: memref<1x64xf32, #tpu.memory_space<vmem>>, %arg7: memref<1x64xf32, #tpu.memory_space<vmem>>, %arg8: memref<1x64xf32, #tpu.memory_space<vmem>>, %arg9: memref<9x64x32xbf16, #tpu.memory_space<vmem>>, %arg10: memref<1x32xf32, #tpu.memory_space<vmem>>, %arg11: memref<1x32xf32, #tpu.memory_space<vmem>>, %arg12: memref<1x32xf32, #tpu.memory_space<vmem>>, %arg13: memref<9x32x16xbf16, #tpu.memory_space<vmem>>, %arg14: memref<1x16xf32, #tpu.memory_space<vmem>>, %arg15: memref<1x16xf32, #tpu.memory_space<vmem>>, %arg16: memref<1x16xf32, #tpu.memory_space<vmem>>, %arg17: memref<16x4xbf16, #tpu.memory_space<vmem>>, %arg18: memref<1x4xf32, #tpu.memory_space<vmem>>, %arg19: memref<1x256x4xf32, #tpu.memory_space<vmem>>, %arg20: memref<304x64xf32, #tpu.memory_space<vmem>>) attributes {dimension_semantics = [#tpu.dimension_semantics<parallel>], iteration_bounds = array<i64: 2>, scalar_prefetch = 0 : i64, scratch_operands = 1 : i64, tpu.core_type = #tpu.core_type<tc>, window_params = [{pipeline_mode = #tpu.pipeline_mode<synchronous>, transform_indices = @transform_0, window_bounds = array<i64: 256, 2>}, {transform_indices = @transform_1, window_bounds = array<i64: 1, 256, 4>}, {pipeline_mode = #tpu.pipeline_mode<synchronous>, transform_indices = @transform_2, window_bounds = array<i64: 4, 8>}, {pipeline_mode = #tpu.pipeline_mode<synchronous>, transform_indices = @transform_3, window_bounds = array<i64: 1, 8>}, {pipeline_mode = #tpu.pipeline_mode<synchronous>, transform_indices = @transform_4, window_bounds = array<i64: 9, 8, 64>}, {pipeline_mode = #tpu.pipeline_mode<synchronous>, transform_indices = @transform_5, window_bounds = array<i64: 1, 64>}, {pipeline_mode = #tpu.pipeline_mode<synchronous>, transform_indices = @transform_6, window_bounds = array<i64: 1, 64>}, {pipeline_mode = #tpu.pipeline_mode<synchronous>, transform_indices = @transform_7, window_bounds = array<i64: 1, 64>}, {pipeline_mode = #tpu.pipeline_mode<synchronous>, transform_indices = @transform_8, window_bounds = array<i64: 9, 64, 32>}, {pipeline_mode = #tpu.pipeline_mode<synchronous>, transform_indices = @transform_9, window_bounds = array<i64: 1, 32>}, {pipeline_mode = #tpu.pipeline_mode<synchronous>, transform_indices = @transform_10, window_bounds = array<i64: 1, 32>}, {pipeline_mode = #tpu.pipeline_mode<synchronous>, transform_indices = @transform_11, window_bounds = array<i64: 1, 32>}, {pipeline_mode = #tpu.pipeline_mode<synchronous>, transform_indices = @transform_12, window_bounds = array<i64: 9, 32, 16>}, {pipeline_mode = #tpu.pipeline_mode<synchronous>, transform_indices = @transform_13, window_bounds = array<i64: 1, 16>}, {pipeline_mode = #tpu.pipeline_mode<synchronous>, transform_indices = @transform_14, window_bounds = array<i64: 1, 16>}, {pipeline_mode = #tpu.pipeline_mode<synchronous>, transform_indices = @transform_15, window_bounds = array<i64: 1, 16>}, {pipeline_mode = #tpu.pipeline_mode<synchronous>, transform_indices = @transform_16, window_bounds = array<i64: 16, 4>}, {pipeline_mode = #tpu.pipeline_mode<synchronous>, transform_indices = @transform_17, window_bounds = array<i64: 1, 4>}, {transform_indices = @transform_18, window_bounds = array<i64: 1, 256, 4>}]} {
    %cst = arith.constant 0.000000e+00 : f32
    %0 = vector.broadcast %cst : f32 to vector<24x64xf32>
    %c0 = arith.constant 0 : index
    %c0_0 = arith.constant 0 : index
    %1 = vector.load %arg20[%c0, %c0_0] : memref<304x64xf32, #tpu.memory_space<vmem>>, vector<24x64xf32>
    tpu.vector_store %arg20[%c0, %c0_0], %0 {strides = array<i32>} : memref<304x64xf32, #tpu.memory_space<vmem>>, vector<24x64xf32>,
    %c280 = arith.constant 280 : index
    %c0_1 = arith.constant 0 : index
    %2 = vector.load %arg20[%c280, %c0_1] : memref<304x64xf32, #tpu.memory_space<vmem>>, vector<24x64xf32>
    tpu.vector_store %arg20[%c280, %c0_1], %0 {strides = array<i32>} : memref<304x64xf32, #tpu.memory_space<vmem>>, vector<24x64xf32>,
    %c0_2 = arith.constant 0 : index
    %c0_3 = arith.constant 0 : index
    %3 = vector.load %arg1[%c0_2, %c0_3] : memref<256x2xf32, #tpu.memory_space<vmem>>, vector<256x1xf32>
    %c0_4 = arith.constant 0 : index
    %c1 = arith.constant 1 : index
    %4 = vector.load %arg1[%c0_4, %c1] : memref<256x2xf32, #tpu.memory_space<vmem>>, vector<256x1xf32>
    %c0_5 = arith.constant 0 : index
    %c0_6 = arith.constant 0 : index
    %c0_7 = arith.constant 0 : index
    %5 = vector.load %arg2[%c0_5, %c0_6, %c0_7] : memref<1x256x4xbf16, #tpu.memory_space<vmem>>, vector<1x256x4xbf16>
    %6 = vector.shape_cast %5 : vector<1x256x4xbf16> to vector<256x4xbf16>
    %c0_8 = arith.constant 0 : index
    %c0_9 = arith.constant 0 : index
    %7 = vector.load %arg3[%c0_8, %c0_9] : memref<4x8xbf16, #tpu.memory_space<vmem>>, vector<4x8xbf16>
    %cst_10 = arith.constant dense<0.000000e+00> : vector<256x8xf32>
    %8 = tpu.matmul %6, %7, %cst_10 {dimension_numbers = #tpu.dot_dimension_numbers<[1], [0], [0], [1], [0, 0, 1, 1], [], []>} : vector<256x4xbf16>, vector<4x8xbf16>, vector<256x8xf32> -> vector<256x8xf32>
    %c0_11 = arith.constant 0 : index
    %c0_12 = arith.constant 0 : index
    %9 = vector.load %arg4[%c0_11, %c0_12] : memref<1x8xf32, #tpu.memory_space<vmem>>, vector<1x8xf32>
    %10 = vector.broadcast %9 : vector<1x8xf32> to vector<256x8xf32>
    %11 = arith.addf %8, %10 : vector<256x8xf32>
    %c24 = arith.constant 24 : index
    %c0_13 = arith.constant 0 : index
    %12 = vector.load %arg20[%c24, %c0_13] : memref<304x64xf32, #tpu.memory_space<vmem>>, vector<256x8xf32>
    tpu.vector_store %arg20[%c24, %c0_13], %11 {strides = array<i32>} : memref<304x64xf32, #tpu.memory_space<vmem>>, vector<256x8xf32>,
    %cst_14 = arith.constant 0.000000e+00 : f32
    %13 = vector.broadcast %cst_14 : f32 to vector<256x64xf32>
    %c7 = arith.constant 7 : index
    %c0_15 = arith.constant 0 : index
    %14 = vector.load %arg20[%c7, %c0_15] : memref<304x64xf32, #tpu.memory_space<vmem>>, vector<256x8xf32>
    %15 = vector.broadcast %3 : vector<256x1xf32> to vector<256x8xf32>
    %16 = arith.mulf %14, %15 : vector<256x8xf32>
    %17 = arith.truncf %16 : vector<256x8xf32> to vector<256x8xbf16>
    %c0_16 = arith.constant 0 : index
    %c0_17 = arith.constant 0 : index
    %c0_18 = arith.constant 0 : index
    %18 = vector.load %arg5[%c0_16, %c0_17, %c0_18] : memref<9x8x64xbf16, #tpu.memory_space<vmem>>, vector<1x8x64xbf16>
    %19 = vector.shape_cast %18 : vector<1x8x64xbf16> to vector<8x64xbf16>
    %cst_19 = arith.constant dense<0.000000e+00> : vector<256x64xf32>
    %20 = tpu.matmul %17, %19, %cst_19 {dimension_numbers = #tpu.dot_dimension_numbers<[1], [0], [0], [1], [0, 0, 1, 1], [], []>} : vector<256x8xbf16>, vector<8x64xbf16>, vector<256x64xf32> -> vector<256x64xf32>
    %21 = arith.addf %13, %20 : vector<256x64xf32>
    %c8 = arith.constant 8 : index
    %c0_20 = arith.constant 0 : index
    %22 = vector.load %arg20[%c8, %c0_20] : memref<304x64xf32, #tpu.memory_space<vmem>>, vector<256x8xf32>
    %23 = arith.truncf %22 : vector<256x8xf32> to vector<256x8xbf16>
    %c1_21 = arith.constant 1 : index
    %c0_22 = arith.constant 0 : index
    %c0_23 = arith.constant 0 : index
    %24 = vector.load %arg5[%c1_21, %c0_22, %c0_23] : memref<9x8x64xbf16, #tpu.memory_space<vmem>>, vector<1x8x64xbf16>
    %25 = vector.shape_cast %24 : vector<1x8x64xbf16> to vector<8x64xbf16>
    %cst_24 = arith.constant dense<0.000000e+00> : vector<256x64xf32>
    %26 = tpu.matmul %23, %25, %cst_24 {dimension_numbers = #tpu.dot_dimension_numbers<[1], [0], [0], [1], [0, 0, 1, 1], [], []>} : vector<256x8xbf16>, vector<8x64xbf16>, vector<256x64xf32> -> vector<256x64xf32>
    %27 = arith.addf %21, %26 : vector<256x64xf32>
    %c9 = arith.constant 9 : index
    %c0_25 = arith.constant 0 : index
    %28 = vector.load %arg20[%c9, %c0_25] : memref<304x64xf32, #tpu.memory_space<vmem>>, vector<256x8xf32>
    %29 = vector.broadcast %4 : vector<256x1xf32> to vector<256x8xf32>
    %30 = arith.mulf %28, %29 : vector<256x8xf32>
    %31 = arith.truncf %30 : vector<256x8xf32> to vector<256x8xbf16>
    %c2 = arith.constant 2 : index
    %c0_26 = arith.constant 0 : index
    %c0_27 = arith.constant 0 : index
    %32 = vector.load %arg5[%c2, %c0_26, %c0_27] : memref<9x8x64xbf16, #tpu.memory_space<vmem>>, vector<1x8x64xbf16>
    %33 = vector.shape_cast %32 : vector<1x8x64xbf16> to vector<8x64xbf16>
    %cst_28 = arith.constant dense<0.000000e+00> : vector<256x64xf32>
    %34 = tpu.matmul %31, %33, %cst_28 {dimension_numbers = #tpu.dot_dimension_numbers<[1], [0], [0], [1], [0, 0, 1, 1], [], []>} : vector<256x8xbf16>, vector<8x64xbf16>, vector<256x64xf32> -> vector<256x64xf32>
    %35 = arith.addf %27, %34 : vector<256x64xf32>
    %c23 = arith.constant 23 : index
    %c0_29 = arith.constant 0 : index
    %36 = vector.load %arg20[%c23, %c0_29] : memref<304x64xf32, #tpu.memory_space<vmem>>, vector<256x8xf32>
    %37 = vector.broadcast %3 : vector<256x1xf32> to vector<256x8xf32>
    %38 = arith.mulf %36, %37 : vector<256x8xf32>
    %39 = arith.truncf %38 : vector<256x8xf32> to vector<256x8xbf16>
    %c3 = arith.constant 3 : index
    %c0_30 = arith.constant 0 : index
    %c0_31 = arith.constant 0 : index
    %40 = vector.load %arg5[%c3, %c0_30, %c0_31] : memref<9x8x64xbf16, #tpu.memory_space<vmem>>, vector<1x8x64xbf16>
    %41 = vector.shape_cast %40 : vector<1x8x64xbf16> to vector<8x64xbf16>
    %cst_32 = arith.constant dense<0.000000e+00> : vector<256x64xf32>
    %42 = tpu.matmul %39, %41, %cst_32 {dimension_numbers = #tpu.dot_dimension_numbers<[1], [0], [0], [1], [0, 0, 1, 1], [], []>} : vector<256x8xbf16>, vector<8x64xbf16>, vector<256x64xf32> -> vector<256x64xf32>
    %43 = arith.addf %35, %42 : vector<256x64xf32>
    %44 = arith.truncf %11 : vector<256x8xf32> to vector<256x8xbf16>
    %c4 = arith.constant 4 : index
    %c0_33 = arith.constant 0 : index
    %c0_34 = arith.constant 0 : index
    %45 = vector.load %arg5[%c4, %c0_33, %c0_34] : memref<9x8x64xbf16, #tpu.memory_space<vmem>>, vector<1x8x64xbf16>
    %46 = vector.shape_cast %45 : vector<1x8x64xbf16> to vector<8x64xbf16>
    %cst_35 = arith.constant dense<0.000000e+00> : vector<256x64xf32>
    %47 = tpu.matmul %44, %46, %cst_35 {dimension_numbers = #tpu.dot_dimension_numbers<[1], [0], [0], [1], [0, 0, 1, 1], [], []>} : vector<256x8xbf16>, vector<8x64xbf16>, vector<256x64xf32> -> vector<256x64xf32>
    %48 = arith.addf %43, %47 : vector<256x64xf32>
    %c25 = arith.constant 25 : index
    %c0_36 = arith.constant 0 : index
    %49 = vector.load %arg20[%c25, %c0_36] : memref<304x64xf32, #tpu.memory_space<vmem>>, vector<256x8xf32>
    %50 = vector.broadcast %4 : vector<256x1xf32> to vector<256x8xf32>
    %51 = arith.mulf %49, %50 : vector<256x8xf32>
    %52 = arith.truncf %51 : vector<256x8xf32> to vector<256x8xbf16>
    %c5 = arith.constant 5 : index
    %c0_37 = arith.constant 0 : index
    %c0_38 = arith.constant 0 : index
    %53 = vector.load %arg5[%c5, %c0_37, %c0_38] : memref<9x8x64xbf16, #tpu.memory_space<vmem>>, vector<1x8x64xbf16>
    %54 = vector.shape_cast %53 : vector<1x8x64xbf16> to vector<8x64xbf16>
    %cst_39 = arith.constant dense<0.000000e+00> : vector<256x64xf32>
    %55 = tpu.matmul %52, %54, %cst_39 {dimension_numbers = #tpu.dot_dimension_numbers<[1], [0], [0], [1], [0, 0, 1, 1], [], []>} : vector<256x8xbf16>, vector<8x64xbf16>, vector<256x64xf32> -> vector<256x64xf32>
    %56 = arith.addf %48, %55 : vector<256x64xf32>
    %c39 = arith.constant 39 : index
    %c0_40 = arith.constant 0 : index
    %57 = vector.load %arg20[%c39, %c0_40] : memref<304x64xf32, #tpu.memory_space<vmem>>, vector<256x8xf32>
    %58 = vector.broadcast %3 : vector<256x1xf32> to vector<256x8xf32>
    %59 = arith.mulf %57, %58 : vector<256x8xf32>
    %60 = arith.truncf %59 : vector<256x8xf32> to vector<256x8xbf16>
    %c6 = arith.constant 6 : index
    %c0_41 = arith.constant 0 : index
    %c0_42 = arith.constant 0 : index
    %61 = vector.load %arg5[%c6, %c0_41, %c0_42] : memref<9x8x64xbf16, #tpu.memory_space<vmem>>, vector<1x8x64xbf16>
    %62 = vector.shape_cast %61 : vector<1x8x64xbf16> to vector<8x64xbf16>
    %cst_43 = arith.constant dense<0.000000e+00> : vector<256x64xf32>
    %63 = tpu.matmul %60, %62, %cst_43 {dimension_numbers = #tpu.dot_dimension_numbers<[1], [0], [0], [1], [0, 0, 1, 1], [], []>} : vector<256x8xbf16>, vector<8x64xbf16>, vector<256x64xf32> -> vector<256x64xf32>
    %64 = arith.addf %56, %63 : vector<256x64xf32>
    %c40 = arith.constant 40 : index
    %c0_44 = arith.constant 0 : index
    %65 = vector.load %arg20[%c40, %c0_44] : memref<304x64xf32, #tpu.memory_space<vmem>>, vector<256x8xf32>
    %66 = arith.truncf %65 : vector<256x8xf32> to vector<256x8xbf16>
    %c7_45 = arith.constant 7 : index
    %c0_46 = arith.constant 0 : index
    %c0_47 = arith.constant 0 : index
    %67 = vector.load %arg5[%c7_45, %c0_46, %c0_47] : memref<9x8x64xbf16, #tpu.memory_space<vmem>>, vector<1x8x64xbf16>
    %68 = vector.shape_cast %67 : vector<1x8x64xbf16> to vector<8x64xbf16>
    %cst_48 = arith.constant dense<0.000000e+00> : vector<256x64xf32>
    %69 = tpu.matmul %66, %68, %cst_48 {dimension_numbers = #tpu.dot_dimension_numbers<[1], [0], [0], [1], [0, 0, 1, 1], [], []>} : vector<256x8xbf16>, vector<8x64xbf16>, vector<256x64xf32> -> vector<256x64xf32>
    %70 = arith.addf %64, %69 : vector<256x64xf32>
    %c41 = arith.constant 41 : index
    %c0_49 = arith.constant 0 : index
    %71 = vector.load %arg20[%c41, %c0_49] : memref<304x64xf32, #tpu.memory_space<vmem>>, vector<256x8xf32>
    %72 = vector.broadcast %4 : vector<256x1xf32> to vector<256x8xf32>
    %73 = arith.mulf %71, %72 : vector<256x8xf32>
    %74 = arith.truncf %73 : vector<256x8xf32> to vector<256x8xbf16>
    %c8_50 = arith.constant 8 : index
    %c0_51 = arith.constant 0 : index
    %c0_52 = arith.constant 0 : index
    %75 = vector.load %arg5[%c8_50, %c0_51, %c0_52] : memref<9x8x64xbf16, #tpu.memory_space<vmem>>, vector<1x8x64xbf16>
    %76 = vector.shape_cast %75 : vector<1x8x64xbf16> to vector<8x64xbf16>
    %cst_53 = arith.constant dense<0.000000e+00> : vector<256x64xf32>
    %77 = tpu.matmul %74, %76, %cst_53 {dimension_numbers = #tpu.dot_dimension_numbers<[1], [0], [0], [1], [0, 0, 1, 1], [], []>} : vector<256x8xbf16>, vector<8x64xbf16>, vector<256x64xf32> -> vector<256x64xf32>
    %78 = arith.addf %70, %77 : vector<256x64xf32>
    %c0_54 = arith.constant 0 : index
    %c0_55 = arith.constant 0 : index
    %79 = vector.load %arg6[%c0_54, %c0_55] : memref<1x64xf32, #tpu.memory_space<vmem>>, vector<1x64xf32>
    %80 = vector.broadcast %79 : vector<1x64xf32> to vector<256x64xf32>
    %81 = arith.addf %78, %80 : vector<256x64xf32>
    %cst_56 = arith.constant 0.000000e+00 : f32
    %82 = vector.broadcast %cst_56 : f32 to vector<256x64xf32>
    %83 = arith.maximumf %81, %82 : vector<256x64xf32>
    %c0_57 = arith.constant 0 : index
    %c0_58 = arith.constant 0 : index
    %84 = vector.load %arg7[%c0_57, %c0_58] : memref<1x64xf32, #tpu.memory_space<vmem>>, vector<1x64xf32>
    %85 = vector.broadcast %84 : vector<1x64xf32> to vector<256x64xf32>
    %86 = arith.mulf %83, %85 : vector<256x64xf32>
    %c0_59 = arith.constant 0 : index
    %c0_60 = arith.constant 0 : index
    %87 = vector.load %arg8[%c0_59, %c0_60] : memref<1x64xf32, #tpu.memory_space<vmem>>, vector<1x64xf32>
    %88 = vector.broadcast %87 : vector<1x64xf32> to vector<256x64xf32>
    %89 = arith.addf %86, %88 : vector<256x64xf32>
    %c24_61 = arith.constant 24 : index
    %c0_62 = arith.constant 0 : index
    %90 = vector.load %arg20[%c24_61, %c0_62] : memref<304x64xf32, #tpu.memory_space<vmem>>, vector<256x64xf32>
    tpu.vector_store %arg20[%c24_61, %c0_62], %89 {strides = array<i32>} : memref<304x64xf32, #tpu.memory_space<vmem>>, vector<256x64xf32>,
    %cst_63 = arith.constant 0.000000e+00 : f32
    %91 = vector.broadcast %cst_63 : f32 to vector<256x32xf32>
    %c7_64 = arith.constant 7 : index
    %c0_65 = arith.constant 0 : index
    %92 = vector.load %arg20[%c7_64, %c0_65] : memref<304x64xf32, #tpu.memory_space<vmem>>, vector<256x64xf32>
    %93 = vector.broadcast %3 : vector<256x1xf32> to vector<256x64xf32>
    %94 = arith.mulf %92, %93 : vector<256x64xf32>
    %95 = arith.truncf %94 : vector<256x64xf32> to vector<256x64xbf16>
    %c0_66 = arith.constant 0 : index
    %c0_67 = arith.constant 0 : index
    %c0_68 = arith.constant 0 : index
    %96 = vector.load %arg9[%c0_66, %c0_67, %c0_68] : memref<9x64x32xbf16, #tpu.memory_space<vmem>>, vector<1x64x32xbf16>
    %97 = vector.shape_cast %96 : vector<1x64x32xbf16> to vector<64x32xbf16>
    %cst_69 = arith.constant dense<0.000000e+00> : vector<256x32xf32>
    %98 = tpu.matmul %95, %97, %cst_69 {dimension_numbers = #tpu.dot_dimension_numbers<[1], [0], [0], [1], [0, 0, 1, 1], [], []>} : vector<256x64xbf16>, vector<64x32xbf16>, vector<256x32xf32> -> vector<256x32xf32>
    %99 = arith.addf %91, %98 : vector<256x32xf32>
    %c8_70 = arith.constant 8 : index
    %c0_71 = arith.constant 0 : index
    %100 = vector.load %arg20[%c8_70, %c0_71] : memref<304x64xf32, #tpu.memory_space<vmem>>, vector<256x64xf32>
    %101 = arith.truncf %100 : vector<256x64xf32> to vector<256x64xbf16>
    %c1_72 = arith.constant 1 : index
    %c0_73 = arith.constant 0 : index
    %c0_74 = arith.constant 0 : index
    %102 = vector.load %arg9[%c1_72, %c0_73, %c0_74] : memref<9x64x32xbf16, #tpu.memory_space<vmem>>, vector<1x64x32xbf16>
    %103 = vector.shape_cast %102 : vector<1x64x32xbf16> to vector<64x32xbf16>
    %cst_75 = arith.constant dense<0.000000e+00> : vector<256x32xf32>
    %104 = tpu.matmul %101, %103, %cst_75 {dimension_numbers = #tpu.dot_dimension_numbers<[1], [0], [0], [1], [0, 0, 1, 1], [], []>} : vector<256x64xbf16>, vector<64x32xbf16>, vector<256x32xf32> -> vector<256x32xf32>
    %105 = arith.addf %99, %104 : vector<256x32xf32>
    %c9_76 = arith.constant 9 : index
    %c0_77 = arith.constant 0 : index
    %106 = vector.load %arg20[%c9_76, %c0_77] : memref<304x64xf32, #tpu.memory_space<vmem>>, vector<256x64xf32>
    %107 = vector.broadcast %4 : vector<256x1xf32> to vector<256x64xf32>
    %108 = arith.mulf %106, %107 : vector<256x64xf32>
    %109 = arith.truncf %108 : vector<256x64xf32> to vector<256x64xbf16>
    %c2_78 = arith.constant 2 : index
    %c0_79 = arith.constant 0 : index
    %c0_80 = arith.constant 0 : index
    %110 = vector.load %arg9[%c2_78, %c0_79, %c0_80] : memref<9x64x32xbf16, #tpu.memory_space<vmem>>, vector<1x64x32xbf16>
    %111 = vector.shape_cast %110 : vector<1x64x32xbf16> to vector<64x32xbf16>
    %cst_81 = arith.constant dense<0.000000e+00> : vector<256x32xf32>
    %112 = tpu.matmul %109, %111, %cst_81 {dimension_numbers = #tpu.dot_dimension_numbers<[1], [0], [0], [1], [0, 0, 1, 1], [], []>} : vector<256x64xbf16>, vector<64x32xbf16>, vector<256x32xf32> -> vector<256x32xf32>
    %113 = arith.addf %105, %112 : vector<256x32xf32>
    %c23_82 = arith.constant 23 : index
    %c0_83 = arith.constant 0 : index
    %114 = vector.load %arg20[%c23_82, %c0_83] : memref<304x64xf32, #tpu.memory_space<vmem>>, vector<256x64xf32>
    %115 = vector.broadcast %3 : vector<256x1xf32> to vector<256x64xf32>
    %116 = arith.mulf %114, %115 : vector<256x64xf32>
    %117 = arith.truncf %116 : vector<256x64xf32> to vector<256x64xbf16>
    %c3_84 = arith.constant 3 : index
    %c0_85 = arith.constant 0 : index
    %c0_86 = arith.constant 0 : index
    %118 = vector.load %arg9[%c3_84, %c0_85, %c0_86] : memref<9x64x32xbf16, #tpu.memory_space<vmem>>, vector<1x64x32xbf16>
    %119 = vector.shape_cast %118 : vector<1x64x32xbf16> to vector<64x32xbf16>
    %cst_87 = arith.constant dense<0.000000e+00> : vector<256x32xf32>
    %120 = tpu.matmul %117, %119, %cst_87 {dimension_numbers = #tpu.dot_dimension_numbers<[1], [0], [0], [1], [0, 0, 1, 1], [], []>} : vector<256x64xbf16>, vector<64x32xbf16>, vector<256x32xf32> -> vector<256x32xf32>
    %121 = arith.addf %113, %120 : vector<256x32xf32>
    %122 = arith.truncf %89 : vector<256x64xf32> to vector<256x64xbf16>
    %c4_88 = arith.constant 4 : index
    %c0_89 = arith.constant 0 : index
    %c0_90 = arith.constant 0 : index
    %123 = vector.load %arg9[%c4_88, %c0_89, %c0_90] : memref<9x64x32xbf16, #tpu.memory_space<vmem>>, vector<1x64x32xbf16>
    %124 = vector.shape_cast %123 : vector<1x64x32xbf16> to vector<64x32xbf16>
    %cst_91 = arith.constant dense<0.000000e+00> : vector<256x32xf32>
    %125 = tpu.matmul %122, %124, %cst_91 {dimension_numbers = #tpu.dot_dimension_numbers<[1], [0], [0], [1], [0, 0, 1, 1], [], []>} : vector<256x64xbf16>, vector<64x32xbf16>, vector<256x32xf32> -> vector<256x32xf32>
    %126 = arith.addf %121, %125 : vector<256x32xf32>
    %c25_92 = arith.constant 25 : index
    %c0_93 = arith.constant 0 : index
    %127 = vector.load %arg20[%c25_92, %c0_93] : memref<304x64xf32, #tpu.memory_space<vmem>>, vector<256x64xf32>
    %128 = vector.broadcast %4 : vector<256x1xf32> to vector<256x64xf32>
    %129 = arith.mulf %127, %128 : vector<256x64xf32>
    %130 = arith.truncf %129 : vector<256x64xf32> to vector<256x64xbf16>
    %c5_94 = arith.constant 5 : index
    %c0_95 = arith.constant 0 : index
    %c0_96 = arith.constant 0 : index
    %131 = vector.load %arg9[%c5_94, %c0_95, %c0_96] : memref<9x64x32xbf16, #tpu.memory_space<vmem>>, vector<1x64x32xbf16>
    %132 = vector.shape_cast %131 : vector<1x64x32xbf16> to vector<64x32xbf16>
    %cst_97 = arith.constant dense<0.000000e+00> : vector<256x32xf32>
    %133 = tpu.matmul %130, %132, %cst_97 {dimension_numbers = #tpu.dot_dimension_numbers<[1], [0], [0], [1], [0, 0, 1, 1], [], []>} : vector<256x64xbf16>, vector<64x32xbf16>, vector<256x32xf32> -> vector<256x32xf32>
    %134 = arith.addf %126, %133 : vector<256x32xf32>
    %c39_98 = arith.constant 39 : index
    %c0_99 = arith.constant 0 : index
    %135 = vector.load %arg20[%c39_98, %c0_99] : memref<304x64xf32, #tpu.memory_space<vmem>>, vector<256x64xf32>
    %136 = vector.broadcast %3 : vector<256x1xf32> to vector<256x64xf32>
    %137 = arith.mulf %135, %136 : vector<256x64xf32>
    %138 = arith.truncf %137 : vector<256x64xf32> to vector<256x64xbf16>
    %c6_100 = arith.constant 6 : index
    %c0_101 = arith.constant 0 : index
    %c0_102 = arith.constant 0 : index
    %139 = vector.load %arg9[%c6_100, %c0_101, %c0_102] : memref<9x64x32xbf16, #tpu.memory_space<vmem>>, vector<1x64x32xbf16>
    %140 = vector.shape_cast %139 : vector<1x64x32xbf16> to vector<64x32xbf16>
    %cst_103 = arith.constant dense<0.000000e+00> : vector<256x32xf32>
    %141 = tpu.matmul %138, %140, %cst_103 {dimension_numbers = #tpu.dot_dimension_numbers<[1], [0], [0], [1], [0, 0, 1, 1], [], []>} : vector<256x64xbf16>, vector<64x32xbf16>, vector<256x32xf32> -> vector<256x32xf32>
    %142 = arith.addf %134, %141 : vector<256x32xf32>
    %c40_104 = arith.constant 40 : index
    %c0_105 = arith.constant 0 : index
    %143 = vector.load %arg20[%c40_104, %c0_105] : memref<304x64xf32, #tpu.memory_space<vmem>>, vector<256x64xf32>
    %144 = arith.truncf %143 : vector<256x64xf32> to vector<256x64xbf16>
    %c7_106 = arith.constant 7 : index
    %c0_107 = arith.constant 0 : index
    %c0_108 = arith.constant 0 : index
    %145 = vector.load %arg9[%c7_106, %c0_107, %c0_108] : memref<9x64x32xbf16, #tpu.memory_space<vmem>>, vector<1x64x32xbf16>
    %146 = vector.shape_cast %145 : vector<1x64x32xbf16> to vector<64x32xbf16>
    %cst_109 = arith.constant dense<0.000000e+00> : vector<256x32xf32>
    %147 = tpu.matmul %144, %146, %cst_109 {dimension_numbers = #tpu.dot_dimension_numbers<[1], [0], [0], [1], [0, 0, 1, 1], [], []>} : vector<256x64xbf16>, vector<64x32xbf16>, vector<256x32xf32> -> vector<256x32xf32>
    %148 = arith.addf %142, %147 : vector<256x32xf32>
    %c41_110 = arith.constant 41 : index
    %c0_111 = arith.constant 0 : index
    %149 = vector.load %arg20[%c41_110, %c0_111] : memref<304x64xf32, #tpu.memory_space<vmem>>, vector<256x64xf32>
    %150 = vector.broadcast %4 : vector<256x1xf32> to vector<256x64xf32>
    %151 = arith.mulf %149, %150 : vector<256x64xf32>
    %152 = arith.truncf %151 : vector<256x64xf32> to vector<256x64xbf16>
    %c8_112 = arith.constant 8 : index
    %c0_113 = arith.constant 0 : index
    %c0_114 = arith.constant 0 : index
    %153 = vector.load %arg9[%c8_112, %c0_113, %c0_114] : memref<9x64x32xbf16, #tpu.memory_space<vmem>>, vector<1x64x32xbf16>
    %154 = vector.shape_cast %153 : vector<1x64x32xbf16> to vector<64x32xbf16>
    %cst_115 = arith.constant dense<0.000000e+00> : vector<256x32xf32>
    %155 = tpu.matmul %152, %154, %cst_115 {dimension_numbers = #tpu.dot_dimension_numbers<[1], [0], [0], [1], [0, 0, 1, 1], [], []>} : vector<256x64xbf16>, vector<64x32xbf16>, vector<256x32xf32> -> vector<256x32xf32>
    %156 = arith.addf %148, %155 : vector<256x32xf32>
    %c0_116 = arith.constant 0 : index
    %c0_117 = arith.constant 0 : index
    %157 = vector.load %arg10[%c0_116, %c0_117] : memref<1x32xf32, #tpu.memory_space<vmem>>, vector<1x32xf32>
    %158 = vector.broadcast %157 : vector<1x32xf32> to vector<256x32xf32>
    %159 = arith.addf %156, %158 : vector<256x32xf32>
    %cst_118 = arith.constant 0.000000e+00 : f32
    %160 = vector.broadcast %cst_118 : f32 to vector<256x32xf32>
    %161 = arith.maximumf %159, %160 : vector<256x32xf32>
    %c0_119 = arith.constant 0 : index
    %c0_120 = arith.constant 0 : index
    %162 = vector.load %arg11[%c0_119, %c0_120] : memref<1x32xf32, #tpu.memory_space<vmem>>, vector<1x32xf32>
    %163 = vector.broadcast %162 : vector<1x32xf32> to vector<256x32xf32>
    %164 = arith.mulf %161, %163 : vector<256x32xf32>
    %c0_121 = arith.constant 0 : index
    %c0_122 = arith.constant 0 : index
    %165 = vector.load %arg12[%c0_121, %c0_122] : memref<1x32xf32, #tpu.memory_space<vmem>>, vector<1x32xf32>
    %166 = vector.broadcast %165 : vector<1x32xf32> to vector<256x32xf32>
    %167 = arith.addf %164, %166 : vector<256x32xf32>
    %c24_123 = arith.constant 24 : index
    %c0_124 = arith.constant 0 : index
    %168 = vector.load %arg20[%c24_123, %c0_124] : memref<304x64xf32, #tpu.memory_space<vmem>>, vector<256x32xf32>
    tpu.vector_store %arg20[%c24_123, %c0_124], %167 {strides = array<i32>} : memref<304x64xf32, #tpu.memory_space<vmem>>, vector<256x32xf32>,
    %cst_125 = arith.constant 0.000000e+00 : f32
    %169 = vector.broadcast %cst_125 : f32 to vector<256x16xf32>
    %c7_126 = arith.constant 7 : index
    %c0_127 = arith.constant 0 : index
    %170 = vector.load %arg20[%c7_126, %c0_127] : memref<304x64xf32, #tpu.memory_space<vmem>>, vector<256x32xf32>
    %171 = vector.broadcast %3 : vector<256x1xf32> to vector<256x32xf32>
    %172 = arith.mulf %170, %171 : vector<256x32xf32>
    %173 = arith.truncf %172 : vector<256x32xf32> to vector<256x32xbf16>
    %c0_128 = arith.constant 0 : index
    %c0_129 = arith.constant 0 : index
    %c0_130 = arith.constant 0 : index
    %174 = vector.load %arg13[%c0_128, %c0_129, %c0_130] : memref<9x32x16xbf16, #tpu.memory_space<vmem>>, vector<1x32x16xbf16>
    %175 = vector.shape_cast %174 : vector<1x32x16xbf16> to vector<32x16xbf16>
    %cst_131 = arith.constant dense<0.000000e+00> : vector<256x16xf32>
    %176 = tpu.matmul %173, %175, %cst_131 {dimension_numbers = #tpu.dot_dimension_numbers<[1], [0], [0], [1], [0, 0, 1, 1], [], []>} : vector<256x32xbf16>, vector<32x16xbf16>, vector<256x16xf32> -> vector<256x16xf32>
    %177 = arith.addf %169, %176 : vector<256x16xf32>
    %c8_132 = arith.constant 8 : index
    %c0_133 = arith.constant 0 : index
    %178 = vector.load %arg20[%c8_132, %c0_133] : memref<304x64xf32, #tpu.memory_space<vmem>>, vector<256x32xf32>
    %179 = arith.truncf %178 : vector<256x32xf32> to vector<256x32xbf16>
    %c1_134 = arith.constant 1 : index
    %c0_135 = arith.constant 0 : index
    %c0_136 = arith.constant 0 : index
    %180 = vector.load %arg13[%c1_134, %c0_135, %c0_136] : memref<9x32x16xbf16, #tpu.memory_space<vmem>>, vector<1x32x16xbf16>
    %181 = vector.shape_cast %180 : vector<1x32x16xbf16> to vector<32x16xbf16>
    %cst_137 = arith.constant dense<0.000000e+00> : vector<256x16xf32>
    %182 = tpu.matmul %179, %181, %cst_137 {dimension_numbers = #tpu.dot_dimension_numbers<[1], [0], [0], [1], [0, 0, 1, 1], [], []>} : vector<256x32xbf16>, vector<32x16xbf16>, vector<256x16xf32> -> vector<256x16xf32>
    %183 = arith.addf %177, %182 : vector<256x16xf32>
    %c9_138 = arith.constant 9 : index
    %c0_139 = arith.constant 0 : index
    %184 = vector.load %arg20[%c9_138, %c0_139] : memref<304x64xf32, #tpu.memory_space<vmem>>, vector<256x32xf32>
    %185 = vector.broadcast %4 : vector<256x1xf32> to vector<256x32xf32>
    %186 = arith.mulf %184, %185 : vector<256x32xf32>
    %187 = arith.truncf %186 : vector<256x32xf32> to vector<256x32xbf16>
    %c2_140 = arith.constant 2 : index
    %c0_141 = arith.constant 0 : index
    %c0_142 = arith.constant 0 : index
    %188 = vector.load %arg13[%c2_140, %c0_141, %c0_142] : memref<9x32x16xbf16, #tpu.memory_space<vmem>>, vector<1x32x16xbf16>
    %189 = vector.shape_cast %188 : vector<1x32x16xbf16> to vector<32x16xbf16>
    %cst_143 = arith.constant dense<0.000000e+00> : vector<256x16xf32>
    %190 = tpu.matmul %187, %189, %cst_143 {dimension_numbers = #tpu.dot_dimension_numbers<[1], [0], [0], [1], [0, 0, 1, 1], [], []>} : vector<256x32xbf16>, vector<32x16xbf16>, vector<256x16xf32> -> vector<256x16xf32>
    %191 = arith.addf %183, %190 : vector<256x16xf32>
    %c23_144 = arith.constant 23 : index
    %c0_145 = arith.constant 0 : index
    %192 = vector.load %arg20[%c23_144, %c0_145] : memref<304x64xf32, #tpu.memory_space<vmem>>, vector<256x32xf32>
    %193 = vector.broadcast %3 : vector<256x1xf32> to vector<256x32xf32>
    %194 = arith.mulf %192, %193 : vector<256x32xf32>
    %195 = arith.truncf %194 : vector<256x32xf32> to vector<256x32xbf16>
    %c3_146 = arith.constant 3 : index
    %c0_147 = arith.constant 0 : index
    %c0_148 = arith.constant 0 : index
    %196 = vector.load %arg13[%c3_146, %c0_147, %c0_148] : memref<9x32x16xbf16, #tpu.memory_space<vmem>>, vector<1x32x16xbf16>
    %197 = vector.shape_cast %196 : vector<1x32x16xbf16> to vector<32x16xbf16>
    %cst_149 = arith.constant dense<0.000000e+00> : vector<256x16xf32>
    %198 = tpu.matmul %195, %197, %cst_149 {dimension_numbers = #tpu.dot_dimension_numbers<[1], [0], [0], [1], [0, 0, 1, 1], [], []>} : vector<256x32xbf16>, vector<32x16xbf16>, vector<256x16xf32> -> vector<256x16xf32>
    %199 = arith.addf %191, %198 : vector<256x16xf32>
    %200 = arith.truncf %167 : vector<256x32xf32> to vector<256x32xbf16>
    %c4_150 = arith.constant 4 : index
    %c0_151 = arith.constant 0 : index
    %c0_152 = arith.constant 0 : index
    %201 = vector.load %arg13[%c4_150, %c0_151, %c0_152] : memref<9x32x16xbf16, #tpu.memory_space<vmem>>, vector<1x32x16xbf16>
    %202 = vector.shape_cast %201 : vector<1x32x16xbf16> to vector<32x16xbf16>
    %cst_153 = arith.constant dense<0.000000e+00> : vector<256x16xf32>
    %203 = tpu.matmul %200, %202, %cst_153 {dimension_numbers = #tpu.dot_dimension_numbers<[1], [0], [0], [1], [0, 0, 1, 1], [], []>} : vector<256x32xbf16>, vector<32x16xbf16>, vector<256x16xf32> -> vector<256x16xf32>
    %204 = arith.addf %199, %203 : vector<256x16xf32>
    %c25_154 = arith.constant 25 : index
    %c0_155 = arith.constant 0 : index
    %205 = vector.load %arg20[%c25_154, %c0_155] : memref<304x64xf32, #tpu.memory_space<vmem>>, vector<256x32xf32>
    %206 = vector.broadcast %4 : vector<256x1xf32> to vector<256x32xf32>
    %207 = arith.mulf %205, %206 : vector<256x32xf32>
    %208 = arith.truncf %207 : vector<256x32xf32> to vector<256x32xbf16>
    %c5_156 = arith.constant 5 : index
    %c0_157 = arith.constant 0 : index
    %c0_158 = arith.constant 0 : index
    %209 = vector.load %arg13[%c5_156, %c0_157, %c0_158] : memref<9x32x16xbf16, #tpu.memory_space<vmem>>, vector<1x32x16xbf16>
    %210 = vector.shape_cast %209 : vector<1x32x16xbf16> to vector<32x16xbf16>
    %cst_159 = arith.constant dense<0.000000e+00> : vector<256x16xf32>
    %211 = tpu.matmul %208, %210, %cst_159 {dimension_numbers = #tpu.dot_dimension_numbers<[1], [0], [0], [1], [0, 0, 1, 1], [], []>} : vector<256x32xbf16>, vector<32x16xbf16>, vector<256x16xf32> -> vector<256x16xf32>
    %212 = arith.addf %204, %211 : vector<256x16xf32>
    %c39_160 = arith.constant 39 : index
    %c0_161 = arith.constant 0 : index
    %213 = vector.load %arg20[%c39_160, %c0_161] : memref<304x64xf32, #tpu.memory_space<vmem>>, vector<256x32xf32>
    %214 = vector.broadcast %3 : vector<256x1xf32> to vector<256x32xf32>
    %215 = arith.mulf %213, %214 : vector<256x32xf32>
    %216 = arith.truncf %215 : vector<256x32xf32> to vector<256x32xbf16>
    %c6_162 = arith.constant 6 : index
    %c0_163 = arith.constant 0 : index
    %c0_164 = arith.constant 0 : index
    %217 = vector.load %arg13[%c6_162, %c0_163, %c0_164] : memref<9x32x16xbf16, #tpu.memory_space<vmem>>, vector<1x32x16xbf16>
    %218 = vector.shape_cast %217 : vector<1x32x16xbf16> to vector<32x16xbf16>
    %cst_165 = arith.constant dense<0.000000e+00> : vector<256x16xf32>
    %219 = tpu.matmul %216, %218, %cst_165 {dimension_numbers = #tpu.dot_dimension_numbers<[1], [0], [0], [1], [0, 0, 1, 1], [], []>} : vector<256x32xbf16>, vector<32x16xbf16>, vector<256x16xf32> -> vector<256x16xf32>
    %220 = arith.addf %212, %219 : vector<256x16xf32>
    %c40_166 = arith.constant 40 : index
    %c0_167 = arith.constant 0 : index
    %221 = vector.load %arg20[%c40_166, %c0_167] : memref<304x64xf32, #tpu.memory_space<vmem>>, vector<256x32xf32>
    %222 = arith.truncf %221 : vector<256x32xf32> to vector<256x32xbf16>
    %c7_168 = arith.constant 7 : index
    %c0_169 = arith.constant 0 : index
    %c0_170 = arith.constant 0 : index
    %223 = vector.load %arg13[%c7_168, %c0_169, %c0_170] : memref<9x32x16xbf16, #tpu.memory_space<vmem>>, vector<1x32x16xbf16>
    %224 = vector.shape_cast %223 : vector<1x32x16xbf16> to vector<32x16xbf16>
    %cst_171 = arith.constant dense<0.000000e+00> : vector<256x16xf32>
    %225 = tpu.matmul %222, %224, %cst_171 {dimension_numbers = #tpu.dot_dimension_numbers<[1], [0], [0], [1], [0, 0, 1, 1], [], []>} : vector<256x32xbf16>, vector<32x16xbf16>, vector<256x16xf32> -> vector<256x16xf32>
    %226 = arith.addf %220, %225 : vector<256x16xf32>
    %c41_172 = arith.constant 41 : index
    %c0_173 = arith.constant 0 : index
    %227 = vector.load %arg20[%c41_172, %c0_173] : memref<304x64xf32, #tpu.memory_space<vmem>>, vector<256x32xf32>
    %228 = vector.broadcast %4 : vector<256x1xf32> to vector<256x32xf32>
    %229 = arith.mulf %227, %228 : vector<256x32xf32>
    %230 = arith.truncf %229 : vector<256x32xf32> to vector<256x32xbf16>
    %c8_174 = arith.constant 8 : index
    %c0_175 = arith.constant 0 : index
    %c0_176 = arith.constant 0 : index
    %231 = vector.load %arg13[%c8_174, %c0_175, %c0_176] : memref<9x32x16xbf16, #tpu.memory_space<vmem>>, vector<1x32x16xbf16>
    %232 = vector.shape_cast %231 : vector<1x32x16xbf16> to vector<32x16xbf16>
    %cst_177 = arith.constant dense<0.000000e+00> : vector<256x16xf32>
    %233 = tpu.matmul %230, %232, %cst_177 {dimension_numbers = #tpu.dot_dimension_numbers<[1], [0], [0], [1], [0, 0, 1, 1], [], []>} : vector<256x32xbf16>, vector<32x16xbf16>, vector<256x16xf32> -> vector<256x16xf32>
    %234 = arith.addf %226, %233 : vector<256x16xf32>
    %c0_178 = arith.constant 0 : index
    %c0_179 = arith.constant 0 : index
    %235 = vector.load %arg14[%c0_178, %c0_179] : memref<1x16xf32, #tpu.memory_space<vmem>>, vector<1x16xf32>
    %236 = vector.broadcast %235 : vector<1x16xf32> to vector<256x16xf32>
    %237 = arith.addf %234, %236 : vector<256x16xf32>
    %cst_180 = arith.constant 0.000000e+00 : f32
    %238 = vector.broadcast %cst_180 : f32 to vector<256x16xf32>
    %239 = arith.maximumf %237, %238 : vector<256x16xf32>
    %c0_181 = arith.constant 0 : index
    %c0_182 = arith.constant 0 : index
    %240 = vector.load %arg15[%c0_181, %c0_182] : memref<1x16xf32, #tpu.memory_space<vmem>>, vector<1x16xf32>
    %241 = vector.broadcast %240 : vector<1x16xf32> to vector<256x16xf32>
    %242 = arith.mulf %239, %241 : vector<256x16xf32>
    %c0_183 = arith.constant 0 : index
    %c0_184 = arith.constant 0 : index
    %243 = vector.load %arg16[%c0_183, %c0_184] : memref<1x16xf32, #tpu.memory_space<vmem>>, vector<1x16xf32>
    %244 = vector.broadcast %243 : vector<1x16xf32> to vector<256x16xf32>
    %245 = arith.addf %242, %244 : vector<256x16xf32>
    %246 = arith.truncf %245 : vector<256x16xf32> to vector<256x16xbf16>
    %c0_185 = arith.constant 0 : index
    %c0_186 = arith.constant 0 : index
    %247 = vector.load %arg17[%c0_185, %c0_186] : memref<16x4xbf16, #tpu.memory_space<vmem>>, vector<16x4xbf16>
    %cst_187 = arith.constant dense<0.000000e+00> : vector<256x4xf32>
    %248 = tpu.matmul %246, %247, %cst_187 {dimension_numbers = #tpu.dot_dimension_numbers<[1], [0], [0], [1], [0, 0, 1, 1], [], []>} : vector<256x16xbf16>, vector<16x4xbf16>, vector<256x4xf32> -> vector<256x4xf32>
    %c0_188 = arith.constant 0 : index
    %c0_189 = arith.constant 0 : index
    %249 = vector.load %arg18[%c0_188, %c0_189] : memref<1x4xf32, #tpu.memory_space<vmem>>, vector<1x4xf32>
    %250 = vector.broadcast %249 : vector<1x4xf32> to vector<256x4xf32>
    %251 = arith.addf %248, %250 : vector<256x4xf32>
    %c0_190 = arith.constant 0 : index
    %c0_191 = arith.constant 0 : index
    %c0_192 = arith.constant 0 : index
    %252 = vector.load %arg19[%c0_190, %c0_191, %c0_192] : memref<1x256x4xf32, #tpu.memory_space<vmem>>, vector<1x256x4xf32>
    %253 = vector.shape_cast %252 : vector<1x256x4xf32> to vector<256x4xf32>
    %254 = vector.shape_cast %251 : vector<256x4xf32> to vector<1x256x4xf32>
    tpu.vector_store %arg19[%c0_190, %c0_191, %c0_192], %254 {strides = array<i32>} : memref<1x256x4xf32, #tpu.memory_space<vmem>>, vector<1x256x4xf32>,
    return
  }
  func.func @transform_0(%arg0: i32) -> (i32, i32) {
    %c0_i32 = arith.constant 0 : i32
    %c0_i32_0 = arith.constant 0 : i32
    %c0_i32_1 = arith.constant 0 : i32
    return %c0_i32, %c0_i32_0 : i32, i32
  }
  func.func @transform_1(%arg0: i32) -> (i32, i32, i32) {
    %c0_i32 = arith.constant 0 : i32
    %c0_i32_0 = arith.constant 0 : i32
    %c0_i32_1 = arith.constant 0 : i32
    return %arg0, %c0_i32, %c0_i32_0 : i32, i32, i32
  }
  func.func @transform_2(%arg0: i32) -> (i32, i32) {
    %c0_i32 = arith.constant 0 : i32
    %c0_i32_0 = arith.constant 0 : i32
    %c0_i32_1 = arith.constant 0 : i32
    return %c0_i32, %c0_i32_0 : i32, i32
  }
  func.func @transform_3(%arg0: i32) -> (i32, i32) {
    %c0_i32 = arith.constant 0 : i32
    %c0_i32_0 = arith.constant 0 : i32
    %c0_i32_1 = arith.constant 0 : i32
    return %c0_i32, %c0_i32_0 : i32, i32
  }
  func.func @transform_4(%arg0: i32) -> (i32, i32, i32) {
    %c0_i32 = arith.constant 0 : i32
    %c0_i32_0 = arith.constant 0 : i32
    %c0_i32_1 = arith.constant 0 : i32
    %c0_i32_2 = arith.constant 0 : i32
    return %c0_i32, %c0_i32_0, %c0_i32_1 : i32, i32, i32
  }
  func.func @transform_5(%arg0: i32) -> (i32, i32) {
    %c0_i32 = arith.constant 0 : i32
    %c0_i32_0 = arith.constant 0 : i32
    %c0_i32_1 = arith.constant 0 : i32
    return %c0_i32, %c0_i32_0 : i32, i32
  }
  func.func @transform_6(%arg0: i32) -> (i32, i32) {
    %c0_i32 = arith.constant 0 : i32
    %c0_i32_0 = arith.constant 0 : i32
    %c0_i32_1 = arith.constant 0 : i32
    return %c0_i32, %c0_i32_0 : i32, i32
  }
  func.func @transform_7(%arg0: i32) -> (i32, i32) {
    %c0_i32 = arith.constant 0 : i32
    %c0_i32_0 = arith.constant 0 : i32
    %c0_i32_1 = arith.constant 0 : i32
    return %c0_i32, %c0_i32_0 : i32, i32
  }
  func.func @transform_8(%arg0: i32) -> (i32, i32, i32) {
    %c0_i32 = arith.constant 0 : i32
    %c0_i32_0 = arith.constant 0 : i32
    %c0_i32_1 = arith.constant 0 : i32
    %c0_i32_2 = arith.constant 0 : i32
    return %c0_i32, %c0_i32_0, %c0_i32_1 : i32, i32, i32
  }
  func.func @transform_9(%arg0: i32) -> (i32, i32) {
    %c0_i32 = arith.constant 0 : i32
    %c0_i32_0 = arith.constant 0 : i32
    %c0_i32_1 = arith.constant 0 : i32
    return %c0_i32, %c0_i32_0 : i32, i32
  }
  func.func @transform_10(%arg0: i32) -> (i32, i32) {
    %c0_i32 = arith.constant 0 : i32
    %c0_i32_0 = arith.constant 0 : i32
    %c0_i32_1 = arith.constant 0 : i32
    return %c0_i32, %c0_i32_0 : i32, i32
  }
  func.func @transform_11(%arg0: i32) -> (i32, i32) {
    %c0_i32 = arith.constant 0 : i32
    %c0_i32_0 = arith.constant 0 : i32
    %c0_i32_1 = arith.constant 0 : i32
    return %c0_i32, %c0_i32_0 : i32, i32
  }
  func.func @transform_12(%arg0: i32) -> (i32, i32, i32) {
    %c0_i32 = arith.constant 0 : i32
    %c0_i32_0 = arith.constant 0 : i32
    %c0_i32_1 = arith.constant 0 : i32
    %c0_i32_2 = arith.constant 0 : i32
    return %c0_i32, %c0_i32_0, %c0_i32_1 : i32, i32, i32
  }
  func.func @transform_13(%arg0: i32) -> (i32, i32) {
    %c0_i32 = arith.constant 0 : i32
    %c0_i32_0 = arith.constant 0 : i32
    %c0_i32_1 = arith.constant 0 : i32
    return %c0_i32, %c0_i32_0 : i32, i32
  }
  func.func @transform_14(%arg0: i32) -> (i32, i32) {
    %c0_i32 = arith.constant 0 : i32
    %c0_i32_0 = arith.constant 0 : i32
    %c0_i32_1 = arith.constant 0 : i32
    return %c0_i32, %c0_i32_0 : i32, i32
  }
  func.func @transform_15(%arg0: i32) -> (i32, i32) {
    %c0_i32 = arith.constant 0 : i32
    %c0_i32_0 = arith.constant 0 : i32
    %c0_i32_1 = arith.constant 0 : i32
    return %c0_i32, %c0_i32_0 : i32, i32
  }
  func.func @transform_16(%arg0: i32) -> (i32, i32) {
    %c0_i32 = arith.constant 0 : i32
    %c0_i32_0 = arith.constant 0 : i32
    %c0_i32_1 = arith.constant 0 : i32
    return %c0_i32, %c0_i32_0 : i32, i32
  }
  func.func @transform_17(%arg0: i32) -> (i32, i32) {
    %c0_i32 = arith.constant 0 : i32
    %c0_i32_0 = arith.constant 0 : i32
    %c0_i32_1 = arith.constant 0 : i32
    return %c0_i32, %c0_i32_0 : i32, i32
  }
  func.func @transform_18(%arg0: i32) -> (i32, i32, i32) {
    %c0_i32 = arith.constant 0 : i32
    %c0_i32_0 = arith.constant 0 : i32
    %c0_i32_1 = arith.constant 0 : i32
    return %arg0, %c0_i32, %c0_i32_0 : i32, i32, i32
  }
}

</mosaic_0001>

<llo_original>
// kernel: tpu_custom_call.1
$region0: #{tpu_custom_call.1}
  #allocation0 [shape = 'u32[]', space=smem, size = 0x4, offset = 0x4, fixed_abs, tag = 'smem constant byte address 0x4 - core index']
  #allocation1 [shape = 'u32[144,128]{1,0:T(1,128)}', space=vmem, size = 0x12000, scoped, tag = 'internal scratch']
  #allocation2 [shape = 'f32[304,64]{1,0:T(8,128)}', space=vmem, size = 0x26000, scoped, tag = 'scratch operand']
  %s0 = inlined_call_operand.vmem [shape: f32[256,2], index: 0, kind: input, shape index: {}]
  %s1 = inlined_call_operand.vmem [shape: bf16[2,256,4], index: 1, kind: input, shape index: {}]
  %s2 = inlined_call_operand.vmem [shape: bf16[4,8], index: 2, kind: input, shape index: {}]
  %s3 = inlined_call_operand.vmem [shape: f32[1,8], index: 3, kind: input, shape index: {}]
  %s4 = inlined_call_operand.vmem [shape: bf16[9,8,64], index: 4, kind: input, shape index: {}]
  %s5 = inlined_call_operand.vmem [shape: f32[1,64], index: 5, kind: input, shape index: {}]
  %s6 = inlined_call_operand.vmem [shape: f32[1,64], index: 6, kind: input, shape index: {}]
  %s7 = inlined_call_operand.vmem [shape: f32[1,64], index: 7, kind: input, shape index: {}]
  %s8 = inlined_call_operand.vmem [shape: bf16[9,64,32], index: 8, kind: input, shape index: {}]
  %s9 = inlined_call_operand.vmem [shape: f32[1,32], index: 9, kind: input, shape index: {}]
  %s10 = inlined_call_operand.vmem [shape: f32[1,32], index: 10, kind: input, shape index: {}]
  %s11 = inlined_call_operand.vmem [shape: f32[1,32], index: 11, kind: input, shape index: {}]
  %s12 = inlined_call_operand.vmem [shape: bf16[9,32,16], index: 12, kind: input, shape index: {}]
  %s13 = inlined_call_operand.vmem [shape: f32[1,16], index: 13, kind: input, shape index: {}]
  %s14 = inlined_call_operand.vmem [shape: f32[1,16], index: 14, kind: input, shape index: {}]
  %s15 = inlined_call_operand.vmem [shape: f32[1,16], index: 15, kind: input, shape index: {}]
  %s16 = inlined_call_operand.vmem [shape: bf16[16,4], index: 16, kind: input, shape index: {}]
  %s17 = inlined_call_operand.vmem [shape: f32[1,4], index: 17, kind: input, shape index: {}]
  %s18 = inlined_call_operand.vmem [shape: f32[2,256,4], index: 18, kind: output, shape index: {}]
  %s19 = sld [smem:[#allocation0]]
  $region105: #{tpu_custom_call.1} parent=0
    _
  %s21 = ssub.s32 1, %s19
  %s22 = scalar_select 0, %s21, %s19
  loop: start=0, step=1, limit=4
  $region2: #{tpu_custom_call.1} parent=0 // loop_pre_header
    _
  $region3: #{tpu_custom_call.1} parent=0 // loop_header
    %s24 = sphi 0, %s28
    %p25 = scmp.ge.s32.totalorder %s24, 4
    %s32 = sphi 0, %s32
    %s34 = sphi 0, %s32
    %s35 = sphi 0, %s34
    %s49 = sphi 0, %s35
    %s55 = sphi 0, %s57
    %s58 = sphi 0, %s55
    %s59 = sphi 0, %s58
    %s75 = sphi 0, %s59
    %s79 = sphi 0, %s79
    %s81 = sphi 0, %s79
    %s82 = sphi 0, %s81
    %s96 = sphi 0, %s82
    %s100 = sphi 0, %s100
    %s102 = sphi 0, %s100
    %s103 = sphi 0, %s102
    %s117 = sphi 0, %s103
    %s121 = sphi 0, %s121
    %s123 = sphi 0, %s121
    %s124 = sphi 0, %s123
    %s138 = sphi 0, %s124
    %s142 = sphi 0, %s142
    %s144 = sphi 0, %s142
    %s145 = sphi 0, %s144
    %s159 = sphi 0, %s145
    %s163 = sphi 0, %s163
    %s165 = sphi 0, %s163
    %s166 = sphi 0, %s165
    %s180 = sphi 0, %s166
    %s184 = sphi 0, %s184
    %s186 = sphi 0, %s184
    %s187 = sphi 0, %s186
    %s201 = sphi 0, %s187
    %s205 = sphi 0, %s205
    %s207 = sphi 0, %s205
    %s208 = sphi 0, %s207
    %s222 = sphi 0, %s208
    %s226 = sphi 0, %s226
    %s228 = sphi 0, %s226
    %s229 = sphi 0, %s228
    %s243 = sphi 0, %s229
    %s247 = sphi 0, %s247
    %s249 = sphi 0, %s247
    %s250 = sphi 0, %s249
    %s264 = sphi 0, %s250
    %s268 = sphi 0, %s268
    %s270 = sphi 0, %s268
    %s271 = sphi 0, %s270
    %s285 = sphi 0, %s271
    %s289 = sphi 0, %s289
    %s291 = sphi 0, %s289
    %s292 = sphi 0, %s291
    %s306 = sphi 0, %s292
    %s310 = sphi 0, %s310
    %s312 = sphi 0, %s310
    %s313 = sphi 0, %s312
    %s327 = sphi 0, %s313
    %s331 = sphi 0, %s331
    %s333 = sphi 0, %s331
    %s334 = sphi 0, %s333
    %s348 = sphi 0, %s334
    %s352 = sphi 0, %s352
    %s354 = sphi 0, %s352
    %s355 = sphi 0, %s354
    %s369 = sphi 0, %s355
    %s373 = sphi 0, %s373
    %s375 = sphi 0, %s373
    %s376 = sphi 0, %s375
    %s390 = sphi 0, %s376
    %s394 = sphi 0, %s394
    %s396 = sphi 0, %s394
    %s397 = sphi 0, %s396
    %s411 = sphi 0, %s397
    %s417 = sphi 0, %s419
    %s420 = sphi 0, %s417
    %s421 = sphi 0, %s420
    %s437 = sphi 0, %s421
  $region4: #{tpu_custom_call.1} parent=0 // loop_header_branch
    %27 = sbr.rel (%p25) target = $region8
  $region5: #{tpu_custom_call.1} parent=0 // loop_body
    %s29 = ssub.s32 %s24, 1
    %s30 = ssub.s32 %s24, 2
    %s31 = sadd.s32 %s24, 1
    %s33 = sadd.s32 %s32, 1
    %p36 = scmp.eq.s32.totalorder %s24, 1
    %p37 = scmp.ne.s32.totalorder %s32, %s34
    %p38 = scmp.eq.s32.totalorder %s24, 0
    %p39 = por %p37, %p38
    %p40 = scmp.ne.s32.totalorder %s32, %s34
    %p41 = scmp.eq.s32.totalorder %s29, 1
    %p42 = por %p40, %p41
    %p43 = scmp.ne.s32.totalorder %s34, %s35
    %p44 = scmp.eq.s32.totalorder %s29, 0
    %p45 = por %p43, %p44
    %p46 = scmp.ne.s32.totalorder %s34, %s35
    %p47 = scmp.eq.s32.totalorder %s30, 1
    %p48 = por %p46, %p47
    %p50 = scmp.ne.s32.totalorder %s35, %s49
    %p51 = scmp.eq.s32.totalorder %s30, 0
    %p52 = por %p50, %p51
    %s53 = ssub.s32 %s24, %s31
    %p54 = scmp.eq.s32.totalorder %s53, 0
    %s56 = sadd.s32 %s55, 1
    %s57 = scalar_select %p54, %s55, %s56
    %p60 = pneg %p54
    %p61 = scmp.eq.s32.totalorder %s24, 1
    %p62 = por %p60, %p61
    %p63 = scmp.ne.s32.totalorder %s55, %s58
    %p64 = scmp.eq.s32.totalorder %s24, 0
    %p65 = por %p63, %p64
    %p66 = scmp.ne.s32.totalorder %s55, %s58
    %p67 = scmp.eq.s32.totalorder %s29, 1
    %p68 = por %p66, %p67
    %p69 = scmp.ne.s32.totalorder %s58, %s59
    %p70 = scmp.eq.s32.totalorder %s29, 0
    %p71 = por %p69, %p70
    %p72 = scmp.ne.s32.totalorder %s58, %s59
    %p73 = scmp.eq.s32.totalorder %s30, 1
    %p74 = por %p72, %p73
    %p76 = scmp.ne.s32.totalorder %s59, %s75
    %p77 = scmp.eq.s32.totalorder %s30, 0
    %p78 = por %p76, %p77
    %s80 = sadd.s32 %s79, 1
    %p83 = scmp.eq.s32.totalorder %s24, 1
    %p84 = scmp.ne.s32.totalorder %s79, %s81
    %p85 = scmp.eq.s32.totalorder %s24, 0
    %p86 = por %p84, %p85
    %p87 = scmp.ne.s32.totalorder %s79, %s81
    %p88 = scmp.eq.s32.totalorder %s29, 1
    %p89 = por %p87, %p88
    %p90 = scmp.ne.s32.totalorder %s81, %s82
    %p91 = scmp.eq.s32.totalorder %s29, 0
    %p92 = por %p90, %p91
    %p93 = scmp.ne.s32.totalorder %s81, %s82
    %p94 = scmp.eq.s32.totalorder %s30, 1
    %p95 = por %p93, %p94
    %p97 = scmp.ne.s32.totalorder %s82, %s96
    %p98 = scmp.eq.s32.totalorder %s30, 0
    %p99 = por %p97, %p98
    %s101 = sadd.s32 %s100, 1
    %p104 = scmp.eq.s32.totalorder %s24, 1
    %p105 = scmp.ne.s32.totalorder %s100, %s102
    %p106 = scmp.eq.s32.totalorder %s24, 0
    %p107 = por %p105, %p106
    %p108 = scmp.ne.s32.totalorder %s100, %s102
    %p109 = scmp.eq.s32.totalorder %s29, 1
    %p110 = por %p108, %p109
    %p111 = scmp.ne.s32.totalorder %s102, %s103
    %p112 = scmp.eq.s32.totalorder %s29, 0
    %p113 = por %p111, %p112
    %p114 = scmp.ne.s32.totalorder %s102, %s103
    %p115 = scmp.eq.s32.totalorder %s30, 1
    %p116 = por %p114, %p115
    %p118 = scmp.ne.s32.totalorder %s103, %s117
    %p119 = scmp.eq.s32.totalorder %s30, 0
    %p120 = por %p118, %p119
    %s122 = sadd.s32 %s121, 1
    %p125 = scmp.eq.s32.totalorder %s24, 1
    %p126 = scmp.ne.s32.totalorder %s121, %s123
    %p127 = scmp.eq.s32.totalorder %s24, 0
    %p128 = por %p126, %p127
    %p129 = scmp.ne.s32.totalorder %s121, %s123
    %p130 = scmp.eq.s32.totalorder %s29, 1
    %p131 = por %p129, %p130
    %p132 = scmp.ne.s32.totalorder %s123, %s124
    %p133 = scmp.eq.s32.totalorder %s29, 0
    %p134 = por %p132, %p133
    %p135 = scmp.ne.s32.totalorder %s123, %s124
    %p136 = scmp.eq.s32.totalorder %s30, 1
    %p137 = por %p135, %p136
    %p139 = scmp.ne.s32.totalorder %s124, %s138
    %p140 = scmp.eq.s32.totalorder %s30, 0
    %p141 = por %p139, %p140
    %s143 = sadd.s32 %s142, 1
    %p146 = scmp.eq.s32.totalorder %s24, 1
    %p147 = scmp.ne.s32.totalorder %s142, %s144
    %p148 = scmp.eq.s32.totalorder %s24, 0
    %p149 = por %p147, %p148
    %p150 = scmp.ne.s32.totalorder %s142, %s144
    %p151 = scmp.eq.s32.totalorder %s29, 1
    %p152 = por %p150, %p151
    %p153 = scmp.ne.s32.totalorder %s144, %s145
    %p154 = scmp.eq.s32.totalorder %s29, 0
    %p155 = por %p153, %p154
    %p156 = scmp.ne.s32.totalorder %s144, %s145
    %p157 = scmp.eq.s32.totalorder %s30, 1
    %p158 = por %p156, %p157
    %p160 = scmp.ne.s32.totalorder %s145, %s159
    %p161 = scmp.eq.s32.totalorder %s30, 0
    %p162 = por %p160, %p161
    %s164 = sadd.s32 %s163, 1
    %p167 = scmp.eq.s32.totalorder %s24, 1
    %p168 = scmp.ne.s32.totalorder %s163, %s165
    %p169 = scmp.eq.s32.totalorder %s24, 0
    %p170 = por %p168, %p169
    %p171 = scmp.ne.s32.totalorder %s163, %s165
    %p172 = scmp.eq.s32.totalorder %s29, 1
    %p173 = por %p171, %p172
    %p174 = scmp.ne.s32.totalorder %s165, %s166
    %p175 = scmp.eq.s32.totalorder %s29, 0
    %p176 = por %p174, %p175
    %p177 = scmp.ne.s32.totalorder %s165, %s166
    %p178 = scmp.eq.s32.totalorder %s30, 1
    %p179 = por %p177, %p178
    %p181 = scmp.ne.s32.totalorder %s166, %s180
    %p182 = scmp.eq.s32.totalorder %s30, 0
    %p183 = por %p181, %p182
    %s185 = sadd.s32 %s184, 1
    %p188 = scmp.eq.s32.totalorder %s24, 1
    %p189 = scmp.ne.s32.totalorder %s184, %s186
    %p190 = scmp.eq.s32.totalorder %s24, 0
    %p191 = por %p189, %p190
    %p192 = scmp.ne.s32.totalorder %s184, %s186
    %p193 = scmp.eq.s32.totalorder %s29, 1
    %p194 = por %p192, %p193
    %p195 = scmp.ne.s32.totalorder %s186, %s187
    %p196 = scmp.eq.s32.totalorder %s29, 0
    %p197 = por %p195, %p196
    %p198 = scmp.ne.s32.totalorder %s186, %s187
    %p199 = scmp.eq.s32.totalorder %s30, 1
    %p200 = por %p198, %p199
    %p202 = scmp.ne.s32.totalorder %s187, %s201
    %p203 = scmp.eq.s32.totalorder %s30, 0
    %p204 = por %p202, %p203
    %s206 = sadd.s32 %s205, 1
    %p209 = scmp.eq.s32.totalorder %s24, 1
    %p210 = scmp.ne.s32.totalorder %s205, %s207
    %p211 = scmp.eq.s32.totalorder %s24, 0
    %p212 = por %p210, %p211
    %p213 = scmp.ne.s32.totalorder %s205, %s207
    %p214 = scmp.eq.s32.totalorder %s29, 1
    %p215 = por %p213, %p214
    %p216 = scmp.ne.s32.totalorder %s207, %s208
    %p217 = scmp.eq.s32.totalorder %s29, 0
    %p218 = por %p216, %p217
    %p219 = scmp.ne.s32.totalorder %s207, %s208
    %p220 = scmp.eq.s32.totalorder %s30, 1
    %p221 = por %p219, %p220
    %p223 = scmp.ne.s32.totalorder %s208, %s222
    %p224 = scmp.eq.s32.totalorder %s30, 0
    %p225 = por %p223, %p224
    %s227 = sadd.s32 %s226, 1
    %p230 = scmp.eq.s32.totalorder %s24, 1
    %p231 = scmp.ne.s32.totalorder %s226, %s228
    %p232 = scmp.eq.s32.totalorder %s24, 0
    %p233 = por %p231, %p232
    %p234 = scmp.ne.s32.totalorder %s226, %s228
    %p235 = scmp.eq.s32.totalorder %s29, 1
    %p236 = por %p234, %p235
    %p237 = scmp.ne.s32.totalorder %s228, %s229
    %p238 = scmp.eq.s32.totalorder %s29, 0
    %p239 = por %p237, %p238
    %p240 = scmp.ne.s32.totalorder %s228, %s229
    %p241 = scmp.eq.s32.totalorder %s30, 1
    %p242 = por %p240, %p241
    %p244 = scmp.ne.s32.totalorder %s229, %s243
    %p245 = scmp.eq.s32.totalorder %s30, 0
    %p246 = por %p244, %p245
    %s248 = sadd.s32 %s247, 1
    %p251 = scmp.eq.s32.totalorder %s24, 1
    %p252 = scmp.ne.s32.totalorder %s247, %s249
    %p253 = scmp.eq.s32.totalorder %s24, 0
    %p254 = por %p252, %p253
    %p255 = scmp.ne.s32.totalorder %s247, %s249
    %p256 = scmp.eq.s32.totalorder %s29, 1
    %p257 = por %p255, %p256
    %p258 = scmp.ne.s32.totalorder %s249, %s250
    %p259 = scmp.eq.s32.totalorder %s29, 0
    %p260 = por %p258, %p259
    %p261 = scmp.ne.s32.totalorder %s249, %s250
    %p262 = scmp.eq.s32.totalorder %s30, 1
    %p263 = por %p261, %p262
    %p265 = scmp.ne.s32.totalorder %s250, %s264
    %p266 = scmp.eq.s32.totalorder %s30, 0
    %p267 = por %p265, %p266
    %s269 = sadd.s32 %s268, 1
    %p272 = scmp.eq.s32.totalorder %s24, 1
    %p273 = scmp.ne.s32.totalorder %s268, %s270
    %p274 = scmp.eq.s32.totalorder %s24, 0
    %p275 = por %p273, %p274
    %p276 = scmp.ne.s32.totalorder %s268, %s270
    %p277 = scmp.eq.s32.totalorder %s29, 1
    %p278 = por %p276, %p277
    %p279 = scmp.ne.s32.totalorder %s270, %s271
    %p280 = scmp.eq.s32.totalorder %s29, 0
    %p281 = por %p279, %p280
    %p282 = scmp.ne.s32.totalorder %s270, %s271
    %p283 = scmp.eq.s32.totalorder %s30, 1
    %p284 = por %p282, %p283
    %p286 = scmp.ne.s32.totalorder %s271, %s285
    %p287 = scmp.eq.s32.totalorder %s30, 0
    %p288 = por %p286, %p287
    %s290 = sadd.s32 %s289, 1
    %p293 = scmp.eq.s32.totalorder %s24, 1
    %p294 = scmp.ne.s32.totalorder %s289, %s291
    %p295 = scmp.eq.s32.totalorder %s24, 0
    %p296 = por %p294, %p295
    %p297 = scmp.ne.s32.totalorder %s289, %s291
    %p298 = scmp.eq.s32.totalorder %s29, 1
    %p299 = por %p297, %p298
    %p300 = scmp.ne.s32.totalorder %s291, %s292
    %p301 = scmp.eq.s32.totalorder %s29, 0
    %p302 = por %p300, %p301
    %p303 = scmp.ne.s32.totalorder %s291, %s292
    %p304 = scmp.eq.s32.totalorder %s30, 1
    %p305 = por %p303, %p304
    %p307 = scmp.ne.s32.totalorder %s292, %s306
    %p308 = scmp.eq.s32.totalorder %s30, 0
    %p309 = por %p307, %p308
    %s311 = sadd.s32 %s310, 1
    %p314 = scmp.eq.s32.totalorder %s24, 1
    %p315 = scmp.ne.s32.totalorder %s310, %s312
    %p316 = scmp.eq.s32.totalorder %s24, 0
    %p317 = por %p315, %p316
    %p318 = scmp.ne.s32.totalorder %s310, %s312
    %p319 = scmp.eq.s32.totalorder %s29, 1
    %p320 = por %p318, %p319
    %p321 = scmp.ne.s32.totalorder %s312, %s313
    %p322 = scmp.eq.s32.totalorder %s29, 0
    %p323 = por %p321, %p322
    %p324 = scmp.ne.s32.totalorder %s312, %s313
    %p325 = scmp.eq.s32.totalorder %s30, 1
    %p326 = por %p324, %p325
    %p328 = scmp.ne.s32.totalorder %s313, %s327
    %p329 = scmp.eq.s32.totalorder %s30, 0
    %p330 = por %p328, %p329
    %s332 = sadd.s32 %s331, 1
    %p335 = scmp.eq.s32.totalorder %s24, 1
    %p336 = scmp.ne.s32.totalorder %s331, %s333
    %p337 = scmp.eq.s32.totalorder %s24, 0
    %p338 = por %p336, %p337
    %p339 = scmp.ne.s32.totalorder %s331, %s333
    %p340 = scmp.eq.s32.totalorder %s29, 1
    %p341 = por %p339, %p340
    %p342 = scmp.ne.s32.totalorder %s333, %s334
    %p343 = scmp.eq.s32.totalorder %s29, 0
    %p344 = por %p342, %p343
    %p345 = scmp.ne.s32.totalorder %s333, %s334
    %p346 = scmp.eq.s32.totalorder %s30, 1
    %p347 = por %p345, %p346
    %p349 = scmp.ne.s32.totalorder %s334, %s348
    %p350 = scmp.eq.s32.totalorder %s30, 0
    %p351 = por %p349, %p350
    %s353 = sadd.s32 %s352, 1
    %p356 = scmp.eq.s32.totalorder %s24, 1
    %p357 = scmp.ne.s32.totalorder %s352, %s354
    %p358 = scmp.eq.s32.totalorder %s24, 0
    %p359 = por %p357, %p358
    %p360 = scmp.ne.s32.totalorder %s352, %s354
    %p361 = scmp.eq.s32.totalorder %s29, 1
    %p362 = por %p360, %p361
    %p363 = scmp.ne.s32.totalorder %s354, %s355
    %p364 = scmp.eq.s32.totalorder %s29, 0
    %p365 = por %p363, %p364
    %p366 = scmp.ne.s32.totalorder %s354, %s355
    %p367 = scmp.eq.s32.totalorder %s30, 1
    %p368 = por %p366, %p367
    %p370 = scmp.ne.s32.totalorder %s355, %s369
    %p371 = scmp.eq.s32.totalorder %s30, 0
    %p372 = por %p370, %p371
    %s374 = sadd.s32 %s373, 1
    %p377 = scmp.eq.s32.totalorder %s24, 1
    %p378 = scmp.ne.s32.totalorder %s373, %s375
    %p379 = scmp.eq.s32.totalorder %s24, 0
    %p380 = por %p378, %p379
    %p381 = scmp.ne.s32.totalorder %s373, %s375
    %p382 = scmp.eq.s32.totalorder %s29, 1
    %p383 = por %p381, %p382
    %p384 = scmp.ne.s32.totalorder %s375, %s376
    %p385 = scmp.eq.s32.totalorder %s29, 0
    %p386 = por %p384, %p385
    %p387 = scmp.ne.s32.totalorder %s375, %s376
    %p388 = scmp.eq.s32.totalorder %s30, 1
    %p389 = por %p387, %p388
    %p391 = scmp.ne.s32.totalorder %s376, %s390
    %p392 = scmp.eq.s32.totalorder %s30, 0
    %p393 = por %p391, %p392
    %s395 = sadd.s32 %s394, 1
    %p398 = scmp.eq.s32.totalorder %s24, 1
    %p399 = scmp.ne.s32.totalorder %s394, %s396
    %p400 = scmp.eq.s32.totalorder %s24, 0
    %p401 = por %p399, %p400
    %p402 = scmp.ne.s32.totalorder %s394, %s396
    %p403 = scmp.eq.s32.totalorder %s29, 1
    %p404 = por %p402, %p403
    %p405 = scmp.ne.s32.totalorder %s396, %s397
    %p406 = scmp.eq.s32.totalorder %s29, 0
    %p407 = por %p405, %p406
    %p408 = scmp.ne.s32.totalorder %s396, %s397
    %p409 = scmp.eq.s32.totalorder %s30, 1
    %p410 = por %p408, %p409
    %p412 = scmp.ne.s32.totalorder %s397, %s411
    %p413 = scmp.eq.s32.totalorder %s30, 0
    %p414 = por %p412, %p413
    %s415 = ssub.s32 %s24, %s31
    %p416 = scmp.eq.s32.totalorder %s415, 0
    %s418 = sadd.s32 %s417, 1
    %s419 = scalar_select %p416, %s417, %s418
    %p422 = pneg %p416
    %p423 = scmp.eq.s32.totalorder %s24, 1
    %p424 = por %p422, %p423
    %p425 = scmp.ne.s32.totalorder %s417, %s420
    %p426 = scmp.eq.s32.totalorder %s24, 0
    %p427 = por %p425, %p426
    %p428 = scmp.ne.s32.totalorder %s417, %s420
    %p429 = scmp.eq.s32.totalorder %s29, 1
    %p430 = por %p428, %p429
    %p431 = scmp.ne.s32.totalorder %s420, %s421
    %p432 = scmp.eq.s32.totalorder %s29, 0
    %p433 = por %p431, %p432
    %p434 = scmp.ne.s32.totalorder %s420, %s421
    %p435 = scmp.eq.s32.totalorder %s30, 1
    %p436 = por %p434, %p435
    %p438 = scmp.ne.s32.totalorder %s421, %s437
    %p439 = scmp.eq.s32.totalorder %s30, 0
    %p440 = por %p438, %p439
    %p441 = scmp.le.s32.totalorder 1, %s24
    %p442 = scmp.lt.s32.totalorder %s24, 3
    %p443 = pnand %p441, %p442
    %p444 = pneg %p443
    // Predicated region
    $region9: #{tpu_custom_call.1} parent=5 // pred_check
      _
    $region10: #{tpu_custom_call.1} parent=5 // pred_check_branch
      %446 = sbr.rel (%p443) target = $region12
    $region11: #{tpu_custom_call.1} parent=5 // pred_region
      %s447 = ssub.s32 %s24, 1
      // Predicated region
      $region13: #{tpu_custom_call.1} parent=11 // pred_check
        %p448 = pneg %p45
      $region14: #{tpu_custom_call.1} parent=11 // pred_check_branch
        %450 = sbr.rel (%p448) target = $region16
      $region15: #{tpu_custom_call.1} parent=11 // pred_region
        _
      $region16: #{tpu_custom_call.1} parent=11 // pred_fallthru
        _
      // Predicated region
      $region17: #{tpu_custom_call.1} parent=11 // pred_check
        %p451 = pneg %p92
      $region18: #{tpu_custom_call.1} parent=11 // pred_check_branch
        %453 = sbr.rel (%p451) target = $region20
      $region19: #{tpu_custom_call.1} parent=11 // pred_region
        _
      $region20: #{tpu_custom_call.1} parent=11 // pred_fallthru
        _
      // Predicated region
      $region21: #{tpu_custom_call.1} parent=11 // pred_check
        %p454 = pneg %p113
      $region22: #{tpu_custom_call.1} parent=11 // pred_check_branch
        %456 = sbr.rel (%p454) target = $region24
      $region23: #{tpu_custom_call.1} parent=11 // pred_region
        _
      $region24: #{tpu_custom_call.1} parent=11 // pred_fallthru
        _
      // Predicated region
      $region25: #{tpu_custom_call.1} parent=11 // pred_check
        %p457 = pneg %p134
      $region26: #{tpu_custom_call.1} parent=11 // pred_check_branch
        %459 = sbr.rel (%p457) target = $region28
      $region27: #{tpu_custom_call.1} parent=11 // pred_region
        _
      $region28: #{tpu_custom_call.1} parent=11 // pred_fallthru
        _
      // Predicated region
      $region29: #{tpu_custom_call.1} parent=11 // pred_check
        %p460 = pneg %p155
      $region30: #{tpu_custom_call.1} parent=11 // pred_check_branch
        %462 = sbr.rel (%p460) target = $region32
      $region31: #{tpu_custom_call.1} parent=11 // pred_region
        _
      $region32: #{tpu_custom_call.1} parent=11 // pred_fallthru
        _
      // Predicated region
      $region33: #{tpu_custom_call.1} parent=11 // pred_check
        %p463 = pneg %p176
      $region34: #{tpu_custom_call.1} parent=11 // pred_check_branch
        %465 = sbr.rel (%p463) target = $region36
      $region35: #{tpu_custom_call.1} parent=11 // pred_region
        _
      $region36: #{tpu_custom_call.1} parent=11 // pred_fallthru
        _
      // Predicated region
      $region37: #{tpu_custom_call.1} parent=11 // pred_check
        %p466 = pneg %p197
      $region38: #{tpu_custom_call.1} parent=11 // pred_check_branch
        %468 = sbr.rel (%p466) target = $region40
      $region39: #{tpu_custom_call.1} parent=11 // pred_region
        _
      $region40: #{tpu_custom_call.1} parent=11 // pred_fallthru
        _
      // Predicated region
      $region41: #{tpu_custom_call.1} parent=11 // pred_check
        %p469 = pneg %p218
      $region42: #{tpu_custom_call.1} parent=11 // pred_check_branch
        %471 = sbr.rel (%p469) target = $region44
      $region43: #{tpu_custom_call.1} parent=11 // pred_region
        _
      $region44: #{tpu_custom_call.1} parent=11 // pred_fallthru
        _
      // Predicated region
      $region45: #{tpu_custom_call.1} parent=11 // pred_check
        %p472 = pneg %p239
      $region46: #{tpu_custom_call.1} parent=11 // pred_check_branch
        %474 = sbr.rel (%p472) target = $region48
      $region47: #{tpu_custom_call.1} parent=11 // pred_region
        _
      $region48: #{tpu_custom_call.1} parent=11 // pred_fallthru
        _
      // Predicated region
      $region49: #{tpu_custom_call.1} parent=11 // pred_check
        %p475 = pneg %p260
      $region50: #{tpu_custom_call.1} parent=11 // pred_check_branch
        %477 = sbr.rel (%p475) target = $region52
      $region51: #{tpu_custom_call.1} parent=11 // pred_region
        _
      $region52: #{tpu_custom_call.1} parent=11 // pred_fallthru
        _
      // Predicated region
      $region53: #{tpu_custom_call.1} parent=11 // pred_check
        %p478 = pneg %p281
      $region54: #{tpu_custom_call.1} parent=11 // pred_check_branch
        %480 = sbr.rel (%p478) target = $region56
      $region55: #{tpu_custom_call.1} parent=11 // pred_region
        _
      $region56: #{tpu_custom_call.1} parent=11 // pred_fallthru
        _
      // Predicated region
      $region57: #{tpu_custom_call.1} parent=11 // pred_check
        %p481 = pneg %p302
      $region58: #{tpu_custom_call.1} parent=11 // pred_check_branch
        %483 = sbr.rel (%p481) target = $region60
      $region59: #{tpu_custom_call.1} parent=11 // pred_region
        _
      $region60: #{tpu_custom_call.1} parent=11 // pred_fallthru
        _
      // Predicated region
      $region61: #{tpu_custom_call.1} parent=11 // pred_check
        %p484 = pneg %p323
      $region62: #{tpu_custom_call.1} parent=11 // pred_check_branch
        %486 = sbr.rel (%p484) target = $region64
      $region63: #{tpu_custom_call.1} parent=11 // pred_region
        _
      $region64: #{tpu_custom_call.1} parent=11 // pred_fallthru
        _
      // Predicated region
      $region65: #{tpu_custom_call.1} parent=11 // pred_check
        %p487 = pneg %p344
      $region66: #{tpu_custom_call.1} parent=11 // pred_check_branch
        %489 = sbr.rel (%p487) target = $region68
      $region67: #{tpu_custom_call.1} parent=11 // pred_region
        _
      $region68: #{tpu_custom_call.1} parent=11 // pred_fallthru
        _
      // Predicated region
      $region69: #{tpu_custom_call.1} parent=11 // pred_check
        %p490 = pneg %p365
      $region70: #{tpu_custom_call.1} parent=11 // pred_check_branch
        %492 = sbr.rel (%p490) target = $region72
      $region71: #{tpu_custom_call.1} parent=11 // pred_region
        _
      $region72: #{tpu_custom_call.1} parent=11 // pred_fallthru
        _
      // Predicated region
      $region73: #{tpu_custom_call.1} parent=11 // pred_check
        %p493 = pneg %p386
      $region74: #{tpu_custom_call.1} parent=11 // pred_check_branch
        %495 = sbr.rel (%p493) target = $region76
      $region75: #{tpu_custom_call.1} parent=11 // pred_region
        _
      $region76: #{tpu_custom_call.1} parent=11 // pred_fallthru
        _
      // Predicated region
      $region77: #{tpu_custom_call.1} parent=11 // pred_check
        %p496 = pneg %p407
      $region78: #{tpu_custom_call.1} parent=11 // pred_check_branch
        %498 = sbr.rel (%p496) target = $region80
      $region79: #{tpu_custom_call.1} parent=11 // pred_region
        _
      $region80: #{tpu_custom_call.1} parent=11 // pred_fallthru
        _
    $region12: #{tpu_custom_call.1} parent=5 // pred_fallthru
      _
    %p499 = scmp.lt.s32.totalorder %s24, 2
    // Predicated region
    $region81: #{tpu_custom_call.1} parent=5 // pred_check
      %p500 = pneg %p499
    $region82: #{tpu_custom_call.1} parent=5 // pred_check_branch
      %502 = sbr.rel (%p500) target = $region84
    $region83: #{tpu_custom_call.1} parent=5 // pred_region
      // Predicated region
      $region85: #{tpu_custom_call.1} parent=83 // pred_check
        %p503 = pneg %p65
      $region86: #{tpu_custom_call.1} parent=83 // pred_check_branch
        %505 = sbr.rel (%p503) target = $region88
      $region87: #{tpu_custom_call.1} parent=83 // pred_region
        %p506 = scmp.lt.s32.totalorder %s24, 1
        %s507 = scalar_select %p506, %s24, 1
        %s508 = smul.addr %s507, 32
        %s509 = smul.addr %s508, 4
        %s510 = scalar_lea.vmem %s1, %s509
      $region88: #{tpu_custom_call.1} parent=83 // pred_fallthru
        _
    $region84: #{tpu_custom_call.1} parent=5 // pred_fallthru
      _
    %p511 = scmp.le.s32.totalorder 1, %s24
    %p512 = scmp.lt.s32.totalorder %s24, 3
    %p513 = pnand %p511, %p512
    %p514 = pneg %p513
    // Predicated region
    $region89: #{tpu_custom_call.1} parent=5 // pred_check
      _
    $region90: #{tpu_custom_call.1} parent=5 // pred_check_branch
      %516 = sbr.rel (%p513) target = $region92
    $region91: #{tpu_custom_call.1} parent=5 // pred_region
      %s517 = ssub.s32 %s24, 1
      %p518 = pneg %p45
      %p519 = pneg %p42
      %p520 = scmp.lt.s32.totalorder %s29, 1
      %s521 = scalar_select %p520, %s29, 1
      %s522 = smul.addr %s521, 32
      %s523 = smul.addr %s522, 4
      %s524 = scalar_lea.vmem %s1, %s523
      %p525 = pneg %p71
      %p526 = pneg %p68
      %p527 = pneg %p92
      %p528 = pneg %p89
      %p529 = pneg %p113
      %p530 = pneg %p110
      %p531 = pneg %p134
      %p532 = pneg %p131
      %p533 = pneg %p155
      %p534 = pneg %p152
      %p535 = pneg %p176
      %p536 = pneg %p173
      %p537 = pneg %p197
      %p538 = pneg %p194
      %p539 = pneg %p218
      %p540 = pneg %p215
      %p541 = pneg %p239
      %p542 = pneg %p236
      %p543 = pneg %p260
      %p544 = pneg %p257
      %p545 = pneg %p281
      %p546 = pneg %p278
      %p547 = pneg %p302
      %p548 = pneg %p299
      %p549 = pneg %p323
      %p550 = pneg %p320
      %p551 = pneg %p344
      %p552 = pneg %p341
      %p553 = pneg %p365
      %p554 = pneg %p362
      %p555 = pneg %p386
      %p556 = pneg %p383
      %p557 = pneg %p407
      %p558 = pneg %p404
      %p559 = pneg %p433
      %p560 = pneg %p430
      %p561 = scmp.lt.s32.totalorder %s29, 1
      %s562 = scalar_select %p561, %s29, 1
      %s563 = smul.addr %s562, 32
      %s564 = smul.addr %s563, 8
      %s565 = scalar_lea.vmem %s18, %s564
      %p566 = scmp.lt.s32.totalorder %s29, 1
      %s567 = scalar_select %p566, %s29, 1
      %s568 = smul.addr %s567, 32
      %s569 = smul.addr %s568, 4
      %s570 = scalar_lea.vmem %s1, %s569
      %p571 = scmp.lt.s32.totalorder %s29, 1
      %s572 = scalar_select %p571, %s29, 1
      %s573 = smul.addr %s572, 32
      %s574 = smul.addr %s573, 8
      %s575 = scalar_lea.vmem %s18, %s574
      %vm577 = vcmask 523264
      %578 = vst.msk [vmem:[#allocation2] sm:$0xff] %vm577, 0.0
      %579 = vst.msk [vmem:[#allocation2 + $0x8] sm:$0xff] %vm577, 0.0
      %580 = vst.msk [vmem:[#allocation2 + $0x10] sm:$0xff] %vm577, 0.0
      %581 = vst.msk [vmem:[#allocation2 + $0x118] sm:$0xff] %vm577, 0.0
      %582 = vst.msk [vmem:[#allocation2 + $0x120] sm:$0xff] %vm577, 0.0
      %583 = vst.msk [vmem:[#allocation2 + $0x128] sm:$0xff] %vm577, 0.0
      %v584 = vld [vmem:[%s0] sm:$0xff]
      %v585 = vld [vmem:[%s0 + $0x8] sm:$0xff]
      %v586 = vld [vmem:[%s0 + $0x10] sm:$0xff]
      %v587 = vld [vmem:[%s0 + $0x18] sm:$0xff]
      %v588 = vld [vmem:[%s0 + $0x20] sm:$0xff]
      %v589 = vld [vmem:[%s0 + $0x28] sm:$0xff]
      %v590 = vld [vmem:[%s0 + $0x30] sm:$0xff]
      %v591 = vld [vmem:[%s0 + $0x38] sm:$0xff]
      %v592 = vld [vmem:[%s0 + $0x40] sm:$0xff]
      %v593 = vld [vmem:[%s0 + $0x48] sm:$0xff]
      %v594 = vld [vmem:[%s0 + $0x50] sm:$0xff]
      %v595 = vld [vmem:[%s0 + $0x58] sm:$0xff]
      %v596 = vld [vmem:[%s0 + $0x60] sm:$0xff]
      %v597 = vld [vmem:[%s0 + $0x68] sm:$0xff]
      %v598 = vld [vmem:[%s0 + $0x70] sm:$0xff]
      %v599 = vld [vmem:[%s0 + $0x78] sm:$0xff]
      %v600 = vld [vmem:[%s0 + $0x80] sm:$0xff]
      %v601 = vld [vmem:[%s0 + $0x88] sm:$0xff]
      %v602 = vld [vmem:[%s0 + $0x90] sm:$0xff]
      %v603 = vld [vmem:[%s0 + $0x98] sm:$0xff]
      %v604 = vld [vmem:[%s0 + $0xa0] sm:$0xff]
      %v605 = vld [vmem:[%s0 + $0xa8] sm:$0xff]
      %v606 = vld [vmem:[%s0 + $0xb0] sm:$0xff]
      %v607 = vld [vmem:[%s0 + $0xb8] sm:$0xff]
      %v608 = vld [vmem:[%s0 + $0xc0] sm:$0xff]
      %v609 = vld [vmem:[%s0 + $0xc8] sm:$0xff]
      %v610 = vld [vmem:[%s0 + $0xd0] sm:$0xff]
      %v611 = vld [vmem:[%s0 + $0xd8] sm:$0xff]
      %v612 = vld [vmem:[%s0 + $0xe0] sm:$0xff]
      %v613 = vld [vmem:[%s0 + $0xe8] sm:$0xff]
      %v614 = vld [vmem:[%s0 + $0xf0] sm:$0xff]
      %v615 = vld [vmem:[%s0 + $0xf8] sm:$0xff]
      %v616 = vld [vmem:[%s570] sm:$0xf]
      %v617 = vld [vmem:[%s570 + $0x4] sm:$0xf]
      %v618 = vld [vmem:[%s570 + $0x8] sm:$0xf]
      %v619 = vld [vmem:[%s570 + $0xc] sm:$0xf]
      %v620 = vld [vmem:[%s570 + $0x10] sm:$0xf]
      %v621 = vld [vmem:[%s570 + $0x14] sm:$0xf]
      %v622 = vld [vmem:[%s570 + $0x18] sm:$0xf]
      %v623 = vld [vmem:[%s570 + $0x1c] sm:$0xf]
      %v624 = vld [vmem:[%s570 + $0x20] sm:$0xf]
      %v625 = vld [vmem:[%s570 + $0x24] sm:$0xf]
      %v626 = vld [vmem:[%s570 + $0x28] sm:$0xf]
      %v627 = vld [vmem:[%s570 + $0x2c] sm:$0xf]
      %v628 = vld [vmem:[%s570 + $0x30] sm:$0xf]
      %v629 = vld [vmem:[%s570 + $0x34] sm:$0xf]
      %v630 = vld [vmem:[%s570 + $0x38] sm:$0xf]
      %v631 = vld [vmem:[%s570 + $0x3c] sm:$0xf]
      %v632 = vld [vmem:[%s570 + $0x40] sm:$0xf]
      %v633 = vld [vmem:[%s570 + $0x44] sm:$0xf]
      %v634 = vld [vmem:[%s570 + $0x48] sm:$0xf]
      %v635 = vld [vmem:[%s570 + $0x4c] sm:$0xf]
      %v636 = vld [vmem:[%s570 + $0x50] sm:$0xf]
      %v637 = vld [vmem:[%s570 + $0x54] sm:$0xf]
      %v638 = vld [vmem:[%s570 + $0x58] sm:$0xf]
      %v639 = vld [vmem:[%s570 + $0x5c] sm:$0xf]
      %v640 = vld [vmem:[%s570 + $0x60] sm:$0xf]
      %v641 = vld [vmem:[%s570 + $0x64] sm:$0xf]
      %v642 = vld [vmem:[%s570 + $0x68] sm:$0xf]
      %v643 = vld [vmem:[%s570 + $0x6c] sm:$0xf]
      %v644 = vld [vmem:[%s570 + $0x70] sm:$0xf]
      %v645 = vld [vmem:[%s570 + $0x74] sm:$0xf]
      %v646 = vld [vmem:[%s570 + $0x78] sm:$0xf]
      %v647 = vld [vmem:[%s570 + $0x7c] sm:$0xf]
      %v648 = vld [vmem:[%s2] sm:$0x3]
      %v649 = vld [vmem:[%s3] sm:$0x1]
      %v651 = vlaneseq
      %v652 = vshrl.u32 %v651, 7
      %v653 = vsub.s32 0, %v652
      %v654 = vrot.slane %v649, %v653
      %v688 = vunpack.c.l.b16 %v616
      %v689 = vunpack.c.l.b16 %v617
      %v690 = vunpack.c.l.b16 %v618
      %v691 = vunpack.c.l.b16 %v619
      %v692 = vunpack.c.l.b16 %v620
      %v693 = vunpack.c.l.b16 %v621
      %v694 = vunpack.c.l.b16 %v622
      %v695 = vunpack.c.l.b16 %v623
      %v696 = vunpack.c.l.b16 %v624
      %v697 = vunpack.c.l.b16 %v625
      %v698 = vunpack.c.l.b16 %v626
      %v699 = vunpack.c.l.b16 %v627
      %v700 = vunpack.c.l.b16 %v628
      %v701 = vunpack.c.l.b16 %v629
      %v702 = vunpack.c.l.b16 %v630
      %v703 = vunpack.c.l.b16 %v631
      %v704 = vunpack.c.l.b16 %v632
      %v705 = vunpack.c.l.b16 %v633
      %v706 = vunpack.c.l.b16 %v634
      %v707 = vunpack.c.l.b16 %v635
      %v708 = vunpack.c.l.b16 %v636
      %v709 = vunpack.c.l.b16 %v637
      %v710 = vunpack.c.l.b16 %v638
      %v711 = vunpack.c.l.b16 %v639
      %v712 = vunpack.c.l.b16 %v640
      %v713 = vunpack.c.l.b16 %v641
      %v714 = vunpack.c.l.b16 %v642
      %v715 = vunpack.c.l.b16 %v643
      %v716 = vunpack.c.l.b16 %v644
      %v717 = vunpack.c.l.b16 %v645
      %v718 = vunpack.c.l.b16 %v646
      %v719 = vunpack.c.l.b16 %v647
      %v720 = vpack.c.b16 %v689, %v688
      %v721 = vpack.c.b16 %v691, %v690
      %v722 = vpack.c.b16 %v693, %v692
      %v723 = vpack.c.b16 %v695, %v694
      %v724 = vpack.c.b16 %v697, %v696
      %v725 = vpack.c.b16 %v699, %v698
      %v726 = vpack.c.b16 %v701, %v700
      %v727 = vpack.c.b16 %v703, %v702
      %v728 = vpack.c.b16 %v705, %v704
      %v729 = vpack.c.b16 %v707, %v706
      %v730 = vpack.c.b16 %v709, %v708
      %v731 = vpack.c.b16 %v711, %v710
      %v732 = vpack.c.b16 %v713, %v712
      %v733 = vpack.c.b16 %v715, %v714
      %v734 = vpack.c.b16 %v717, %v716
      %v735 = vpack.c.b16 %v719, %v718
      %vm736 = vcmask 31744
      %v738 = vsel %vm736, %v720, 0
      %v741 = vsel %vm736, %v721, 0
      %v744 = vsel %vm736, %v722, 0
      %v747 = vsel %vm736, %v723, 0
      %v750 = vsel %vm736, %v724, 0
      %v753 = vsel %vm736, %v725, 0
      %v756 = vsel %vm736, %v726, 0
      %v759 = vsel %vm736, %v727, 0
      %v762 = vsel %vm736, %v728, 0
      %v765 = vsel %vm736, %v729, 0
      %v768 = vsel %vm736, %v730, 0
      %v771 = vsel %vm736, %v731, 0
      %v774 = vsel %vm736, %v732, 0
      %v777 = vsel %vm736, %v733, 0
      %v780 = vsel %vm736, %v734, 0
      %v783 = vsel %vm736, %v735, 0
      %vm785 = vcmask 1041408
      %v787 = vsel %vm785, %v648, 0
      %789 = vmatprep.subr.bf16.mxu0 0
      %790 = vmatpush1.bf16.msra.mxu0 %v787
      %791 = vmatprep.subr.bf16.mxu0 0
      %792 = vmatpush1.bf16.msra.mxu0 0
      %793 = vmatprep.subr.bf16.mxu0 0
      %794 = vmatpush1.bf16.msra.mxu0 0
      %795 = vmatprep.subr.bf16.mxu0 0
      %796 = vmatpush1.bf16.msra.mxu0 0
      %797 = vmatprep.subr.bf16.mxu0 0
      %798 = vmatpush1.bf16.msra.mxu0 0
      %799 = vmatprep.subr.bf16.mxu0 0
      %800 = vmatpush1.bf16.msra.mxu0 0
      %801 = vmatprep.subr.bf16.mxu0 0
      %802 = vmatpush1.bf16.msra.mxu0 0
      %803 = vmatprep.subr.bf16.mxu0 0
      %804 = vmatpush1.bf16.msra.mxu0 0
      %805 = vmatprep.subr.bf16.mxu0 0
      %806 = vmatpush1.bf16.msra.mxu0 0
      %807 = vmatprep.subr.bf16.mxu0 0
      %808 = vmatpush1.bf16.msra.mxu0 0
      %809 = vmatprep.subr.bf16.mxu0 0
      %810 = vmatpush1.bf16.msra.mxu0 0
      %811 = vmatprep.subr.bf16.mxu0 0
      %812 = vmatpush1.bf16.msra.mxu0 0
      %813 = vmatprep.subr.bf16.mxu0 0
      %814 = vmatpush1.bf16.msra.mxu0 0
      %815 = vmatprep.subr.bf16.mxu0 0
      %816 = vmatpush1.bf16.msra.mxu0 0
      %817 = vmatprep.subr.bf16.mxu0 0
      %818 = vmatpush1.bf16.msra.mxu0 0
      %819 = vmatprep.subr.bf16.mxu0 0
      %820 = vmatpush1.bf16.msra.mxu0 0
      %821 = vmatprep.mubr.bf16.mxu0 0
      %822 = vmatmul.mubr.bf16.gmra.mrb[0].mxu0 %v738
      %v823 = vpop.f32.mrb[0].mxu0
      %v824 = vadd.f32 %v654, %v823
      %v825 = vpop.f32.mrb[0].mxu0
      %v826 = vpop.f32.mrb[0].mxu0
      %v827 = vadd.f32 %v654, %v826
      %v828 = vpop.f32.mrb[0].mxu0
      %829 = vmatprep.mubr.bf16.mxu0 0
      %830 = vmatmul.mubr.bf16.gmra.mrb[0].mxu0 %v741
      %v831 = vpop.f32.mrb[0].mxu0
      %v832 = vadd.f32 %v654, %v831
      %v833 = vpop.f32.mrb[0].mxu0
      %v834 = vpop.f32.mrb[0].mxu0
      %v835 = vadd.f32 %v654, %v834
      %v836 = vpop.f32.mrb[0].mxu0
      %837 = vmatprep.mubr.bf16.mxu0 0
      %838 = vmatmul.mubr.bf16.gmra.mrb[0].mxu0 %v744
      %v839 = vpop.f32.mrb[0].mxu0
      %v840 = vadd.f32 %v654, %v839
      %v841 = vpop.f32.mrb[0].mxu0
      %v842 = vpop.f32.mrb[0].mxu0
      %v843 = vadd.f32 %v654, %v842
      %v844 = vpop.f32.mrb[0].mxu0
      %845 = vmatprep.mubr.bf16.mxu0 0
      %846 = vmatmul.mubr.bf16.gmra.mrb[0].mxu0 %v747
      %v847 = vpop.f32.mrb[0].mxu0
      %v848 = vadd.f32 %v654, %v847
      %v849 = vpop.f32.mrb[0].mxu0
      %v850 = vpop.f32.mrb[0].mxu0
      %v851 = vadd.f32 %v654, %v850
      %v852 = vpop.f32.mrb[0].mxu0
      %853 = vmatprep.mubr.bf16.mxu0 0
      %854 = vmatmul.mubr.bf16.gmra.mrb[0].mxu0 %v750
      %v855 = vpop.f32.mrb[0].mxu0
      %v856 = vadd.f32 %v654, %v855
      %v857 = vpop.f32.mrb[0].mxu0
      %v858 = vpop.f32.mrb[0].mxu0
      %v859 = vadd.f32 %v654, %v858
      %v860 = vpop.f32.mrb[0].mxu0
      %861 = vmatprep.mubr.bf16.mxu0 0
      %862 = vmatmul.mubr.bf16.gmra.mrb[0].mxu0 %v753
      %v863 = vpop.f32.mrb[0].mxu0
      %v864 = vadd.f32 %v654, %v863
      %v865 = vpop.f32.mrb[0].mxu0
      %v866 = vpop.f32.mrb[0].mxu0
      %v867 = vadd.f32 %v654, %v866
      %v868 = vpop.f32.mrb[0].mxu0
      %869 = vmatprep.mubr.bf16.mxu0 0
      %870 = vmatmul.mubr.bf16.gmra.mrb[0].mxu0 %v756
      %v871 = vpop.f32.mrb[0].mxu0
      %v872 = vadd.f32 %v654, %v871
      %v873 = vpop.f32.mrb[0].mxu0
      %v874 = vpop.f32.mrb[0].mxu0
      %v875 = vadd.f32 %v654, %v874
      %v876 = vpop.f32.mrb[0].mxu0
      %877 = vmatprep.mubr.bf16.mxu0 0
      %878 = vmatmul.mubr.bf16.gmra.mrb[0].mxu0 %v759
      %v879 = vpop.f32.mrb[0].mxu0
      %v880 = vadd.f32 %v654, %v879
      %v881 = vpop.f32.mrb[0].mxu0
      %v882 = vpop.f32.mrb[0].mxu0
      %v883 = vadd.f32 %v654, %v882
      %v884 = vpop.f32.mrb[0].mxu0
      %885 = vmatprep.mubr.bf16.mxu0 0
      %886 = vmatmul.mubr.bf16.gmra.mrb[0].mxu0 %v762
      %v887 = vpop.f32.mrb[0].mxu0
      %v888 = vadd.f32 %v654, %v887
      %v889 = vpop.f32.mrb[0].mxu0
      %v890 = vpop.f32.mrb[0].mxu0
      %v891 = vadd.f32 %v654, %v890
      %v892 = vpop.f32.mrb[0].mxu0
      %893 = vmatprep.mubr.bf16.mxu0 0
      %894 = vmatmul.mubr.bf16.gmra.mrb[0].mxu0 %v765
      %v895 = vpop.f32.mrb[0].mxu0
      %v896 = vadd.f32 %v654, %v895
      %v897 = vpop.f32.mrb[0].mxu0
      %v898 = vpop.f32.mrb[0].mxu0
      %v899 = vadd.f32 %v654, %v898
      %v900 = vpop.f32.mrb[0].mxu0
      %901 = vmatprep.mubr.bf16.mxu0 0
      %902 = vmatmul.mubr.bf16.gmra.mrb[0].mxu0 %v768
      %v903 = vpop.f32.mrb[0].mxu0
      %v904 = vadd.f32 %v654, %v903
      %v905 = vpop.f32.mrb[0].mxu0
      %v906 = vpop.f32.mrb[0].mxu0
      %v907 = vadd.f32 %v654, %v906
      %v908 = vpop.f32.mrb[0].mxu0
      %909 = vmatprep.mubr.bf16.mxu0 0
      %910 = vmatmul.mubr.bf16.gmra.mrb[0].mxu0 %v771
      %v911 = vpop.f32.mrb[0].mxu0
      %v912 = vadd.f32 %v654, %v911
      %v913 = vpop.f32.mrb[0].mxu0
      %v914 = vpop.f32.mrb[0].mxu0
      %v915 = vadd.f32 %v654, %v914
      %v916 = vpop.f32.mrb[0].mxu0
      %917 = vmatprep.mubr.bf16.mxu0 0
      %918 = vmatmul.mubr.bf16.gmra.mrb[0].mxu0 %v774
      %v919 = vpop.f32.mrb[0].mxu0
      %v920 = vadd.f32 %v654, %v919
      %v921 = vpop.f32.mrb[0].mxu0
      %v922 = vpop.f32.mrb[0].mxu0
      %v923 = vadd.f32 %v654, %v922
      %v924 = vpop.f32.mrb[0].mxu0
      %925 = vmatprep.mubr.bf16.mxu0 0
      %926 = vmatmul.mubr.bf16.gmra.mrb[0].mxu0 %v777
      %v927 = vpop.f32.mrb[0].mxu0
      %v928 = vadd.f32 %v654, %v927
      %v929 = vpop.f32.mrb[0].mxu0
      %v930 = vpop.f32.mrb[0].mxu0
      %v931 = vadd.f32 %v654, %v930
      %v932 = vpop.f32.mrb[0].mxu0
      %933 = vmatprep.mubr.bf16.mxu0 0
      %934 = vmatmul.mubr.bf16.gmra.mrb[0].mxu0 %v780
      %v935 = vpop.f32.mrb[0].mxu0
      %v936 = vadd.f32 %v654, %v935
      %v937 = vpop.f32.mrb[0].mxu0
      %v938 = vpop.f32.mrb[0].mxu0
      %v939 = vadd.f32 %v654, %v938
      %v940 = vpop.f32.mrb[0].mxu0
      %941 = vmatprep.mubr.bf16.mxu0 0
      %942 = vmatmul.mubr.bf16.gmra.mrb[0].mxu0 %v783
      %v943 = vpop.f32.mrb[0].mxu0
      %v944 = vadd.f32 %v654, %v943
      %v945 = vpop.f32.mrb[0].mxu0
      %v946 = vpop.f32.mrb[0].mxu0
      %v947 = vadd.f32 %v654, %v946
      %v948 = vpop.f32.mrb[0].mxu0
      %949 = vdwg.mxu0
      %vm950 = vcmask 64512
      %951 = vst.msk [vmem:[#allocation2 + $0x18] sm:$0xff] %vm950, %v824
      %952 = vst.msk [vmem:[#allocation2 + $0x20] sm:$0xff] %vm950, %v827
      %953 = vst.msk [vmem:[#allocation2 + $0x28] sm:$0xff] %vm950, %v832
      %954 = vst.msk [vmem:[#allocation2 + $0x30] sm:$0xff] %vm950, %v835
      %955 = vst.msk [vmem:[#allocation2 + $0x38] sm:$0xff] %vm950, %v840
      %956 = vst.msk [vmem:[#allocation2 + $0x40] sm:$0xff] %vm950, %v843
      %957 = vst.msk [vmem:[#allocation2 + $0x48] sm:$0xff] %vm950, %v848
      %958 = vst.msk [vmem:[#allocation2 + $0x50] sm:$0xff] %vm950, %v851
      %959 = vst.msk [vmem:[#allocation2 + $0x58] sm:$0xff] %vm950, %v856
      %960 = vst.msk [vmem:[#allocation2 + $0x60] sm:$0xff] %vm950, %v859
      %961 = vst.msk [vmem:[#allocation2 + $0x68] sm:$0xff] %vm950, %v864
      %962 = vst.msk [vmem:[#allocation2 + $0x70] sm:$0xff] %vm950, %v867
      %963 = vst.msk [vmem:[#allocation2 + $0x78] sm:$0xff] %vm950, %v872
      %964 = vst.msk [vmem:[#allocation2 + $0x80] sm:$0xff] %vm950, %v875
      %965 = vst.msk [vmem:[#allocation2 + $0x88] sm:$0xff] %vm950, %v880
      %966 = vst.msk [vmem:[#allocation2 + $0x90] sm:$0xff] %vm950, %v883
      %967 = vst.msk [vmem:[#allocation2 + $0x98] sm:$0xff] %vm950, %v888
      %968 = vst.msk [vmem:[#allocation2 + $0xa0] sm:$0xff] %vm950, %v891
      %969 = vst.msk [vmem:[#allocation2 + $0xa8] sm:$0xff] %vm950, %v896
      %970 = vst.msk [vmem:[#allocation2 + $0xb0] sm:$0xff] %vm950, %v899
      %971 = vst.msk [vmem:[#allocation2 + $0xb8] sm:$0xff] %vm950, %v904
      %972 = vst.msk [vmem:[#allocation2 + $0xc0] sm:$0xff] %vm950, %v907
      %973 = vst.msk [vmem:[#allocation2 + $0xc8] sm:$0xff] %vm950, %v912
      %974 = vst.msk [vmem:[#allocation2 + $0xd0] sm:$0xff] %vm950, %v915
      %975 = vst.msk [vmem:[#allocation2 + $0xd8] sm:$0xff] %vm950, %v920
      %976 = vst.msk [vmem:[#allocation2 + $0xe0] sm:$0xff] %vm950, %v923
      %977 = vst.msk [vmem:[#allocation2 + $0xe8] sm:$0xff] %vm950, %v928
      %978 = vst.msk [vmem:[#allocation2 + $0xf0] sm:$0xff] %vm950, %v931
      %979 = vst.msk [vmem:[#allocation2 + $0xf8] sm:$0xff] %vm950, %v936
      %980 = vst.msk [vmem:[#allocation2 + $0x100] sm:$0xff] %vm950, %v939
      %981 = vst.msk [vmem:[#allocation2 + $0x108] sm:$0xff] %vm950, %v944
      %982 = vst.msk [vmem:[#allocation2 + $0x110] sm:$0xff] %vm950, %v947
      %v983 = vld [vmem:[#allocation2 + $0x7] sm:$0xff]
      %v984 = vld [vmem:[#allocation2 + $0xf] sm:$0xff]
      %v985 = vld [vmem:[#allocation2 + $0x17] sm:$0xff]
      %v986 = vld [vmem:[#allocation2 + $0x1f] sm:$0xff]
      %v987 = vld [vmem:[#allocation2 + $0x27] sm:$0xff]
      %v988 = vld [vmem:[#allocation2 + $0x2f] sm:$0xff]
      %v989 = vld [vmem:[#allocation2 + $0x37] sm:$0xff]
      %v990 = vld [vmem:[#allocation2 + $0x3f] sm:$0xff]
      %v991 = vld [vmem:[#allocation2 + $0x47] sm:$0xff]
      %v992 = vld [vmem:[#allocation2 + $0x4f] sm:$0xff]
      %v993 = vld [vmem:[#allocation2 + $0x57] sm:$0xff]
      %v994 = vld [vmem:[#allocation2 + $0x5f] sm:$0xff]
      %v995 = vld [vmem:[#allocation2 + $0x67] sm:$0xff]
      %v996 = vld [vmem:[#allocation2 + $0x6f] sm:$0xff]
      %v997 = vld [vmem:[#allocation2 + $0x77] sm:$0xff]
      %v998 = vld [vmem:[#allocation2 + $0x7f] sm:$0xff]
      %v999 = vld [vmem:[#allocation2 + $0x87] sm:$0xff]
      %v1000 = vld [vmem:[#allocation2 + $0x8f] sm:$0xff]
      %v1001 = vld [vmem:[#allocation2 + $0x97] sm:$0xff]
      %v1002 = vld [vmem:[#allocation2 + $0x9f] sm:$0xff]
      %v1003 = vld [vmem:[#allocation2 + $0xa7] sm:$0xff]
      %v1004 = vld [vmem:[#allocation2 + $0xaf] sm:$0xff]
      %v1005 = vld [vmem:[#allocation2 + $0xb7] sm:$0xff]
      %v1006 = vld [vmem:[#allocation2 + $0xbf] sm:$0xff]
      %v1007 = vld [vmem:[#allocation2 + $0xc7] sm:$0xff]
      %v1008 = vld [vmem:[#allocation2 + $0xcf] sm:$0xff]
      %v1009 = vld [vmem:[#allocation2 + $0xd7] sm:$0xff]
      %v1010 = vld [vmem:[#allocation2 + $0xdf] sm:$0xff]
      %v1011 = vld [vmem:[#allocation2 + $0xe7] sm:$0xff]
      %v1012 = vld [vmem:[#allocation2 + $0xef] sm:$0xff]
      %v1013 = vld [vmem:[#allocation2 + $0xf7] sm:$0xff]
      %v1014 = vld [vmem:[#allocation2 + $0xff] sm:$0xff]
      %1016 = vset.pattern.permute.xlu0 0
      %1017 = vperm.xlu0 %1016, %v584
      %v1018 = vpop.permute.xlu0 %1017
      %1021 = vset.pattern.permute.xlu0 0
      %1022 = vperm.xlu0 %1021, %v585
      %v1023 = vpop.permute.xlu0 %1022
      %1026 = vset.pattern.permute.xlu0 0
      %1027 = vperm.xlu0 %1026, %v586
      %v1028 = vpop.permute.xlu0 %1027
      %1031 = vset.pattern.permute.xlu0 0
      %1032 = vperm.xlu0 %1031, %v587
      %v1033 = vpop.permute.xlu0 %1032
      %1036 = vset.pattern.permute.xlu0 0
      %1037 = vperm.xlu0 %1036, %v588
      %v1038 = vpop.permute.xlu0 %1037
      %1041 = vset.pattern.permute.xlu0 0
      %1042 = vperm.xlu0 %1041, %v589
      %v1043 = vpop.permute.xlu0 %1042
      %1046 = vset.pattern.permute.xlu0 0
      %1047 = vperm.xlu0 %1046, %v590
      %v1048 = vpop.permute.xlu0 %1047
      %1051 = vset.pattern.permute.xlu0 0
      %1052 = vperm.xlu0 %1051, %v591
      %v1053 = vpop.permute.xlu0 %1052
      %1056 = vset.pattern.permute.xlu0 0
      %1057 = vperm.xlu0 %1056, %v592
      %v1058 = vpop.permute.xlu0 %1057
      %1061 = vset.pattern.permute.xlu0 0
      %1062 = vperm.xlu0 %1061, %v593
      %v1063 = vpop.permute.xlu0 %1062
      %1066 = vset.pattern.permute.xlu0 0
      %1067 = vperm.xlu0 %1066, %v594
      %v1068 = vpop.permute.xlu0 %1067
      %1071 = vset.pattern.permute.xlu0 0
      %1072 = vperm.xlu0 %1071, %v595
      %v1073 = vpop.permute.xlu0 %1072
      %1076 = vset.pattern.permute.xlu0 0
      %1077 = vperm.xlu0 %1076, %v596
      %v1078 = vpop.permute.xlu0 %1077
      %1081 = vset.pattern.permute.xlu0 0
      %1082 = vperm.xlu0 %1081, %v597
      %v1083 = vpop.permute.xlu0 %1082
      %1086 = vset.pattern.permute.xlu0 0
      %1087 = vperm.xlu0 %1086, %v598
      %v1088 = vpop.permute.xlu0 %1087
      %1091 = vset.pattern.permute.xlu0 0
      %1092 = vperm.xlu0 %1091, %v599
      %v1093 = vpop.permute.xlu0 %1092
      %1096 = vset.pattern.permute.xlu0 0
      %1097 = vperm.xlu0 %1096, %v600
      %v1098 = vpop.permute.xlu0 %1097
      %1101 = vset.pattern.permute.xlu0 0
      %1102 = vperm.xlu0 %1101, %v601
      %v1103 = vpop.permute.xlu0 %1102
      %1106 = vset.pattern.permute.xlu0 0
      %1107 = vperm.xlu0 %1106, %v602
      %v1108 = vpop.permute.xlu0 %1107
      %1111 = vset.pattern.permute.xlu0 0
      %1112 = vperm.xlu0 %1111, %v603
      %v1113 = vpop.permute.xlu0 %1112
      %1116 = vset.pattern.permute.xlu0 0
      %1117 = vperm.xlu0 %1116, %v604
      %v1118 = vpop.permute.xlu0 %1117
      %1121 = vset.pattern.permute.xlu0 0
      %1122 = vperm.xlu0 %1121, %v605
      %v1123 = vpop.permute.xlu0 %1122
      %1126 = vset.pattern.permute.xlu0 0
      %1127 = vperm.xlu0 %1126, %v606
      %v1128 = vpop.permute.xlu0 %1127
      %1131 = vset.pattern.permute.xlu0 0
      %1132 = vperm.xlu0 %1131, %v607
      %v1133 = vpop.permute.xlu0 %1132
      %1136 = vset.pattern.permute.xlu0 0
      %1137 = vperm.xlu0 %1136, %v608
      %v1138 = vpop.permute.xlu0 %1137
      %1141 = vset.pattern.permute.xlu0 0
      %1142 = vperm.xlu0 %1141, %v609
      %v1143 = vpop.permute.xlu0 %1142
      %1146 = vset.pattern.permute.xlu0 0
      %1147 = vperm.xlu0 %1146, %v610
      %v1148 = vpop.permute.xlu0 %1147
      %1151 = vset.pattern.permute.xlu0 0
      %1152 = vperm.xlu0 %1151, %v611
      %v1153 = vpop.permute.xlu0 %1152
      %1156 = vset.pattern.permute.xlu0 0
      %1157 = vperm.xlu0 %1156, %v612
      %v1158 = vpop.permute.xlu0 %1157
      %1161 = vset.pattern.permute.xlu0 0
      %1162 = vperm.xlu0 %1161, %v613
      %v1163 = vpop.permute.xlu0 %1162
      %1166 = vset.pattern.permute.xlu0 0
      %1167 = vperm.xlu0 %1166, %v614
      %v1168 = vpop.permute.xlu0 %1167
      %1171 = vset.pattern.permute.xlu0 0
      %1172 = vperm.xlu0 %1171, %v615
      %v1173 = vpop.permute.xlu0 %1172
      %v1175 = vmul.f32 %v983, %v1018
      %v1176 = vmul.f32 %v984, %v1023
      %v1177 = vmul.f32 %v985, %v1028
      %v1178 = vmul.f32 %v986, %v1033
      %v1179 = vmul.f32 %v987, %v1038
      %v1180 = vmul.f32 %v988, %v1043
      %v1181 = vmul.f32 %v989, %v1048
      %v1182 = vmul.f32 %v990, %v1053
      %v1183 = vmul.f32 %v991, %v1058
      %v1184 = vmul.f32 %v992, %v1063
      %v1185 = vmul.f32 %v993, %v1068
      %v1186 = vmul.f32 %v994, %v1073
      %v1187 = vmul.f32 %v995, %v1078
      %v1188 = vmul.f32 %v996, %v1083
      %v1189 = vmul.f32 %v997, %v1088
      %v1190 = vmul.f32 %v998, %v1093
      %v1191 = vmul.f32 %v999, %v1098
      %v1192 = vmul.f32 %v1000, %v1103
      %v1193 = vmul.f32 %v1001, %v1108
      %v1194 = vmul.f32 %v1002, %v1113
      %v1195 = vmul.f32 %v1003, %v1118
      %v1196 = vmul.f32 %v1004, %v1123
      %v1197 = vmul.f32 %v1005, %v1128
      %v1198 = vmul.f32 %v1006, %v1133
      %v1199 = vmul.f32 %v1007, %v1138
      %v1200 = vmul.f32 %v1008, %v1143
      %v1201 = vmul.f32 %v1009, %v1148
      %v1202 = vmul.f32 %v1010, %v1153
      %v1203 = vmul.f32 %v1011, %v1158
      %v1204 = vmul.f32 %v1012, %v1163
      %v1205 = vmul.f32 %v1013, %v1168
      %v1206 = vmul.f32 %v1014, %v1173
      %v1207 = vpack.c.bf16 %v1176, %v1175
      %v1208 = vpack.c.bf16 %v1178, %v1177
      %v1209 = vpack.c.bf16 %v1180, %v1179
      %v1210 = vpack.c.bf16 %v1182, %v1181
      %v1211 = vpack.c.bf16 %v1184, %v1183
      %v1212 = vpack.c.bf16 %v1186, %v1185
      %v1213 = vpack.c.bf16 %v1188, %v1187
      %v1214 = vpack.c.bf16 %v1190, %v1189
      %v1215 = vpack.c.bf16 %v1192, %v1191
      %v1216 = vpack.c.bf16 %v1194, %v1193
      %v1217 = vpack.c.bf16 %v1196, %v1195
      %v1218 = vpack.c.bf16 %v1198, %v1197
      %v1219 = vpack.c.bf16 %v1200, %v1199
      %v1220 = vpack.c.bf16 %v1202, %v1201
      %v1221 = vpack.c.bf16 %v1204, %v1203
      %v1222 = vpack.c.bf16 %v1206, %v1205
      %v1223 = vld [vmem:[%s4] sm:$0xf]
      %v1224 = vld [vmem:[#allocation2 + $0x8] sm:$0xff]
      %v1225 = vld [vmem:[#allocation2 + $0x10] sm:$0xff]
      %v1226 = vld [vmem:[#allocation2 + $0x18] sm:$0xff]
      %v1227 = vld [vmem:[#allocation2 + $0x20] sm:$0xff]
      %v1228 = vld [vmem:[#allocation2 + $0x28] sm:$0xff]
      %v1229 = vld [vmem:[#allocation2 + $0x30] sm:$0xff]
      %v1230 = vld [vmem:[#allocation2 + $0x38] sm:$0xff]
      %v1231 = vld [vmem:[#allocation2 + $0x40] sm:$0xff]
      %v1232 = vld [vmem:[#allocation2 + $0x48] sm:$0xff]
      %v1233 = vld [vmem:[#allocation2 + $0x50] sm:$0xff]
      %v1234 = vld [vmem:[#allocation2 + $0x58] sm:$0xff]
      %v1235 = vld [vmem:[#allocation2 + $0x60] sm:$0xff]
      %v1236 = vld [vmem:[#allocation2 + $0x68] sm:$0xff]
      %v1237 = vld [vmem:[#allocation2 + $0x70] sm:$0xff]
      %v1238 = vld [vmem:[#allocation2 + $0x78] sm:$0xff]
      %v1239 = vld [vmem:[#allocation2 + $0x80] sm:$0xff]
      %v1240 = vld [vmem:[#allocation2 + $0x88] sm:$0xff]
      %v1241 = vld [vmem:[#allocation2 + $0x90] sm:$0xff]
      %v1242 = vld [vmem:[#allocation2 + $0x98] sm:$0xff]
      %v1243 = vld [vmem:[#allocation2 + $0xa0] sm:$0xff]
      %v1244 = vld [vmem:[#allocation2 + $0xa8] sm:$0xff]
      %v1245 = vld [vmem:[#allocation2 + $0xb0] sm:$0xff]
      %v1246 = vld [vmem:[#allocation2 + $0xb8] sm:$0xff]
      %v1247 = vld [vmem:[#allocation2 + $0xc0] sm:$0xff]
      %v1248 = vld [vmem:[#allocation2 + $0xc8] sm:$0xff]
      %v1249 = vld [vmem:[#allocation2 + $0xd0] sm:$0xff]
      %v1250 = vld [vmem:[#allocation2 + $0xd8] sm:$0xff]
      %v1251 = vld [vmem:[#allocation2 + $0xe0] sm:$0xff]
      %v1252 = vld [vmem:[#allocation2 + $0xe8] sm:$0xff]
      %v1253 = vld [vmem:[#allocation2 + $0xf0] sm:$0xff]
      %v1254 = vld [vmem:[#allocation2 + $0xf8] sm:$0xff]
      %v1255 = vld [vmem:[#allocation2 + $0x100] sm:$0xff]
      %v1256 = vpack.c.bf16 %v1225, %v1224
      %v1257 = vpack.c.bf16 %v1227, %v1226
      %v1258 = vpack.c.bf16 %v1229, %v1228
      %v1259 = vpack.c.bf16 %v1231, %v1230
      %v1260 = vpack.c.bf16 %v1233, %v1232
      %v1261 = vpack.c.bf16 %v1235, %v1234
      %v1262 = vpack.c.bf16 %v1237, %v1236
      %v1263 = vpack.c.bf16 %v1239, %v1238
      %v1264 = vpack.c.bf16 %v1241, %v1240
      %v1265 = vpack.c.bf16 %v1243, %v1242
      %v1266 = vpack.c.bf16 %v1245, %v1244
      %v1267 = vpack.c.bf16 %v1247, %v1246
      %v1268 = vpack.c.bf16 %v1249, %v1248
      %v1269 = vpack.c.bf16 %v1251, %v1250
      %v1270 = vpack.c.bf16 %v1253, %v1252
      %v1271 = vpack.c.bf16 %v1255, %v1254
      %s1272 = scalar_lea.vmem %s4, 4
      %v1273 = vld [vmem:[%s1272] sm:$0xf]
      %v1275 = vsel %vm950, %v1256, 0
      %v1278 = vsel %vm950, %v1257, 0
      %v1281 = vsel %vm950, %v1258, 0
      %v1284 = vsel %vm950, %v1259, 0
      %v1287 = vsel %vm950, %v1260, 0
      %v1290 = vsel %vm950, %v1261, 0
      %v1293 = vsel %vm950, %v1262, 0
      %v1296 = vsel %vm950, %v1263, 0
      %v1299 = vsel %vm950, %v1264, 0
      %v1302 = vsel %vm950, %v1265, 0
      %v1305 = vsel %vm950, %v1266, 0
      %v1308 = vsel %vm950, %v1267, 0
      %v1311 = vsel %vm950, %v1268, 0
      %v1314 = vsel %vm950, %v1269, 0
      %v1317 = vsel %vm950, %v1270, 0
      %v1320 = vsel %vm950, %v1271, 0
      %vm1322 = vcmask 1043456
      %v1324 = vsel %vm1322, %v1273, 0
      %1326 = vmatprep.subr.bf16.mxu0 0
      %1327 = vmatpush1.bf16.msra.mxu0 %v1324
      %1328 = vmatprep.subr.bf16.mxu0 0
      %1329 = vmatpush1.bf16.msra.mxu0 0
      %1330 = vmatprep.subr.bf16.mxu0 0
      %1331 = vmatpush1.bf16.msra.mxu0 0
      %1332 = vmatprep.subr.bf16.mxu0 0
      %1333 = vmatpush1.bf16.msra.mxu0 0
      %1334 = vmatprep.subr.bf16.mxu0 0
      %1335 = vmatpush1.bf16.msra.mxu0 0
      %1336 = vmatprep.subr.bf16.mxu0 0
      %1337 = vmatpush1.bf16.msra.mxu0 0
      %1338 = vmatprep.subr.bf16.mxu0 0
      %1339 = vmatpush1.bf16.msra.mxu0 0
      %1340 = vmatprep.subr.bf16.mxu0 0
      %1341 = vmatpush1.bf16.msra.mxu0 0
      %1342 = vmatprep.subr.bf16.mxu0 0
      %1343 = vmatpush1.bf16.msra.mxu0 0
      %1344 = vmatprep.subr.bf16.mxu0 0
      %1345 = vmatpush1.bf16.msra.mxu0 0
      %1346 = vmatprep.subr.bf16.mxu0 0
      %1347 = vmatpush1.bf16.msra.mxu0 0
      %1348 = vmatprep.subr.bf16.mxu0 0
      %1349 = vmatpush1.bf16.msra.mxu0 0
      %1350 = vmatprep.subr.bf16.mxu0 0
      %1351 = vmatpush1.bf16.msra.mxu0 0
      %1352 = vmatprep.subr.bf16.mxu0 0
      %1353 = vmatpush1.bf16.msra.mxu0 0
      %1354 = vmatprep.subr.bf16.mxu0 0
      %1355 = vmatpush1.bf16.msra.mxu0 0
      %1356 = vmatprep.subr.bf16.mxu0 0
      %1357 = vmatpush1.bf16.msra.mxu0 0
      %1358 = vmatprep.mubr.bf16.mxu0 0
      %1359 = vmatmul.mubr.bf16.gmra.mrb[0].mxu0 %v1275
      %v1360 = vpop.f32.mrb[0].mxu0
      %v1361 = vadd.f32 0.0, %v1360
      %v1362 = vpop.f32.mrb[0].mxu0
      %v1363 = vpop.f32.mrb[0].mxu0
      %v1364 = vadd.f32 0.0, %v1363
      %v1365 = vpop.f32.mrb[0].mxu0
      %1366 = vmatprep.mubr.bf16.mxu0 0
      %1367 = vmatmul.mubr.bf16.gmra.mrb[0].mxu0 %v1278
      %v1368 = vpop.f32.mrb[0].mxu0
      %v1369 = vadd.f32 0.0, %v1368
      %v1370 = vpop.f32.mrb[0].mxu0
      %v1371 = vpop.f32.mrb[0].mxu0
      %v1372 = vadd.f32 0.0, %v1371
      %v1373 = vpop.f32.mrb[0].mxu0
      %1374 = vmatprep.mubr.bf16.mxu0 0
      %1375 = vmatmul.mubr.bf16.gmra.mrb[0].mxu0 %v1281
      %v1376 = vpop.f32.mrb[0].mxu0
      %v1377 = vadd.f32 0.0, %v1376
      %v1378 = vpop.f32.mrb[0].mxu0
      %v1379 = vpop.f32.mrb[0].mxu0
      %v1380 = vadd.f32 0.0, %v1379
      %v1381 = vpop.f32.mrb[0].mxu0
      %1382 = vmatprep.mubr.bf16.mxu0 0
      %1383 = vmatmul.mubr.bf16.gmra.mrb[0].mxu0 %v1284
      %v1384 = vpop.f32.mrb[0].mxu0
      %v1385 = vadd.f32 0.0, %v1384
      %v1386 = vpop.f32.mrb[0].mxu0
      %v1387 = vpop.f32.mrb[0].mxu0
      %v1388 = vadd.f32 0.0, %v1387
      %v1389 = vpop.f32.mrb[0].mxu0
      %1390 = vmatprep.mubr.bf16.mxu0 0
      %1391 = vmatmul.mubr.bf16.gmra.mrb[0].mxu0 %v1287
      %v1392 = vpop.f32.mrb[0].mxu0
      %v1393 = vadd.f32 0.0, %v1392
      %v1394 = vpop.f32.mrb[0].mxu0
      %v1395 = vpop.f32.mrb[0].mxu0
      %v1396 = vadd.f32 0.0, %v1395
      %v1397 = vpop.f32.mrb[0].mxu0
      %1398 = vmatprep.mubr.bf16.mxu0 0
      %1399 = vmatmul.mubr.bf16.gmra.mrb[0].mxu0 %v1290
      %v1400 = vpop.f32.mrb[0].mxu0
      %v1401 = vadd.f32 0.0, %v1400
      %v1402 = vpop.f32.mrb[0].mxu0
      %v1403 = vpop.f32.mrb[0].mxu0
      %v1404 = vadd.f32 0.0, %v1403
      %v1405 = vpop.f32.mrb[0].mxu0
      %1406 = vmatprep.mubr.bf16.mxu0 0
      %1407 = vmatmul.mubr.bf16.gmra.mrb[0].mxu0 %v1293
      %v1408 = vpop.f32.mrb[0].mxu0
      %v1409 = vadd.f32 0.0, %v1408
      %v1410 = vpop.f32.mrb[0].mxu0
      %v1411 = vpop.f32.mrb[0].mxu0
      %v1412 = vadd.f32 0.0, %v1411
      %v1413 = vpop.f32.mrb[0].mxu0
      %1414 = vmatprep.mubr.bf16.mxu0 0
      %1415 = vmatmul.mubr.bf16.gmra.mrb[0].mxu0 %v1296
      %v1416 = vpop.f32.mrb[0].mxu0
      %v1417 = vadd.f32 0.0, %v1416
      %v1418 = vpop.f32.mrb[0].mxu0
      %v1419 = vpop.f32.mrb[0].mxu0
      %v1420 = vadd.f32 0.0, %v1419
      %v1421 = vpop.f32.mrb[0].mxu0
      %1422 = vmatprep.mubr.bf16.mxu0 0
      %1423 = vmatmul.mubr.bf16.gmra.mrb[0].mxu0 %v1299
      %v1424 = vpop.f32.mrb[0].mxu0
      %v1425 = vadd.f32 0.0, %v1424
      %v1426 = vpop.f32.mrb[0].mxu0
      %v1427 = vpop.f32.mrb[0].mxu0
      %v1428 = vadd.f32 0.0, %v1427
      %v1429 = vpop.f32.mrb[0].mxu0
      %1430 = vmatprep.mubr.bf16.mxu0 0
      %1431 = vmatmul.mubr.bf16.gmra.mrb[0].mxu0 %v1302
      %v1432 = vpop.f32.mrb[0].mxu0
      %v1433 = vadd.f32 0.0, %v1432
      %v1434 = vpop.f32.mrb[0].mxu0
      %v1435 = vpop.f32.mrb[0].mxu0
      %v1436 = vadd.f32 0.0, %v1435
      %v1437 = vpop.f32.mrb[0].mxu0
      %1438 = vmatprep.mubr.bf16.mxu0 0
      %1439 = vmatmul.mubr.bf16.gmra.mrb[0].mxu0 %v1305
      %v1440 = vpop.f32.mrb[0].mxu0
      %v1441 = vadd.f32 0.0, %v1440
      %v1442 = vpop.f32.mrb[0].mxu0
      %v1443 = vpop.f32.mrb[0].mxu0
      %v1444 = vadd.f32 0.0, %v1443
      %v1445 = vpop.f32.mrb[0].mxu0
      %1446 = vmatprep.mubr.bf16.mxu0 0
      %1447 = vmatmul.mubr.bf16.gmra.mrb[0].mxu0 %v1308
      %v1448 = vpop.f32.mrb[0].mxu0
      %v1449 = vadd.f32 0.0, %v1448
      %v1450 = vpop.f32.mrb[0].mxu0
      %v1451 = vpop.f32.mrb[0].mxu0
      %v1452 = vadd.f32 0.0, %v1451
      %v1453 = vpop.f32.mrb[0].mxu0
      %1454 = vmatprep.mubr.bf16.mxu0 0
      %1455 = vmatmul.mubr.bf16.gmra.mrb[0].mxu0 %v1311
      %v1456 = vpop.f32.mrb[0].mxu0
      %v1457 = vadd.f32 0.0, %v1456
      %v1458 = vpop.f32.mrb[0].mxu0
      %v1459 = vpop.f32.mrb[0].mxu0
      %v1460 = vadd.f32 0.0, %v1459
      %v1461 = vpop.f32.mrb[0].mxu0
      %1462 = vmatprep.mubr.bf16.mxu0 0
      %1463 = vmatmul.mubr.bf16.gmra.mrb[0].mxu0 %v1314
      %v1464 = vpop.f32.mrb[0].mxu0
      %v1465 = vadd.f32 0.0, %v1464
      %v1466 = vpop.f32.mrb[0].mxu0
      %v1467 = vpop.f32.mrb[0].mxu0
      %v1468 = vadd.f32 0.0, %v1467
      %v1469 = vpop.f32.mrb[0].mxu0
      %1470 = vmatprep.mubr.bf16.mxu0 0
      %1471 = vmatmul.mubr.bf16.gmra.mrb[0].mxu0 %v1317
      %v1472 = vpop.f32.mrb[0].mxu0
      %v1473 = vadd.f32 0.0, %v1472
      %v1474 = vpop.f32.mrb[0].mxu0
      %v1475 = vpop.f32.mrb[0].mxu0
      %v1476 = vadd.f32 0.0, %v1475
      %v1477 = vpop.f32.mrb[0].mxu0
      %1478 = vmatprep.mubr.bf16.mxu0 0
      %1479 = vmatmul.mubr.bf16.gmra.mrb[0].mxu0 %v1320
      %v1480 = vpop.f32.mrb[0].mxu0
      %v1481 = vadd.f32 0.0, %v1480
      %v1482 = vpop.f32.mrb[0].mxu0
      %v1483 = vpop.f32.mrb[0].mxu0
      %v1484 = vadd.f32 0.0, %v1483
      %v1485 = vpop.f32.mrb[0].mxu0
      %1486 = vdwg.mxu0
      %v1488 = vsel %vm950, %v1207, 0
      %v1491 = vsel %vm950, %v1208, 0
      %v1494 = vsel %vm950, %v1209, 0
      %v1497 = vsel %vm950, %v1210, 0
      %v1500 = vsel %vm950, %v1211, 0
      %v1503 = vsel %vm950, %v1212, 0
      %v1506 = vsel %vm950, %v1213, 0
      %v1509 = vsel %vm950, %v1214, 0
      %v1512 = vsel %vm950, %v1215, 0
      %v1515 = vsel %vm950, %v1216, 0
      %v1518 = vsel %vm950, %v1217, 0
      %v1521 = vsel %vm950, %v1218, 0
      %v1524 = vsel %vm950, %v1219, 0
      %v1527 = vsel %vm950, %v1220, 0
      %v1530 = vsel %vm950, %v1221, 0
      %v1533 = vsel %vm950, %v1222, 0
      %v1536 = vsel %vm1322, %v1223, 0
      %1538 = vmatprep.subr.bf16.mxu0 0
      %1539 = vmatpush1.bf16.msra.mxu0 %v1536
      %1540 = vmatprep.subr.bf16.mxu0 0
      %1541 = vmatpush1.bf16.msra.mxu0 0
      %1542 = vmatprep.subr.bf16.mxu0 0
      %1543 = vmatpush1.bf16.msra.mxu0 0
      %1544 = vmatprep.subr.bf16.mxu0 0
      %1545 = vmatpush1.bf16.msra.mxu0 0
      %1546 = vmatprep.subr.bf16.mxu0 0
      %1547 = vmatpush1.bf16.msra.mxu0 0
      %1548 = vmatprep.subr.bf16.mxu0 0
      %1549 = vmatpush1.bf16.msra.mxu0 0
      %1550 = vmatprep.subr.bf16.mxu0 0
      %1551 = vmatpush1.bf16.msra.mxu0 0
      %1552 = vmatprep.subr.bf16.mxu0 0
      %1553 = vmatpush1.bf16.msra.mxu0 0
      %1554 = vmatprep.subr.bf16.mxu0 0
      %1555 = vmatpush1.bf16.msra.mxu0 0
      %1556 = vmatprep.subr.bf16.mxu0 0
      %1557 = vmatpush1.bf16.msra.mxu0 0
      %1558 = vmatprep.subr.bf16.mxu0 0
      %1559 = vmatpush1.bf16.msra.mxu0 0
      %1560 = vmatprep.subr.bf16.mxu0 0
      %1561 = vmatpush1.bf16.msra.mxu0 0
      %1562 = vmatprep.subr.bf16.mxu0 0
      %1563 = vmatpush1.bf16.msra.mxu0 0
      %1564 = vmatprep.subr.bf16.mxu0 0
      %1565 = vmatpush1.bf16.msra.mxu0 0
      %1566 = vmatprep.subr.bf16.mxu0 0
      %1567 = vmatpush1.bf16.msra.mxu0 0
      %1568 = vmatprep.subr.bf16.mxu0 0
      %1569 = vmatpush1.bf16.msra.mxu0 0
      %1570 = vmatprep.mubr.bf16.mxu0 0
      %1571 = vmatmul.mubr.bf16.gmra.mrb[0].mxu0 %v1488
      %v1572 = vpop.f32.mrb[0].mxu0
      %v1573 = vadd.f32 %v1361, %v1572
      %v1574 = vpop.f32.mrb[0].mxu0
      %v1575 = vpop.f32.mrb[0].mxu0
      %v1576 = vadd.f32 %v1364, %v1575
      %v1577 = vpop.f32.mrb[0].mxu0
      %1578 = vmatprep.mubr.bf16.mxu0 0
      %1579 = vmatmul.mubr.bf16.gmra.mrb[0].mxu0 %v1491
      %v1580 = vpop.f32.mrb[0].mxu0
      %v1581 = vadd.f32 %v1369, %v1580
      %v1582 = vpop.f32.mrb[0].mxu0
      %v1583 = vpop.f32.mrb[0].mxu0
      %v1584 = vadd.f32 %v1372, %v1583
      %v1585 = vpop.f32.mrb[0].mxu0
      %1586 = vmatprep.mubr.bf16.mxu0 0
      %1587 = vmatmul.mubr.bf16.gmra.mrb[0].mxu0 %v1494
      %v1588 = vpop.f32.mrb[0].mxu0
      %v1589 = vadd.f32 %v1377, %v1588
      %v1590 = vpop.f32.mrb[0].mxu0
      %v1591 = vpop.f32.mrb[0].mxu0
      %v1592 = vadd.f32 %v1380, %v1591
      %v1593 = vpop.f32.mrb[0].mxu0
      %1594 = vmatprep.mubr.bf16.mxu0 0
      %1595 = vmatmul.mubr.bf16.gmra.mrb[0].mxu0 %v1497
      %v1596 = vpop.f32.mrb[0].mxu0
      %v1597 = vadd.f32 %v1385, %v1596
      %v1598 = vpop.f32.mrb[0].mxu0
      %v1599 = vpop.f32.mrb[0].mxu0
      %v1600 = vadd.f32 %v1388, %v1599
      %v1601 = vpop.f32.mrb[0].mxu0
      %1602 = vmatprep.mubr.bf16.mxu0 0
      %1603 = vmatmul.mubr.bf16.gmra.mrb[0].mxu0 %v1500
      %v1604 = vpop.f32.mrb[0].mxu0
      %v1605 = vadd.f32 %v1393, %v1604
      %v1606 = vpop.f32.mrb[0].mxu0
      %v1607 = vpop.f32.mrb[0].mxu0
      %v1608 = vadd.f32 %v1396, %v1607
      %v1609 = vpop.f32.mrb[0].mxu0
      %1610 = vmatprep.mubr.bf16.mxu0 0
      %1611 = vmatmul.mubr.bf16.gmra.mrb[0].mxu0 %v1503
      %v1612 = vpop.f32.mrb[0].mxu0
      %v1613 = vadd.f32 %v1401, %v1612
      %v1614 = vpop.f32.mrb[0].mxu0
      %v1615 = vpop.f32.mrb[0].mxu0
      %v1616 = vadd.f32 %v1404, %v1615
      %v1617 = vpop.f32.mrb[0].mxu0
      %1618 = vmatprep.mubr.bf16.mxu0 0
      %1619 = vmatmul.mubr.bf16.gmra.mrb[0].mxu0 %v1506
      %v1620 = vpop.f32.mrb[0].mxu0
      %v1621 = vadd.f32 %v1409, %v1620
      %v1622 = vpop.f32.mrb[0].mxu0
      %v1623 = vpop.f32.mrb[0].mxu0
      %v1624 = vadd.f32 %v1412, %v1623
      %v1625 = vpop.f32.mrb[0].mxu0
      %1626 = vmatprep.mubr.bf16.mxu0 0
      %1627 = vmatmul.mubr.bf16.gmra.mrb[0].mxu0 %v1509
      %v1628 = vpop.f32.mrb[0].mxu0
      %v1629 = vadd.f32 %v1417, %v1628
      %v1630 = vpop.f32.mrb[0].mxu0
      %v1631 = vpop.f32.mrb[0].mxu0
      %v1632 = vadd.f32 %v1420, %v1631
      %v1633 = vpop.f32.mrb[0].mxu0
      %1634 = vmatprep.mubr.bf16.mxu0 0
      %1635 = vmatmul.mubr.bf16.gmra.mrb[0].mxu0 %v1512
      %v1636 = vpop.f32.mrb[0].mxu0
      %v1637 = vadd.f32 %v1425, %v1636
      %v1638 = vpop.f32.mrb[0].mxu0
      %v1639 = vpop.f32.mrb[0].mxu0
      %v1640 = vadd.f32 %v1428, %v1639
      %v1641 = vpop.f32.mrb[0].mxu0
      %1642 = vmatprep.mubr.bf16.mxu0 0
      %1643 = vmatmul.mubr.bf16.gmra.mrb[0].mxu0 %v1515
      %v1644 = vpop.f32.mrb[0].mxu0
      %v1645 = vadd.f32 %v1433, %v1644
      %v1646 = vpop.f32.mrb[0].mxu0
      %v1647 = vpop.f32.mrb[0].mxu0
      %v1648 = vadd.f32 %v1436, %v1647
      %v1649 = vpop.f32.mrb[0].mxu0
      %1650 = vmatprep.mubr.bf16.mxu0 0
      %1651 = vmatmul.mubr.bf16.gmra.mrb[0].mxu0 %v1518
      %v1652 = vpop.f32.mrb[0].mxu0
      %v1653 = vadd.f32 %v1441, %v1652
      %v1654 = vpop.f32.mrb[0].mxu0
      %v1655 = vpop.f32.mrb[0].mxu0
      %v1656 = vadd.f32 %v1444, %v1655
      %v1657 = vpop.f32.mrb[0].mxu0
      %1658 = vmatprep.mubr.bf16.mxu0 0
      %1659 = vmatmul.mubr.bf16.gmra.mrb[0].mxu0 %v1521
      %v1660 = vpop.f32.mrb[0].mxu0
      %v1661 = vadd.f32 %v1449, %v1660
      %v1662 = vpop.f32.mrb[0].mxu0
      %v1663 = vpop.f32.mrb[0].mxu0
      %v1664 = vadd.f32 %v1452, %v1663
      %v1665 = vpop.f32.mrb[0].mxu0
      %1666 = vmatprep.mubr.bf16.mxu0 0
      %1667 = vmatmul.mubr.bf16.gmra.mrb[0].mxu0 %v1524
      %v1668 = vpop.f32.mrb[0].mxu0
      %v1669 = vadd.f32 %v1457, %v1668
      %v1670 = vpop.f32.mrb[0].mxu0
      %v1671 = vpop.f32.mrb[0].mxu0
      %v1672 = vadd.f32 %v1460, %v1671
      %v1673 = vpop.f32.mrb[0].mxu0
      %1674 = vmatprep.mubr.bf16.mxu0 0
      %1675 = vmatmul.mubr.bf16.gmra.mrb[0].mxu0 %v1527
      %v1676 = vpop.f32.mrb[0].mxu0
      %v1677 = vadd.f32 %v1465, %v1676
      %v1678 = vpop.f32.mrb[0].mxu0
      %v1679 = vpop.f32.mrb[0].mxu0
      %v1680 = vadd.f32 %v1468, %v1679
      %v1681 = vpop.f32.mrb[0].mxu0
      %1682 = vmatprep.mubr.bf16.mxu0 0
      %1683 = vmatmul.mubr.bf16.gmra.mrb[0].mxu0 %v1530
      %v1684 = vpop.f32.mrb[0].mxu0
      %v1685 = vadd.f32 %v1473, %v1684
      %v1686 = vpop.f32.mrb[0].mxu0
      %v1687 = vpop.f32.mrb[0].mxu0
      %v1688 = vadd.f32 %v1476, %v1687
      %v1689 = vpop.f32.mrb[0].mxu0
      %1690 = vmatprep.mubr.bf16.mxu0 0
      %1691 = vmatmul.mubr.bf16.gmra.mrb[0].mxu0 %v1533
      %v1692 = vpop.f32.mrb[0].mxu0
      %v1693 = vadd.f32 %v1481, %v1692
      %v1694 = vpop.f32.mrb[0].mxu0
      %v1695 = vpop.f32.mrb[0].mxu0
      %v1696 = vadd.f32 %v1484, %v1695
      %v1697 = vpop.f32.mrb[0].mxu0
      %1698 = vdwg.mxu0
      %v1699 = vld [vmem:[#allocation2 + $0x9] sm:$0xff]
      %v1700 = vld [vmem:[#allocation2 + $0x11] sm:$0xff]
      %v1701 = vld [vmem:[#allocation2 + $0x19] sm:$0xff]
      %v1702 = vld [vmem:[#allocation2 + $0x21] sm:$0xff]
      %v1703 = vld [vmem:[#allocation2 + $0x29] sm:$0xff]
      %v1704 = vld [vmem:[#allocation2 + $0x31] sm:$0xff]
      %v1705 = vld [vmem:[#allocation2 + $0x39] sm:$0xff]
      %v1706 = vld [vmem:[#allocation2 + $0x41] sm:$0xff]
      %v1707 = vld [vmem:[#allocation2 + $0x49] sm:$0xff]
      %v1708 = vld [vmem:[#allocation2 + $0x51] sm:$0xff]
      %v1709 = vld [vmem:[#allocation2 + $0x59] sm:$0xff]
      %v1710 = vld [vmem:[#allocation2 + $0x61] sm:$0xff]
      %v1711 = vld [vmem:[#allocation2 + $0x69] sm:$0xff]
      %v1712 = vld [vmem:[#allocation2 + $0x71] sm:$0xff]
      %v1713 = vld [vmem:[#allocation2 + $0x79] sm:$0xff]
      %v1714 = vld [vmem:[#allocation2 + $0x81] sm:$0xff]
      %v1715 = vld [vmem:[#allocation2 + $0x89] sm:$0xff]
      %v1716 = vld [vmem:[#allocation2 + $0x91] sm:$0xff]
      %v1717 = vld [vmem:[#allocation2 + $0x99] sm:$0xff]
      %v1718 = vld [vmem:[#allocation2 + $0xa1] sm:$0xff]
      %v1719 = vld [vmem:[#allocation2 + $0xa9] sm:$0xff]
      %v1720 = vld [vmem:[#allocation2 + $0xb1] sm:$0xff]
      %v1721 = vld [vmem:[#allocation2 + $0xb9] sm:$0xff]
      %v1722 = vld [vmem:[#allocation2 + $0xc1] sm:$0xff]
      %v1723 = vld [vmem:[#allocation2 + $0xc9] sm:$0xff]
      %v1724 = vld [vmem:[#allocation2 + $0xd1] sm:$0xff]
      %v1725 = vld [vmem:[#allocation2 + $0xd9] sm:$0xff]
      %v1726 = vld [vmem:[#allocation2 + $0xe1] sm:$0xff]
      %v1727 = vld [vmem:[#allocation2 + $0xe9] sm:$0xff]
      %v1728 = vld [vmem:[#allocation2 + $0xf1] sm:$0xff]
      %v1729 = vld [vmem:[#allocation2 + $0xf9] sm:$0xff]
      %v1730 = vld [vmem:[#allocation2 + $0x101] sm:$0xff]
      %1731 = vset.pattern.permute.xlu0 1
      %1732 = vperm.xlu0 %1731, %v584
      %v1733 = vpop.permute.xlu0 %1732
      %1735 = vset.pattern.permute.xlu0 1
      %1736 = vperm.xlu0 %1735, %v585
      %v1737 = vpop.permute.xlu0 %1736
      %1739 = vset.pattern.permute.xlu0 1
      %1740 = vperm.xlu0 %1739, %v586
      %v1741 = vpop.permute.xlu0 %1740
      %1743 = vset.pattern.permute.xlu0 1
      %1744 = vperm.xlu0 %1743, %v587
      %v1745 = vpop.permute.xlu0 %1744
      %1747 = vset.pattern.permute.xlu0 1
      %1748 = vperm.xlu0 %1747, %v588
      %v1749 = vpop.permute.xlu0 %1748
      %1751 = vset.pattern.permute.xlu0 1
      %1752 = vperm.xlu0 %1751, %v589
      %v1753 = vpop.permute.xlu0 %1752
      %1755 = vset.pattern.permute.xlu0 1
      %1756 = vperm.xlu0 %1755, %v590
      %v1757 = vpop.permute.xlu0 %1756
      %1759 = vset.pattern.permute.xlu0 1
      %1760 = vperm.xlu0 %1759, %v591
      %v1761 = vpop.permute.xlu0 %1760
      %1763 = vset.pattern.permute.xlu0 1
      %1764 = vperm.xlu0 %1763, %v592
      %v1765 = vpop.permute.xlu0 %1764
      %1767 = vset.pattern.permute.xlu0 1
      %1768 = vperm.xlu0 %1767, %v593
      %v1769 = vpop.permute.xlu0 %1768
      %1771 = vset.pattern.permute.xlu0 1
      %1772 = vperm.xlu0 %1771, %v594
      %v1773 = vpop.permute.xlu0 %1772
      %1775 = vset.pattern.permute.xlu0 1
      %1776 = vperm.xlu0 %1775, %v595
      %v1777 = vpop.permute.xlu0 %1776
      %1779 = vset.pattern.permute.xlu0 1
      %1780 = vperm.xlu0 %1779, %v596
      %v1781 = vpop.permute.xlu0 %1780
      %1783 = vset.pattern.permute.xlu0 1
      %1784 = vperm.xlu0 %1783, %v597
      %v1785 = vpop.permute.xlu0 %1784
      %1787 = vset.pattern.permute.xlu0 1
      %1788 = vperm.xlu0 %1787, %v598
      %v1789 = vpop.permute.xlu0 %1788
      %1791 = vset.pattern.permute.xlu0 1
      %1792 = vperm.xlu0 %1791, %v599
      %v1793 = vpop.permute.xlu0 %1792
      %1795 = vset.pattern.permute.xlu0 1
      %1796 = vperm.xlu0 %1795, %v600
      %v1797 = vpop.permute.xlu0 %1796
      %1799 = vset.pattern.permute.xlu0 1
      %1800 = vperm.xlu0 %1799, %v601
      %v1801 = vpop.permute.xlu0 %1800
      %1803 = vset.pattern.permute.xlu0 1
      %1804 = vperm.xlu0 %1803, %v602
      %v1805 = vpop.permute.xlu0 %1804
      %1807 = vset.pattern.permute.xlu0 1
      %1808 = vperm.xlu0 %1807, %v603
      %v1809 = vpop.permute.xlu0 %1808
      %1811 = vset.pattern.permute.xlu0 1
      %1812 = vperm.xlu0 %1811, %v604
      %v1813 = vpop.permute.xlu0 %1812
      %1815 = vset.pattern.permute.xlu0 1
      %1816 = vperm.xlu0 %1815, %v605
      %v1817 = vpop.permute.xlu0 %1816
      %1819 = vset.pattern.permute.xlu0 1
      %1820 = vperm.xlu0 %1819, %v606
      %v1821 = vpop.permute.xlu0 %1820
      %1823 = vset.pattern.permute.xlu0 1
      %1824 = vperm.xlu0 %1823, %v607
      %v1825 = vpop.permute.xlu0 %1824
      %1827 = vset.pattern.permute.xlu0 1
      %1828 = vperm.xlu0 %1827, %v608
      %v1829 = vpop.permute.xlu0 %1828
      %1831 = vset.pattern.permute.xlu0 1
      %1832 = vperm.xlu0 %1831, %v609
      %v1833 = vpop.permute.xlu0 %1832
      %1835 = vset.pattern.permute.xlu0 1
      %1836 = vperm.xlu0 %1835, %v610
      %v1837 = vpop.permute.xlu0 %1836
      %1839 = vset.pattern.permute.xlu0 1
      %1840 = vperm.xlu0 %1839, %v611
      %v1841 = vpop.permute.xlu0 %1840
      %1843 = vset.pattern.permute.xlu0 1
      %1844 = vperm.xlu0 %1843, %v612
      %v1845 = vpop.permute.xlu0 %1844
      %1847 = vset.pattern.permute.xlu0 1
      %1848 = vperm.xlu0 %1847, %v613
      %v1849 = vpop.permute.xlu0 %1848
      %1851 = vset.pattern.permute.xlu0 1
      %1852 = vperm.xlu0 %1851, %v614
      %v1853 = vpop.permute.xlu0 %1852
      %1855 = vset.pattern.permute.xlu0 1
      %1856 = vperm.xlu0 %1855, %v615
      %v1857 = vpop.permute.xlu0 %1856
      %v1859 = vmul.f32 %v1699, %v1733
      %v1860 = vmul.f32 %v1700, %v1737
      %v1861 = vmul.f32 %v1701, %v1741
      %v1862 = vmul.f32 %v1702, %v1745
      %v1863 = vmul.f32 %v1703, %v1749
      %v1864 = vmul.f32 %v1704, %v1753
      %v1865 = vmul.f32 %v1705, %v1757
      %v1866 = vmul.f32 %v1706, %v1761
      %v1867 = vmul.f32 %v1707, %v1765
      %v1868 = vmul.f32 %v1708, %v1769
      %v1869 = vmul.f32 %v1709, %v1773
      %v1870 = vmul.f32 %v1710, %v1777
      %v1871 = vmul.f32 %v1711, %v1781
      %v1872 = vmul.f32 %v1712, %v1785
      %v1873 = vmul.f32 %v1713, %v1789
      %v1874 = vmul.f32 %v1714, %v1793
      %v1875 = vmul.f32 %v1715, %v1797
      %v1876 = vmul.f32 %v1716, %v1801
      %v1877 = vmul.f32 %v1717, %v1805
      %v1878 = vmul.f32 %v1718, %v1809
      %v1879 = vmul.f32 %v1719, %v1813
      %v1880 = vmul.f32 %v1720, %v1817
      %v1881 = vmul.f32 %v1721, %v1821
      %v1882 = vmul.f32 %v1722, %v1825
      %v1883 = vmul.f32 %v1723, %v1829
      %v1884 = vmul.f32 %v1724, %v1833
      %v1885 = vmul.f32 %v1725, %v1837
      %v1886 = vmul.f32 %v1726, %v1841
      %v1887 = vmul.f32 %v1727, %v1845
      %v1888 = vmul.f32 %v1728, %v1849
      %v1889 = vmul.f32 %v1729, %v1853
      %v1890 = vmul.f32 %v1730, %v1857
      %v1891 = vpack.c.bf16 %v1860, %v1859
      %v1892 = vpack.c.bf16 %v1862, %v1861
      %v1893 = vpack.c.bf16 %v1864, %v1863
      %v1894 = vpack.c.bf16 %v1866, %v1865
      %v1895 = vpack.c.bf16 %v1868, %v1867
      %v1896 = vpack.c.bf16 %v1870, %v1869
      %v1897 = vpack.c.bf16 %v1872, %v1871
      %v1898 = vpack.c.bf16 %v1874, %v1873
      %v1899 = vpack.c.bf16 %v1876, %v1875
      %v1900 = vpack.c.bf16 %v1878, %v1877
      %v1901 = vpack.c.bf16 %v1880, %v1879
      %v1902 = vpack.c.bf16 %v1882, %v1881
      %v1903 = vpack.c.bf16 %v1884, %v1883
      %v1904 = vpack.c.bf16 %v1886, %v1885
      %v1905 = vpack.c.bf16 %v1888, %v1887
      %v1906 = vpack.c.bf16 %v1890, %v1889
      %s1907 = scalar_lea.vmem %s4, 8
      %v1908 = vld [vmem:[%s1907] sm:$0xf]
      %v1910 = vsel %vm950, %v1891, 0
      %v1913 = vsel %vm950, %v1892, 0
      %v1916 = vsel %vm950, %v1893, 0
      %v1919 = vsel %vm950, %v1894, 0
      %v1922 = vsel %vm950, %v1895, 0
      %v1925 = vsel %vm950, %v1896, 0
      %v1928 = vsel %vm950, %v1897, 0
      %v1931 = vsel %vm950, %v1898, 0
      %v1934 = vsel %vm950, %v1899, 0
      %v1937 = vsel %vm950, %v1900, 0
      %v1940 = vsel %vm950, %v1901, 0
      %v1943 = vsel %vm950, %v1902, 0
      %v1946 = vsel %vm950, %v1903, 0
      %v1949 = vsel %vm950, %v1904, 0
      %v1952 = vsel %vm950, %v1905, 0
      %v1955 = vsel %vm950, %v1906, 0
      %v1958 = vsel %vm1322, %v1908, 0
      %1960 = vmatprep.subr.bf16.mxu0 0
      %1961 = vmatpush1.bf16.msra.mxu0 %v1958
      %1962 = vmatprep.subr.bf16.mxu0 0
      %1963 = vmatpush1.bf16.msra.mxu0 0
      %1964 = vmatprep.subr.bf16.mxu0 0
      %1965 = vmatpush1.bf16.msra.mxu0 0
      %1966 = vmatprep.subr.bf16.mxu0 0
      %1967 = vmatpush1.bf16.msra.mxu0 0
      %1968 = vmatprep.subr.bf16.mxu0 0
      %1969 = vmatpush1.bf16.msra.mxu0 0
      %1970 = vmatprep.subr.bf16.mxu0 0
      %1971 = vmatpush1.bf16.msra.mxu0 0
      %1972 = vmatprep.subr.bf16.mxu0 0
      %1973 = vmatpush1.bf16.msra.mxu0 0
      %1974 = vmatprep.subr.bf16.mxu0 0
      %1975 = vmatpush1.bf16.msra.mxu0 0
      %1976 = vmatprep.subr.bf16.mxu0 0
      %1977 = vmatpush1.bf16.msra.mxu0 0
      %1978 = vmatprep.subr.bf16.mxu0 0
      %1979 = vmatpush1.bf16.msra.mxu0 0
      %1980 = vmatprep.subr.bf16.mxu0 0
      %1981 = vmatpush1.bf16.msra.mxu0 0
      %1982 = vmatprep.subr.bf16.mxu0 0
      %1983 = vmatpush1.bf16.msra.mxu0 0
      %1984 = vmatprep.subr.bf16.mxu0 0
      %1985 = vmatpush1.bf16.msra.mxu0 0
      %1986 = vmatprep.subr.bf16.mxu0 0
      %1987 = vmatpush1.bf16.msra.mxu0 0
      %1988 = vmatprep.subr.bf16.mxu0 0
      %1989 = vmatpush1.bf16.msra.mxu0 0
      %1990 = vmatprep.subr.bf16.mxu0 0
      %1991 = vmatpush1.bf16.msra.mxu0 0
      %1992 = vmatprep.mubr.bf16.mxu0 0
      %1993 = vmatmul.mubr.bf16.gmra.mrb[0].mxu0 %v1910
      %v1994 = vpop.f32.mrb[0].mxu0
      %v1995 = vadd.f32 0.0, %v1994
      %v1996 = vpop.f32.mrb[0].mxu0
      %v1997 = vpop.f32.mrb[0].mxu0
      %v1998 = vadd.f32 0.0, %v1997
      %v1999 = vpop.f32.mrb[0].mxu0
      %2000 = vmatprep.mubr.bf16.mxu0 0
      %2001 = vmatmul.mubr.bf16.gmra.mrb[0].mxu0 %v1913
      %v2002 = vpop.f32.mrb[0].mxu0
      %v2003 = vadd.f32 0.0, %v2002
      %v2004 = vpop.f32.mrb[0].mxu0
      %v2005 = vpop.f32.mrb[0].mxu0
      %v2006 = vadd.f32 0.0, %v2005
      %v2007 = vpop.f32.mrb[0].mxu0
      %2008 = vmatprep.mubr.bf16.mxu0 0
      %2009 = vmatmul.mubr.bf16.gmra.mrb[0].mxu0 %v1916
      %v2010 = vpop.f32.mrb[0].mxu0
      %v2011 = vadd.f32 0.0, %v2010
      %v2012 = vpop.f32.mrb[0].mxu0
      %v2013 = vpop.f32.mrb[0].mxu0
      %v2014 = vadd.f32 0.0, %v2013
      %v2015 = vpop.f32.mrb[0].mxu0
      %2016 = vmatprep.mubr.bf16.mxu0 0
      %2017 = vmatmul.mubr.bf16.gmra.mrb[0].mxu0 %v1919
      %v2018 = vpop.f32.mrb[0].mxu0
      %v2019 = vadd.f32 0.0, %v2018
      %v2020 = vpop.f32.mrb[0].mxu0
      %v2021 = vpop.f32.mrb[0].mxu0
      %v2022 = vadd.f32 0.0, %v2021
      %v2023 = vpop.f32.mrb[0].mxu0
      %2024 = vmatprep.mubr.bf16.mxu0 0
      %2025 = vmatmul.mubr.bf16.gmra.mrb[0].mxu0 %v1922
      %v2026 = vpop.f32.mrb[0].mxu0
      %v2027 = vadd.f32 0.0, %v2026
      %v2028 = vpop.f32.mrb[0].mxu0
      %v2029 = vpop.f32.mrb[0].mxu0
      %v2030 = vadd.f32 0.0, %v2029
      %v2031 = vpop.f32.mrb[0].mxu0
      %2032 = vmatprep.mubr.bf16.mxu0 0
      %2033 = vmatmul.mubr.bf16.gmra.mrb[0].mxu0 %v1925
      %v2034 = vpop.f32.mrb[0].mxu0
      %v2035 = vadd.f32 0.0, %v2034
      %v2036 = vpop.f32.mrb[0].mxu0
      %v2037 = vpop.f32.mrb[0].mxu0
      %v2038 = vadd.f32 0.0, %v2037
      %v2039 = vpop.f32.mrb[0].mxu0
      %2040 = vmatprep.mubr.bf16.mxu0 0
      %2041 = vmatmul.mubr.bf16.gmra.mrb[0].mxu0 %v1928
      %v2042 = vpop.f32.mrb[0].mxu0
      %v2043 = vadd.f32 0.0, %v2042
      %v2044 = vpop.f32.mrb[0].mxu0
      %v2045 = vpop.f32.mrb[0].mxu0
      %v2046 = vadd.f32 0.0, %v2045
      %v2047 = vpop.f32.mrb[0].mxu0
      %2048 = vmatprep.mubr.bf16.mxu0 0
      %2049 = vmatmul.mubr.bf16.gmra.mrb[0].mxu0 %v1931
      %v2050 = vpop.f32.mrb[0].mxu0
      %v2051 = vadd.f32 0.0, %v2050
      %v2052 = vpop.f32.mrb[0].mxu0
      %v2053 = vpop.f32.mrb[0].mxu0
      %v2054 = vadd.f32 0.0, %v2053
      %v2055 = vpop.f32.mrb[0].mxu0
      %2056 = vmatprep.mubr.bf16.mxu0 0
      %2057 = vmatmul.mubr.bf16.gmra.mrb[0].mxu0 %v1934
      %v2058 = vpop.f32.mrb[0].mxu0
      %v2059 = vadd.f32 0.0, %v2058
      %v2060 = vpop.f32.mrb[0].mxu0
      %v2061 = vpop.f32.mrb[0].mxu0
      %v2062 = vadd.f32 0.0, %v2061
      %v2063 = vpop.f32.mrb[0].mxu0
      %2064 = vmatprep.mubr.bf16.mxu0 0
      %2065 = vmatmul.mubr.bf16.gmra.mrb[0].mxu0 %v1937
      %v2066 = vpop.f32.mrb[0].mxu0
      %v2067 = vadd.f32 0.0, %v2066
      %v2068 = vpop.f32.mrb[0].mxu0
      %v2069 = vpop.f32.mrb[0].mxu0
      %v2070 = vadd.f32 0.0, %v2069
      %v2071 = vpop.f32.mrb[0].mxu0
      %2072 = vmatprep.mubr.bf16.mxu0 0
      %2073 = vmatmul.mubr.bf16.gmra.mrb[0].mxu0 %v1940
      %v2074 = vpop.f32.mrb[0].mxu0
      %v2075 = vadd.f32 0.0, %v2074
      %v2076 = vpop.f32.mrb[0].mxu0
      %v2077 = vpop.f32.mrb[0].mxu0
      %v2078 = vadd.f32 0.0, %v2077
      %v2079 = vpop.f32.mrb[0].mxu0
      %2080 = vmatprep.mubr.bf16.mxu0 0
      %2081 = vmatmul.mubr.bf16.gmra.mrb[0].mxu0 %v1943
      %v2082 = vpop.f32.mrb[0].mxu0
      %v2083 = vadd.f32 0.0, %v2082
      %v2084 = vpop.f32.mrb[0].mxu0
      %v2085 = vpop.f32.mrb[0].mxu0
      %v2086 = vadd.f32 0.0, %v2085
      %v2087 = vpop.f32.mrb[0].mxu0
      %2088 = vmatprep.mubr.bf16.mxu0 0
      %2089 = vmatmul.mubr.bf16.gmra.mrb[0].mxu0 %v1946
      %v2090 = vpop.f32.mrb[0].mxu0
      %v2091 = vadd.f32 0.0, %v2090
      %v2092 = vpop.f32.mrb[0].mxu0
      %v2093 = vpop.f32.mrb[0].mxu0
      %v2094 = vadd.f32 0.0, %v2093
      %v2095 = vpop.f32.mrb[0].mxu0
      %2096 = vmatprep.mubr.bf16.mxu0 0
      %2097 = vmatmul.mubr.bf16.gmra.mrb[0].mxu0 %v1949
      %v2098 = vpop.f32.mrb[0].mxu0
      %v2099 = vadd.f32 0.0, %v2098
      %v2100 = vpop.f32.mrb[0].mxu0
      %v2101 = vpop.f32.mrb[0].mxu0
      %v2102 = vadd.f32 0.0, %v2101
      %v2103 = vpop.f32.mrb[0].mxu0
      %2104 = vmatprep.mubr.bf16.mxu0 0
      %2105 = vmatmul.mubr.bf16.gmra.mrb[0].mxu0 %v1952
      %v2106 = vpop.f32.mrb[0].mxu0
      %v2107 = vadd.f32 0.0, %v2106
      %v2108 = vpop.f32.mrb[0].mxu0
      %v2109 = vpop.f32.mrb[0].mxu0
      %v2110 = vadd.f32 0.0, %v2109
      %v2111 = vpop.f32.mrb[0].mxu0
      %2112 = vmatprep.mubr.bf16.mxu0 0
      %2113 = vmatmul.mubr.bf16.gmra.mrb[0].mxu0 %v1955
      %v2114 = vpop.f32.mrb[0].mxu0
      %v2115 = vadd.f32 0.0, %v2114
      %v2116 = vpop.f32.mrb[0].mxu0
      %v2117 = vpop.f32.mrb[0].mxu0
      %v2118 = vadd.f32 0.0, %v2117
      %v2119 = vpop.f32.mrb[0].mxu0
      %2120 = vdwg.mxu0
      %v2121 = vadd.f32 %v1573, %v1995
      %v2122 = vadd.f32 %v1576, %v1998
      %v2123 = vadd.f32 %v1581, %v2003
      %v2124 = vadd.f32 %v1584, %v2006
      %v2125 = vadd.f32 %v1589, %v2011
      %v2126 = vadd.f32 %v1592, %v2014
      %v2127 = vadd.f32 %v1597, %v2019
      %v2128 = vadd.f32 %v1600, %v2022
      %v2129 = vadd.f32 %v1605, %v2027
      %v2130 = vadd.f32 %v1608, %v2030
      %v2131 = vadd.f32 %v1613, %v2035
      %v2132 = vadd.f32 %v1616, %v2038
      %v2133 = vadd.f32 %v1621, %v2043
      %v2134 = vadd.f32 %v1624, %v2046
      %v2135 = vadd.f32 %v1629, %v2051
      %v2136 = vadd.f32 %v1632, %v2054
      %v2137 = vadd.f32 %v1637, %v2059
      %v2138 = vadd.f32 %v1640, %v2062
      %v2139 = vadd.f32 %v1645, %v2067
      %v2140 = vadd.f32 %v1648, %v2070
      %v2141 = vadd.f32 %v1653, %v2075
      %v2142 = vadd.f32 %v1656, %v2078
      %v2143 = vadd.f32 %v1661, %v2083
      %v2144 = vadd.f32 %v1664, %v2086
      %v2145 = vadd.f32 %v1669, %v2091
      %v2146 = vadd.f32 %v1672, %v2094
      %v2147 = vadd.f32 %v1677, %v2099
      %v2148 = vadd.f32 %v1680, %v2102
      %v2149 = vadd.f32 %v1685, %v2107
      %v2150 = vadd.f32 %v1688, %v2110
      %v2151 = vadd.f32 %v1693, %v2115
      %v2152 = vadd.f32 %v1696, %v2118
      %v2153 = vld [vmem:[#allocation2 + $0x17] sm:$0xff]
      %v2154 = vld [vmem:[#allocation2 + $0x1f] sm:$0xff]
      %v2155 = vld [vmem:[#allocation2 + $0x27] sm:$0xff]
      %v2156 = vld [vmem:[#allocation2 + $0x2f] sm:$0xff]
      %v2157 = vld [vmem:[#allocation2 + $0x37] sm:$0xff]
      %v2158 = vld [vmem:[#allocation2 + $0x3f] sm:$0xff]
      %v2159 = vld [vmem:[#allocation2 + $0x47] sm:$0xff]
      %v2160 = vld [vmem:[#allocation2 + $0x4f] sm:$0xff]
      %v2161 = vld [vmem:[#allocation2 + $0x57] sm:$0xff]
      %v2162 = vld [vmem:[#allocation2 + $0x5f] sm:$0xff]
      %v2163 = vld [vmem:[#allocation2 + $0x67] sm:$0xff]
      %v2164 = vld [vmem:[#allocation2 + $0x6f] sm:$0xff]
      %v2165 = vld [vmem:[#allocation2 + $0x77] sm:$0xff]
      %v2166 = vld [vmem:[#allocation2 + $0x7f] sm:$0xff]
      %v2167 = vld [vmem:[#allocation2 + $0x87] sm:$0xff]
      %v2168 = vld [vmem:[#allocation2 + $0x8f] sm:$0xff]
      %v2169 = vld [vmem:[#allocation2 + $0x97] sm:$0xff]
      %v2170 = vld [vmem:[#allocation2 + $0x9f] sm:$0xff]
      %v2171 = vld [vmem:[#allocation2 + $0xa7] sm:$0xff]
      %v2172 = vld [vmem:[#allocation2 + $0xaf] sm:$0xff]
      %v2173 = vld [vmem:[#allocation2 + $0xb7] sm:$0xff]
      %v2174 = vld [vmem:[#allocation2 + $0xbf] sm:$0xff]
      %v2175 = vld [vmem:[#allocation2 + $0xc7] sm:$0xff]
      %v2176 = vld [vmem:[#allocation2 + $0xcf] sm:$0xff]
      %v2177 = vld [vmem:[#allocation2 + $0xd7] sm:$0xff]
      %v2178 = vld [vmem:[#allocation2 + $0xdf] sm:$0xff]
      %v2179 = vld [vmem:[#allocation2 + $0xe7] sm:$0xff]
      %v2180 = vld [vmem:[#allocation2 + $0xef] sm:$0xff]
      %v2181 = vld [vmem:[#allocation2 + $0xf7] sm:$0xff]
      %v2182 = vld [vmem:[#allocation2 + $0xff] sm:$0xff]
      %v2183 = vld [vmem:[#allocation2 + $0x107] sm:$0xff]
      %v2184 = vld [vmem:[#allocation2 + $0x10f] sm:$0xff]
      %v2185 = vmul.f32 %v2153, %v1018
      %v2186 = vmul.f32 %v2154, %v1023
      %v2187 = vmul.f32 %v2155, %v1028
      %v2188 = vmul.f32 %v2156, %v1033
      %v2189 = vmul.f32 %v2157, %v1038
      %v2190 = vmul.f32 %v2158, %v1043
      %v2191 = vmul.f32 %v2159, %v1048
      %v2192 = vmul.f32 %v2160, %v1053
      %v2193 = vmul.f32 %v2161, %v1058
      %v2194 = vmul.f32 %v2162, %v1063
      %v2195 = vmul.f32 %v2163, %v1068
      %v2196 = vmul.f32 %v2164, %v1073
      %v2197 = vmul.f32 %v2165, %v1078
      %v2198 = vmul.f32 %v2166, %v1083
      %v2199 = vmul.f32 %v2167, %v1088
      %v2200 = vmul.f32 %v2168, %v1093
      %v2201 = vmul.f32 %v2169, %v1098
      %v2202 = vmul.f32 %v2170, %v1103
      %v2203 = vmul.f32 %v2171, %v1108
      %v2204 = vmul.f32 %v2172, %v1113
      %v2205 = vmul.f32 %v2173, %v1118
      %v2206 = vmul.f32 %v2174, %v1123
      %v2207 = vmul.f32 %v2175, %v1128
      %v2208 = vmul.f32 %v2176, %v1133
      %v2209 = vmul.f32 %v2177, %v1138
      %v2210 = vmul.f32 %v2178, %v1143
      %v2211 = vmul.f32 %v2179, %v1148
      %v2212 = vmul.f32 %v2180, %v1153
      %v2213 = vmul.f32 %v2181, %v1158
      %v2214 = vmul.f32 %v2182, %v1163
      %v2215 = vmul.f32 %v2183, %v1168
      %v2216 = vmul.f32 %v2184, %v1173
      %v2217 = vpack.c.bf16 %v2186, %v2185
      %v2218 = vpack.c.bf16 %v2188, %v2187
      %v2219 = vpack.c.bf16 %v2190, %v2189
      %v2220 = vpack.c.bf16 %v2192, %v2191
      %v2221 = vpack.c.bf16 %v2194, %v2193
      %v2222 = vpack.c.bf16 %v2196, %v2195
      %v2223 = vpack.c.bf16 %v2198, %v2197
      %v2224 = vpack.c.bf16 %v2200, %v2199
      %v2225 = vpack.c.bf16 %v2202, %v2201
      %v2226 = vpack.c.bf16 %v2204, %v2203
      %v2227 = vpack.c.bf16 %v2206, %v2205
      %v2228 = vpack.c.bf16 %v2208, %v2207
      %v2229 = vpack.c.bf16 %v2210, %v2209
      %v2230 = vpack.c.bf16 %v2212, %v2211
      %v2231 = vpack.c.bf16 %v2214, %v2213
      %v2232 = vpack.c.bf16 %v2216, %v2215
      %s2233 = scalar_lea.vmem %s4, 12
      %v2234 = vld [vmem:[%s2233] sm:$0xf]
      %v2236 = vsel %vm950, %v2217, 0
      %v2239 = vsel %vm950, %v2218, 0
      %v2242 = vsel %vm950, %v2219, 0
      %v2245 = vsel %vm950, %v2220, 0
      %v2248 = vsel %vm950, %v2221, 0
      %v2251 = vsel %vm950, %v2222, 0
      %v2254 = vsel %vm950, %v2223, 0
      %v2257 = vsel %vm950, %v2224, 0
      %v2260 = vsel %vm950, %v2225, 0
      %v2263 = vsel %vm950, %v2226, 0
      %v2266 = vsel %vm950, %v2227, 0
      %v2269 = vsel %vm950, %v2228, 0
      %v2272 = vsel %vm950, %v2229, 0
      %v2275 = vsel %vm950, %v2230, 0
      %v2278 = vsel %vm950, %v2231, 0
      %v2281 = vsel %vm950, %v2232, 0
      %v2284 = vsel %vm1322, %v2234, 0
      %2286 = vmatprep.subr.bf16.mxu0 0
      %2287 = vmatpush1.bf16.msra.mxu0 %v2284
      %2288 = vmatprep.subr.bf16.mxu0 0
      %2289 = vmatpush1.bf16.msra.mxu0 0
      %2290 = vmatprep.subr.bf16.mxu0 0
      %2291 = vmatpush1.bf16.msra.mxu0 0
      %2292 = vmatprep.subr.bf16.mxu0 0
      %2293 = vmatpush1.bf16.msra.mxu0 0
      %2294 = vmatprep.subr.bf16.mxu0 0
      %2295 = vmatpush1.bf16.msra.mxu0 0
      %2296 = vmatprep.subr.bf16.mxu0 0
      %2297 = vmatpush1.bf16.msra.mxu0 0
      %2298 = vmatprep.subr.bf16.mxu0 0
      %2299 = vmatpush1.bf16.msra.mxu0 0
      %2300 = vmatprep.subr.bf16.mxu0 0
      %2301 = vmatpush1.bf16.msra.mxu0 0
      %2302 = vmatprep.subr.bf16.mxu0 0
      %2303 = vmatpush1.bf16.msra.mxu0 0
      %2304 = vmatprep.subr.bf16.mxu0 0
      %2305 = vmatpush1.bf16.msra.mxu0 0
      %2306 = vmatprep.subr.bf16.mxu0 0
      %2307 = vmatpush1.bf16.msra.mxu0 0
      %2308 = vmatprep.subr.bf16.mxu0 0
      %2309 = vmatpush1.bf16.msra.mxu0 0
      %2310 = vmatprep.subr.bf16.mxu0 0
      %2311 = vmatpush1.bf16.msra.mxu0 0
      %2312 = vmatprep.subr.bf16.mxu0 0
      %2313 = vmatpush1.bf16.msra.mxu0 0
      %2314 = vmatprep.subr.bf16.mxu0 0
      %2315 = vmatpush1.bf16.msra.mxu0 0
      %2316 = vmatprep.subr.bf16.mxu0 0
      %2317 = vmatpush1.bf16.msra.mxu0 0
      %2318 = vmatprep.mubr.bf16.mxu0 0
      %2319 = vmatmul.mubr.bf16.gmra.mrb[0].mxu0 %v2236
      %v2320 = vpop.f32.mrb[0].mxu0
      %v2321 = vadd.f32 0.0, %v2320
      %v2322 = vpop.f32.mrb[0].mxu0
      %v2323 = vpop.f32.mrb[0].mxu0
      %v2324 = vadd.f32 0.0, %v2323
      %v2325 = vpop.f32.mrb[0].mxu0
      %2326 = vmatprep.mubr.bf16.mxu0 0
      %2327 = vmatmul.mubr.bf16.gmra.mrb[0].mxu0 %v2239
      %v2328 = vpop.f32.mrb[0].mxu0
      %v2329 = vadd.f32 0.0, %v2328
      %v2330 = vpop.f32.mrb[0].mxu0
      %v2331 = vpop.f32.mrb[0].mxu0
      %v2332 = vadd.f32 0.0, %v2331
      %v2333 = vpop.f32.mrb[0].mxu0
      %2334 = vmatprep.mubr.bf16.mxu0 0
      %2335 = vmatmul.mubr.bf16.gmra.mrb[0].mxu0 %v2242
      %v2336 = vpop.f32.mrb[0].mxu0
      %v2337 = vadd.f32 0.0, %v2336
      %v2338 = vpop.f32.mrb[0].mxu0
      %v2339 = vpop.f32.mrb[0].mxu0
      %v2340 = vadd.f32 0.0, %v2339
      %v2341 = vpop.f32.mrb[0].mxu0
      %2342 = vmatprep.mubr.bf16.mxu0 0
      %2343 = vmatmul.mubr.bf16.gmra.mrb[0].mxu0 %v2245
      %v2344 = vpop.f32.mrb[0].mxu0
      %v2345 = vadd.f32 0.0, %v2344
      %v2346 = vpop.f32.mrb[0].mxu0
      %v2347 = vpop.f32.mrb[0].mxu0
      %v2348 = vadd.f32 0.0, %v2347
      %v2349 = vpop.f32.mrb[0].mxu0
      %2350 = vmatprep.mubr.bf16.mxu0 0
      %2351 = vmatmul.mubr.bf16.gmra.mrb[0].mxu0 %v2248
      %v2352 = vpop.f32.mrb[0].mxu0
      %v2353 = vadd.f32 0.0, %v2352
      %v2354 = vpop.f32.mrb[0].mxu0
      %v2355 = vpop.f32.mrb[0].mxu0
      %v2356 = vadd.f32 0.0, %v2355
      %v2357 = vpop.f32.mrb[0].mxu0
      %2358 = vmatprep.mubr.bf16.mxu0 0
      %2359 = vmatmul.mubr.bf16.gmra.mrb[0].mxu0 %v2251
      %v2360 = vpop.f32.mrb[0].mxu0
      %v2361 = vadd.f32 0.0, %v2360
      %v2362 = vpop.f32.mrb[0].mxu0
      %v2363 = vpop.f32.mrb[0].mxu0
      %v2364 = vadd.f32 0.0, %v2363
      %v2365 = vpop.f32.mrb[0].mxu0
      %2366 = vmatprep.mubr.bf16.mxu0 0
      %2367 = vmatmul.mubr.bf16.gmra.mrb[0].mxu0 %v2254
      %v2368 = vpop.f32.mrb[0].mxu0
      %v2369 = vadd.f32 0.0, %v2368
      %v2370 = vpop.f32.mrb[0].mxu0
      %v2371 = vpop.f32.mrb[0].mxu0
      %v2372 = vadd.f32 0.0, %v2371
      %v2373 = vpop.f32.mrb[0].mxu0
      %2374 = vmatprep.mubr.bf16.mxu0 0
      %2375 = vmatmul.mubr.bf16.gmra.mrb[0].mxu0 %v2257
      %v2376 = vpop.f32.mrb[0].mxu0
      %v2377 = vadd.f32 0.0, %v2376
      %v2378 = vpop.f32.mrb[0].mxu0
      %v2379 = vpop.f32.mrb[0].mxu0
      %v2380 = vadd.f32 0.0, %v2379
      %v2381 = vpop.f32.mrb[0].mxu0
      %2382 = vmatprep.mubr.bf16.mxu0 0
      %2383 = vmatmul.mubr.bf16.gmra.mrb[0].mxu0 %v2260
      %v2384 = vpop.f32.mrb[0].mxu0
      %v2385 = vadd.f32 0.0, %v2384
      %v2386 = vpop.f32.mrb[0].mxu0
      %v2387 = vpop.f32.mrb[0].mxu0
      %v2388 = vadd.f32 0.0, %v2387
      %v2389 = vpop.f32.mrb[0].mxu0
      %2390 = vmatprep.mubr.bf16.mxu0 0
      %2391 = vmatmul.mubr.bf16.gmra.mrb[0].mxu0 %v2263
      %v2392 = vpop.f32.mrb[0].mxu0
      %v2393 = vadd.f32 0.0, %v2392
      %v2394 = vpop.f32.mrb[0].mxu0
      %v2395 = vpop.f32.mrb[0].mxu0
      %v2396 = vadd.f32 0.0, %v2395
      %v2397 = vpop.f32.mrb[0].mxu0
      %2398 = vmatprep.mubr.bf16.mxu0 0
      %2399 = vmatmul.mubr.bf16.gmra.mrb[0].mxu0 %v2266
      %v2400 = vpop.f32.mrb[0].mxu0
      %v2401 = vadd.f32 0.0, %v2400
      %v2402 = vpop.f32.mrb[0].mxu0
      %v2403 = vpop.f32.mrb[0].mxu0
      %v2404 = vadd.f32 0.0, %v2403
      %v2405 = vpop.f32.mrb[0].mxu0
      %2406 = vmatprep.mubr.bf16.mxu0 0
      %2407 = vmatmul.mubr.bf16.gmra.mrb[0].mxu0 %v2269
      %v2408 = vpop.f32.mrb[0].mxu0
      %v2409 = vadd.f32 0.0, %v2408
      %v2410 = vpop.f32.mrb[0].mxu0
      %v2411 = vpop.f32.mrb[0].mxu0
      %v2412 = vadd.f32 0.0, %v2411
      %v2413 = vpop.f32.mrb[0].mxu0
      %2414 = vmatprep.mubr.bf16.mxu0 0
      %2415 = vmatmul.mubr.bf16.gmra.mrb[0].mxu0 %v2272
      %v2416 = vpop.f32.mrb[0].mxu0
      %v2417 = vadd.f32 0.0, %v2416
      %v2418 = vpop.f32.mrb[0].mxu0
      %v2419 = vpop.f32.mrb[0].mxu0
      %v2420 = vadd.f32 0.0, %v2419
      %v2421 = vpop.f32.mrb[0].mxu0
      %2422 = vmatprep.mubr.bf16.mxu0 0
      %2423 = vmatmul.mubr.bf16.gmra.mrb[0].mxu0 %v2275
      %v2424 = vpop.f32.mrb[0].mxu0
      %v2425 = vadd.f32 0.0, %v2424
      %v2426 = vpop.f32.mrb[0].mxu0
      %v2427 = vpop.f32.mrb[0].mxu0
      %v2428 = vadd.f32 0.0, %v2427
      %v2429 = vpop.f32.mrb[0].mxu0
      %2430 = vmatprep.mubr.bf16.mxu0 0
      %2431 = vmatmul.mubr.bf16.gmra.mrb[0].mxu0 %v2278
      %v2432 = vpop.f32.mrb[0].mxu0
      %v2433 = vadd.f32 0.0, %v2432
      %v2434 = vpop.f32.mrb[0].mxu0
      %v2435 = vpop.f32.mrb[0].mxu0
      %v2436 = vadd.f32 0.0, %v2435
      %v2437 = vpop.f32.mrb[0].mxu0
      %2438 = vmatprep.mubr.bf16.mxu0 0
      %2439 = vmatmul.mubr.bf16.gmra.mrb[0].mxu0 %v2281
      %v2440 = vpop.f32.mrb[0].mxu0
      %v2441 = vadd.f32 0.0, %v2440
      %v2442 = vpop.f32.mrb[0].mxu0
      %v2443 = vpop.f32.mrb[0].mxu0
      %v2444 = vadd.f32 0.0, %v2443
      %v2445 = vpop.f32.mrb[0].mxu0
      %2446 = vdwg.mxu0
      %v2447 = vadd.f32 %v2121, %v2321
      %v2448 = vadd.f32 %v2122, %v2324
      %v2449 = vadd.f32 %v2123, %v2329
      %v2450 = vadd.f32 %v2124, %v2332
      %v2451 = vadd.f32 %v2125, %v2337
      %v2452 = vadd.f32 %v2126, %v2340
      %v2453 = vadd.f32 %v2127, %v2345
      %v2454 = vadd.f32 %v2128, %v2348
      %v2455 = vadd.f32 %v2129, %v2353
      %v2456 = vadd.f32 %v2130, %v2356
      %v2457 = vadd.f32 %v2131, %v2361
      %v2458 = vadd.f32 %v2132, %v2364
      %v2459 = vadd.f32 %v2133, %v2369
      %v2460 = vadd.f32 %v2134, %v2372
      %v2461 = vadd.f32 %v2135, %v2377
      %v2462 = vadd.f32 %v2136, %v2380
      %v2463 = vadd.f32 %v2137, %v2385
      %v2464 = vadd.f32 %v2138, %v2388
      %v2465 = vadd.f32 %v2139, %v2393
      %v2466 = vadd.f32 %v2140, %v2396
      %v2467 = vadd.f32 %v2141, %v2401
      %v2468 = vadd.f32 %v2142, %v2404
      %v2469 = vadd.f32 %v2143, %v2409
      %v2470 = vadd.f32 %v2144, %v2412
      %v2471 = vadd.f32 %v2145, %v2417
      %v2472 = vadd.f32 %v2146, %v2420
      %v2473 = vadd.f32 %v2147, %v2425
      %v2474 = vadd.f32 %v2148, %v2428
      %v2475 = vadd.f32 %v2149, %v2433
      %v2476 = vadd.f32 %v2150, %v2436
      %v2477 = vadd.f32 %v2151, %v2441
      %v2478 = vadd.f32 %v2152, %v2444
      %v2479 = vpack.c.bf16 %v827, %v824
      %v2480 = vpack.c.bf16 %v835, %v832
      %v2481 = vpack.c.bf16 %v843, %v840
      %v2482 = vpack.c.bf16 %v851, %v848
      %v2483 = vpack.c.bf16 %v859, %v856
      %v2484 = vpack.c.bf16 %v867, %v864
      %v2485 = vpack.c.bf16 %v875, %v872
      %v2486 = vpack.c.bf16 %v883, %v880
      %v2487 = vpack.c.bf16 %v891, %v888
      %v2488 = vpack.c.bf16 %v899, %v896
      %v2489 = vpack.c.bf16 %v907, %v904
      %v2490 = vpack.c.bf16 %v915, %v912
      %v2491 = vpack.c.bf16 %v923, %v920
      %v2492 = vpack.c.bf16 %v931, %v928
      %v2493 = vpack.c.bf16 %v939, %v936
      %v2494 = vpack.c.bf16 %v947, %v944
      %s2495 = scalar_lea.vmem %s4, 16
      %v2496 = vld [vmem:[%s2495] sm:$0xf]
      %v2498 = vsel %vm950, %v2479, 0
      %v2501 = vsel %vm950, %v2480, 0
      %v2504 = vsel %vm950, %v2481, 0
      %v2507 = vsel %vm950, %v2482, 0
      %v2510 = vsel %vm950, %v2483, 0
      %v2513 = vsel %vm950, %v2484, 0
      %v2516 = vsel %vm950, %v2485, 0
      %v2519 = vsel %vm950, %v2486, 0
      %v2522 = vsel %vm950, %v2487, 0
      %v2525 = vsel %vm950, %v2488, 0
      %v2528 = vsel %vm950, %v2489, 0
      %v2531 = vsel %vm950, %v2490, 0
      %v2534 = vsel %vm950, %v2491, 0
      %v2537 = vsel %vm950, %v2492, 0
      %v2540 = vsel %vm950, %v2493, 0
      %v2543 = vsel %vm950, %v2494, 0
      %v2546 = vsel %vm1322, %v2496, 0
      %2548 = vmatprep.subr.bf16.mxu0 0
      %2549 = vmatpush1.bf16.msra.mxu0 %v2546
      %2550 = vmatprep.subr.bf16.mxu0 0
      %2551 = vmatpush1.bf16.msra.mxu0 0
      %2552 = vmatprep.subr.bf16.mxu0 0
      %2553 = vmatpush1.bf16.msra.mxu0 0
      %2554 = vmatprep.subr.bf16.mxu0 0
      %2555 = vmatpush1.bf16.msra.mxu0 0
      %2556 = vmatprep.subr.bf16.mxu0 0
      %2557 = vmatpush1.bf16.msra.mxu0 0
      %2558 = vmatprep.subr.bf16.mxu0 0
      %2559 = vmatpush1.bf16.msra.mxu0 0
      %2560 = vmatprep.subr.bf16.mxu0 0
      %2561 = vmatpush1.bf16.msra.mxu0 0
      %2562 = vmatprep.subr.bf16.mxu0 0
      %2563 = vmatpush1.bf16.msra.mxu0 0
      %2564 = vmatprep.subr.bf16.mxu0 0
      %2565 = vmatpush1.bf16.msra.mxu0 0
      %2566 = vmatprep.subr.bf16.mxu0 0
      %2567 = vmatpush1.bf16.msra.mxu0 0
      %2568 = vmatprep.subr.bf16.mxu0 0
      %2569 = vmatpush1.bf16.msra.mxu0 0
      %2570 = vmatprep.subr.bf16.mxu0 0
      %2571 = vmatpush1.bf16.msra.mxu0 0
      %2572 = vmatprep.subr.bf16.mxu0 0
      %2573 = vmatpush1.bf16.msra.mxu0 0
      %2574 = vmatprep.subr.bf16.mxu0 0
      %2575 = vmatpush1.bf16.msra.mxu0 0
      %2576 = vmatprep.subr.bf16.mxu0 0
      %2577 = vmatpush1.bf16.msra.mxu0 0
      %2578 = vmatprep.subr.bf16.mxu0 0
      %2579 = vmatpush1.bf16.msra.mxu0 0
      %2580 = vmatprep.mubr.bf16.mxu0 0
      %2581 = vmatmul.mubr.bf16.gmra.mrb[0].mxu0 %v2498
      %v2582 = vpop.f32.mrb[0].mxu0
      %v2583 = vadd.f32 0.0, %v2582
      %v2584 = vpop.f32.mrb[0].mxu0
      %v2585 = vpop.f32.mrb[0].mxu0
      %v2586 = vadd.f32 0.0, %v2585
      %v2587 = vpop.f32.mrb[0].mxu0
      %2588 = vmatprep.mubr.bf16.mxu0 0
      %2589 = vmatmul.mubr.bf16.gmra.mrb[0].mxu0 %v2501
      %v2590 = vpop.f32.mrb[0].mxu0
      %v2591 = vadd.f32 0.0, %v2590
      %v2592 = vpop.f32.mrb[0].mxu0
      %v2593 = vpop.f32.mrb[0].mxu0
      %v2594 = vadd.f32 0.0, %v2593
      %v2595 = vpop.f32.mrb[0].mxu0
      %2596 = vmatprep.mubr.bf16.mxu0 0
      %2597 = vmatmul.mubr.bf16.gmra.mrb[0].mxu0 %v2504
      %v2598 = vpop.f32.mrb[0].mxu0
      %v2599 = vadd.f32 0.0, %v2598
      %v2600 = vpop.f32.mrb[0].mxu0
      %v2601 = vpop.f32.mrb[0].mxu0
      %v2602 = vadd.f32 0.0, %v2601
      %v2603 = vpop.f32.mrb[0].mxu0
      %2604 = vmatprep.mubr.bf16.mxu0 0
      %2605 = vmatmul.mubr.bf16.gmra.mrb[0].mxu0 %v2507
      %v2606 = vpop.f32.mrb[0].mxu0
      %v2607 = vadd.f32 0.0, %v2606
      %v2608 = vpop.f32.mrb[0].mxu0
      %v2609 = vpop.f32.mrb[0].mxu0
      %v2610 = vadd.f32 0.0, %v2609
      %v2611 = vpop.f32.mrb[0].mxu0
      %2612 = vmatprep.mubr.bf16.mxu0 0
      %2613 = vmatmul.mubr.bf16.gmra.mrb[0].mxu0 %v2510
      %v2614 = vpop.f32.mrb[0].mxu0
      %v2615 = vadd.f32 0.0, %v2614
      %v2616 = vpop.f32.mrb[0].mxu0
      %v2617 = vpop.f32.mrb[0].mxu0
      %v2618 = vadd.f32 0.0, %v2617
      %v2619 = vpop.f32.mrb[0].mxu0
      %2620 = vmatprep.mubr.bf16.mxu0 0
      %2621 = vmatmul.mubr.bf16.gmra.mrb[0].mxu0 %v2513
      %v2622 = vpop.f32.mrb[0].mxu0
      %v2623 = vadd.f32 0.0, %v2622
      %v2624 = vpop.f32.mrb[0].mxu0
      %v2625 = vpop.f32.mrb[0].mxu0
      %v2626 = vadd.f32 0.0, %v2625
      %v2627 = vpop.f32.mrb[0].mxu0
      %2628 = vmatprep.mubr.bf16.mxu0 0
      %2629 = vmatmul.mubr.bf16.gmra.mrb[0].mxu0 %v2516
      %v2630 = vpop.f32.mrb[0].mxu0
      %v2631 = vadd.f32 0.0, %v2630
      %v2632 = vpop.f32.mrb[0].mxu0
      %v2633 = vpop.f32.mrb[0].mxu0
      %v2634 = vadd.f32 0.0, %v2633
      %v2635 = vpop.f32.mrb[0].mxu0
      %2636 = vmatprep.mubr.bf16.mxu0 0
      %2637 = vmatmul.mubr.bf16.gmra.mrb[0].mxu0 %v2519
      %v2638 = vpop.f32.mrb[0].mxu0
      %v2639 = vadd.f32 0.0, %v2638
      %v2640 = vpop.f32.mrb[0].mxu0
      %v2641 = vpop.f32.mrb[0].mxu0
      %v2642 = vadd.f32 0.0, %v2641
      %v2643 = vpop.f32.mrb[0].mxu0
      %2644 = vmatprep.mubr.bf16.mxu0 0
      %2645 = vmatmul.mubr.bf16.gmra.mrb[0].mxu0 %v2522
      %v2646 = vpop.f32.mrb[0].mxu0
      %v2647 = vadd.f32 0.0, %v2646
      %v2648 = vpop.f32.mrb[0].mxu0
      %v2649 = vpop.f32.mrb[0].mxu0
      %v2650 = vadd.f32 0.0, %v2649
      %v2651 = vpop.f32.mrb[0].mxu0
      %2652 = vmatprep.mubr.bf16.mxu0 0
      %2653 = vmatmul.mubr.bf16.gmra.mrb[0].mxu0 %v2525
      %v2654 = vpop.f32.mrb[0].mxu0
      %v2655 = vadd.f32 0.0, %v2654
      %v2656 = vpop.f32.mrb[0].mxu0
      %v2657 = vpop.f32.mrb[0].mxu0
      %v2658 = vadd.f32 0.0, %v2657
      %v2659 = vpop.f32.mrb[0].mxu0
      %2660 = vmatprep.mubr.bf16.mxu0 0
      %2661 = vmatmul.mubr.bf16.gmra.mrb[0].mxu0 %v2528
      %v2662 = vpop.f32.mrb[0].mxu0
      %v2663 = vadd.f32 0.0, %v2662
      %v2664 = vpop.f32.mrb[0].mxu0
      %v2665 = vpop.f32.mrb[0].mxu0
      %v2666 = vadd.f32 0.0, %v2665
      %v2667 = vpop.f32.mrb[0].mxu0
      %2668 = vmatprep.mubr.bf16.mxu0 0
      %2669 = vmatmul.mubr.bf16.gmra.mrb[0].mxu0 %v2531
      %v2670 = vpop.f32.mrb[0].mxu0
      %v2671 = vadd.f32 0.0, %v2670
      %v2672 = vpop.f32.mrb[0].mxu0
      %v2673 = vpop.f32.mrb[0].mxu0
      %v2674 = vadd.f32 0.0, %v2673
      %v2675 = vpop.f32.mrb[0].mxu0
      %2676 = vmatprep.mubr.bf16.mxu0 0
      %2677 = vmatmul.mubr.bf16.gmra.mrb[0].mxu0 %v2534
      %v2678 = vpop.f32.mrb[0].mxu0
      %v2679 = vadd.f32 0.0, %v2678
      %v2680 = vpop.f32.mrb[0].mxu0
      %v2681 = vpop.f32.mrb[0].mxu0
      %v2682 = vadd.f32 0.0, %v2681
      %v2683 = vpop.f32.mrb[0].mxu0
      %2684 = vmatprep.mubr.bf16.mxu0 0
      %2685 = vmatmul.mubr.bf16.gmra.mrb[0].mxu0 %v2537
      %v2686 = vpop.f32.mrb[0].mxu0
      %v2687 = vadd.f32 0.0, %v2686
      %v2688 = vpop.f32.mrb[0].mxu0
      %v2689 = vpop.f32.mrb[0].mxu0
      %v2690 = vadd.f32 0.0, %v2689
      %v2691 = vpop.f32.mrb[0].mxu0
      %2692 = vmatprep.mubr.bf16.mxu0 0
      %2693 = vmatmul.mubr.bf16.gmra.mrb[0].mxu0 %v2540
      %v2694 = vpop.f32.mrb[0].mxu0
      %v2695 = vadd.f32 0.0, %v2694
      %v2696 = vpop.f32.mrb[0].mxu0
      %v2697 = vpop.f32.mrb[0].mxu0
      %v2698 = vadd.f32 0.0, %v2697
      %v2699 = vpop.f32.mrb[0].mxu0
      %2700 = vmatprep.mubr.bf16.mxu0 0
      %2701 = vmatmul.mubr.bf16.gmra.mrb[0].mxu0 %v2543
      %v2702 = vpop.f32.mrb[0].mxu0
      %v2703 = vadd.f32 0.0, %v2702
      %v2704 = vpop.f32.mrb[0].mxu0
      %v2705 = vpop.f32.mrb[0].mxu0
      %v2706 = vadd.f32 0.0, %v2705
      %v2707 = vpop.f32.mrb[0].mxu0
      %2708 = vdwg.mxu0
      %v2709 = vadd.f32 %v2447, %v2583
      %v2710 = vadd.f32 %v2448, %v2586
      %v2711 = vadd.f32 %v2449, %v2591
      %v2712 = vadd.f32 %v2450, %v2594
      %v2713 = vadd.f32 %v2451, %v2599
      %v2714 = vadd.f32 %v2452, %v2602
      %v2715 = vadd.f32 %v2453, %v2607
      %v2716 = vadd.f32 %v2454, %v2610
      %v2717 = vadd.f32 %v2455, %v2615
      %v2718 = vadd.f32 %v2456, %v2618
      %v2719 = vadd.f32 %v2457, %v2623
      %v2720 = vadd.f32 %v2458, %v2626
      %v2721 = vadd.f32 %v2459, %v2631
      %v2722 = vadd.f32 %v2460, %v2634
      %v2723 = vadd.f32 %v2461, %v2639
      %v2724 = vadd.f32 %v2462, %v2642
      %v2725 = vadd.f32 %v2463, %v2647
      %v2726 = vadd.f32 %v2464, %v2650
      %v2727 = vadd.f32 %v2465, %v2655
      %v2728 = vadd.f32 %v2466, %v2658
      %v2729 = vadd.f32 %v2467, %v2663
      %v2730 = vadd.f32 %v2468, %v2666
      %v2731 = vadd.f32 %v2469, %v2671
      %v2732 = vadd.f32 %v2470, %v2674
      %v2733 = vadd.f32 %v2471, %v2679
      %v2734 = vadd.f32 %v2472, %v2682
      %v2735 = vadd.f32 %v2473, %v2687
      %v2736 = vadd.f32 %v2474, %v2690
      %v2737 = vadd.f32 %v2475, %v2695
      %v2738 = vadd.f32 %v2476, %v2698
      %v2739 = vadd.f32 %v2477, %v2703
      %v2740 = vadd.f32 %v2478, %v2706
      %v2741 = vld [vmem:[#allocation2 + $0x19] sm:$0xff]
      %v2742 = vld [vmem:[#allocation2 + $0x21] sm:$0xff]
      %v2743 = vld [vmem:[#allocation2 + $0x29] sm:$0xff]
      %v2744 = vld [vmem:[#allocation2 + $0x31] sm:$0xff]
      %v2745 = vld [vmem:[#allocation2 + $0x39] sm:$0xff]
      %v2746 = vld [vmem:[#allocation2 + $0x41] sm:$0xff]
      %v2747 = vld [vmem:[#allocation2 + $0x49] sm:$0xff]
      %v2748 = vld [vmem:[#allocation2 + $0x51] sm:$0xff]
      %v2749 = vld [vmem:[#allocation2 + $0x59] sm:$0xff]
      %v2750 = vld [vmem:[#allocation2 + $0x61] sm:$0xff]
      %v2751 = vld [vmem:[#allocation2 + $0x69] sm:$0xff]
      %v2752 = vld [vmem:[#allocation2 + $0x71] sm:$0xff]
      %v2753 = vld [vmem:[#allocation2 + $0x79] sm:$0xff]
      %v2754 = vld [vmem:[#allocation2 + $0x81] sm:$0xff]
      %v2755 = vld [vmem:[#allocation2 + $0x89] sm:$0xff]
      %v2756 = vld [vmem:[#allocation2 + $0x91] sm:$0xff]
      %v2757 = vld [vmem:[#allocation2 + $0x99] sm:$0xff]
      %v2758 = vld [vmem:[#allocation2 + $0xa1] sm:$0xff]
      %v2759 = vld [vmem:[#allocation2 + $0xa9] sm:$0xff]
      %v2760 = vld [vmem:[#allocation2 + $0xb1] sm:$0xff]
      %v2761 = vld [vmem:[#allocation2 + $0xb9] sm:$0xff]
      %v2762 = vld [vmem:[#allocation2 + $0xc1] sm:$0xff]
      %v2763 = vld [vmem:[#allocation2 + $0xc9] sm:$0xff]
      %v2764 = vld [vmem:[#allocation2 + $0xd1] sm:$0xff]
      %v2765 = vld [vmem:[#allocation2 + $0xd9] sm:$0xff]
      %v2766 = vld [vmem:[#allocation2 + $0xe1] sm:$0xff]
      %v2767 = vld [vmem:[#allocation2 + $0xe9] sm:$0xff]
      %v2768 = vld [vmem:[#allocation2 + $0xf1] sm:$0xff]
      %v2769 = vld [vmem:[#allocation2 + $0xf9] sm:$0xff]
      %v2770 = vld [vmem:[#allocation2 + $0x101] sm:$0xff]
      %v2771 = vld [vmem:[#allocation2 + $0x109] sm:$0xff]
      %v2772 = vld [vmem:[#allocation2 + $0x111] sm:$0xff]
      %v2773 = vmul.f32 %v2741, %v1733
      %v2774 = vmul.f32 %v2742, %v1737
      %v2775 = vmul.f32 %v2743, %v1741
      %v2776 = vmul.f32 %v2744, %v1745
      %v2777 = vmul.f32 %v2745, %v1749
      %v2778 = vmul.f32 %v2746, %v1753
      %v2779 = vmul.f32 %v2747, %v1757
      %v2780 = vmul.f32 %v2748, %v1761
      %v2781 = vmul.f32 %v2749, %v1765
      %v2782 = vmul.f32 %v2750, %v1769
      %v2783 = vmul.f32 %v2751, %v1773
      %v2784 = vmul.f32 %v2752, %v1777
      %v2785 = vmul.f32 %v2753, %v1781
      %v2786 = vmul.f32 %v2754, %v1785
      %v2787 = vmul.f32 %v2755, %v1789
      %v2788 = vmul.f32 %v2756, %v1793
      %v2789 = vmul.f32 %v2757, %v1797
      %v2790 = vmul.f32 %v2758, %v1801
      %v2791 = vmul.f32 %v2759, %v1805
      %v2792 = vmul.f32 %v2760, %v1809
      %v2793 = vmul.f32 %v2761, %v1813
      %v2794 = vmul.f32 %v2762, %v1817
      %v2795 = vmul.f32 %v2763, %v1821
      %v2796 = vmul.f32 %v2764, %v1825
      %v2797 = vmul.f32 %v2765, %v1829
      %v2798 = vmul.f32 %v2766, %v1833
      %v2799 = vmul.f32 %v2767, %v1837
      %v2800 = vmul.f32 %v2768, %v1841
      %v2801 = vmul.f32 %v2769, %v1845
      %v2802 = vmul.f32 %v2770, %v1849
      %v2803 = vmul.f32 %v2771, %v1853
      %v2804 = vmul.f32 %v2772, %v1857
      %v2805 = vpack.c.bf16 %v2774, %v2773
      %v2806 = vpack.c.bf16 %v2776, %v2775
      %v2807 = vpack.c.bf16 %v2778, %v2777
      %v2808 = vpack.c.bf16 %v2780, %v2779
      %v2809 = vpack.c.bf16 %v2782, %v2781
      %v2810 = vpack.c.bf16 %v2784, %v2783
      %v2811 = vpack.c.bf16 %v2786, %v2785
      %v2812 = vpack.c.bf16 %v2788, %v2787
      %v2813 = vpack.c.bf16 %v2790, %v2789
      %v2814 = vpack.c.bf16 %v2792, %v2791
      %v2815 = vpack.c.bf16 %v2794, %v2793
      %v2816 = vpack.c.bf16 %v2796, %v2795
      %v2817 = vpack.c.bf16 %v2798, %v2797
      %v2818 = vpack.c.bf16 %v2800, %v2799
      %v2819 = vpack.c.bf16 %v2802, %v2801
      %v2820 = vpack.c.bf16 %v2804, %v2803
      %s2821 = scalar_lea.vmem %s4, 20
      %v2822 = vld [vmem:[%s2821] sm:$0xf]
      %v2824 = vsel %vm950, %v2805, 0
      %v2827 = vsel %vm950, %v2806, 0
      %v2830 = vsel %vm950, %v2807, 0
      %v2833 = vsel %vm950, %v2808, 0
      %v2836 = vsel %vm950, %v2809, 0
      %v2839 = vsel %vm950, %v2810, 0
      %v2842 = vsel %vm950, %v2811, 0
      %v2845 = vsel %vm950, %v2812, 0
      %v2848 = vsel %vm950, %v2813, 0
      %v2851 = vsel %vm950, %v2814, 0
      %v2854 = vsel %vm950, %v2815, 0
      %v2857 = vsel %vm950, %v2816, 0
      %v2860 = vsel %vm950, %v2817, 0
      %v2863 = vsel %vm950, %v2818, 0
      %v2866 = vsel %vm950, %v2819, 0
      %v2869 = vsel %vm950, %v2820, 0
      %v2872 = vsel %vm1322, %v2822, 0
      %2874 = vmatprep.subr.bf16.mxu0 0
      %2875 = vmatpush1.bf16.msra.mxu0 %v2872
      %2876 = vmatprep.subr.bf16.mxu0 0
      %2877 = vmatpush1.bf16.msra.mxu0 0
      %2878 = vmatprep.subr.bf16.mxu0 0
      %2879 = vmatpush1.bf16.msra.mxu0 0
      %2880 = vmatprep.subr.bf16.mxu0 0
      %2881 = vmatpush1.bf16.msra.mxu0 0
      %2882 = vmatprep.subr.bf16.mxu0 0
      %2883 = vmatpush1.bf16.msra.mxu0 0
      %2884 = vmatprep.subr.bf16.mxu0 0
      %2885 = vmatpush1.bf16.msra.mxu0 0
      %2886 = vmatprep.subr.bf16.mxu0 0
      %2887 = vmatpush1.bf16.msra.mxu0 0
      %2888 = vmatprep.subr.bf16.mxu0 0
      %2889 = vmatpush1.bf16.msra.mxu0 0
      %2890 = vmatprep.subr.bf16.mxu0 0
      %2891 = vmatpush1.bf16.msra.mxu0 0
      %2892 = vmatprep.subr.bf16.mxu0 0
      %2893 = vmatpush1.bf16.msra.mxu0 0
      %2894 = vmatprep.subr.bf16.mxu0 0
      %2895 = vmatpush1.bf16.msra.mxu0 0
      %2896 = vmatprep.subr.bf16.mxu0 0
      %2897 = vmatpush1.bf16.msra.mxu0 0
      %2898 = vmatprep.subr.bf16.mxu0 0
      %2899 = vmatpush1.bf16.msra.mxu0 0
      %2900 = vmatprep.subr.bf16.mxu0 0
      %2901 = vmatpush1.bf16.msra.mxu0 0
      %2902 = vmatprep.subr.bf16.mxu0 0
      %2903 = vmatpush1.bf16.msra.mxu0 0
      %2904 = vmatprep.subr.bf16.mxu0 0
      %2905 = vmatpush1.bf16.msra.mxu0 0
      %2906 = vmatprep.mubr.bf16.mxu0 0
      %2907 = vmatmul.mubr.bf16.gmra.mrb[0].mxu0 %v2824
      %v2908 = vpop.f32.mrb[0].mxu0
      %v2909 = vadd.f32 0.0, %v2908
      %v2910 = vpop.f32.mrb[0].mxu0
      %v2911 = vpop.f32.mrb[0].mxu0
      %v2912 = vadd.f32 0.0, %v2911
      %v2913 = vpop.f32.mrb[0].mxu0
      %2914 = vmatprep.mubr.bf16.mxu0 0
      %2915 = vmatmul.mubr.bf16.gmra.mrb[0].mxu0 %v2827
      %v2916 = vpop.f32.mrb[0].mxu0
      %v2917 = vadd.f32 0.0, %v2916
      %v2918 = vpop.f32.mrb[0].mxu0
      %v2919 = vpop.f32.mrb[0].mxu0
      %v2920 = vadd.f32 0.0, %v2919
      %v2921 = vpop.f32.mrb[0].mxu0
      %2922 = vmatprep.mubr.bf16.mxu0 0
      %2923 = vmatmul.mubr.bf16.gmra.mrb[0].mxu0 %v2830
      %v2924 = vpop.f32.mrb[0].mxu0
      %v2925 = vadd.f32 0.0, %v2924
      %v2926 = vpop.f32.mrb[0].mxu0
      %v2927 = vpop.f32.mrb[0].mxu0
      %v2928 = vadd.f32 0.0, %v2927
      %v2929 = vpop.f32.mrb[0].mxu0
      %2930 = vmatprep.mubr.bf16.mxu0 0
      %2931 = vmatmul.mubr.bf16.gmra.mrb[0].mxu0 %v2833
      %v2932 = vpop.f32.mrb[0].mxu0
      %v2933 = vadd.f32 0.0, %v2932
      %v2934 = vpop.f32.mrb[0].mxu0
      %v2935 = vpop.f32.mrb[0].mxu0
      %v2936 = vadd.f32 0.0, %v2935
      %v2937 = vpop.f32.mrb[0].mxu0
      %2938 = vmatprep.mubr.bf16.mxu0 0
      %2939 = vmatmul.mubr.bf16.gmra.mrb[0].mxu0 %v2836
      %v2940 = vpop.f32.mrb[0].mxu0
      %v2941 = vadd.f32 0.0, %v2940
      %v2942 = vpop.f32.mrb[0].mxu0
      %v2943 = vpop.f32.mrb[0].mxu0
      %v2944 = vadd.f32 0.0, %v2943
      %v2945 = vpop.f32.mrb[0].mxu0
      %2946 = vmatprep.mubr.bf16.mxu0 0
      %2947 = vmatmul.mubr.bf16.gmra.mrb[0].mxu0 %v2839
      %v2948 = vpop.f32.mrb[0].mxu0
      %v2949 = vadd.f32 0.0, %v2948
      %v2950 = vpop.f32.mrb[0].mxu0
      %v2951 = vpop.f32.mrb[0].mxu0
      %v2952 = vadd.f32 0.0, %v2951
      %v2953 = vpop.f32.mrb[0].mxu0
      %2954 = vmatprep.mubr.bf16.mxu0 0
      %2955 = vmatmul.mubr.bf16.gmra.mrb[0].mxu0 %v2842
      %v2956 = vpop.f32.mrb[0].mxu0
      %v2957 = vadd.f32 0.0, %v2956
      %v2958 = vpop.f32.mrb[0].mxu0
      %v2959 = vpop.f32.mrb[0].mxu0
      %v2960 = vadd.f32 0.0, %v2959
      %v2961 = vpop.f32.mrb[0].mxu0
      %2962 = vmatprep.mubr.bf16.mxu0 0
      %2963 = vmatmul.mubr.bf16.gmra.mrb[0].mxu0 %v2845
      %v2964 = vpop.f32.mrb[0].mxu0
      %v2965 = vadd.f32 0.0, %v2964
      %v2966 = vpop.f32.mrb[0].mxu0
      %v2967 = vpop.f32.mrb[0].mxu0
      %v2968 = vadd.f32 0.0, %v2967
      %v2969 = vpop.f32.mrb[0].mxu0
      %2970 = vmatprep.mubr.bf16.mxu0 0
      %2971 = vmatmul.mubr.bf16.gmra.mrb[0].mxu0 %v2848
      %v2972 = vpop.f32.mrb[0].mxu0
      %v2973 = vadd.f32 0.0, %v2972
      %v2974 = vpop.f32.mrb[0].mxu0
      %v2975 = vpop.f32.mrb[0].mxu0
      %v2976 = vadd.f32 0.0, %v2975
      %v2977 = vpop.f32.mrb[0].mxu0
      %2978 = vmatprep.mubr.bf16.mxu0 0
      %2979 = vmatmul.mubr.bf16.gmra.mrb[0].mxu0 %v2851
      %v2980 = vpop.f32.mrb[0].mxu0
      %v2981 = vadd.f32 0.0, %v2980
      %v2982 = vpop.f32.mrb[0].mxu0
      %v2983 = vpop.f32.mrb[0].mxu0
      %v2984 = vadd.f32 0.0, %v2983
      %v2985 = vpop.f32.mrb[0].mxu0
      %2986 = vmatprep.mubr.bf16.mxu0 0
      %2987 = vmatmul.mubr.bf16.gmra.mrb[0].mxu0 %v2854
      %v2988 = vpop.f32.mrb[0].mxu0
      %v2989 = vadd.f32 0.0, %v2988
      %v2990 = vpop.f32.mrb[0].mxu0
      %v2991 = vpop.f32.mrb[0].mxu0
      %v2992 = vadd.f32 0.0, %v2991
      %v2993 = vpop.f32.mrb[0].mxu0
      %2994 = vmatprep.mubr.bf16.mxu0 0
      %2995 = vmatmul.mubr.bf16.gmra.mrb[0].mxu0 %v2857
      %v2996 = vpop.f32.mrb[0].mxu0
      %v2997 = vadd.f32 0.0, %v2996
      %v2998 = vpop.f32.mrb[0].mxu0
      %v2999 = vpop.f32.mrb[0].mxu0
      %v3000 = vadd.f32 0.0, %v2999
      %v3001 = vpop.f32.mrb[0].mxu0
      %3002 = vmatprep.mubr.bf16.mxu0 0
      %3003 = vmatmul.mubr.bf16.gmra.mrb[0].mxu0 %v2860
      %v3004 = vpop.f32.mrb[0].mxu0
      %v3005 = vadd.f32 0.0, %v3004
      %v3006 = vpop.f32.mrb[0].mxu0
      %v3007 = vpop.f32.mrb[0].mxu0
      %v3008 = vadd.f32 0.0, %v3007
      %v3009 = vpop.f32.mrb[0].mxu0
      %3010 = vmatprep.mubr.bf16.mxu0 0
      %3011 = vmatmul.mubr.bf16.gmra.mrb[0].mxu0 %v2863
      %v3012 = vpop.f32.mrb[0].mxu0
      %v3013 = vadd.f32 0.0, %v3012
      %v3014 = vpop.f32.mrb[0].mxu0
      %v3015 = vpop.f32.mrb[0].mxu0
      %v3016 = vadd.f32 0.0, %v3015
      %v3017 = vpop.f32.mrb[0].mxu0
      %3018 = vmatprep.mubr.bf16.mxu0 0
      %3019 = vmatmul.mubr.bf16.gmra.mrb[0].mxu0 %v2866
      %v3020 = vpop.f32.mrb[0].mxu0
      %v3021 = vadd.f32 0.0, %v3020
      %v3022 = vpop.f32.mrb[0].mxu0
      %v3023 = vpop.f32.mrb[0].mxu0
      %v3024 = vadd.f32 0.0, %v3023
      %v3025 = vpop.f32.mrb[0].mxu0
      %3026 = vmatprep.mubr.bf16.mxu0 0
      %3027 = vmatmul.mubr.bf16.gmra.mrb[0].mxu0 %v2869
      %v3028 = vpop.f32.mrb[0].mxu0
      %v3029 = vadd.f32 0.0, %v3028
      %v3030 = vpop.f32.mrb[0].mxu0
      %v3031 = vpop.f32.mrb[0].mxu0
      %v3032 = vadd.f32 0.0, %v3031
      %v3033 = vpop.f32.mrb[0].mxu0
      %3034 = vdwg.mxu0
      %v3035 = vadd.f32 %v2709, %v2909
      %v3036 = vadd.f32 %v2710, %v2912
      %v3037 = vadd.f32 %v2711, %v2917
      %v3038 = vadd.f32 %v2712, %v2920
      %v3039 = vadd.f32 %v2713, %v2925
      %v3040 = vadd.f32 %v2714, %v2928
      %v3041 = vadd.f32 %v2715, %v2933
      %v3042 = vadd.f32 %v2716, %v2936
      %v3043 = vadd.f32 %v2717, %v2941
      %v3044 = vadd.f32 %v2718, %v2944
      %v3045 = vadd.f32 %v2719, %v2949
      %v3046 = vadd.f32 %v2720, %v2952
      %v3047 = vadd.f32 %v2721, %v2957
      %v3048 = vadd.f32 %v2722, %v2960
      %v3049 = vadd.f32 %v2723, %v2965
      %v3050 = vadd.f32 %v2724, %v2968
      %v3051 = vadd.f32 %v2725, %v2973
      %v3052 = vadd.f32 %v2726, %v2976
      %v3053 = vadd.f32 %v2727, %v2981
      %v3054 = vadd.f32 %v2728, %v2984
      %v3055 = vadd.f32 %v2729, %v2989
      %v3056 = vadd.f32 %v2730, %v2992
      %v3057 = vadd.f32 %v2731, %v2997
      %v3058 = vadd.f32 %v2732, %v3000
      %v3059 = vadd.f32 %v2733, %v3005
      %v3060 = vadd.f32 %v2734, %v3008
      %v3061 = vadd.f32 %v2735, %v3013
      %v3062 = vadd.f32 %v2736, %v3016
      %v3063 = vadd.f32 %v2737, %v3021
      %v3064 = vadd.f32 %v2738, %v3024
      %v3065 = vadd.f32 %v2739, %v3029
      %v3066 = vadd.f32 %v2740, %v3032
      %v3067 = vld [vmem:[#allocation2 + $0x27] sm:$0xff]
      %v3068 = vld [vmem:[#allocation2 + $0x2f] sm:$0xff]
      %v3069 = vld [vmem:[#allocation2 + $0x37] sm:$0xff]
      %v3070 = vld [vmem:[#allocation2 + $0x3f] sm:$0xff]
      %v3071 = vld [vmem:[#allocation2 + $0x47] sm:$0xff]
      %v3072 = vld [vmem:[#allocation2 + $0x4f] sm:$0xff]
      %v3073 = vld [vmem:[#allocation2 + $0x57] sm:$0xff]
      %v3074 = vld [vmem:[#allocation2 + $0x5f] sm:$0xff]
      %v3075 = vld [vmem:[#allocation2 + $0x67] sm:$0xff]
      %v3076 = vld [vmem:[#allocation2 + $0x6f] sm:$0xff]
      %v3077 = vld [vmem:[#allocation2 + $0x77] sm:$0xff]
      %v3078 = vld [vmem:[#allocation2 + $0x7f] sm:$0xff]
      %v3079 = vld [vmem:[#allocation2 + $0x87] sm:$0xff]
      %v3080 = vld [vmem:[#allocation2 + $0x8f] sm:$0xff]
      %v3081 = vld [vmem:[#allocation2 + $0x97] sm:$0xff]
      %v3082 = vld [vmem:[#allocation2 + $0x9f] sm:$0xff]
      %v3083 = vld [vmem:[#allocation2 + $0xa7] sm:$0xff]
      %v3084 = vld [vmem:[#allocation2 + $0xaf] sm:$0xff]
      %v3085 = vld [vmem:[#allocation2 + $0xb7] sm:$0xff]
      %v3086 = vld [vmem:[#allocation2 + $0xbf] sm:$0xff]
      %v3087 = vld [vmem:[#allocation2 + $0xc7] sm:$0xff]
      %v3088 = vld [vmem:[#allocation2 + $0xcf] sm:$0xff]
      %v3089 = vld [vmem:[#allocation2 + $0xd7] sm:$0xff]
      %v3090 = vld [vmem:[#allocation2 + $0xdf] sm:$0xff]
      %v3091 = vld [vmem:[#allocation2 + $0xe7] sm:$0xff]
      %v3092 = vld [vmem:[#allocation2 + $0xef] sm:$0xff]
      %v3093 = vld [vmem:[#allocation2 + $0xf7] sm:$0xff]
      %v3094 = vld [vmem:[#allocation2 + $0xff] sm:$0xff]
      %v3095 = vld [vmem:[#allocation2 + $0x107] sm:$0xff]
      %v3096 = vld [vmem:[#allocation2 + $0x10f] sm:$0xff]
      %v3097 = vld [vmem:[#allocation2 + $0x117] sm:$0xff]
      %v3098 = vld [vmem:[#allocation2 + $0x11f] sm:$0xff]
      %v3099 = vmul.f32 %v3067, %v1018
      %v3100 = vmul.f32 %v3068, %v1023
      %v3101 = vmul.f32 %v3069, %v1028
      %v3102 = vmul.f32 %v3070, %v1033
      %v3103 = vmul.f32 %v3071, %v1038
      %v3104 = vmul.f32 %v3072, %v1043
      %v3105 = vmul.f32 %v3073, %v1048
      %v3106 = vmul.f32 %v3074, %v1053
      %v3107 = vmul.f32 %v3075, %v1058
      %v3108 = vmul.f32 %v3076, %v1063
      %v3109 = vmul.f32 %v3077, %v1068
      %v3110 = vmul.f32 %v3078, %v1073
      %v3111 = vmul.f32 %v3079, %v1078
      %v3112 = vmul.f32 %v3080, %v1083
      %v3113 = vmul.f32 %v3081, %v1088
      %v3114 = vmul.f32 %v3082, %v1093
      %v3115 = vmul.f32 %v3083, %v1098
      %v3116 = vmul.f32 %v3084, %v1103
      %v3117 = vmul.f32 %v3085, %v1108
      %v3118 = vmul.f32 %v3086, %v1113
      %v3119 = vmul.f32 %v3087, %v1118
      %v3120 = vmul.f32 %v3088, %v1123
      %v3121 = vmul.f32 %v3089, %v1128
      %v3122 = vmul.f32 %v3090, %v1133
      %v3123 = vmul.f32 %v3091, %v1138
      %v3124 = vmul.f32 %v3092, %v1143
      %v3125 = vmul.f32 %v3093, %v1148
      %v3126 = vmul.f32 %v3094, %v1153
      %v3127 = vmul.f32 %v3095, %v1158
      %v3128 = vmul.f32 %v3096, %v1163
      %v3129 = vmul.f32 %v3097, %v1168
      %v3130 = vmul.f32 %v3098, %v1173
      %v3131 = vpack.c.bf16 %v3100, %v3099
      %v3132 = vpack.c.bf16 %v3102, %v3101
      %v3133 = vpack.c.bf16 %v3104, %v3103
      %v3134 = vpack.c.bf16 %v3106, %v3105
      %v3135 = vpack.c.bf16 %v3108, %v3107
      %v3136 = vpack.c.bf16 %v3110, %v3109
      %v3137 = vpack.c.bf16 %v3112, %v3111
      %v3138 = vpack.c.bf16 %v3114, %v3113
      %v3139 = vpack.c.bf16 %v3116, %v3115
      %v3140 = vpack.c.bf16 %v3118, %v3117
      %v3141 = vpack.c.bf16 %v3120, %v3119
      %v3142 = vpack.c.bf16 %v3122, %v3121
      %v3143 = vpack.c.bf16 %v3124, %v3123
      %v3144 = vpack.c.bf16 %v3126, %v3125
      %v3145 = vpack.c.bf16 %v3128, %v3127
      %v3146 = vpack.c.bf16 %v3130, %v3129
      %s3147 = scalar_lea.vmem %s4, 24
      %v3148 = vld [vmem:[%s3147] sm:$0xf]
      %v3150 = vsel %vm950, %v3131, 0
      %v3153 = vsel %vm950, %v3132, 0
      %v3156 = vsel %vm950, %v3133, 0
      %v3159 = vsel %vm950, %v3134, 0
      %v3162 = vsel %vm950, %v3135, 0
      %v3165 = vsel %vm950, %v3136, 0
      %v3168 = vsel %vm950, %v3137, 0
      %v3171 = vsel %vm950, %v3138, 0
      %v3174 = vsel %vm950, %v3139, 0
      %v3177 = vsel %vm950, %v3140, 0
      %v3180 = vsel %vm950, %v3141, 0
      %v3183 = vsel %vm950, %v3142, 0
      %v3186 = vsel %vm950, %v3143, 0
      %v3189 = vsel %vm950, %v3144, 0
      %v3192 = vsel %vm950, %v3145, 0
      %v3195 = vsel %vm950, %v3146, 0
      %v3198 = vsel %vm1322, %v3148, 0
      %3200 = vmatprep.subr.bf16.mxu0 0
      %3201 = vmatpush1.bf16.msra.mxu0 %v3198
      %3202 = vmatprep.subr.bf16.mxu0 0
      %3203 = vmatpush1.bf16.msra.mxu0 0
      %3204 = vmatprep.subr.bf16.mxu0 0
      %3205 = vmatpush1.bf16.msra.mxu0 0
      %3206 = vmatprep.subr.bf16.mxu0 0
      %3207 = vmatpush1.bf16.msra.mxu0 0
      %3208 = vmatprep.subr.bf16.mxu0 0
      %3209 = vmatpush1.bf16.msra.mxu0 0
      %3210 = vmatprep.subr.bf16.mxu0 0
      %3211 = vmatpush1.bf16.msra.mxu0 0
      %3212 = vmatprep.subr.bf16.mxu0 0
      %3213 = vmatpush1.bf16.msra.mxu0 0
      %3214 = vmatprep.subr.bf16.mxu0 0
      %3215 = vmatpush1.bf16.msra.mxu0 0
      %3216 = vmatprep.subr.bf16.mxu0 0
      %3217 = vmatpush1.bf16.msra.mxu0 0
      %3218 = vmatprep.subr.bf16.mxu0 0
      %3219 = vmatpush1.bf16.msra.mxu0 0
      %3220 = vmatprep.subr.bf16.mxu0 0
      %3221 = vmatpush1.bf16.msra.mxu0 0
      %3222 = vmatprep.subr.bf16.mxu0 0
      %3223 = vmatpush1.bf16.msra.mxu0 0
      %3224 = vmatprep.subr.bf16.mxu0 0
      %3225 = vmatpush1.bf16.msra.mxu0 0
      %3226 = vmatprep.subr.bf16.mxu0 0
      %3227 = vmatpush1.bf16.msra.mxu0 0
      %3228 = vmatprep.subr.bf16.mxu0 0
      %3229 = vmatpush1.bf16.msra.mxu0 0
      %3230 = vmatprep.subr.bf16.mxu0 0
      %3231 = vmatpush1.bf16.msra.mxu0 0
      %3232 = vmatprep.mubr.bf16.mxu0 0
      %3233 = vmatmul.mubr.bf16.gmra.mrb[0].mxu0 %v3150
      %v3234 = vpop.f32.mrb[0].mxu0
      %v3235 = vadd.f32 0.0, %v3234
      %v3236 = vpop.f32.mrb[0].mxu0
      %v3237 = vpop.f32.mrb[0].mxu0
      %v3238 = vadd.f32 0.0, %v3237
      %v3239 = vpop.f32.mrb[0].mxu0
      %3240 = vmatprep.mubr.bf16.mxu0 0
      %3241 = vmatmul.mubr.bf16.gmra.mrb[0].mxu0 %v3153
      %v3242 = vpop.f32.mrb[0].mxu0
      %v3243 = vadd.f32 0.0, %v3242
      %v3244 = vpop.f32.mrb[0].mxu0
      %v3245 = vpop.f32.mrb[0].mxu0
      %v3246 = vadd.f32 0.0, %v3245
      %v3247 = vpop.f32.mrb[0].mxu0
      %3248 = vmatprep.mubr.bf16.mxu0 0
      %3249 = vmatmul.mubr.bf16.gmra.mrb[0].mxu0 %v3156
      %v3250 = vpop.f32.mrb[0].mxu0
      %v3251 = vadd.f32 0.0, %v3250
      %v3252 = vpop.f32.mrb[0].mxu0
      %v3253 = vpop.f32.mrb[0].mxu0
      %v3254 = vadd.f32 0.0, %v3253
      %v3255 = vpop.f32.mrb[0].mxu0
      %3256 = vmatprep.mubr.bf16.mxu0 0
      %3257 = vmatmul.mubr.bf16.gmra.mrb[0].mxu0 %v3159
      %v3258 = vpop.f32.mrb[0].mxu0
      %v3259 = vadd.f32 0.0, %v3258
      %v3260 = vpop.f32.mrb[0].mxu0
      %v3261 = vpop.f32.mrb[0].mxu0
      %v3262 = vadd.f32 0.0, %v3261
      %v3263 = vpop.f32.mrb[0].mxu0
      %3264 = vmatprep.mubr.bf16.mxu0 0
      %3265 = vmatmul.mubr.bf16.gmra.mrb[0].mxu0 %v3162
      %v3266 = vpop.f32.mrb[0].mxu0
      %v3267 = vadd.f32 0.0, %v3266
      %v3268 = vpop.f32.mrb[0].mxu0
      %v3269 = vpop.f32.mrb[0].mxu0
      %v3270 = vadd.f32 0.0, %v3269
      %v3271 = vpop.f32.mrb[0].mxu0
      %3272 = vmatprep.mubr.bf16.mxu0 0
      %3273 = vmatmul.mubr.bf16.gmra.mrb[0].mxu0 %v3165
      %v3274 = vpop.f32.mrb[0].mxu0
      %v3275 = vadd.f32 0.0, %v3274
      %v3276 = vpop.f32.mrb[0].mxu0
      %v3277 = vpop.f32.mrb[0].mxu0
      %v3278 = vadd.f32 0.0, %v3277
      %v3279 = vpop.f32.mrb[0].mxu0
      %3280 = vmatprep.mubr.bf16.mxu0 0
      %3281 = vmatmul.mubr.bf16.gmra.mrb[0].mxu0 %v3168
      %v3282 = vpop.f32.mrb[0].mxu0
      %v3283 = vadd.f32 0.0, %v3282
      %v3284 = vpop.f32.mrb[0].mxu0
      %v3285 = vpop.f32.mrb[0].mxu0
      %v3286 = vadd.f32 0.0, %v3285
      %v3287 = vpop.f32.mrb[0].mxu0
      %3288 = vmatprep.mubr.bf16.mxu0 0
      %3289 = vmatmul.mubr.bf16.gmra.mrb[0].mxu0 %v3171
      %v3290 = vpop.f32.mrb[0].mxu0
      %v3291 = vadd.f32 0.0, %v3290
      %v3292 = vpop.f32.mrb[0].mxu0
      %v3293 = vpop.f32.mrb[0].mxu0
      %v3294 = vadd.f32 0.0, %v3293
      %v3295 = vpop.f32.mrb[0].mxu0
      %3296 = vmatprep.mubr.bf16.mxu0 0
      %3297 = vmatmul.mubr.bf16.gmra.mrb[0].mxu0 %v3174
      %v3298 = vpop.f32.mrb[0].mxu0
      %v3299 = vadd.f32 0.0, %v3298
      %v3300 = vpop.f32.mrb[0].mxu0
      %v3301 = vpop.f32.mrb[0].mxu0
      %v3302 = vadd.f32 0.0, %v3301
      %v3303 = vpop.f32.mrb[0].mxu0
      %3304 = vmatprep.mubr.bf16.mxu0 0
      %3305 = vmatmul.mubr.bf16.gmra.mrb[0].mxu0 %v3177
      %v3306 = vpop.f32.mrb[0].mxu0
      %v3307 = vadd.f32 0.0, %v3306
      %v3308 = vpop.f32.mrb[0].mxu0
      %v3309 = vpop.f32.mrb[0].mxu0
      %v3310 = vadd.f32 0.0, %v3309
      %v3311 = vpop.f32.mrb[0].mxu0
      %3312 = vmatprep.mubr.bf16.mxu0 0
      %3313 = vmatmul.mubr.bf16.gmra.mrb[0].mxu0 %v3180
      %v3314 = vpop.f32.mrb[0].mxu0
      %v3315 = vadd.f32 0.0, %v3314
      %v3316 = vpop.f32.mrb[0].mxu0
      %v3317 = vpop.f32.mrb[0].mxu0
      %v3318 = vadd.f32 0.0, %v3317
      %v3319 = vpop.f32.mrb[0].mxu0
      %3320 = vmatprep.mubr.bf16.mxu0 0
      %3321 = vmatmul.mubr.bf16.gmra.mrb[0].mxu0 %v3183
      %v3322 = vpop.f32.mrb[0].mxu0
      %v3323 = vadd.f32 0.0, %v3322
      %v3324 = vpop.f32.mrb[0].mxu0
      %v3325 = vpop.f32.mrb[0].mxu0
      %v3326 = vadd.f32 0.0, %v3325
      %v3327 = vpop.f32.mrb[0].mxu0
      %3328 = vmatprep.mubr.bf16.mxu0 0
      %3329 = vmatmul.mubr.bf16.gmra.mrb[0].mxu0 %v3186
      %v3330 = vpop.f32.mrb[0].mxu0
      %v3331 = vadd.f32 0.0, %v3330
      %v3332 = vpop.f32.mrb[0].mxu0
      %v3333 = vpop.f32.mrb[0].mxu0
      %v3334 = vadd.f32 0.0, %v3333
      %v3335 = vpop.f32.mrb[0].mxu0
      %3336 = vmatprep.mubr.bf16.mxu0 0
      %3337 = vmatmul.mubr.bf16.gmra.mrb[0].mxu0 %v3189
      %v3338 = vpop.f32.mrb[0].mxu0
      %v3339 = vadd.f32 0.0, %v3338
      %v3340 = vpop.f32.mrb[0].mxu0
      %v3341 = vpop.f32.mrb[0].mxu0
      %v3342 = vadd.f32 0.0, %v3341
      %v3343 = vpop.f32.mrb[0].mxu0
      %3344 = vmatprep.mubr.bf16.mxu0 0
      %3345 = vmatmul.mubr.bf16.gmra.mrb[0].mxu0 %v3192
      %v3346 = vpop.f32.mrb[0].mxu0
      %v3347 = vadd.f32 0.0, %v3346
      %v3348 = vpop.f32.mrb[0].mxu0
      %v3349 = vpop.f32.mrb[0].mxu0
      %v3350 = vadd.f32 0.0, %v3349
      %v3351 = vpop.f32.mrb[0].mxu0
      %3352 = vmatprep.mubr.bf16.mxu0 0
      %3353 = vmatmul.mubr.bf16.gmra.mrb[0].mxu0 %v3195
      %v3354 = vpop.f32.mrb[0].mxu0
      %v3355 = vadd.f32 0.0, %v3354
      %v3356 = vpop.f32.mrb[0].mxu0
      %v3357 = vpop.f32.mrb[0].mxu0
      %v3358 = vadd.f32 0.0, %v3357
      %v3359 = vpop.f32.mrb[0].mxu0
      %3360 = vdwg.mxu0
      %v3361 = vadd.f32 %v3035, %v3235
      %v3362 = vadd.f32 %v3036, %v3238
      %v3363 = vadd.f32 %v3037, %v3243
      %v3364 = vadd.f32 %v3038, %v3246
      %v3365 = vadd.f32 %v3039, %v3251
      %v3366 = vadd.f32 %v3040, %v3254
      %v3367 = vadd.f32 %v3041, %v3259
      %v3368 = vadd.f32 %v3042, %v3262
      %v3369 = vadd.f32 %v3043, %v3267
      %v3370 = vadd.f32 %v3044, %v3270
      %v3371 = vadd.f32 %v3045, %v3275
      %v3372 = vadd.f32 %v3046, %v3278
      %v3373 = vadd.f32 %v3047, %v3283
      %v3374 = vadd.f32 %v3048, %v3286
      %v3375 = vadd.f32 %v3049, %v3291
      %v3376 = vadd.f32 %v3050, %v3294
      %v3377 = vadd.f32 %v3051, %v3299
      %v3378 = vadd.f32 %v3052, %v3302
      %v3379 = vadd.f32 %v3053, %v3307
      %v3380 = vadd.f32 %v3054, %v3310
      %v3381 = vadd.f32 %v3055, %v3315
      %v3382 = vadd.f32 %v3056, %v3318
      %v3383 = vadd.f32 %v3057, %v3323
      %v3384 = vadd.f32 %v3058, %v3326
      %v3385 = vadd.f32 %v3059, %v3331
      %v3386 = vadd.f32 %v3060, %v3334
      %v3387 = vadd.f32 %v3061, %v3339
      %v3388 = vadd.f32 %v3062, %v3342
      %v3389 = vadd.f32 %v3063, %v3347
      %v3390 = vadd.f32 %v3064, %v3350
      %v3391 = vadd.f32 %v3065, %v3355
      %v3392 = vadd.f32 %v3066, %v3358
      %v3393 = vld [vmem:[#allocation2 + $0x28] sm:$0xff]
      %v3394 = vld [vmem:[#allocation2 + $0x30] sm:$0xff]
      %v3395 = vld [vmem:[#allocation2 + $0x38] sm:$0xff]
      %v3396 = vld [vmem:[#allocation2 + $0x40] sm:$0xff]
      %v3397 = vld [vmem:[#allocation2 + $0x48] sm:$0xff]
      %v3398 = vld [vmem:[#allocation2 + $0x50] sm:$0xff]
      %v3399 = vld [vmem:[#allocation2 + $0x58] sm:$0xff]
      %v3400 = vld [vmem:[#allocation2 + $0x60] sm:$0xff]
      %v3401 = vld [vmem:[#allocation2 + $0x68] sm:$0xff]
      %v3402 = vld [vmem:[#allocation2 + $0x70] sm:$0xff]
      %v3403 = vld [vmem:[#allocation2 + $0x78] sm:$0xff]
      %v3404 = vld [vmem:[#allocation2 + $0x80] sm:$0xff]
      %v3405 = vld [vmem:[#allocation2 + $0x88] sm:$0xff]
      %v3406 = vld [vmem:[#allocation2 + $0x90] sm:$0xff]
      %v3407 = vld [vmem:[#allocation2 + $0x98] sm:$0xff]
      %v3408 = vld [vmem:[#allocation2 + $0xa0] sm:$0xff]
      %v3409 = vld [vmem:[#allocation2 + $0xa8] sm:$0xff]
      %v3410 = vld [vmem:[#allocation2 + $0xb0] sm:$0xff]
      %v3411 = vld [vmem:[#allocation2 + $0xb8] sm:$0xff]
      %v3412 = vld [vmem:[#allocation2 + $0xc0] sm:$0xff]
      %v3413 = vld [vmem:[#allocation2 + $0xc8] sm:$0xff]
      %v3414 = vld [vmem:[#allocation2 + $0xd0] sm:$0xff]
      %v3415 = vld [vmem:[#allocation2 + $0xd8] sm:$0xff]
      %v3416 = vld [vmem:[#allocation2 + $0xe0] sm:$0xff]
      %v3417 = vld [vmem:[#allocation2 + $0xe8] sm:$0xff]
      %v3418 = vld [vmem:[#allocation2 + $0xf0] sm:$0xff]
      %v3419 = vld [vmem:[#allocation2 + $0xf8] sm:$0xff]
      %v3420 = vld [vmem:[#allocation2 + $0x100] sm:$0xff]
      %v3421 = vld [vmem:[#allocation2 + $0x108] sm:$0xff]
      %v3422 = vld [vmem:[#allocation2 + $0x110] sm:$0xff]
      %v3423 = vld [vmem:[#allocation2 + $0x118] sm:$0xff]
      %v3424 = vld [vmem:[#allocation2 + $0x120] sm:$0xff]
      %v3425 = vpack.c.bf16 %v3394, %v3393
      %v3426 = vpack.c.bf16 %v3396, %v3395
      %v3427 = vpack.c.bf16 %v3398, %v3397
      %v3428 = vpack.c.bf16 %v3400, %v3399
      %v3429 = vpack.c.bf16 %v3402, %v3401
      %v3430 = vpack.c.bf16 %v3404, %v3403
      %v3431 = vpack.c.bf16 %v3406, %v3405
      %v3432 = vpack.c.bf16 %v3408, %v3407
      %v3433 = vpack.c.bf16 %v3410, %v3409
      %v3434 = vpack.c.bf16 %v3412, %v3411
      %v3435 = vpack.c.bf16 %v3414, %v3413
      %v3436 = vpack.c.bf16 %v3416, %v3415
      %v3437 = vpack.c.bf16 %v3418, %v3417
      %v3438 = vpack.c.bf16 %v3420, %v3419
      %v3439 = vpack.c.bf16 %v3422, %v3421
      %v3440 = vpack.c.bf16 %v3424, %v3423
      %s3441 = scalar_lea.vmem %s4, 28
      %v3442 = vld [vmem:[%s3441] sm:$0xf]
      %v3444 = vsel %vm950, %v3425, 0
      %v3447 = vsel %vm950, %v3426, 0
      %v3450 = vsel %vm950, %v3427, 0
      %v3453 = vsel %vm950, %v3428, 0
      %v3456 = vsel %vm950, %v3429, 0
      %v3459 = vsel %vm950, %v3430, 0
      %v3462 = vsel %vm950, %v3431, 0
      %v3465 = vsel %vm950, %v3432, 0
      %v3468 = vsel %vm950, %v3433, 0
      %v3471 = vsel %vm950, %v3434, 0
      %v3474 = vsel %vm950, %v3435, 0
      %v3477 = vsel %vm950, %v3436, 0
      %v3480 = vsel %vm950, %v3437, 0
      %v3483 = vsel %vm950, %v3438, 0
      %v3486 = vsel %vm950, %v3439, 0
      %v3489 = vsel %vm950, %v3440, 0
      %v3492 = vsel %vm1322, %v3442, 0
      %3494 = vmatprep.subr.bf16.mxu0 0
      %3495 = vmatpush1.bf16.msra.mxu0 %v3492
      %3496 = vmatprep.subr.bf16.mxu0 0
      %3497 = vmatpush1.bf16.msra.mxu0 0
      %3498 = vmatprep.subr.bf16.mxu0 0
      %3499 = vmatpush1.bf16.msra.mxu0 0
      %3500 = vmatprep.subr.bf16.mxu0 0
      %3501 = vmatpush1.bf16.msra.mxu0 0
      %3502 = vmatprep.subr.bf16.mxu0 0
      %3503 = vmatpush1.bf16.msra.mxu0 0
      %3504 = vmatprep.subr.bf16.mxu0 0
      %3505 = vmatpush1.bf16.msra.mxu0 0
      %3506 = vmatprep.subr.bf16.mxu0 0
      %3507 = vmatpush1.bf16.msra.mxu0 0
      %3508 = vmatprep.subr.bf16.mxu0 0
      %3509 = vmatpush1.bf16.msra.mxu0 0
      %3510 = vmatprep.subr.bf16.mxu0 0
      %3511 = vmatpush1.bf16.msra.mxu0 0
      %3512 = vmatprep.subr.bf16.mxu0 0
      %3513 = vmatpush1.bf16.msra.mxu0 0
      %3514 = vmatprep.subr.bf16.mxu0 0
      %3515 = vmatpush1.bf16.msra.mxu0 0
      %3516 = vmatprep.subr.bf16.mxu0 0
      %3517 = vmatpush1.bf16.msra.mxu0 0
      %3518 = vmatprep.subr.bf16.mxu0 0
      %3519 = vmatpush1.bf16.msra.mxu0 0
      %3520 = vmatprep.subr.bf16.mxu0 0
      %3521 = vmatpush1.bf16.msra.mxu0 0
      %3522 = vmatprep.subr.bf16.mxu0 0
      %3523 = vmatpush1.bf16.msra.mxu0 0
      %3524 = vmatprep.subr.bf16.mxu0 0
      %3525 = vmatpush1.bf16.msra.mxu0 0
      %3526 = vmatprep.mubr.bf16.mxu0 0
      %3527 = vmatmul.mubr.bf16.gmra.mrb[0].mxu0 %v3444
      %v3528 = vpop.f32.mrb[0].mxu0
      %v3529 = vadd.f32 0.0, %v3528
      %v3530 = vpop.f32.mrb[0].mxu0
      %v3531 = vpop.f32.mrb[0].mxu0
      %v3532 = vadd.f32 0.0, %v3531
      %v3533 = vpop.f32.mrb[0].mxu0
      %3534 = vmatprep.mubr.bf16.mxu0 0
      %3535 = vmatmul.mubr.bf16.gmra.mrb[0].mxu0 %v3447
      %v3536 = vpop.f32.mrb[0].mxu0
      %v3537 = vadd.f32 0.0, %v3536
      %v3538 = vpop.f32.mrb[0].mxu0
      %v3539 = vpop.f32.mrb[0].mxu0
      %v3540 = vadd.f32 0.0, %v3539
      %v3541 = vpop.f32.mrb[0].mxu0
      %3542 = vmatprep.mubr.bf16.mxu0 0
      %3543 = vmatmul.mubr.bf16.gmra.mrb[0].mxu0 %v3450
      %v3544 = vpop.f32.mrb[0].mxu0
      %v3545 = vadd.f32 0.0, %v3544
      %v3546 = vpop.f32.mrb[0].mxu0
      %v3547 = vpop.f32.mrb[0].mxu0
      %v3548 = vadd.f32 0.0, %v3547
      %v3549 = vpop.f32.mrb[0].mxu0
      %3550 = vmatprep.mubr.bf16.mxu0 0
      %3551 = vmatmul.mubr.bf16.gmra.mrb[0].mxu0 %v3453
      %v3552 = vpop.f32.mrb[0].mxu0
      %v3553 = vadd.f32 0.0, %v3552
      %v3554 = vpop.f32.mrb[0].mxu0
      %v3555 = vpop.f32.mrb[0].mxu0
      %v3556 = vadd.f32 0.0, %v3555
      %v3557 = vpop.f32.mrb[0].mxu0
      %3558 = vmatprep.mubr.bf16.mxu0 0
      %3559 = vmatmul.mubr.bf16.gmra.mrb[0].mxu0 %v3456
      %v3560 = vpop.f32.mrb[0].mxu0
      %v3561 = vadd.f32 0.0, %v3560
      %v3562 = vpop.f32.mrb[0].mxu0
      %v3563 = vpop.f32.mrb[0].mxu0
      %v3564 = vadd.f32 0.0, %v3563
      %v3565 = vpop.f32.mrb[0].mxu0
      %3566 = vmatprep.mubr.bf16.mxu0 0
      %3567 = vmatmul.mubr.bf16.gmra.mrb[0].mxu0 %v3459
      %v3568 = vpop.f32.mrb[0].mxu0
      %v3569 = vadd.f32 0.0, %v3568
      %v3570 = vpop.f32.mrb[0].mxu0
      %v3571 = vpop.f32.mrb[0].mxu0
      %v3572 = vadd.f32 0.0, %v3571
      %v3573 = vpop.f32.mrb[0].mxu0
      %3574 = vmatprep.mubr.bf16.mxu0 0
      %3575 = vmatmul.mubr.bf16.gmra.mrb[0].mxu0 %v3462
      %v3576 = vpop.f32.mrb[0].mxu0
      %v3577 = vadd.f32 0.0, %v3576
      %v3578 = vpop.f32.mrb[0].mxu0
      %v3579 = vpop.f32.mrb[0].mxu0
      %v3580 = vadd.f32 0.0, %v3579
      %v3581 = vpop.f32.mrb[0].mxu0
      %3582 = vmatprep.mubr.bf16.mxu0 0
      %3583 = vmatmul.mubr.bf16.gmra.mrb[0].mxu0 %v3465
      %v3584 = vpop.f32.mrb[0].mxu0
      %v3585 = vadd.f32 0.0, %v3584
      %v3586 = vpop.f32.mrb[0].mxu0
      %v3587 = vpop.f32.mrb[0].mxu0
      %v3588 = vadd.f32 0.0, %v3587
      %v3589 = vpop.f32.mrb[0].mxu0
      %3590 = vmatprep.mubr.bf16.mxu0 0
      %3591 = vmatmul.mubr.bf16.gmra.mrb[0].mxu0 %v3468
      %v3592 = vpop.f32.mrb[0].mxu0
      %v3593 = vadd.f32 0.0, %v3592
      %v3594 = vpop.f32.mrb[0].mxu0
      %v3595 = vpop.f32.mrb[0].mxu0
      %v3596 = vadd.f32 0.0, %v3595
      %v3597 = vpop.f32.mrb[0].mxu0
      %3598 = vmatprep.mubr.bf16.mxu0 0
      %3599 = vmatmul.mubr.bf16.gmra.mrb[0].mxu0 %v3471
      %v3600 = vpop.f32.mrb[0].mxu0
      %v3601 = vadd.f32 0.0, %v3600
      %v3602 = vpop.f32.mrb[0].mxu0
      %v3603 = vpop.f32.mrb[0].mxu0
      %v3604 = vadd.f32 0.0, %v3603
      %v3605 = vpop.f32.mrb[0].mxu0
      %3606 = vmatprep.mubr.bf16.mxu0 0
      %3607 = vmatmul.mubr.bf16.gmra.mrb[0].mxu0 %v3474
      %v3608 = vpop.f32.mrb[0].mxu0
      %v3609 = vadd.f32 0.0, %v3608
      %v3610 = vpop.f32.mrb[0].mxu0
      %v3611 = vpop.f32.mrb[0].mxu0
      %v3612 = vadd.f32 0.0, %v3611
      %v3613 = vpop.f32.mrb[0].mxu0
      %3614 = vmatprep.mubr.bf16.mxu0 0
      %3615 = vmatmul.mubr.bf16.gmra.mrb[0].mxu0 %v3477
      %v3616 = vpop.f32.mrb[0].mxu0
      %v3617 = vadd.f32 0.0, %v3616
      %v3618 = vpop.f32.mrb[0].mxu0
      %v3619 = vpop.f32.mrb[0].mxu0
      %v3620 = vadd.f32 0.0, %v3619
      %v3621 = vpop.f32.mrb[0].mxu0
      %3622 = vmatprep.mubr.bf16.mxu0 0
      %3623 = vmatmul.mubr.bf16.gmra.mrb[0].mxu0 %v3480
      %v3624 = vpop.f32.mrb[0].mxu0
      %v3625 = vadd.f32 0.0, %v3624
      %v3626 = vpop.f32.mrb[0].mxu0
      %v3627 = vpop.f32.mrb[0].mxu0
      %v3628 = vadd.f32 0.0, %v3627
      %v3629 = vpop.f32.mrb[0].mxu0
      %3630 = vmatprep.mubr.bf16.mxu0 0
      %3631 = vmatmul.mubr.bf16.gmra.mrb[0].mxu0 %v3483
      %v3632 = vpop.f32.mrb[0].mxu0
      %v3633 = vadd.f32 0.0, %v3632
      %v3634 = vpop.f32.mrb[0].mxu0
      %v3635 = vpop.f32.mrb[0].mxu0
      %v3636 = vadd.f32 0.0, %v3635
      %v3637 = vpop.f32.mrb[0].mxu0
      %3638 = vmatprep.mubr.bf16.mxu0 0
      %3639 = vmatmul.mubr.bf16.gmra.mrb[0].mxu0 %v3486
      %v3640 = vpop.f32.mrb[0].mxu0
      %v3641 = vadd.f32 0.0, %v3640
      %v3642 = vpop.f32.mrb[0].mxu0
      %v3643 = vpop.f32.mrb[0].mxu0
      %v3644 = vadd.f32 0.0, %v3643
      %v3645 = vpop.f32.mrb[0].mxu0
      %3646 = vmatprep.mubr.bf16.mxu0 0
      %3647 = vmatmul.mubr.bf16.gmra.mrb[0].mxu0 %v3489
      %v3648 = vpop.f32.mrb[0].mxu0
      %v3649 = vadd.f32 0.0, %v3648
      %v3650 = vpop.f32.mrb[0].mxu0
      %v3651 = vpop.f32.mrb[0].mxu0
      %v3652 = vadd.f32 0.0, %v3651
      %v3653 = vpop.f32.mrb[0].mxu0
      %3654 = vdwg.mxu0
      %v3655 = vadd.f32 %v3361, %v3529
      %v3656 = vadd.f32 %v3362, %v3532
      %v3657 = vadd.f32 %v3363, %v3537
      %v3658 = vadd.f32 %v3364, %v3540
      %v3659 = vadd.f32 %v3365, %v3545
      %v3660 = vadd.f32 %v3366, %v3548
      %v3661 = vadd.f32 %v3367, %v3553
      %v3662 = vadd.f32 %v3368, %v3556
      %v3663 = vadd.f32 %v3369, %v3561
      %v3664 = vadd.f32 %v3370, %v3564
      %v3665 = vadd.f32 %v3371, %v3569
      %v3666 = vadd.f32 %v3372, %v3572
      %v3667 = vadd.f32 %v3373, %v3577
      %v3668 = vadd.f32 %v3374, %v3580
      %v3669 = vadd.f32 %v3375, %v3585
      %v3670 = vadd.f32 %v3376, %v3588
      %v3671 = vadd.f32 %v3377, %v3593
      %v3672 = vadd.f32 %v3378, %v3596
      %v3673 = vadd.f32 %v3379, %v3601
      %v3674 = vadd.f32 %v3380, %v3604
      %v3675 = vadd.f32 %v3381, %v3609
      %v3676 = vadd.f32 %v3382, %v3612
      %v3677 = vadd.f32 %v3383, %v3617
      %v3678 = vadd.f32 %v3384, %v3620
      %v3679 = vadd.f32 %v3385, %v3625
      %v3680 = vadd.f32 %v3386, %v3628
      %v3681 = vadd.f32 %v3387, %v3633
      %v3682 = vadd.f32 %v3388, %v3636
      %v3683 = vadd.f32 %v3389, %v3641
      %v3684 = vadd.f32 %v3390, %v3644
      %v3685 = vadd.f32 %v3391, %v3649
      %v3686 = vadd.f32 %v3392, %v3652
      %v3687 = vld [vmem:[#allocation2 + $0x29] sm:$0xff]
      %v3688 = vld [vmem:[#allocation2 + $0x31] sm:$0xff]
      %v3689 = vld [vmem:[#allocation2 + $0x39] sm:$0xff]
      %v3690 = vld [vmem:[#allocation2 + $0x41] sm:$0xff]
      %v3691 = vld [vmem:[#allocation2 + $0x49] sm:$0xff]
      %v3692 = vld [vmem:[#allocation2 + $0x51] sm:$0xff]
      %v3693 = vld [vmem:[#allocation2 + $0x59] sm:$0xff]
      %v3694 = vld [vmem:[#allocation2 + $0x61] sm:$0xff]
      %v3695 = vld [vmem:[#allocation2 + $0x69] sm:$0xff]
      %v3696 = vld [vmem:[#allocation2 + $0x71] sm:$0xff]
      %v3697 = vld [vmem:[#allocation2 + $0x79] sm:$0xff]
      %v3698 = vld [vmem:[#allocation2 + $0x81] sm:$0xff]
      %v3699 = vld [vmem:[#allocation2 + $0x89] sm:$0xff]
      %v3700 = vld [vmem:[#allocation2 + $0x91] sm:$0xff]
      %v3701 = vld [vmem:[#allocation2 + $0x99] sm:$0xff]
      %v3702 = vld [vmem:[#allocation2 + $0xa1] sm:$0xff]
      %v3703 = vld [vmem:[#allocation2 + $0xa9] sm:$0xff]
      %v3704 = vld [vmem:[#allocation2 + $0xb1] sm:$0xff]
      %v3705 = vld [vmem:[#allocation2 + $0xb9] sm:$0xff]
      %v3706 = vld [vmem:[#allocation2 + $0xc1] sm:$0xff]
      %v3707 = vld [vmem:[#allocation2 + $0xc9] sm:$0xff]
      %v3708 = vld [vmem:[#allocation2 + $0xd1] sm:$0xff]
      %v3709 = vld [vmem:[#allocation2 + $0xd9] sm:$0xff]
      %v3710 = vld [vmem:[#allocation2 + $0xe1] sm:$0xff]
      %v3711 = vld [vmem:[#allocation2 + $0xe9] sm:$0xff]
      %v3712 = vld [vmem:[#allocation2 + $0xf1] sm:$0xff]
      %v3713 = vld [vmem:[#allocation2 + $0xf9] sm:$0xff]
      %v3714 = vld [vmem:[#allocation2 + $0x101] sm:$0xff]
      %v3715 = vld [vmem:[#allocation2 + $0x109] sm:$0xff]
      %v3716 = vld [vmem:[#allocation2 + $0x111] sm:$0xff]
      %v3717 = vld [vmem:[#allocation2 + $0x119] sm:$0xff]
      %v3718 = vld [vmem:[#allocation2 + $0x121] sm:$0xff]
      %v3719 = vmul.f32 %v3687, %v1733
      %v3720 = vmul.f32 %v3688, %v1737
      %v3721 = vmul.f32 %v3689, %v1741
      %v3722 = vmul.f32 %v3690, %v1745
      %v3723 = vmul.f32 %v3691, %v1749
      %v3724 = vmul.f32 %v3692, %v1753
      %v3725 = vmul.f32 %v3693, %v1757
      %v3726 = vmul.f32 %v3694, %v1761
      %v3727 = vmul.f32 %v3695, %v1765
      %v3728 = vmul.f32 %v3696, %v1769
      %v3729 = vmul.f32 %v3697, %v1773
      %v3730 = vmul.f32 %v3698, %v1777
      %v3731 = vmul.f32 %v3699, %v1781
      %v3732 = vmul.f32 %v3700, %v1785
      %v3733 = vmul.f32 %v3701, %v1789
      %v3734 = vmul.f32 %v3702, %v1793
      %v3735 = vmul.f32 %v3703, %v1797
      %v3736 = vmul.f32 %v3704, %v1801
      %v3737 = vmul.f32 %v3705, %v1805
      %v3738 = vmul.f32 %v3706, %v1809
      %v3739 = vmul.f32 %v3707, %v1813
      %v3740 = vmul.f32 %v3708, %v1817
      %v3741 = vmul.f32 %v3709, %v1821
      %v3742 = vmul.f32 %v3710, %v1825
      %v3743 = vmul.f32 %v3711, %v1829
      %v3744 = vmul.f32 %v3712, %v1833
      %v3745 = vmul.f32 %v3713, %v1837
      %v3746 = vmul.f32 %v3714, %v1841
      %v3747 = vmul.f32 %v3715, %v1845
      %v3748 = vmul.f32 %v3716, %v1849
      %v3749 = vmul.f32 %v3717, %v1853
      %v3750 = vmul.f32 %v3718, %v1857
      %v3751 = vpack.c.bf16 %v3720, %v3719
      %v3752 = vpack.c.bf16 %v3722, %v3721
      %v3753 = vpack.c.bf16 %v3724, %v3723
      %v3754 = vpack.c.bf16 %v3726, %v3725
      %v3755 = vpack.c.bf16 %v3728, %v3727
      %v3756 = vpack.c.bf16 %v3730, %v3729
      %v3757 = vpack.c.bf16 %v3732, %v3731
      %v3758 = vpack.c.bf16 %v3734, %v3733
      %v3759 = vpack.c.bf16 %v3736, %v3735
      %v3760 = vpack.c.bf16 %v3738, %v3737
      %v3761 = vpack.c.bf16 %v3740, %v3739
      %v3762 = vpack.c.bf16 %v3742, %v3741
      %v3763 = vpack.c.bf16 %v3744, %v3743
      %v3764 = vpack.c.bf16 %v3746, %v3745
      %v3765 = vpack.c.bf16 %v3748, %v3747
      %v3766 = vpack.c.bf16 %v3750, %v3749
      %s3767 = scalar_lea.vmem %s4, 32
      %v3768 = vld [vmem:[%s3767] sm:$0xf]
      %v3770 = vsel %vm950, %v3751, 0
      %v3773 = vsel %vm950, %v3752, 0
      %v3776 = vsel %vm950, %v3753, 0
      %v3779 = vsel %vm950, %v3754, 0
      %v3782 = vsel %vm950, %v3755, 0
      %v3785 = vsel %vm950, %v3756, 0
      %v3788 = vsel %vm950, %v3757, 0
      %v3791 = vsel %vm950, %v3758, 0
      %v3794 = vsel %vm950, %v3759, 0
      %v3797 = vsel %vm950, %v3760, 0
      %v3800 = vsel %vm950, %v3761, 0
      %v3803 = vsel %vm950, %v3762, 0
      %v3806 = vsel %vm950, %v3763, 0
      %v3809 = vsel %vm950, %v3764, 0
      %v3812 = vsel %vm950, %v3765, 0
      %v3815 = vsel %vm950, %v3766, 0
      %v3818 = vsel %vm1322, %v3768, 0
      %3820 = vmatprep.subr.bf16.mxu0 0
      %3821 = vmatpush1.bf16.msra.mxu0 %v3818
      %3822 = vmatprep.subr.bf16.mxu0 0
      %3823 = vmatpush1.bf16.msra.mxu0 0
      %3824 = vmatprep.subr.bf16.mxu0 0
      %3825 = vmatpush1.bf16.msra.mxu0 0
      %3826 = vmatprep.subr.bf16.mxu0 0
      %3827 = vmatpush1.bf16.msra.mxu0 0
      %3828 = vmatprep.subr.bf16.mxu0 0
      %3829 = vmatpush1.bf16.msra.mxu0 0
      %3830 = vmatprep.subr.bf16.mxu0 0
      %3831 = vmatpush1.bf16.msra.mxu0 0
      %3832 = vmatprep.subr.bf16.mxu0 0
      %3833 = vmatpush1.bf16.msra.mxu0 0
      %3834 = vmatprep.subr.bf16.mxu0 0
      %3835 = vmatpush1.bf16.msra.mxu0 0
      %3836 = vmatprep.subr.bf16.mxu0 0
      %3837 = vmatpush1.bf16.msra.mxu0 0
      %3838 = vmatprep.subr.bf16.mxu0 0
      %3839 = vmatpush1.bf16.msra.mxu0 0
      %3840 = vmatprep.subr.bf16.mxu0 0
      %3841 = vmatpush1.bf16.msra.mxu0 0
      %3842 = vmatprep.subr.bf16.mxu0 0
      %3843 = vmatpush1.bf16.msra.mxu0 0
      %3844 = vmatprep.subr.bf16.mxu0 0
      %3845 = vmatpush1.bf16.msra.mxu0 0
      %3846 = vmatprep.subr.bf16.mxu0 0
      %3847 = vmatpush1.bf16.msra.mxu0 0
      %3848 = vmatprep.subr.bf16.mxu0 0
      %3849 = vmatpush1.bf16.msra.mxu0 0
      %3850 = vmatprep.subr.bf16.mxu0 0
      %3851 = vmatpush1.bf16.msra.mxu0 0
      %3852 = vmatprep.mubr.bf16.mxu0 0
      %3853 = vmatmul.mubr.bf16.gmra.mrb[0].mxu0 %v3770
      %v3854 = vpop.f32.mrb[0].mxu0
      %v3855 = vadd.f32 0.0, %v3854
      %v3856 = vpop.f32.mrb[0].mxu0
      %v3857 = vpop.f32.mrb[0].mxu0
      %v3858 = vadd.f32 0.0, %v3857
      %v3859 = vpop.f32.mrb[0].mxu0
      %3860 = vmatprep.mubr.bf16.mxu0 0
      %3861 = vmatmul.mubr.bf16.gmra.mrb[0].mxu0 %v3773
      %v3862 = vpop.f32.mrb[0].mxu0
      %v3863 = vadd.f32 0.0, %v3862
      %v3864 = vpop.f32.mrb[0].mxu0
      %v3865 = vpop.f32.mrb[0].mxu0
      %v3866 = vadd.f32 0.0, %v3865
      %v3867 = vpop.f32.mrb[0].mxu0
      %3868 = vmatprep.mubr.bf16.mxu0 0
      %3869 = vmatmul.mubr.bf16.gmra.mrb[0].mxu0 %v3776
      %v3870 = vpop.f32.mrb[0].mxu0
      %v3871 = vadd.f32 0.0, %v3870
      %v3872 = vpop.f32.mrb[0].mxu0
      %v3873 = vpop.f32.mrb[0].mxu0
      %v3874 = vadd.f32 0.0, %v3873
      %v3875 = vpop.f32.mrb[0].mxu0
      %3876 = vmatprep.mubr.bf16.mxu0 0
      %3877 = vmatmul.mubr.bf16.gmra.mrb[0].mxu0 %v3779
      %v3878 = vpop.f32.mrb[0].mxu0
      %v3879 = vadd.f32 0.0, %v3878
      %v3880 = vpop.f32.mrb[0].mxu0
      %v3881 = vpop.f32.mrb[0].mxu0
      %v3882 = vadd.f32 0.0, %v3881
      %v3883 = vpop.f32.mrb[0].mxu0
      %3884 = vmatprep.mubr.bf16.mxu0 0
      %3885 = vmatmul.mubr.bf16.gmra.mrb[0].mxu0 %v3782
      %v3886 = vpop.f32.mrb[0].mxu0
      %v3887 = vadd.f32 0.0, %v3886
      %v3888 = vpop.f32.mrb[0].mxu0
      %v3889 = vpop.f32.mrb[0].mxu0
      %v3890 = vadd.f32 0.0, %v3889
      %v3891 = vpop.f32.mrb[0].mxu0
      %3892 = vmatprep.mubr.bf16.mxu0 0
      %3893 = vmatmul.mubr.bf16.gmra.mrb[0].mxu0 %v3785
      %v3894 = vpop.f32.mrb[0].mxu0
      %v3895 = vadd.f32 0.0, %v3894
      %v3896 = vpop.f32.mrb[0].mxu0
      %v3897 = vpop.f32.mrb[0].mxu0
      %v3898 = vadd.f32 0.0, %v3897
      %v3899 = vpop.f32.mrb[0].mxu0
      %3900 = vmatprep.mubr.bf16.mxu0 0
      %3901 = vmatmul.mubr.bf16.gmra.mrb[0].mxu0 %v3788
      %v3902 = vpop.f32.mrb[0].mxu0
      %v3903 = vadd.f32 0.0, %v3902
      %v3904 = vpop.f32.mrb[0].mxu0
      %v3905 = vpop.f32.mrb[0].mxu0
      %v3906 = vadd.f32 0.0, %v3905
      %v3907 = vpop.f32.mrb[0].mxu0
      %3908 = vmatprep.mubr.bf16.mxu0 0
      %3909 = vmatmul.mubr.bf16.gmra.mrb[0].mxu0 %v3791
      %v3910 = vpop.f32.mrb[0].mxu0
      %v3911 = vadd.f32 0.0, %v3910
      %v3912 = vpop.f32.mrb[0].mxu0
      %v3913 = vpop.f32.mrb[0].mxu0
      %v3914 = vadd.f32 0.0, %v3913
      %v3915 = vpop.f32.mrb[0].mxu0
      %3916 = vmatprep.mubr.bf16.mxu0 0
      %3917 = vmatmul.mubr.bf16.gmra.mrb[0].mxu0 %v3794
      %v3918 = vpop.f32.mrb[0].mxu0
      %v3919 = vadd.f32 0.0, %v3918
      %v3920 = vpop.f32.mrb[0].mxu0
      %v3921 = vpop.f32.mrb[0].mxu0
      %v3922 = vadd.f32 0.0, %v3921
      %v3923 = vpop.f32.mrb[0].mxu0
      %3924 = vmatprep.mubr.bf16.mxu0 0
      %3925 = vmatmul.mubr.bf16.gmra.mrb[0].mxu0 %v3797
      %v3926 = vpop.f32.mrb[0].mxu0
      %v3927 = vadd.f32 0.0, %v3926
      %v3928 = vpop.f32.mrb[0].mxu0
      %v3929 = vpop.f32.mrb[0].mxu0
      %v3930 = vadd.f32 0.0, %v3929
      %v3931 = vpop.f32.mrb[0].mxu0
      %3932 = vmatprep.mubr.bf16.mxu0 0
      %3933 = vmatmul.mubr.bf16.gmra.mrb[0].mxu0 %v3800
      %v3934 = vpop.f32.mrb[0].mxu0
      %v3935 = vadd.f32 0.0, %v3934
      %v3936 = vpop.f32.mrb[0].mxu0
      %v3937 = vpop.f32.mrb[0].mxu0
      %v3938 = vadd.f32 0.0, %v3937
      %v3939 = vpop.f32.mrb[0].mxu0
      %3940 = vmatprep.mubr.bf16.mxu0 0
      %3941 = vmatmul.mubr.bf16.gmra.mrb[0].mxu0 %v3803
      %v3942 = vpop.f32.mrb[0].mxu0
      %v3943 = vadd.f32 0.0, %v3942
      %v3944 = vpop.f32.mrb[0].mxu0
      %v3945 = vpop.f32.mrb[0].mxu0
      %v3946 = vadd.f32 0.0, %v3945
      %v3947 = vpop.f32.mrb[0].mxu0
      %3948 = vmatprep.mubr.bf16.mxu0 0
      %3949 = vmatmul.mubr.bf16.gmra.mrb[0].mxu0 %v3806
      %v3950 = vpop.f32.mrb[0].mxu0
      %v3951 = vadd.f32 0.0, %v3950
      %v3952 = vpop.f32.mrb[0].mxu0
      %v3953 = vpop.f32.mrb[0].mxu0
      %v3954 = vadd.f32 0.0, %v3953
      %v3955 = vpop.f32.mrb[0].mxu0
      %3956 = vmatprep.mubr.bf16.mxu0 0
      %3957 = vmatmul.mubr.bf16.gmra.mrb[0].mxu0 %v3809
      %v3958 = vpop.f32.mrb[0].mxu0
      %v3959 = vadd.f32 0.0, %v3958
      %v3960 = vpop.f32.mrb[0].mxu0
      %v3961 = vpop.f32.mrb[0].mxu0
      %v3962 = vadd.f32 0.0, %v3961
      %v3963 = vpop.f32.mrb[0].mxu0
      %3964 = vmatprep.mubr.bf16.mxu0 0
      %3965 = vmatmul.mubr.bf16.gmra.mrb[0].mxu0 %v3812
      %v3966 = vpop.f32.mrb[0].mxu0
      %v3967 = vadd.f32 0.0, %v3966
      %v3968 = vpop.f32.mrb[0].mxu0
      %v3969 = vpop.f32.mrb[0].mxu0
      %v3970 = vadd.f32 0.0, %v3969
      %v3971 = vpop.f32.mrb[0].mxu0
      %3972 = vmatprep.mubr.bf16.mxu0 0
      %3973 = vmatmul.mubr.bf16.gmra.mrb[0].mxu0 %v3815
      %v3974 = vpop.f32.mrb[0].mxu0
      %v3975 = vadd.f32 0.0, %v3974
      %v3976 = vpop.f32.mrb[0].mxu0
      %v3977 = vpop.f32.mrb[0].mxu0
      %v3978 = vadd.f32 0.0, %v3977
      %v3979 = vpop.f32.mrb[0].mxu0
      %3980 = vdwg.mxu0
      %v3981 = vadd.f32 %v3655, %v3855
      %v3982 = vadd.f32 %v3656, %v3858
      %v3983 = vadd.f32 %v3657, %v3863
      %v3984 = vadd.f32 %v3658, %v3866
      %v3985 = vadd.f32 %v3659, %v3871
      %v3986 = vadd.f32 %v3660, %v3874
      %v3987 = vadd.f32 %v3661, %v3879
      %v3988 = vadd.f32 %v3662, %v3882
      %v3989 = vadd.f32 %v3663, %v3887
      %v3990 = vadd.f32 %v3664, %v3890
      %v3991 = vadd.f32 %v3665, %v3895
      %v3992 = vadd.f32 %v3666, %v3898
      %v3993 = vadd.f32 %v3667, %v3903
      %v3994 = vadd.f32 %v3668, %v3906
      %v3995 = vadd.f32 %v3669, %v3911
      %v3996 = vadd.f32 %v3670, %v3914
      %v3997 = vadd.f32 %v3671, %v3919
      %v3998 = vadd.f32 %v3672, %v3922
      %v3999 = vadd.f32 %v3673, %v3927
      %v4000 = vadd.f32 %v3674, %v3930
      %v4001 = vadd.f32 %v3675, %v3935
      %v4002 = vadd.f32 %v3676, %v3938
      %v4003 = vadd.f32 %v3677, %v3943
      %v4004 = vadd.f32 %v3678, %v3946
      %v4005 = vadd.f32 %v3679, %v3951
      %v4006 = vadd.f32 %v3680, %v3954
      %v4007 = vadd.f32 %v3681, %v3959
      %v4008 = vadd.f32 %v3682, %v3962
      %v4009 = vadd.f32 %v3683, %v3967
      %v4010 = vadd.f32 %v3684, %v3970
      %v4011 = vadd.f32 %v3685, %v3975
      %v4012 = vadd.f32 %v3686, %v3978
      %v4013 = vld [vmem:[%s5] sm:$0x1]
      %v4015 = vlaneseq
      %v4016 = vshrl.u32 %v4015, 7
      %v4017 = vsub.s32 0, %v4016
      %v4018 = vrot.slane %v4013, %v4017
      %v4020 = vadd.f32 %v3981, %v4018
      %v4021 = vadd.f32 %v3982, %v4018
      %v4022 = vadd.f32 %v3983, %v4018
      %v4023 = vadd.f32 %v3984, %v4018
      %v4024 = vadd.f32 %v3985, %v4018
      %v4025 = vadd.f32 %v3986, %v4018
      %v4026 = vadd.f32 %v3987, %v4018
      %v4027 = vadd.f32 %v3988, %v4018
      %v4028 = vadd.f32 %v3989, %v4018
      %v4029 = vadd.f32 %v3990, %v4018
      %v4030 = vadd.f32 %v3991, %v4018
      %v4031 = vadd.f32 %v3992, %v4018
      %v4032 = vadd.f32 %v3993, %v4018
      %v4033 = vadd.f32 %v3994, %v4018
      %v4034 = vadd.f32 %v3995, %v4018
      %v4035 = vadd.f32 %v3996, %v4018
      %v4036 = vadd.f32 %v3997, %v4018
      %v4037 = vadd.f32 %v3998, %v4018
      %v4038 = vadd.f32 %v3999, %v4018
      %v4039 = vadd.f32 %v4000, %v4018
      %v4040 = vadd.f32 %v4001, %v4018
      %v4041 = vadd.f32 %v4002, %v4018
      %v4042 = vadd.f32 %v4003, %v4018
      %v4043 = vadd.f32 %v4004, %v4018
      %v4044 = vadd.f32 %v4005, %v4018
      %v4045 = vadd.f32 %v4006, %v4018
      %v4046 = vadd.f32 %v4007, %v4018
      %v4047 = vadd.f32 %v4008, %v4018
      %v4048 = vadd.f32 %v4009, %v4018
      %v4049 = vadd.f32 %v4010, %v4018
      %v4050 = vadd.f32 %v4011, %v4018
      %v4051 = vadd.f32 %v4012, %v4018
      %v4052 = vmax.f32 %v4020, 0.0
      %v4053 = vmax.f32 %v4021, 0.0
      %v4054 = vmax.f32 %v4022, 0.0
      %v4055 = vmax.f32 %v4023, 0.0
      %v4056 = vmax.f32 %v4024, 0.0
      %v4057 = vmax.f32 %v4025, 0.0
      %v4058 = vmax.f32 %v4026, 0.0
      %v4059 = vmax.f32 %v4027, 0.0
      %v4060 = vmax.f32 %v4028, 0.0
      %v4061 = vmax.f32 %v4029, 0.0
      %v4062 = vmax.f32 %v4030, 0.0
      %v4063 = vmax.f32 %v4031, 0.0
      %v4064 = vmax.f32 %v4032, 0.0
      %v4065 = vmax.f32 %v4033, 0.0
      %v4066 = vmax.f32 %v4034, 0.0
      %v4067 = vmax.f32 %v4035, 0.0
      %v4068 = vmax.f32 %v4036, 0.0
      %v4069 = vmax.f32 %v4037, 0.0
      %v4070 = vmax.f32 %v4038, 0.0
      %v4071 = vmax.f32 %v4039, 0.0
      %v4072 = vmax.f32 %v4040, 0.0
      %v4073 = vmax.f32 %v4041, 0.0
      %v4074 = vmax.f32 %v4042, 0.0
      %v4075 = vmax.f32 %v4043, 0.0
      %v4076 = vmax.f32 %v4044, 0.0
      %v4077 = vmax.f32 %v4045, 0.0
      %v4078 = vmax.f32 %v4046, 0.0
      %v4079 = vmax.f32 %v4047, 0.0
      %v4080 = vmax.f32 %v4048, 0.0
      %v4081 = vmax.f32 %v4049, 0.0
      %v4082 = vmax.f32 %v4050, 0.0
      %v4083 = vmax.f32 %v4051, 0.0
      %v4084 = vld [vmem:[%s6] sm:$0x1]
      %v4086 = vlaneseq
      %v4087 = vshrl.u32 %v4086, 7
      %v4088 = vsub.s32 0, %v4087
      %v4089 = vrot.slane %v4084, %v4088
      %v4091 = vmul.f32 %v4052, %v4089
      %v4092 = vmul.f32 %v4053, %v4089
      %v4093 = vmul.f32 %v4054, %v4089
      %v4094 = vmul.f32 %v4055, %v4089
      %v4095 = vmul.f32 %v4056, %v4089
      %v4096 = vmul.f32 %v4057, %v4089
      %v4097 = vmul.f32 %v4058, %v4089
      %v4098 = vmul.f32 %v4059, %v4089
      %v4099 = vmul.f32 %v4060, %v4089
      %v4100 = vmul.f32 %v4061, %v4089
      %v4101 = vmul.f32 %v4062, %v4089
      %v4102 = vmul.f32 %v4063, %v4089
      %v4103 = vmul.f32 %v4064, %v4089
      %v4104 = vmul.f32 %v4065, %v4089
      %v4105 = vmul.f32 %v4066, %v4089
      %v4106 = vmul.f32 %v4067, %v4089
      %v4107 = vmul.f32 %v4068, %v4089
      %v4108 = vmul.f32 %v4069, %v4089
      %v4109 = vmul.f32 %v4070, %v4089
      %v4110 = vmul.f32 %v4071, %v4089
      %v4111 = vmul.f32 %v4072, %v4089
      %v4112 = vmul.f32 %v4073, %v4089
      %v4113 = vmul.f32 %v4074, %v4089
      %v4114 = vmul.f32 %v4075, %v4089
      %v4115 = vmul.f32 %v4076, %v4089
      %v4116 = vmul.f32 %v4077, %v4089
      %v4117 = vmul.f32 %v4078, %v4089
      %v4118 = vmul.f32 %v4079, %v4089
      %v4119 = vmul.f32 %v4080, %v4089
      %v4120 = vmul.f32 %v4081, %v4089
      %v4121 = vmul.f32 %v4082, %v4089
      %v4122 = vmul.f32 %v4083, %v4089
      %v4123 = vld [vmem:[%s7] sm:$0x1]
      %v4125 = vlaneseq
      %v4126 = vshrl.u32 %v4125, 7
      %v4127 = vsub.s32 0, %v4126
      %v4128 = vrot.slane %v4123, %v4127
      %v4130 = vadd.f32 %v4091, %v4128
      %v4131 = vadd.f32 %v4092, %v4128
      %v4132 = vadd.f32 %v4093, %v4128
      %v4133 = vadd.f32 %v4094, %v4128
      %v4134 = vadd.f32 %v4095, %v4128
      %v4135 = vadd.f32 %v4096, %v4128
      %v4136 = vadd.f32 %v4097, %v4128
      %v4137 = vadd.f32 %v4098, %v4128
      %v4138 = vadd.f32 %v4099, %v4128
      %v4139 = vadd.f32 %v4100, %v4128
      %v4140 = vadd.f32 %v4101, %v4128
      %v4141 = vadd.f32 %v4102, %v4128
      %v4142 = vadd.f32 %v4103, %v4128
      %v4143 = vadd.f32 %v4104, %v4128
      %v4144 = vadd.f32 %v4105, %v4128
      %v4145 = vadd.f32 %v4106, %v4128
      %v4146 = vadd.f32 %v4107, %v4128
      %v4147 = vadd.f32 %v4108, %v4128
      %v4148 = vadd.f32 %v4109, %v4128
      %v4149 = vadd.f32 %v4110, %v4128
      %v4150 = vadd.f32 %v4111, %v4128
      %v4151 = vadd.f32 %v4112, %v4128
      %v4152 = vadd.f32 %v4113, %v4128
      %v4153 = vadd.f32 %v4114, %v4128
      %v4154 = vadd.f32 %v4115, %v4128
      %v4155 = vadd.f32 %v4116, %v4128
      %v4156 = vadd.f32 %v4117, %v4128
      %v4157 = vadd.f32 %v4118, %v4128
      %v4158 = vadd.f32 %v4119, %v4128
      %v4159 = vadd.f32 %v4120, %v4128
      %v4160 = vadd.f32 %v4121, %v4128
      %v4161 = vadd.f32 %v4122, %v4128
      %4162 = vst.msk [vmem:[#allocation2 + $0x18] sm:$0xff] %vm577, %v4130
      %4163 = vst.msk [vmem:[#allocation2 + $0x20] sm:$0xff] %vm577, %v4131
      %4164 = vst.msk [vmem:[#allocation2 + $0x28] sm:$0xff] %vm577, %v4132
      %4165 = vst.msk [vmem:[#allocation2 + $0x30] sm:$0xff] %vm577, %v4133
      %4166 = vst.msk [vmem:[#allocation2 + $0x38] sm:$0xff] %vm577, %v4134
      %4167 = vst.msk [vmem:[#allocation2 + $0x40] sm:$0xff] %vm577, %v4135
      %4168 = vst.msk [vmem:[#allocation2 + $0x48] sm:$0xff] %vm577, %v4136
      %4169 = vst.msk [vmem:[#allocation2 + $0x50] sm:$0xff] %vm577, %v4137
      %4170 = vst.msk [vmem:[#allocation2 + $0x58] sm:$0xff] %vm577, %v4138
      %4171 = vst.msk [vmem:[#allocation2 + $0x60] sm:$0xff] %vm577, %v4139
      %4172 = vst.msk [vmem:[#allocation2 + $0x68] sm:$0xff] %vm577, %v4140
      %4173 = vst.msk [vmem:[#allocation2 + $0x70] sm:$0xff] %vm577, %v4141
      %4174 = vst.msk [vmem:[#allocation2 + $0x78] sm:$0xff] %vm577, %v4142
      %4175 = vst.msk [vmem:[#allocation2 + $0x80] sm:$0xff] %vm577, %v4143
      %4176 = vst.msk [vmem:[#allocation2 + $0x88] sm:$0xff] %vm577, %v4144
      %4177 = vst.msk [vmem:[#allocation2 + $0x90] sm:$0xff] %vm577, %v4145
      %4178 = vst.msk [vmem:[#allocation2 + $0x98] sm:$0xff] %vm577, %v4146
      %4179 = vst.msk [vmem:[#allocation2 + $0xa0] sm:$0xff] %vm577, %v4147
      %4180 = vst.msk [vmem:[#allocation2 + $0xa8] sm:$0xff] %vm577, %v4148
      %4181 = vst.msk [vmem:[#allocation2 + $0xb0] sm:$0xff] %vm577, %v4149
      %4182 = vst.msk [vmem:[#allocation2 + $0xb8] sm:$0xff] %vm577, %v4150
      %4183 = vst.msk [vmem:[#allocation2 + $0xc0] sm:$0xff] %vm577, %v4151
      %4184 = vst.msk [vmem:[#allocation2 + $0xc8] sm:$0xff] %vm577, %v4152
      %4185 = vst.msk [vmem:[#allocation2 + $0xd0] sm:$0xff] %vm577, %v4153
      %4186 = vst.msk [vmem:[#allocation2 + $0xd8] sm:$0xff] %vm577, %v4154
      %4187 = vst.msk [vmem:[#allocation2 + $0xe0] sm:$0xff] %vm577, %v4155
      %4188 = vst.msk [vmem:[#allocation2 + $0xe8] sm:$0xff] %vm577, %v4156
      %4189 = vst.msk [vmem:[#allocation2 + $0xf0] sm:$0xff] %vm577, %v4157
      %4190 = vst.msk [vmem:[#allocation2 + $0xf8] sm:$0xff] %vm577, %v4158
      %4191 = vst.msk [vmem:[#allocation2 + $0x100] sm:$0xff] %vm577, %v4159
      %4192 = vst.msk [vmem:[#allocation2 + $0x108] sm:$0xff] %vm577, %v4160
      %4193 = vst.msk [vmem:[#allocation2 + $0x110] sm:$0xff] %vm577, %v4161
      %v4194 = vld [vmem:[#allocation2 + $0x7] sm:$0xff]
      %v4195 = vld [vmem:[#allocation2 + $0xf] sm:$0xff]
      %v4196 = vld [vmem:[#allocation2 + $0x17] sm:$0xff]
      %v4197 = vld [vmem:[#allocation2 + $0x1f] sm:$0xff]
      %v4198 = vld [vmem:[#allocation2 + $0x27] sm:$0xff]
      %v4199 = vld [vmem:[#allocation2 + $0x2f] sm:$0xff]
      %v4200 = vld [vmem:[#allocation2 + $0x37] sm:$0xff]
      %v4201 = vld [vmem:[#allocation2 + $0x3f] sm:$0xff]
      %v4202 = vld [vmem:[#allocation2 + $0x47] sm:$0xff]
      %v4203 = vld [vmem:[#allocation2 + $0x4f] sm:$0xff]
      %v4204 = vld [vmem:[#allocation2 + $0x57] sm:$0xff]
      %v4205 = vld [vmem:[#allocation2 + $0x5f] sm:$0xff]
      %v4206 = vld [vmem:[#allocation2 + $0x67] sm:$0xff]
      %v4207 = vld [vmem:[#allocation2 + $0x6f] sm:$0xff]
      %v4208 = vld [vmem:[#allocation2 + $0x77] sm:$0xff]
      %v4209 = vld [vmem:[#allocation2 + $0x7f] sm:$0xff]
      %v4210 = vld [vmem:[#allocation2 + $0x87] sm:$0xff]
      %v4211 = vld [vmem:[#allocation2 + $0x8f] sm:$0xff]
      %v4212 = vld [vmem:[#allocation2 + $0x97] sm:$0xff]
      %v4213 = vld [vmem:[#allocation2 + $0x9f] sm:$0xff]
      %v4214 = vld [vmem:[#allocation2 + $0xa7] sm:$0xff]
      %v4215 = vld [vmem:[#allocation2 + $0xaf] sm:$0xff]
      %v4216 = vld [vmem:[#allocation2 + $0xb7] sm:$0xff]
      %v4217 = vld [vmem:[#allocation2 + $0xbf] sm:$0xff]
      %v4218 = vld [vmem:[#allocation2 + $0xc7] sm:$0xff]
      %v4219 = vld [vmem:[#allocation2 + $0xcf] sm:$0xff]
      %v4220 = vld [vmem:[#allocation2 + $0xd7] sm:$0xff]
      %v4221 = vld [vmem:[#allocation2 + $0xdf] sm:$0xff]
      %v4222 = vld [vmem:[#allocation2 + $0xe7] sm:$0xff]
      %v4223 = vld [vmem:[#allocation2 + $0xef] sm:$0xff]
      %v4224 = vld [vmem:[#allocation2 + $0xf7] sm:$0xff]
      %v4225 = vld [vmem:[#allocation2 + $0xff] sm:$0xff]
      %v4226 = vmul.f32 %v4194, %v1018
      %v4227 = vmul.f32 %v4195, %v1023
      %v4228 = vmul.f32 %v4196, %v1028
      %v4229 = vmul.f32 %v4197, %v1033
      %v4230 = vmul.f32 %v4198, %v1038
      %v4231 = vmul.f32 %v4199, %v1043
      %v4232 = vmul.f32 %v4200, %v1048
      %v4233 = vmul.f32 %v4201, %v1053
      %v4234 = vmul.f32 %v4202, %v1058
      %v4235 = vmul.f32 %v4203, %v1063
      %v4236 = vmul.f32 %v4204, %v1068
      %v4237 = vmul.f32 %v4205, %v1073
      %v4238 = vmul.f32 %v4206, %v1078
      %v4239 = vmul.f32 %v4207, %v1083
      %v4240 = vmul.f32 %v4208, %v1088
      %v4241 = vmul.f32 %v4209, %v1093
      %v4242 = vmul.f32 %v4210, %v1098
      %v4243 = vmul.f32 %v4211, %v1103
      %v4244 = vmul.f32 %v4212, %v1108
      %v4245 = vmul.f32 %v4213, %v1113
      %v4246 = vmul.f32 %v4214, %v1118
      %v4247 = vmul.f32 %v4215, %v1123
      %v4248 = vmul.f32 %v4216, %v1128
      %v4249 = vmul.f32 %v4217, %v1133
      %v4250 = vmul.f32 %v4218, %v1138
      %v4251 = vmul.f32 %v4219, %v1143
      %v4252 = vmul.f32 %v4220, %v1148
      %v4253 = vmul.f32 %v4221, %v1153
      %v4254 = vmul.f32 %v4222, %v1158
      %v4255 = vmul.f32 %v4223, %v1163
      %v4256 = vmul.f32 %v4224, %v1168
      %v4257 = vmul.f32 %v4225, %v1173
      %v4258 = vpack.c.bf16 %v4227, %v4226
      %v4259 = vpack.c.bf16 %v4229, %v4228
      %v4260 = vpack.c.bf16 %v4231, %v4230
      %v4261 = vpack.c.bf16 %v4233, %v4232
      %v4262 = vpack.c.bf16 %v4235, %v4234
      %v4263 = vpack.c.bf16 %v4237, %v4236
      %v4264 = vpack.c.bf16 %v4239, %v4238
      %v4265 = vpack.c.bf16 %v4241, %v4240
      %v4266 = vpack.c.bf16 %v4243, %v4242
      %v4267 = vpack.c.bf16 %v4245, %v4244
      %v4268 = vpack.c.bf16 %v4247, %v4246
      %v4269 = vpack.c.bf16 %v4249, %v4248
      %v4270 = vpack.c.bf16 %v4251, %v4250
      %v4271 = vpack.c.bf16 %v4253, %v4252
      %v4272 = vpack.c.bf16 %v4255, %v4254
      %v4273 = vpack.c.bf16 %v4257, %v4256
      %v4274 = vld [vmem:[%s8] sm:$0xf]
      %v4275 = vld [vmem:[%s8 + $0x4] sm:$0xf]
      %v4276 = vld [vmem:[%s8 + $0x8] sm:$0xf]
      %v4277 = vld [vmem:[%s8 + $0xc] sm:$0xf]
      %v4278 = vld [vmem:[%s8 + $0x10] sm:$0xf]
      %v4279 = vld [vmem:[%s8 + $0x14] sm:$0xf]
      %v4280 = vld [vmem:[%s8 + $0x18] sm:$0xf]
      %v4281 = vld [vmem:[%s8 + $0x1c] sm:$0xf]
      %v4282 = vld [vmem:[#allocation2 + $0x8] sm:$0xff]
      %v4283 = vld [vmem:[#allocation2 + $0x10] sm:$0xff]
      %v4284 = vld [vmem:[#allocation2 + $0x18] sm:$0xff]
      %v4285 = vld [vmem:[#allocation2 + $0x20] sm:$0xff]
      %v4286 = vld [vmem:[#allocation2 + $0x28] sm:$0xff]
      %v4287 = vld [vmem:[#allocation2 + $0x30] sm:$0xff]
      %v4288 = vld [vmem:[#allocation2 + $0x38] sm:$0xff]
      %v4289 = vld [vmem:[#allocation2 + $0x40] sm:$0xff]
      %v4290 = vld [vmem:[#allocation2 + $0x48] sm:$0xff]
      %v4291 = vld [vmem:[#allocation2 + $0x50] sm:$0xff]
      %v4292 = vld [vmem:[#allocation2 + $0x58] sm:$0xff]
      %v4293 = vld [vmem:[#allocation2 + $0x60] sm:$0xff]
      %v4294 = vld [vmem:[#allocation2 + $0x68] sm:$0xff]
      %v4295 = vld [vmem:[#allocation2 + $0x70] sm:$0xff]
      %v4296 = vld [vmem:[#allocation2 + $0x78] sm:$0xff]
      %v4297 = vld [vmem:[#allocation2 + $0x80] sm:$0xff]
      %v4298 = vld [vmem:[#allocation2 + $0x88] sm:$0xff]
      %v4299 = vld [vmem:[#allocation2 + $0x90] sm:$0xff]
      %v4300 = vld [vmem:[#allocation2 + $0x98] sm:$0xff]
      %v4301 = vld [vmem:[#allocation2 + $0xa0] sm:$0xff]
      %v4302 = vld [vmem:[#allocation2 + $0xa8] sm:$0xff]
      %v4303 = vld [vmem:[#allocation2 + $0xb0] sm:$0xff]
      %v4304 = vld [vmem:[#allocation2 + $0xb8] sm:$0xff]
      %v4305 = vld [vmem:[#allocation2 + $0xc0] sm:$0xff]
      %v4306 = vld [vmem:[#allocation2 + $0xc8] sm:$0xff]
      %v4307 = vld [vmem:[#allocation2 + $0xd0] sm:$0xff]
      %v4308 = vld [vmem:[#allocation2 + $0xd8] sm:$0xff]
      %v4309 = vld [vmem:[#allocation2 + $0xe0] sm:$0xff]
      %v4310 = vld [vmem:[#allocation2 + $0xe8] sm:$0xff]
      %v4311 = vld [vmem:[#allocation2 + $0xf0] sm:$0xff]
      %v4312 = vld [vmem:[#allocation2 + $0xf8] sm:$0xff]
      %v4313 = vld [vmem:[#allocation2 + $0x100] sm:$0xff]
      %v4314 = vpack.c.bf16 %v4283, %v4282
      %v4315 = vpack.c.bf16 %v4285, %v4284
      %v4316 = vpack.c.bf16 %v4287, %v4286
      %v4317 = vpack.c.bf16 %v4289, %v4288
      %v4318 = vpack.c.bf16 %v4291, %v4290
      %v4319 = vpack.c.bf16 %v4293, %v4292
      %v4320 = vpack.c.bf16 %v4295, %v4294
      %v4321 = vpack.c.bf16 %v4297, %v4296
      %v4322 = vpack.c.bf16 %v4299, %v4298
      %v4323 = vpack.c.bf16 %v4301, %v4300
      %v4324 = vpack.c.bf16 %v4303, %v4302
      %v4325 = vpack.c.bf16 %v4305, %v4304
      %v4326 = vpack.c.bf16 %v4307, %v4306
      %v4327 = vpack.c.bf16 %v4309, %v4308
      %v4328 = vpack.c.bf16 %v4311, %v4310
      %v4329 = vpack.c.bf16 %v4313, %v4312
      %s4330 = scalar_lea.vmem %s8, 32
      %v4331 = vld [vmem:[%s4330] sm:$0xf]
      %v4332 = vld [vmem:[%s4330 + $0x4] sm:$0xf]
      %v4333 = vld [vmem:[%s4330 + $0x8] sm:$0xf]
      %v4334 = vld [vmem:[%s4330 + $0xc] sm:$0xf]
      %v4335 = vld [vmem:[%s4330 + $0x10] sm:$0xf]
      %v4336 = vld [vmem:[%s4330 + $0x14] sm:$0xf]
      %v4337 = vld [vmem:[%s4330 + $0x18] sm:$0xf]
      %v4338 = vld [vmem:[%s4330 + $0x1c] sm:$0xf]
      %v4347 = vunpack.c.l.b16 %v4331
      %v4348 = vunpack.c.l.b16 %v4332
      %v4349 = vunpack.c.l.b16 %v4333
      %v4350 = vunpack.c.l.b16 %v4334
      %v4351 = vunpack.c.l.b16 %v4335
      %v4352 = vunpack.c.l.b16 %v4336
      %v4353 = vunpack.c.l.b16 %v4337
      %v4354 = vunpack.c.l.b16 %v4338
      %v4355 = vpack.c.b16 %v4348, %v4347
      %v4356 = vpack.c.b16 %v4350, %v4349
      %v4357 = vpack.c.b16 %v4352, %v4351
      %v4358 = vpack.c.b16 %v4354, %v4353
      %v4364 = vsel %vm577, %v4314, 0
      %v4367 = vsel %vm577, %v4315, 0
      %v4370 = vsel %vm577, %v4316, 0
      %v4373 = vsel %vm577, %v4317, 0
      %v4376 = vsel %vm577, %v4318, 0
      %v4379 = vsel %vm577, %v4319, 0
      %v4382 = vsel %vm577, %v4320, 0
      %v4385 = vsel %vm577, %v4321, 0
      %v4388 = vsel %vm577, %v4322, 0
      %v4391 = vsel %vm577, %v4323, 0
      %v4394 = vsel %vm577, %v4324, 0
      %v4397 = vsel %vm577, %v4325, 0
      %v4400 = vsel %vm577, %v4326, 0
      %v4403 = vsel %vm577, %v4327, 0
      %v4406 = vsel %vm577, %v4328, 0
      %v4409 = vsel %vm577, %v4329, 0
      %4411 = vmatprep.subr.bf16.mxu0 0
      %4412 = vmatpush1.bf16.msra.mxu0 %v4355
      %4413 = vmatprep.subr.bf16.mxu0 0
      %4414 = vmatpush1.bf16.msra.mxu0 %v4356
      %4415 = vmatprep.subr.bf16.mxu0 0
      %4416 = vmatpush1.bf16.msra.mxu0 %v4357
      %4417 = vmatprep.subr.bf16.mxu0 0
      %4418 = vmatpush1.bf16.msra.mxu0 %v4358
      %4419 = vmatprep.subr.bf16.mxu0 0
      %4420 = vmatpush1.bf16.msra.mxu0 0
      %4421 = vmatprep.subr.bf16.mxu0 0
      %4422 = vmatpush1.bf16.msra.mxu0 0
      %4423 = vmatprep.subr.bf16.mxu0 0
      %4424 = vmatpush1.bf16.msra.mxu0 0
      %4425 = vmatprep.subr.bf16.mxu0 0
      %4426 = vmatpush1.bf16.msra.mxu0 0
      %4427 = vmatprep.subr.bf16.mxu0 0
      %4428 = vmatpush1.bf16.msra.mxu0 0
      %4429 = vmatprep.subr.bf16.mxu0 0
      %4430 = vmatpush1.bf16.msra.mxu0 0
      %4431 = vmatprep.subr.bf16.mxu0 0
      %4432 = vmatpush1.bf16.msra.mxu0 0
      %4433 = vmatprep.subr.bf16.mxu0 0
      %4434 = vmatpush1.bf16.msra.mxu0 0
      %4435 = vmatprep.subr.bf16.mxu0 0
      %4436 = vmatpush1.bf16.msra.mxu0 0
      %4437 = vmatprep.subr.bf16.mxu0 0
      %4438 = vmatpush1.bf16.msra.mxu0 0
      %4439 = vmatprep.subr.bf16.mxu0 0
      %4440 = vmatpush1.bf16.msra.mxu0 0
      %4441 = vmatprep.subr.bf16.mxu0 0
      %4442 = vmatpush1.bf16.msra.mxu0 0
      %4443 = vmatprep.mubr.bf16.mxu0 0
      %4444 = vmatmul.mubr.bf16.gmra.mrb[0].mxu0 %v4364
      %v4445 = vpop.f32.mrb[0].mxu0
      %v4446 = vadd.f32 0.0, %v4445
      %v4447 = vpop.f32.mrb[0].mxu0
      %v4448 = vpop.f32.mrb[0].mxu0
      %v4449 = vadd.f32 0.0, %v4448
      %v4450 = vpop.f32.mrb[0].mxu0
      %4451 = vmatprep.mubr.bf16.mxu0 0
      %4452 = vmatmul.mubr.bf16.gmra.mrb[0].mxu0 %v4367
      %v4453 = vpop.f32.mrb[0].mxu0
      %v4454 = vadd.f32 0.0, %v4453
      %v4455 = vpop.f32.mrb[0].mxu0
      %v4456 = vpop.f32.mrb[0].mxu0
      %v4457 = vadd.f32 0.0, %v4456
      %v4458 = vpop.f32.mrb[0].mxu0
      %4459 = vmatprep.mubr.bf16.mxu0 0
      %4460 = vmatmul.mubr.bf16.gmra.mrb[0].mxu0 %v4370
      %v4461 = vpop.f32.mrb[0].mxu0
      %v4462 = vadd.f32 0.0, %v4461
      %v4463 = vpop.f32.mrb[0].mxu0
      %v4464 = vpop.f32.mrb[0].mxu0
      %v4465 = vadd.f32 0.0, %v4464
      %v4466 = vpop.f32.mrb[0].mxu0
      %4467 = vmatprep.mubr.bf16.mxu0 0
      %4468 = vmatmul.mubr.bf16.gmra.mrb[0].mxu0 %v4373
      %v4469 = vpop.f32.mrb[0].mxu0
      %v4470 = vadd.f32 0.0, %v4469
      %v4471 = vpop.f32.mrb[0].mxu0
      %v4472 = vpop.f32.mrb[0].mxu0
      %v4473 = vadd.f32 0.0, %v4472
      %v4474 = vpop.f32.mrb[0].mxu0
      %4475 = vmatprep.mubr.bf16.mxu0 0
      %4476 = vmatmul.mubr.bf16.gmra.mrb[0].mxu0 %v4376
      %v4477 = vpop.f32.mrb[0].mxu0
      %v4478 = vadd.f32 0.0, %v4477
      %v4479 = vpop.f32.mrb[0].mxu0
      %v4480 = vpop.f32.mrb[0].mxu0
      %v4481 = vadd.f32 0.0, %v4480
      %v4482 = vpop.f32.mrb[0].mxu0
      %4483 = vmatprep.mubr.bf16.mxu0 0
      %4484 = vmatmul.mubr.bf16.gmra.mrb[0].mxu0 %v4379
      %v4485 = vpop.f32.mrb[0].mxu0
      %v4486 = vadd.f32 0.0, %v4485
      %v4487 = vpop.f32.mrb[0].mxu0
      %v4488 = vpop.f32.mrb[0].mxu0
      %v4489 = vadd.f32 0.0, %v4488
      %v4490 = vpop.f32.mrb[0].mxu0
      %4491 = vmatprep.mubr.bf16.mxu0 0
      %4492 = vmatmul.mubr.bf16.gmra.mrb[0].mxu0 %v4382
      %v4493 = vpop.f32.mrb[0].mxu0
      %v4494 = vadd.f32 0.0, %v4493
      %v4495 = vpop.f32.mrb[0].mxu0
      %v4496 = vpop.f32.mrb[0].mxu0
      %v4497 = vadd.f32 0.0, %v4496
      %v4498 = vpop.f32.mrb[0].mxu0
      %4499 = vmatprep.mubr.bf16.mxu0 0
      %4500 = vmatmul.mubr.bf16.gmra.mrb[0].mxu0 %v4385
      %v4501 = vpop.f32.mrb[0].mxu0
      %v4502 = vadd.f32 0.0, %v4501
      %v4503 = vpop.f32.mrb[0].mxu0
      %v4504 = vpop.f32.mrb[0].mxu0
      %v4505 = vadd.f32 0.0, %v4504
      %v4506 = vpop.f32.mrb[0].mxu0
      %4507 = vmatprep.mubr.bf16.mxu0 0
      %4508 = vmatmul.mubr.bf16.gmra.mrb[0].mxu0 %v4388
      %v4509 = vpop.f32.mrb[0].mxu0
      %v4510 = vadd.f32 0.0, %v4509
      %v4511 = vpop.f32.mrb[0].mxu0
      %v4512 = vpop.f32.mrb[0].mxu0
      %v4513 = vadd.f32 0.0, %v4512
      %v4514 = vpop.f32.mrb[0].mxu0
      %4515 = vmatprep.mubr.bf16.mxu0 0
      %4516 = vmatmul.mubr.bf16.gmra.mrb[0].mxu0 %v4391
      %v4517 = vpop.f32.mrb[0].mxu0
      %v4518 = vadd.f32 0.0, %v4517
      %v4519 = vpop.f32.mrb[0].mxu0
      %v4520 = vpop.f32.mrb[0].mxu0
      %v4521 = vadd.f32 0.0, %v4520
      %v4522 = vpop.f32.mrb[0].mxu0
      %4523 = vmatprep.mubr.bf16.mxu0 0
      %4524 = vmatmul.mubr.bf16.gmra.mrb[0].mxu0 %v4394
      %v4525 = vpop.f32.mrb[0].mxu0
      %v4526 = vadd.f32 0.0, %v4525
      %v4527 = vpop.f32.mrb[0].mxu0
      %v4528 = vpop.f32.mrb[0].mxu0
      %v4529 = vadd.f32 0.0, %v4528
      %v4530 = vpop.f32.mrb[0].mxu0
      %4531 = vmatprep.mubr.bf16.mxu0 0
      %4532 = vmatmul.mubr.bf16.gmra.mrb[0].mxu0 %v4397
      %v4533 = vpop.f32.mrb[0].mxu0
      %v4534 = vadd.f32 0.0, %v4533
      %v4535 = vpop.f32.mrb[0].mxu0
      %v4536 = vpop.f32.mrb[0].mxu0
      %v4537 = vadd.f32 0.0, %v4536
      %v4538 = vpop.f32.mrb[0].mxu0
      %4539 = vmatprep.mubr.bf16.mxu0 0
      %4540 = vmatmul.mubr.bf16.gmra.mrb[0].mxu0 %v4400
      %v4541 = vpop.f32.mrb[0].mxu0
      %v4542 = vadd.f32 0.0, %v4541
      %v4543 = vpop.f32.mrb[0].mxu0
      %v4544 = vpop.f32.mrb[0].mxu0
      %v4545 = vadd.f32 0.0, %v4544
      %v4546 = vpop.f32.mrb[0].mxu0
      %4547 = vmatprep.mubr.bf16.mxu0 0
      %4548 = vmatmul.mubr.bf16.gmra.mrb[0].mxu0 %v4403
      %v4549 = vpop.f32.mrb[0].mxu0
      %v4550 = vadd.f32 0.0, %v4549
      %v4551 = vpop.f32.mrb[0].mxu0
      %v4552 = vpop.f32.mrb[0].mxu0
      %v4553 = vadd.f32 0.0, %v4552
      %v4554 = vpop.f32.mrb[0].mxu0
      %4555 = vmatprep.mubr.bf16.mxu0 0
      %4556 = vmatmul.mubr.bf16.gmra.mrb[0].mxu0 %v4406
      %v4557 = vpop.f32.mrb[0].mxu0
      %v4558 = vadd.f32 0.0, %v4557
      %v4559 = vpop.f32.mrb[0].mxu0
      %v4560 = vpop.f32.mrb[0].mxu0
      %v4561 = vadd.f32 0.0, %v4560
      %v4562 = vpop.f32.mrb[0].mxu0
      %4563 = vmatprep.mubr.bf16.mxu0 0
      %4564 = vmatmul.mubr.bf16.gmra.mrb[0].mxu0 %v4409
      %v4565 = vpop.f32.mrb[0].mxu0
      %v4566 = vadd.f32 0.0, %v4565
      %v4567 = vpop.f32.mrb[0].mxu0
      %v4568 = vpop.f32.mrb[0].mxu0
      %v4569 = vadd.f32 0.0, %v4568
      %v4570 = vpop.f32.mrb[0].mxu0
      %4571 = vdwg.mxu0
      %v4580 = vunpack.c.l.b16 %v4274
      %v4581 = vunpack.c.l.b16 %v4275
      %v4582 = vunpack.c.l.b16 %v4276
      %v4583 = vunpack.c.l.b16 %v4277
      %v4584 = vunpack.c.l.b16 %v4278
      %v4585 = vunpack.c.l.b16 %v4279
      %v4586 = vunpack.c.l.b16 %v4280
      %v4587 = vunpack.c.l.b16 %v4281
      %v4588 = vpack.c.b16 %v4581, %v4580
      %v4589 = vpack.c.b16 %v4583, %v4582
      %v4590 = vpack.c.b16 %v4585, %v4584
      %v4591 = vpack.c.b16 %v4587, %v4586
      %v4597 = vsel %vm577, %v4258, 0
      %v4600 = vsel %vm577, %v4259, 0
      %v4603 = vsel %vm577, %v4260, 0
      %v4606 = vsel %vm577, %v4261, 0
      %v4609 = vsel %vm577, %v4262, 0
      %v4612 = vsel %vm577, %v4263, 0
      %v4615 = vsel %vm577, %v4264, 0
      %v4618 = vsel %vm577, %v4265, 0
      %v4621 = vsel %vm577, %v4266, 0
      %v4624 = vsel %vm577, %v4267, 0
      %v4627 = vsel %vm577, %v4268, 0
      %v4630 = vsel %vm577, %v4269, 0
      %v4633 = vsel %vm577, %v4270, 0
      %v4636 = vsel %vm577, %v4271, 0
      %v4639 = vsel %vm577, %v4272, 0
      %v4642 = vsel %vm577, %v4273, 0
      %4644 = vmatprep.subr.bf16.mxu0 0
      %4645 = vmatpush1.bf16.msra.mxu0 %v4588
      %4646 = vmatprep.subr.bf16.mxu0 0
      %4647 = vmatpush1.bf16.msra.mxu0 %v4589
      %4648 = vmatprep.subr.bf16.mxu0 0
      %4649 = vmatpush1.bf16.msra.mxu0 %v4590
      %4650 = vmatprep.subr.bf16.mxu0 0
      %4651 = vmatpush1.bf16.msra.mxu0 %v4591
      %4652 = vmatprep.subr.bf16.mxu0 0
      %4653 = vmatpush1.bf16.msra.mxu0 0
      %4654 = vmatprep.subr.bf16.mxu0 0
      %4655 = vmatpush1.bf16.msra.mxu0 0
      %4656 = vmatprep.subr.bf16.mxu0 0
      %4657 = vmatpush1.bf16.msra.mxu0 0
      %4658 = vmatprep.subr.bf16.mxu0 0
      %4659 = vmatpush1.bf16.msra.mxu0 0
      %4660 = vmatprep.subr.bf16.mxu0 0
      %4661 = vmatpush1.bf16.msra.mxu0 0
      %4662 = vmatprep.subr.bf16.mxu0 0
      %4663 = vmatpush1.bf16.msra.mxu0 0
      %4664 = vmatprep.subr.bf16.mxu0 0
      %4665 = vmatpush1.bf16.msra.mxu0 0
      %4666 = vmatprep.subr.bf16.mxu0 0
      %4667 = vmatpush1.bf16.msra.mxu0 0
      %4668 = vmatprep.subr.bf16.mxu0 0
      %4669 = vmatpush1.bf16.msra.mxu0 0
      %4670 = vmatprep.subr.bf16.mxu0 0
      %4671 = vmatpush1.bf16.msra.mxu0 0
      %4672 = vmatprep.subr.bf16.mxu0 0
      %4673 = vmatpush1.bf16.msra.mxu0 0
      %4674 = vmatprep.subr.bf16.mxu0 0
      %4675 = vmatpush1.bf16.msra.mxu0 0
      %4676 = vmatprep.mubr.bf16.mxu0 0
      %4677 = vmatmul.mubr.bf16.gmra.mrb[0].mxu0 %v4597
      %v4678 = vpop.f32.mrb[0].mxu0
      %v4679 = vadd.f32 %v4446, %v4678
      %v4680 = vpop.f32.mrb[0].mxu0
      %v4681 = vpop.f32.mrb[0].mxu0
      %v4682 = vadd.f32 %v4449, %v4681
      %v4683 = vpop.f32.mrb[0].mxu0
      %4684 = vmatprep.mubr.bf16.mxu0 0
      %4685 = vmatmul.mubr.bf16.gmra.mrb[0].mxu0 %v4600
      %v4686 = vpop.f32.mrb[0].mxu0
      %v4687 = vadd.f32 %v4454, %v4686
      %v4688 = vpop.f32.mrb[0].mxu0
      %v4689 = vpop.f32.mrb[0].mxu0
      %v4690 = vadd.f32 %v4457, %v4689
      %v4691 = vpop.f32.mrb[0].mxu0
      %4692 = vmatprep.mubr.bf16.mxu0 0
      %4693 = vmatmul.mubr.bf16.gmra.mrb[0].mxu0 %v4603
      %v4694 = vpop.f32.mrb[0].mxu0
      %v4695 = vadd.f32 %v4462, %v4694
      %v4696 = vpop.f32.mrb[0].mxu0
      %v4697 = vpop.f32.mrb[0].mxu0
      %v4698 = vadd.f32 %v4465, %v4697
      %v4699 = vpop.f32.mrb[0].mxu0
      %4700 = vmatprep.mubr.bf16.mxu0 0
      %4701 = vmatmul.mubr.bf16.gmra.mrb[0].mxu0 %v4606
      %v4702 = vpop.f32.mrb[0].mxu0
      %v4703 = vadd.f32 %v4470, %v4702
      %v4704 = vpop.f32.mrb[0].mxu0
      %v4705 = vpop.f32.mrb[0].mxu0
      %v4706 = vadd.f32 %v4473, %v4705
      %v4707 = vpop.f32.mrb[0].mxu0
      %4708 = vmatprep.mubr.bf16.mxu0 0
      %4709 = vmatmul.mubr.bf16.gmra.mrb[0].mxu0 %v4609
      %v4710 = vpop.f32.mrb[0].mxu0
      %v4711 = vadd.f32 %v4478, %v4710
      %v4712 = vpop.f32.mrb[0].mxu0
      %v4713 = vpop.f32.mrb[0].mxu0
      %v4714 = vadd.f32 %v4481, %v4713
      %v4715 = vpop.f32.mrb[0].mxu0
      %4716 = vmatprep.mubr.bf16.mxu0 0
      %4717 = vmatmul.mubr.bf16.gmra.mrb[0].mxu0 %v4612
      %v4718 = vpop.f32.mrb[0].mxu0
      %v4719 = vadd.f32 %v4486, %v4718
      %v4720 = vpop.f32.mrb[0].mxu0
      %v4721 = vpop.f32.mrb[0].mxu0
      %v4722 = vadd.f32 %v4489, %v4721
      %v4723 = vpop.f32.mrb[0].mxu0
      %4724 = vmatprep.mubr.bf16.mxu0 0
      %4725 = vmatmul.mubr.bf16.gmra.mrb[0].mxu0 %v4615
      %v4726 = vpop.f32.mrb[0].mxu0
      %v4727 = vadd.f32 %v4494, %v4726
      %v4728 = vpop.f32.mrb[0].mxu0
      %v4729 = vpop.f32.mrb[0].mxu0
      %v4730 = vadd.f32 %v4497, %v4729
      %v4731 = vpop.f32.mrb[0].mxu0
      %4732 = vmatprep.mubr.bf16.mxu0 0
      %4733 = vmatmul.mubr.bf16.gmra.mrb[0].mxu0 %v4618
      %v4734 = vpop.f32.mrb[0].mxu0
      %v4735 = vadd.f32 %v4502, %v4734
      %v4736 = vpop.f32.mrb[0].mxu0
      %v4737 = vpop.f32.mrb[0].mxu0
      %v4738 = vadd.f32 %v4505, %v4737
      %v4739 = vpop.f32.mrb[0].mxu0
      %4740 = vmatprep.mubr.bf16.mxu0 0
      %4741 = vmatmul.mubr.bf16.gmra.mrb[0].mxu0 %v4621
      %v4742 = vpop.f32.mrb[0].mxu0
      %v4743 = vadd.f32 %v4510, %v4742
      %v4744 = vpop.f32.mrb[0].mxu0
      %v4745 = vpop.f32.mrb[0].mxu0
      %v4746 = vadd.f32 %v4513, %v4745
      %v4747 = vpop.f32.mrb[0].mxu0
      %4748 = vmatprep.mubr.bf16.mxu0 0
      %4749 = vmatmul.mubr.bf16.gmra.mrb[0].mxu0 %v4624
      %v4750 = vpop.f32.mrb[0].mxu0
      %v4751 = vadd.f32 %v4518, %v4750
      %v4752 = vpop.f32.mrb[0].mxu0
      %v4753 = vpop.f32.mrb[0].mxu0
      %v4754 = vadd.f32 %v4521, %v4753
      %v4755 = vpop.f32.mrb[0].mxu0
      %4756 = vmatprep.mubr.bf16.mxu0 0
      %4757 = vmatmul.mubr.bf16.gmra.mrb[0].mxu0 %v4627
      %v4758 = vpop.f32.mrb[0].mxu0
      %v4759 = vadd.f32 %v4526, %v4758
      %v4760 = vpop.f32.mrb[0].mxu0
      %v4761 = vpop.f32.mrb[0].mxu0
      %v4762 = vadd.f32 %v4529, %v4761
      %v4763 = vpop.f32.mrb[0].mxu0
      %4764 = vmatprep.mubr.bf16.mxu0 0
      %4765 = vmatmul.mubr.bf16.gmra.mrb[0].mxu0 %v4630
      %v4766 = vpop.f32.mrb[0].mxu0
      %v4767 = vadd.f32 %v4534, %v4766
      %v4768 = vpop.f32.mrb[0].mxu0
      %v4769 = vpop.f32.mrb[0].mxu0
      %v4770 = vadd.f32 %v4537, %v4769
      %v4771 = vpop.f32.mrb[0].mxu0
      %4772 = vmatprep.mubr.bf16.mxu0 0
      %4773 = vmatmul.mubr.bf16.gmra.mrb[0].mxu0 %v4633
      %v4774 = vpop.f32.mrb[0].mxu0
      %v4775 = vadd.f32 %v4542, %v4774
      %v4776 = vpop.f32.mrb[0].mxu0
      %v4777 = vpop.f32.mrb[0].mxu0
      %v4778 = vadd.f32 %v4545, %v4777
      %v4779 = vpop.f32.mrb[0].mxu0
      %4780 = vmatprep.mubr.bf16.mxu0 0
      %4781 = vmatmul.mubr.bf16.gmra.mrb[0].mxu0 %v4636
      %v4782 = vpop.f32.mrb[0].mxu0
      %v4783 = vadd.f32 %v4550, %v4782
      %v4784 = vpop.f32.mrb[0].mxu0
      %v4785 = vpop.f32.mrb[0].mxu0
      %v4786 = vadd.f32 %v4553, %v4785
      %v4787 = vpop.f32.mrb[0].mxu0
      %4788 = vmatprep.mubr.bf16.mxu0 0
      %4789 = vmatmul.mubr.bf16.gmra.mrb[0].mxu0 %v4639
      %v4790 = vpop.f32.mrb[0].mxu0
      %v4791 = vadd.f32 %v4558, %v4790
      %v4792 = vpop.f32.mrb[0].mxu0
      %v4793 = vpop.f32.mrb[0].mxu0
      %v4794 = vadd.f32 %v4561, %v4793
      %v4795 = vpop.f32.mrb[0].mxu0
      %4796 = vmatprep.mubr.bf16.mxu0 0
      %4797 = vmatmul.mubr.bf16.gmra.mrb[0].mxu0 %v4642
      %v4798 = vpop.f32.mrb[0].mxu0
      %v4799 = vadd.f32 %v4566, %v4798
      %v4800 = vpop.f32.mrb[0].mxu0
      %v4801 = vpop.f32.mrb[0].mxu0
      %v4802 = vadd.f32 %v4569, %v4801
      %v4803 = vpop.f32.mrb[0].mxu0
      %4804 = vdwg.mxu0
      %v4805 = vld [vmem:[#allocation2 + $0x9] sm:$0xff]
      %v4806 = vld [vmem:[#allocation2 + $0x11] sm:$0xff]
      %v4807 = vld [vmem:[#allocation2 + $0x19] sm:$0xff]
      %v4808 = vld [vmem:[#allocation2 + $0x21] sm:$0xff]
      %v4809 = vld [vmem:[#allocation2 + $0x29] sm:$0xff]
      %v4810 = vld [vmem:[#allocation2 + $0x31] sm:$0xff]
      %v4811 = vld [vmem:[#allocation2 + $0x39] sm:$0xff]
      %v4812 = vld [vmem:[#allocation2 + $0x41] sm:$0xff]
      %v4813 = vld [vmem:[#allocation2 + $0x49] sm:$0xff]
      %v4814 = vld [vmem:[#allocation2 + $0x51] sm:$0xff]
      %v4815 = vld [vmem:[#allocation2 + $0x59] sm:$0xff]
      %v4816 = vld [vmem:[#allocation2 + $0x61] sm:$0xff]
      %v4817 = vld [vmem:[#allocation2 + $0x69] sm:$0xff]
      %v4818 = vld [vmem:[#allocation2 + $0x71] sm:$0xff]
      %v4819 = vld [vmem:[#allocation2 + $0x79] sm:$0xff]
      %v4820 = vld [vmem:[#allocation2 + $0x81] sm:$0xff]
      %v4821 = vld [vmem:[#allocation2 + $0x89] sm:$0xff]
      %v4822 = vld [vmem:[#allocation2 + $0x91] sm:$0xff]
      %v4823 = vld [vmem:[#allocation2 + $0x99] sm:$0xff]
      %v4824 = vld [vmem:[#allocation2 + $0xa1] sm:$0xff]
      %v4825 = vld [vmem:[#allocation2 + $0xa9] sm:$0xff]
      %v4826 = vld [vmem:[#allocation2 + $0xb1] sm:$0xff]
      %v4827 = vld [vmem:[#allocation2 + $0xb9] sm:$0xff]
      %v4828 = vld [vmem:[#allocation2 + $0xc1] sm:$0xff]
      %v4829 = vld [vmem:[#allocation2 + $0xc9] sm:$0xff]
      %v4830 = vld [vmem:[#allocation2 + $0xd1] sm:$0xff]
      %v4831 = vld [vmem:[#allocation2 + $0xd9] sm:$0xff]
      %v4832 = vld [vmem:[#allocation2 + $0xe1] sm:$0xff]
      %v4833 = vld [vmem:[#allocation2 + $0xe9] sm:$0xff]
      %v4834 = vld [vmem:[#allocation2 + $0xf1] sm:$0xff]
      %v4835 = vld [vmem:[#allocation2 + $0xf9] sm:$0xff]
      %v4836 = vld [vmem:[#allocation2 + $0x101] sm:$0xff]
      %v4837 = vmul.f32 %v4805, %v1733
      %v4838 = vmul.f32 %v4806, %v1737
      %v4839 = vmul.f32 %v4807, %v1741
      %v4840 = vmul.f32 %v4808, %v1745
      %v4841 = vmul.f32 %v4809, %v1749
      %v4842 = vmul.f32 %v4810, %v1753
      %v4843 = vmul.f32 %v4811, %v1757
      %v4844 = vmul.f32 %v4812, %v1761
      %v4845 = vmul.f32 %v4813, %v1765
      %v4846 = vmul.f32 %v4814, %v1769
      %v4847 = vmul.f32 %v4815, %v1773
      %v4848 = vmul.f32 %v4816, %v1777
      %v4849 = vmul.f32 %v4817, %v1781
      %v4850 = vmul.f32 %v4818, %v1785
      %v4851 = vmul.f32 %v4819, %v1789
      %v4852 = vmul.f32 %v4820, %v1793
      %v4853 = vmul.f32 %v4821, %v1797
      %v4854 = vmul.f32 %v4822, %v1801
      %v4855 = vmul.f32 %v4823, %v1805
      %v4856 = vmul.f32 %v4824, %v1809
      %v4857 = vmul.f32 %v4825, %v1813
      %v4858 = vmul.f32 %v4826, %v1817
      %v4859 = vmul.f32 %v4827, %v1821
      %v4860 = vmul.f32 %v4828, %v1825
      %v4861 = vmul.f32 %v4829, %v1829
      %v4862 = vmul.f32 %v4830, %v1833
      %v4863 = vmul.f32 %v4831, %v1837
      %v4864 = vmul.f32 %v4832, %v1841
      %v4865 = vmul.f32 %v4833, %v1845
      %v4866 = vmul.f32 %v4834, %v1849
      %v4867 = vmul.f32 %v4835, %v1853
      %v4868 = vmul.f32 %v4836, %v1857
      %v4869 = vpack.c.bf16 %v4838, %v4837
      %v4870 = vpack.c.bf16 %v4840, %v4839
      %v4871 = vpack.c.bf16 %v4842, %v4841
      %v4872 = vpack.c.bf16 %v4844, %v4843
      %v4873 = vpack.c.bf16 %v4846, %v4845
      %v4874 = vpack.c.bf16 %v4848, %v4847
      %v4875 = vpack.c.bf16 %v4850, %v4849
      %v4876 = vpack.c.bf16 %v4852, %v4851
      %v4877 = vpack.c.bf16 %v4854, %v4853
      %v4878 = vpack.c.bf16 %v4856, %v4855
      %v4879 = vpack.c.bf16 %v4858, %v4857
      %v4880 = vpack.c.bf16 %v4860, %v4859
      %v4881 = vpack.c.bf16 %v4862, %v4861
      %v4882 = vpack.c.bf16 %v4864, %v4863
      %v4883 = vpack.c.bf16 %v4866, %v4865
      %v4884 = vpack.c.bf16 %v4868, %v4867
      %s4885 = scalar_lea.vmem %s8, 64
      %v4886 = vld [vmem:[%s4885] sm:$0xf]
      %v4887 = vld [vmem:[%s4885 + $0x4] sm:$0xf]
      %v4888 = vld [vmem:[%s4885 + $0x8] sm:$0xf]
      %v4889 = vld [vmem:[%s4885 + $0xc] sm:$0xf]
      %v4890 = vld [vmem:[%s4885 + $0x10] sm:$0xf]
      %v4891 = vld [vmem:[%s4885 + $0x14] sm:$0xf]
      %v4892 = vld [vmem:[%s4885 + $0x18] sm:$0xf]
      %v4893 = vld [vmem:[%s4885 + $0x1c] sm:$0xf]
      %v4902 = vunpack.c.l.b16 %v4886
      %v4903 = vunpack.c.l.b16 %v4887
      %v4904 = vunpack.c.l.b16 %v4888
      %v4905 = vunpack.c.l.b16 %v4889
      %v4906 = vunpack.c.l.b16 %v4890
      %v4907 = vunpack.c.l.b16 %v4891
      %v4908 = vunpack.c.l.b16 %v4892
      %v4909 = vunpack.c.l.b16 %v4893
      %v4910 = vpack.c.b16 %v4903, %v4902
      %v4911 = vpack.c.b16 %v4905, %v4904
      %v4912 = vpack.c.b16 %v4907, %v4906
      %v4913 = vpack.c.b16 %v4909, %v4908
      %v4919 = vsel %vm577, %v4869, 0
      %v4922 = vsel %vm577, %v4870, 0
      %v4925 = vsel %vm577, %v4871, 0
      %v4928 = vsel %vm577, %v4872, 0
      %v4931 = vsel %vm577, %v4873, 0
      %v4934 = vsel %vm577, %v4874, 0
      %v4937 = vsel %vm577, %v4875, 0
      %v4940 = vsel %vm577, %v4876, 0
      %v4943 = vsel %vm577, %v4877, 0
      %v4946 = vsel %vm577, %v4878, 0
      %v4949 = vsel %vm577, %v4879, 0
      %v4952 = vsel %vm577, %v4880, 0
      %v4955 = vsel %vm577, %v4881, 0
      %v4958 = vsel %vm577, %v4882, 0
      %v4961 = vsel %vm577, %v4883, 0
      %v4964 = vsel %vm577, %v4884, 0
      %4966 = vmatprep.subr.bf16.mxu0 0
      %4967 = vmatpush1.bf16.msra.mxu0 %v4910
      %4968 = vmatprep.subr.bf16.mxu0 0
      %4969 = vmatpush1.bf16.msra.mxu0 %v4911
      %4970 = vmatprep.subr.bf16.mxu0 0
      %4971 = vmatpush1.bf16.msra.mxu0 %v4912
      %4972 = vmatprep.subr.bf16.mxu0 0
      %4973 = vmatpush1.bf16.msra.mxu0 %v4913
      %4974 = vmatprep.subr.bf16.mxu0 0
      %4975 = vmatpush1.bf16.msra.mxu0 0
      %4976 = vmatprep.subr.bf16.mxu0 0
      %4977 = vmatpush1.bf16.msra.mxu0 0
      %4978 = vmatprep.subr.bf16.mxu0 0
      %4979 = vmatpush1.bf16.msra.mxu0 0
      %4980 = vmatprep.subr.bf16.mxu0 0
      %4981 = vmatpush1.bf16.msra.mxu0 0
      %4982 = vmatprep.subr.bf16.mxu0 0
      %4983 = vmatpush1.bf16.msra.mxu0 0
      %4984 = vmatprep.subr.bf16.mxu0 0
      %4985 = vmatpush1.bf16.msra.mxu0 0
      %4986 = vmatprep.subr.bf16.mxu0 0
      %4987 = vmatpush1.bf16.msra.mxu0 0
      %4988 = vmatprep.subr.bf16.mxu0 0
      %4989 = vmatpush1.bf16.msra.mxu0 0
      %4990 = vmatprep.subr.bf16.mxu0 0
      %4991 = vmatpush1.bf16.msra.mxu0 0
      %4992 = vmatprep.subr.bf16.mxu0 0
      %4993 = vmatpush1.bf16.msra.mxu0 0
      %4994 = vmatprep.subr.bf16.mxu0 0
      %4995 = vmatpush1.bf16.msra.mxu0 0
      %4996 = vmatprep.subr.bf16.mxu0 0
      %4997 = vmatpush1.bf16.msra.mxu0 0
      %4998 = vmatprep.mubr.bf16.mxu0 0
      %4999 = vmatmul.mubr.bf16.gmra.mrb[0].mxu0 %v4919
      %v5000 = vpop.f32.mrb[0].mxu0
      %v5001 = vadd.f32 0.0, %v5000
      %v5002 = vpop.f32.mrb[0].mxu0
      %v5003 = vpop.f32.mrb[0].mxu0
      %v5004 = vadd.f32 0.0, %v5003
      %v5005 = vpop.f32.mrb[0].mxu0
      %5006 = vmatprep.mubr.bf16.mxu0 0
      %5007 = vmatmul.mubr.bf16.gmra.mrb[0].mxu0 %v4922
      %v5008 = vpop.f32.mrb[0].mxu0
      %v5009 = vadd.f32 0.0, %v5008
      %v5010 = vpop.f32.mrb[0].mxu0
      %v5011 = vpop.f32.mrb[0].mxu0
      %v5012 = vadd.f32 0.0, %v5011
      %v5013 = vpop.f32.mrb[0].mxu0
      %5014 = vmatprep.mubr.bf16.mxu0 0
      %5015 = vmatmul.mubr.bf16.gmra.mrb[0].mxu0 %v4925
      %v5016 = vpop.f32.mrb[0].mxu0
      %v5017 = vadd.f32 0.0, %v5016
      %v5018 = vpop.f32.mrb[0].mxu0
      %v5019 = vpop.f32.mrb[0].mxu0
      %v5020 = vadd.f32 0.0, %v5019
      %v5021 = vpop.f32.mrb[0].mxu0
      %5022 = vmatprep.mubr.bf16.mxu0 0
      %5023 = vmatmul.mubr.bf16.gmra.mrb[0].mxu0 %v4928
      %v5024 = vpop.f32.mrb[0].mxu0
      %v5025 = vadd.f32 0.0, %v5024
      %v5026 = vpop.f32.mrb[0].mxu0
      %v5027 = vpop.f32.mrb[0].mxu0
      %v5028 = vadd.f32 0.0, %v5027
      %v5029 = vpop.f32.mrb[0].mxu0
      %5030 = vmatprep.mubr.bf16.mxu0 0
      %5031 = vmatmul.mubr.bf16.gmra.mrb[0].mxu0 %v4931
      %v5032 = vpop.f32.mrb[0].mxu0
      %v5033 = vadd.f32 0.0, %v5032
      %v5034 = vpop.f32.mrb[0].mxu0
      %v5035 = vpop.f32.mrb[0].mxu0
      %v5036 = vadd.f32 0.0, %v5035
      %v5037 = vpop.f32.mrb[0].mxu0
      %5038 = vmatprep.mubr.bf16.mxu0 0
      %5039 = vmatmul.mubr.bf16.gmra.mrb[0].mxu0 %v4934
      %v5040 = vpop.f32.mrb[0].mxu0
      %v5041 = vadd.f32 0.0, %v5040
      %v5042 = vpop.f32.mrb[0].mxu0
      %v5043 = vpop.f32.mrb[0].mxu0
      %v5044 = vadd.f32 0.0, %v5043
      %v5045 = vpop.f32.mrb[0].mxu0
      %5046 = vmatprep.mubr.bf16.mxu0 0
      %5047 = vmatmul.mubr.bf16.gmra.mrb[0].mxu0 %v4937
      %v5048 = vpop.f32.mrb[0].mxu0
      %v5049 = vadd.f32 0.0, %v5048
      %v5050 = vpop.f32.mrb[0].mxu0
      %v5051 = vpop.f32.mrb[0].mxu0
      %v5052 = vadd.f32 0.0, %v5051
      %v5053 = vpop.f32.mrb[0].mxu0
      %5054 = vmatprep.mubr.bf16.mxu0 0
      %5055 = vmatmul.mubr.bf16.gmra.mrb[0].mxu0 %v4940
      %v5056 = vpop.f32.mrb[0].mxu0
      %v5057 = vadd.f32 0.0, %v5056
      %v5058 = vpop.f32.mrb[0].mxu0
      %v5059 = vpop.f32.mrb[0].mxu0
      %v5060 = vadd.f32 0.0, %v5059
      %v5061 = vpop.f32.mrb[0].mxu0
      %5062 = vmatprep.mubr.bf16.mxu0 0
      %5063 = vmatmul.mubr.bf16.gmra.mrb[0].mxu0 %v4943
      %v5064 = vpop.f32.mrb[0].mxu0
      %v5065 = vadd.f32 0.0, %v5064
      %v5066 = vpop.f32.mrb[0].mxu0
      %v5067 = vpop.f32.mrb[0].mxu0
      %v5068 = vadd.f32 0.0, %v5067
      %v5069 = vpop.f32.mrb[0].mxu0
      %5070 = vmatprep.mubr.bf16.mxu0 0
      %5071 = vmatmul.mubr.bf16.gmra.mrb[0].mxu0 %v4946
      %v5072 = vpop.f32.mrb[0].mxu0
      %v5073 = vadd.f32 0.0, %v5072
      %v5074 = vpop.f32.mrb[0].mxu0
      %v5075 = vpop.f32.mrb[0].mxu0
      %v5076 = vadd.f32 0.0, %v5075
      %v5077 = vpop.f32.mrb[0].mxu0
      %5078 = vmatprep.mubr.bf16.mxu0 0
      %5079 = vmatmul.mubr.bf16.gmra.mrb[0].mxu0 %v4949
      %v5080 = vpop.f32.mrb[0].mxu0
      %v5081 = vadd.f32 0.0, %v5080
      %v5082 = vpop.f32.mrb[0].mxu0
      %v5083 = vpop.f32.mrb[0].mxu0
      %v5084 = vadd.f32 0.0, %v5083
      %v5085 = vpop.f32.mrb[0].mxu0
      %5086 = vmatprep.mubr.bf16.mxu0 0
      %5087 = vmatmul.mubr.bf16.gmra.mrb[0].mxu0 %v4952
      %v5088 = vpop.f32.mrb[0].mxu0
      %v5089 = vadd.f32 0.0, %v5088
      %v5090 = vpop.f32.mrb[0].mxu0
      %v5091 = vpop.f32.mrb[0].mxu0
      %v5092 = vadd.f32 0.0, %v5091
      %v5093 = vpop.f32.mrb[0].mxu0
      %5094 = vmatprep.mubr.bf16.mxu0 0
      %5095 = vmatmul.mubr.bf16.gmra.mrb[0].mxu0 %v4955
      %v5096 = vpop.f32.mrb[0].mxu0
      %v5097 = vadd.f32 0.0, %v5096
      %v5098 = vpop.f32.mrb[0].mxu0
      %v5099 = vpop.f32.mrb[0].mxu0
      %v5100 = vadd.f32 0.0, %v5099
      %v5101 = vpop.f32.mrb[0].mxu0
      %5102 = vmatprep.mubr.bf16.mxu0 0
      %5103 = vmatmul.mubr.bf16.gmra.mrb[0].mxu0 %v4958
      %v5104 = vpop.f32.mrb[0].mxu0
      %v5105 = vadd.f32 0.0, %v5104
      %v5106 = vpop.f32.mrb[0].mxu0
      %v5107 = vpop.f32.mrb[0].mxu0
      %v5108 = vadd.f32 0.0, %v5107
      %v5109 = vpop.f32.mrb[0].mxu0
      %5110 = vmatprep.mubr.bf16.mxu0 0
      %5111 = vmatmul.mubr.bf16.gmra.mrb[0].mxu0 %v4961
      %v5112 = vpop.f32.mrb[0].mxu0
      %v5113 = vadd.f32 0.0, %v5112
      %v5114 = vpop.f32.mrb[0].mxu0
      %v5115 = vpop.f32.mrb[0].mxu0
      %v5116 = vadd.f32 0.0, %v5115
      %v5117 = vpop.f32.mrb[0].mxu0
      %5118 = vmatprep.mubr.bf16.mxu0 0
      %5119 = vmatmul.mubr.bf16.gmra.mrb[0].mxu0 %v4964
      %v5120 = vpop.f32.mrb[0].mxu0
      %v5121 = vadd.f32 0.0, %v5120
      %v5122 = vpop.f32.mrb[0].mxu0
      %v5123 = vpop.f32.mrb[0].mxu0
      %v5124 = vadd.f32 0.0, %v5123
      %v5125 = vpop.f32.mrb[0].mxu0
      %5126 = vdwg.mxu0
      %v5127 = vadd.f32 %v4679, %v5001
      %v5128 = vadd.f32 %v4682, %v5004
      %v5129 = vadd.f32 %v4687, %v5009
      %v5130 = vadd.f32 %v4690, %v5012
      %v5131 = vadd.f32 %v4695, %v5017
      %v5132 = vadd.f32 %v4698, %v5020
      %v5133 = vadd.f32 %v4703, %v5025
      %v5134 = vadd.f32 %v4706, %v5028
      %v5135 = vadd.f32 %v4711, %v5033
      %v5136 = vadd.f32 %v4714, %v5036
      %v5137 = vadd.f32 %v4719, %v5041
      %v5138 = vadd.f32 %v4722, %v5044
      %v5139 = vadd.f32 %v4727, %v5049
      %v5140 = vadd.f32 %v4730, %v5052
      %v5141 = vadd.f32 %v4735, %v5057
      %v5142 = vadd.f32 %v4738, %v5060
      %v5143 = vadd.f32 %v4743, %v5065
      %v5144 = vadd.f32 %v4746, %v5068
      %v5145 = vadd.f32 %v4751, %v5073
      %v5146 = vadd.f32 %v4754, %v5076
      %v5147 = vadd.f32 %v4759, %v5081
      %v5148 = vadd.f32 %v4762, %v5084
      %v5149 = vadd.f32 %v4767, %v5089
      %v5150 = vadd.f32 %v4770, %v5092
      %v5151 = vadd.f32 %v4775, %v5097
      %v5152 = vadd.f32 %v4778, %v5100
      %v5153 = vadd.f32 %v4783, %v5105
      %v5154 = vadd.f32 %v4786, %v5108
      %v5155 = vadd.f32 %v4791, %v5113
      %v5156 = vadd.f32 %v4794, %v5116
      %v5157 = vadd.f32 %v4799, %v5121
      %v5158 = vadd.f32 %v4802, %v5124
      %v5159 = vld [vmem:[#allocation2 + $0x17] sm:$0xff]
      %v5160 = vld [vmem:[#allocation2 + $0x1f] sm:$0xff]
      %v5161 = vld [vmem:[#allocation2 + $0x27] sm:$0xff]
      %v5162 = vld [vmem:[#allocation2 + $0x2f] sm:$0xff]
      %v5163 = vld [vmem:[#allocation2 + $0x37] sm:$0xff]
      %v5164 = vld [vmem:[#allocation2 + $0x3f] sm:$0xff]
      %v5165 = vld [vmem:[#allocation2 + $0x47] sm:$0xff]
      %v5166 = vld [vmem:[#allocation2 + $0x4f] sm:$0xff]
      %v5167 = vld [vmem:[#allocation2 + $0x57] sm:$0xff]
      %v5168 = vld [vmem:[#allocation2 + $0x5f] sm:$0xff]
      %v5169 = vld [vmem:[#allocation2 + $0x67] sm:$0xff]
      %v5170 = vld [vmem:[#allocation2 + $0x6f] sm:$0xff]
      %v5171 = vld [vmem:[#allocation2 + $0x77] sm:$0xff]
      %v5172 = vld [vmem:[#allocation2 + $0x7f] sm:$0xff]
      %v5173 = vld [vmem:[#allocation2 + $0x87] sm:$0xff]
      %v5174 = vld [vmem:[#allocation2 + $0x8f] sm:$0xff]
      %v5175 = vld [vmem:[#allocation2 + $0x97] sm:$0xff]
      %v5176 = vld [vmem:[#allocation2 + $0x9f] sm:$0xff]
      %v5177 = vld [vmem:[#allocation2 + $0xa7] sm:$0xff]
      %v5178 = vld [vmem:[#allocation2 + $0xaf] sm:$0xff]
      %v5179 = vld [vmem:[#allocation2 + $0xb7] sm:$0xff]
      %v5180 = vld [vmem:[#allocation2 + $0xbf] sm:$0xff]
      %v5181 = vld [vmem:[#allocation2 + $0xc7] sm:$0xff]
      %v5182 = vld [vmem:[#allocation2 + $0xcf] sm:$0xff]
      %v5183 = vld [vmem:[#allocation2 + $0xd7] sm:$0xff]
      %v5184 = vld [vmem:[#allocation2 + $0xdf] sm:$0xff]
      %v5185 = vld [vmem:[#allocation2 + $0xe7] sm:$0xff]
      %v5186 = vld [vmem:[#allocation2 + $0xef] sm:$0xff]
      %v5187 = vld [vmem:[#allocation2 + $0xf7] sm:$0xff]
      %v5188 = vld [vmem:[#allocation2 + $0xff] sm:$0xff]
      %v5189 = vld [vmem:[#allocation2 + $0x107] sm:$0xff]
      %v5190 = vld [vmem:[#allocation2 + $0x10f] sm:$0xff]
      %v5191 = vmul.f32 %v5159, %v1018
      %v5192 = vmul.f32 %v5160, %v1023
      %v5193 = vmul.f32 %v5161, %v1028
      %v5194 = vmul.f32 %v5162, %v1033
      %v5195 = vmul.f32 %v5163, %v1038
      %v5196 = vmul.f32 %v5164, %v1043
      %v5197 = vmul.f32 %v5165, %v1048
      %v5198 = vmul.f32 %v5166, %v1053
      %v5199 = vmul.f32 %v5167, %v1058
      %v5200 = vmul.f32 %v5168, %v1063
      %v5201 = vmul.f32 %v5169, %v1068
      %v5202 = vmul.f32 %v5170, %v1073
      %v5203 = vmul.f32 %v5171, %v1078
      %v5204 = vmul.f32 %v5172, %v1083
      %v5205 = vmul.f32 %v5173, %v1088
      %v5206 = vmul.f32 %v5174, %v1093
      %v5207 = vmul.f32 %v5175, %v1098
      %v5208 = vmul.f32 %v5176, %v1103
      %v5209 = vmul.f32 %v5177, %v1108
      %v5210 = vmul.f32 %v5178, %v1113
      %v5211 = vmul.f32 %v5179, %v1118
      %v5212 = vmul.f32 %v5180, %v1123
      %v5213 = vmul.f32 %v5181, %v1128
      %v5214 = vmul.f32 %v5182, %v1133
      %v5215 = vmul.f32 %v5183, %v1138
      %v5216 = vmul.f32 %v5184, %v1143
      %v5217 = vmul.f32 %v5185, %v1148
      %v5218 = vmul.f32 %v5186, %v1153
      %v5219 = vmul.f32 %v5187, %v1158
      %v5220 = vmul.f32 %v5188, %v1163
      %v5221 = vmul.f32 %v5189, %v1168
      %v5222 = vmul.f32 %v5190, %v1173
      %v5223 = vpack.c.bf16 %v5192, %v5191
      %v5224 = vpack.c.bf16 %v5194, %v5193
      %v5225 = vpack.c.bf16 %v5196, %v5195
      %v5226 = vpack.c.bf16 %v5198, %v5197
      %v5227 = vpack.c.bf16 %v5200, %v5199
      %v5228 = vpack.c.bf16 %v5202, %v5201
      %v5229 = vpack.c.bf16 %v5204, %v5203
      %v5230 = vpack.c.bf16 %v5206, %v5205
      %v5231 = vpack.c.bf16 %v5208, %v5207
      %v5232 = vpack.c.bf16 %v5210, %v5209
      %v5233 = vpack.c.bf16 %v5212, %v5211
      %v5234 = vpack.c.bf16 %v5214, %v5213
      %v5235 = vpack.c.bf16 %v5216, %v5215
      %v5236 = vpack.c.bf16 %v5218, %v5217
      %v5237 = vpack.c.bf16 %v5220, %v5219
      %v5238 = vpack.c.bf16 %v5222, %v5221
      %s5239 = scalar_lea.vmem %s8, 96
      %v5240 = vld [vmem:[%s5239] sm:$0xf]
      %v5241 = vld [vmem:[%s5239 + $0x4] sm:$0xf]
      %v5242 = vld [vmem:[%s5239 + $0x8] sm:$0xf]
      %v5243 = vld [vmem:[%s5239 + $0xc] sm:$0xf]
      %v5244 = vld [vmem:[%s5239 + $0x10] sm:$0xf]
      %v5245 = vld [vmem:[%s5239 + $0x14] sm:$0xf]
      %v5246 = vld [vmem:[%s5239 + $0x18] sm:$0xf]
      %v5247 = vld [vmem:[%s5239 + $0x1c] sm:$0xf]
      %v5256 = vunpack.c.l.b16 %v5240
      %v5257 = vunpack.c.l.b16 %v5241
      %v5258 = vunpack.c.l.b16 %v5242
      %v5259 = vunpack.c.l.b16 %v5243
      %v5260 = vunpack.c.l.b16 %v5244
      %v5261 = vunpack.c.l.b16 %v5245
      %v5262 = vunpack.c.l.b16 %v5246
      %v5263 = vunpack.c.l.b16 %v5247
      %v5264 = vpack.c.b16 %v5257, %v5256
      %v5265 = vpack.c.b16 %v5259, %v5258
      %v5266 = vpack.c.b16 %v5261, %v5260
      %v5267 = vpack.c.b16 %v5263, %v5262
      %v5273 = vsel %vm577, %v5223, 0
      %v5276 = vsel %vm577, %v5224, 0
      %v5279 = vsel %vm577, %v5225, 0
      %v5282 = vsel %vm577, %v5226, 0
      %v5285 = vsel %vm577, %v5227, 0
      %v5288 = vsel %vm577, %v5228, 0
      %v5291 = vsel %vm577, %v5229, 0
      %v5294 = vsel %vm577, %v5230, 0
      %v5297 = vsel %vm577, %v5231, 0
      %v5300 = vsel %vm577, %v5232, 0
      %v5303 = vsel %vm577, %v5233, 0
      %v5306 = vsel %vm577, %v5234, 0
      %v5309 = vsel %vm577, %v5235, 0
      %v5312 = vsel %vm577, %v5236, 0
      %v5315 = vsel %vm577, %v5237, 0
      %v5318 = vsel %vm577, %v5238, 0
      %5320 = vmatprep.subr.bf16.mxu0 0
      %5321 = vmatpush1.bf16.msra.mxu0 %v5264
      %5322 = vmatprep.subr.bf16.mxu0 0
      %5323 = vmatpush1.bf16.msra.mxu0 %v5265
      %5324 = vmatprep.subr.bf16.mxu0 0
      %5325 = vmatpush1.bf16.msra.mxu0 %v5266
      %5326 = vmatprep.subr.bf16.mxu0 0
      %5327 = vmatpush1.bf16.msra.mxu0 %v5267
      %5328 = vmatprep.subr.bf16.mxu0 0
      %5329 = vmatpush1.bf16.msra.mxu0 0
      %5330 = vmatprep.subr.bf16.mxu0 0
      %5331 = vmatpush1.bf16.msra.mxu0 0
      %5332 = vmatprep.subr.bf16.mxu0 0
      %5333 = vmatpush1.bf16.msra.mxu0 0
      %5334 = vmatprep.subr.bf16.mxu0 0
      %5335 = vmatpush1.bf16.msra.mxu0 0
      %5336 = vmatprep.subr.bf16.mxu0 0
      %5337 = vmatpush1.bf16.msra.mxu0 0
      %5338 = vmatprep.subr.bf16.mxu0 0
      %5339 = vmatpush1.bf16.msra.mxu0 0
      %5340 = vmatprep.subr.bf16.mxu0 0
      %5341 = vmatpush1.bf16.msra.mxu0 0
      %5342 = vmatprep.subr.bf16.mxu0 0
      %5343 = vmatpush1.bf16.msra.mxu0 0
      %5344 = vmatprep.subr.bf16.mxu0 0
      %5345 = vmatpush1.bf16.msra.mxu0 0
      %5346 = vmatprep.subr.bf16.mxu0 0
      %5347 = vmatpush1.bf16.msra.mxu0 0
      %5348 = vmatprep.subr.bf16.mxu0 0
      %5349 = vmatpush1.bf16.msra.mxu0 0
      %5350 = vmatprep.subr.bf16.mxu0 0
      %5351 = vmatpush1.bf16.msra.mxu0 0
      %5352 = vmatprep.mubr.bf16.mxu0 0
      %5353 = vmatmul.mubr.bf16.gmra.mrb[0].mxu0 %v5273
      %v5354 = vpop.f32.mrb[0].mxu0
      %v5355 = vadd.f32 0.0, %v5354
      %v5356 = vpop.f32.mrb[0].mxu0
      %v5357 = vpop.f32.mrb[0].mxu0
      %v5358 = vadd.f32 0.0, %v5357
      %v5359 = vpop.f32.mrb[0].mxu0
      %5360 = vmatprep.mubr.bf16.mxu0 0
      %5361 = vmatmul.mubr.bf16.gmra.mrb[0].mxu0 %v5276
      %v5362 = vpop.f32.mrb[0].mxu0
      %v5363 = vadd.f32 0.0, %v5362
      %v5364 = vpop.f32.mrb[0].mxu0
      %v5365 = vpop.f32.mrb[0].mxu0
      %v5366 = vadd.f32 0.0, %v5365
      %v5367 = vpop.f32.mrb[0].mxu0
      %5368 = vmatprep.mubr.bf16.mxu0 0
      %5369 = vmatmul.mubr.bf16.gmra.mrb[0].mxu0 %v5279
      %v5370 = vpop.f32.mrb[0].mxu0
      %v5371 = vadd.f32 0.0, %v5370
      %v5372 = vpop.f32.mrb[0].mxu0
      %v5373 = vpop.f32.mrb[0].mxu0
      %v5374 = vadd.f32 0.0, %v5373
      %v5375 = vpop.f32.mrb[0].mxu0
      %5376 = vmatprep.mubr.bf16.mxu0 0
      %5377 = vmatmul.mubr.bf16.gmra.mrb[0].mxu0 %v5282
      %v5378 = vpop.f32.mrb[0].mxu0
      %v5379 = vadd.f32 0.0, %v5378
      %v5380 = vpop.f32.mrb[0].mxu0
      %v5381 = vpop.f32.mrb[0].mxu0
      %v5382 = vadd.f32 0.0, %v5381
      %v5383 = vpop.f32.mrb[0].mxu0
      %5384 = vmatprep.mubr.bf16.mxu0 0
      %5385 = vmatmul.mubr.bf16.gmra.mrb[0].mxu0 %v5285
      %v5386 = vpop.f32.mrb[0].mxu0
      %v5387 = vadd.f32 0.0, %v5386
      %v5388 = vpop.f32.mrb[0].mxu0
      %v5389 = vpop.f32.mrb[0].mxu0
      %v5390 = vadd.f32 0.0, %v5389
      %v5391 = vpop.f32.mrb[0].mxu0
      %5392 = vmatprep.mubr.bf16.mxu0 0
      %5393 = vmatmul.mubr.bf16.gmra.mrb[0].mxu0 %v5288
      %v5394 = vpop.f32.mrb[0].mxu0
      %v5395 = vadd.f32 0.0, %v5394
      %v5396 = vpop.f32.mrb[0].mxu0
      %v5397 = vpop.f32.mrb[0].mxu0
      %v5398 = vadd.f32 0.0, %v5397
      %v5399 = vpop.f32.mrb[0].mxu0
      %5400 = vmatprep.mubr.bf16.mxu0 0
      %5401 = vmatmul.mubr.bf16.gmra.mrb[0].mxu0 %v5291
      %v5402 = vpop.f32.mrb[0].mxu0
      %v5403 = vadd.f32 0.0, %v5402
      %v5404 = vpop.f32.mrb[0].mxu0
      %v5405 = vpop.f32.mrb[0].mxu0
      %v5406 = vadd.f32 0.0, %v5405
      %v5407 = vpop.f32.mrb[0].mxu0
      %5408 = vmatprep.mubr.bf16.mxu0 0
      %5409 = vmatmul.mubr.bf16.gmra.mrb[0].mxu0 %v5294
      %v5410 = vpop.f32.mrb[0].mxu0
      %v5411 = vadd.f32 0.0, %v5410
      %v5412 = vpop.f32.mrb[0].mxu0
      %v5413 = vpop.f32.mrb[0].mxu0
      %v5414 = vadd.f32 0.0, %v5413
      %v5415 = vpop.f32.mrb[0].mxu0
      %5416 = vmatprep.mubr.bf16.mxu0 0
      %5417 = vmatmul.mubr.bf16.gmra.mrb[0].mxu0 %v5297
      %v5418 = vpop.f32.mrb[0].mxu0
      %v5419 = vadd.f32 0.0, %v5418
      %v5420 = vpop.f32.mrb[0].mxu0
      %v5421 = vpop.f32.mrb[0].mxu0
      %v5422 = vadd.f32 0.0, %v5421
      %v5423 = vpop.f32.mrb[0].mxu0
      %5424 = vmatprep.mubr.bf16.mxu0 0
      %5425 = vmatmul.mubr.bf16.gmra.mrb[0].mxu0 %v5300
      %v5426 = vpop.f32.mrb[0].mxu0
      %v5427 = vadd.f32 0.0, %v5426
      %v5428 = vpop.f32.mrb[0].mxu0
      %v5429 = vpop.f32.mrb[0].mxu0
      %v5430 = vadd.f32 0.0, %v5429
      %v5431 = vpop.f32.mrb[0].mxu0
      %5432 = vmatprep.mubr.bf16.mxu0 0
      %5433 = vmatmul.mubr.bf16.gmra.mrb[0].mxu0 %v5303
      %v5434 = vpop.f32.mrb[0].mxu0
      %v5435 = vadd.f32 0.0, %v5434
      %v5436 = vpop.f32.mrb[0].mxu0
      %v5437 = vpop.f32.mrb[0].mxu0
      %v5438 = vadd.f32 0.0, %v5437
      %v5439 = vpop.f32.mrb[0].mxu0
      %5440 = vmatprep.mubr.bf16.mxu0 0
      %5441 = vmatmul.mubr.bf16.gmra.mrb[0].mxu0 %v5306
      %v5442 = vpop.f32.mrb[0].mxu0
      %v5443 = vadd.f32 0.0, %v5442
      %v5444 = vpop.f32.mrb[0].mxu0
      %v5445 = vpop.f32.mrb[0].mxu0
      %v5446 = vadd.f32 0.0, %v5445
      %v5447 = vpop.f32.mrb[0].mxu0
      %5448 = vmatprep.mubr.bf16.mxu0 0
      %5449 = vmatmul.mubr.bf16.gmra.mrb[0].mxu0 %v5309
      %v5450 = vpop.f32.mrb[0].mxu0
      %v5451 = vadd.f32 0.0, %v5450
      %v5452 = vpop.f32.mrb[0].mxu0
      %v5453 = vpop.f32.mrb[0].mxu0
      %v5454 = vadd.f32 0.0, %v5453
      %v5455 = vpop.f32.mrb[0].mxu0
      %5456 = vmatprep.mubr.bf16.mxu0 0
      %5457 = vmatmul.mubr.bf16.gmra.mrb[0].mxu0 %v5312
      %v5458 = vpop.f32.mrb[0].mxu0
      %v5459 = vadd.f32 0.0, %v5458
      %v5460 = vpop.f32.mrb[0].mxu0
      %v5461 = vpop.f32.mrb[0].mxu0
      %v5462 = vadd.f32 0.0, %v5461
      %v5463 = vpop.f32.mrb[0].mxu0
      %5464 = vmatprep.mubr.bf16.mxu0 0
      %5465 = vmatmul.mubr.bf16.gmra.mrb[0].mxu0 %v5315
      %v5466 = vpop.f32.mrb[0].mxu0
      %v5467 = vadd.f32 0.0, %v5466
      %v5468 = vpop.f32.mrb[0].mxu0
      %v5469 = vpop.f32.mrb[0].mxu0
      %v5470 = vadd.f32 0.0, %v5469
      %v5471 = vpop.f32.mrb[0].mxu0
      %5472 = vmatprep.mubr.bf16.mxu0 0
      %5473 = vmatmul.mubr.bf16.gmra.mrb[0].mxu0 %v5318
      %v5474 = vpop.f32.mrb[0].mxu0
      %v5475 = vadd.f32 0.0, %v5474
      %v5476 = vpop.f32.mrb[0].mxu0
      %v5477 = vpop.f32.mrb[0].mxu0
      %v5478 = vadd.f32 0.0, %v5477
      %v5479 = vpop.f32.mrb[0].mxu0
      %5480 = vdwg.mxu0
      %v5481 = vadd.f32 %v5127, %v5355
      %v5482 = vadd.f32 %v5128, %v5358
      %v5483 = vadd.f32 %v5129, %v5363
      %v5484 = vadd.f32 %v5130, %v5366
      %v5485 = vadd.f32 %v5131, %v5371
      %v5486 = vadd.f32 %v5132, %v5374
      %v5487 = vadd.f32 %v5133, %v5379
      %v5488 = vadd.f32 %v5134, %v5382
      %v5489 = vadd.f32 %v5135, %v5387
      %v5490 = vadd.f32 %v5136, %v5390
      %v5491 = vadd.f32 %v5137, %v5395
      %v5492 = vadd.f32 %v5138, %v5398
      %v5493 = vadd.f32 %v5139, %v5403
      %v5494 = vadd.f32 %v5140, %v5406
      %v5495 = vadd.f32 %v5141, %v5411
      %v5496 = vadd.f32 %v5142, %v5414
      %v5497 = vadd.f32 %v5143, %v5419
      %v5498 = vadd.f32 %v5144, %v5422
      %v5499 = vadd.f32 %v5145, %v5427
      %v5500 = vadd.f32 %v5146, %v5430
      %v5501 = vadd.f32 %v5147, %v5435
      %v5502 = vadd.f32 %v5148, %v5438
      %v5503 = vadd.f32 %v5149, %v5443
      %v5504 = vadd.f32 %v5150, %v5446
      %v5505 = vadd.f32 %v5151, %v5451
      %v5506 = vadd.f32 %v5152, %v5454
      %v5507 = vadd.f32 %v5153, %v5459
      %v5508 = vadd.f32 %v5154, %v5462
      %v5509 = vadd.f32 %v5155, %v5467
      %v5510 = vadd.f32 %v5156, %v5470
      %v5511 = vadd.f32 %v5157, %v5475
      %v5512 = vadd.f32 %v5158, %v5478
      %v5513 = vpack.c.bf16 %v4131, %v4130
      %v5514 = vpack.c.bf16 %v4133, %v4132
      %v5515 = vpack.c.bf16 %v4135, %v4134
      %v5516 = vpack.c.bf16 %v4137, %v4136
      %v5517 = vpack.c.bf16 %v4139, %v4138
      %v5518 = vpack.c.bf16 %v4141, %v4140
      %v5519 = vpack.c.bf16 %v4143, %v4142
      %v5520 = vpack.c.bf16 %v4145, %v4144
      %v5521 = vpack.c.bf16 %v4147, %v4146
      %v5522 = vpack.c.bf16 %v4149, %v4148
      %v5523 = vpack.c.bf16 %v4151, %v4150
      %v5524 = vpack.c.bf16 %v4153, %v4152
      %v5525 = vpack.c.bf16 %v4155, %v4154
      %v5526 = vpack.c.bf16 %v4157, %v4156
      %v5527 = vpack.c.bf16 %v4159, %v4158
      %v5528 = vpack.c.bf16 %v4161, %v4160
      %s5529 = scalar_lea.vmem %s8, 128
      %v5530 = vld [vmem:[%s5529] sm:$0xf]
      %v5531 = vld [vmem:[%s5529 + $0x4] sm:$0xf]
      %v5532 = vld [vmem:[%s5529 + $0x8] sm:$0xf]
      %v5533 = vld [vmem:[%s5529 + $0xc] sm:$0xf]
      %v5534 = vld [vmem:[%s5529 + $0x10] sm:$0xf]
      %v5535 = vld [vmem:[%s5529 + $0x14] sm:$0xf]
      %v5536 = vld [vmem:[%s5529 + $0x18] sm:$0xf]
      %v5537 = vld [vmem:[%s5529 + $0x1c] sm:$0xf]
      %v5546 = vunpack.c.l.b16 %v5530
      %v5547 = vunpack.c.l.b16 %v5531
      %v5548 = vunpack.c.l.b16 %v5532
      %v5549 = vunpack.c.l.b16 %v5533
      %v5550 = vunpack.c.l.b16 %v5534
      %v5551 = vunpack.c.l.b16 %v5535
      %v5552 = vunpack.c.l.b16 %v5536
      %v5553 = vunpack.c.l.b16 %v5537
      %v5554 = vpack.c.b16 %v5547, %v5546
      %v5555 = vpack.c.b16 %v5549, %v5548
      %v5556 = vpack.c.b16 %v5551, %v5550
      %v5557 = vpack.c.b16 %v5553, %v5552
      %v5563 = vsel %vm577, %v5513, 0
      %v5566 = vsel %vm577, %v5514, 0
      %v5569 = vsel %vm577, %v5515, 0
      %v5572 = vsel %vm577, %v5516, 0
      %v5575 = vsel %vm577, %v5517, 0
      %v5578 = vsel %vm577, %v5518, 0
      %v5581 = vsel %vm577, %v5519, 0
      %v5584 = vsel %vm577, %v5520, 0
      %v5587 = vsel %vm577, %v5521, 0
      %v5590 = vsel %vm577, %v5522, 0
      %v5593 = vsel %vm577, %v5523, 0
      %v5596 = vsel %vm577, %v5524, 0
      %v5599 = vsel %vm577, %v5525, 0
      %v5602 = vsel %vm577, %v5526, 0
      %v5605 = vsel %vm577, %v5527, 0
      %v5608 = vsel %vm577, %v5528, 0
      %5610 = vmatprep.subr.bf16.mxu0 0
      %5611 = vmatpush1.bf16.msra.mxu0 %v5554
      %5612 = vmatprep.subr.bf16.mxu0 0
      %5613 = vmatpush1.bf16.msra.mxu0 %v5555
      %5614 = vmatprep.subr.bf16.mxu0 0
      %5615 = vmatpush1.bf16.msra.mxu0 %v5556
      %5616 = vmatprep.subr.bf16.mxu0 0
      %5617 = vmatpush1.bf16.msra.mxu0 %v5557
      %5618 = vmatprep.subr.bf16.mxu0 0
      %5619 = vmatpush1.bf16.msra.mxu0 0
      %5620 = vmatprep.subr.bf16.mxu0 0
      %5621 = vmatpush1.bf16.msra.mxu0 0
      %5622 = vmatprep.subr.bf16.mxu0 0
      %5623 = vmatpush1.bf16.msra.mxu0 0
      %5624 = vmatprep.subr.bf16.mxu0 0
      %5625 = vmatpush1.bf16.msra.mxu0 0
      %5626 = vmatprep.subr.bf16.mxu0 0
      %5627 = vmatpush1.bf16.msra.mxu0 0
      %5628 = vmatprep.subr.bf16.mxu0 0
      %5629 = vmatpush1.bf16.msra.mxu0 0
      %5630 = vmatprep.subr.bf16.mxu0 0
      %5631 = vmatpush1.bf16.msra.mxu0 0
      %5632 = vmatprep.subr.bf16.mxu0 0
      %5633 = vmatpush1.bf16.msra.mxu0 0
      %5634 = vmatprep.subr.bf16.mxu0 0
      %5635 = vmatpush1.bf16.msra.mxu0 0
      %5636 = vmatprep.subr.bf16.mxu0 0
      %5637 = vmatpush1.bf16.msra.mxu0 0
      %5638 = vmatprep.subr.bf16.mxu0 0
      %5639 = vmatpush1.bf16.msra.mxu0 0
      %5640 = vmatprep.subr.bf16.mxu0 0
      %5641 = vmatpush1.bf16.msra.mxu0 0
      %5642 = vmatprep.mubr.bf16.mxu0 0
      %5643 = vmatmul.mubr.bf16.gmra.mrb[0].mxu0 %v5563
      %v5644 = vpop.f32.mrb[0].mxu0
      %v5645 = vadd.f32 0.0, %v5644
      %v5646 = vpop.f32.mrb[0].mxu0
      %v5647 = vpop.f32.mrb[0].mxu0
      %v5648 = vadd.f32 0.0, %v5647
      %v5649 = vpop.f32.mrb[0].mxu0
      %5650 = vmatprep.mubr.bf16.mxu0 0
      %5651 = vmatmul.mubr.bf16.gmra.mrb[0].mxu0 %v5566
      %v5652 = vpop.f32.mrb[0].mxu0
      %v5653 = vadd.f32 0.0, %v5652
      %v5654 = vpop.f32.mrb[0].mxu0
      %v5655 = vpop.f32.mrb[0].mxu0
      %v5656 = vadd.f32 0.0, %v5655
      %v5657 = vpop.f32.mrb[0].mxu0
      %5658 = vmatprep.mubr.bf16.mxu0 0
      %5659 = vmatmul.mubr.bf16.gmra.mrb[0].mxu0 %v5569
      %v5660 = vpop.f32.mrb[0].mxu0
      %v5661 = vadd.f32 0.0, %v5660
      %v5662 = vpop.f32.mrb[0].mxu0
      %v5663 = vpop.f32.mrb[0].mxu0
      %v5664 = vadd.f32 0.0, %v5663
      %v5665 = vpop.f32.mrb[0].mxu0
      %5666 = vmatprep.mubr.bf16.mxu0 0
      %5667 = vmatmul.mubr.bf16.gmra.mrb[0].mxu0 %v5572
      %v5668 = vpop.f32.mrb[0].mxu0
      %v5669 = vadd.f32 0.0, %v5668
      %v5670 = vpop.f32.mrb[0].mxu0
      %v5671 = vpop.f32.mrb[0].mxu0
      %v5672 = vadd.f32 0.0, %v5671
      %v5673 = vpop.f32.mrb[0].mxu0
      %5674 = vmatprep.mubr.bf16.mxu0 0
      %5675 = vmatmul.mubr.bf16.gmra.mrb[0].mxu0 %v5575
      %v5676 = vpop.f32.mrb[0].mxu0
      %v5677 = vadd.f32 0.0, %v5676
      %v5678 = vpop.f32.mrb[0].mxu0
      %v5679 = vpop.f32.mrb[0].mxu0
      %v5680 = vadd.f32 0.0, %v5679
      %v5681 = vpop.f32.mrb[0].mxu0
      %5682 = vmatprep.mubr.bf16.mxu0 0
      %5683 = vmatmul.mubr.bf16.gmra.mrb[0].mxu0 %v5578
      %v5684 = vpop.f32.mrb[0].mxu0
      %v5685 = vadd.f32 0.0, %v5684
      %v5686 = vpop.f32.mrb[0].mxu0
      %v5687 = vpop.f32.mrb[0].mxu0
      %v5688 = vadd.f32 0.0, %v5687
      %v5689 = vpop.f32.mrb[0].mxu0
      %5690 = vmatprep.mubr.bf16.mxu0 0
      %5691 = vmatmul.mubr.bf16.gmra.mrb[0].mxu0 %v5581
      %v5692 = vpop.f32.mrb[0].mxu0
      %v5693 = vadd.f32 0.0, %v5692
      %v5694 = vpop.f32.mrb[0].mxu0
      %v5695 = vpop.f32.mrb[0].mxu0
      %v5696 = vadd.f32 0.0, %v5695
      %v5697 = vpop.f32.mrb[0].mxu0
      %5698 = vmatprep.mubr.bf16.mxu0 0
      %5699 = vmatmul.mubr.bf16.gmra.mrb[0].mxu0 %v5584
      %v5700 = vpop.f32.mrb[0].mxu0
      %v5701 = vadd.f32 0.0, %v5700
      %v5702 = vpop.f32.mrb[0].mxu0
      %v5703 = vpop.f32.mrb[0].mxu0
      %v5704 = vadd.f32 0.0, %v5703
      %v5705 = vpop.f32.mrb[0].mxu0
      %5706 = vmatprep.mubr.bf16.mxu0 0
      %5707 = vmatmul.mubr.bf16.gmra.mrb[0].mxu0 %v5587
      %v5708 = vpop.f32.mrb[0].mxu0
      %v5709 = vadd.f32 0.0, %v5708
      %v5710 = vpop.f32.mrb[0].mxu0
      %v5711 = vpop.f32.mrb[0].mxu0
      %v5712 = vadd.f32 0.0, %v5711
      %v5713 = vpop.f32.mrb[0].mxu0
      %5714 = vmatprep.mubr.bf16.mxu0 0
      %5715 = vmatmul.mubr.bf16.gmra.mrb[0].mxu0 %v5590
      %v5716 = vpop.f32.mrb[0].mxu0
      %v5717 = vadd.f32 0.0, %v5716
      %v5718 = vpop.f32.mrb[0].mxu0
      %v5719 = vpop.f32.mrb[0].mxu0
      %v5720 = vadd.f32 0.0, %v5719
      %v5721 = vpop.f32.mrb[0].mxu0
      %5722 = vmatprep.mubr.bf16.mxu0 0
      %5723 = vmatmul.mubr.bf16.gmra.mrb[0].mxu0 %v5593
      %v5724 = vpop.f32.mrb[0].mxu0
      %v5725 = vadd.f32 0.0, %v5724
      %v5726 = vpop.f32.mrb[0].mxu0
      %v5727 = vpop.f32.mrb[0].mxu0
      %v5728 = vadd.f32 0.0, %v5727
      %v5729 = vpop.f32.mrb[0].mxu0
      %5730 = vmatprep.mubr.bf16.mxu0 0
      %5731 = vmatmul.mubr.bf16.gmra.mrb[0].mxu0 %v5596
      %v5732 = vpop.f32.mrb[0].mxu0
      %v5733 = vadd.f32 0.0, %v5732
      %v5734 = vpop.f32.mrb[0].mxu0
      %v5735 = vpop.f32.mrb[0].mxu0
      %v5736 = vadd.f32 0.0, %v5735
      %v5737 = vpop.f32.mrb[0].mxu0
      %5738 = vmatprep.mubr.bf16.mxu0 0
      %5739 = vmatmul.mubr.bf16.gmra.mrb[0].mxu0 %v5599
      %v5740 = vpop.f32.mrb[0].mxu0
      %v5741 = vadd.f32 0.0, %v5740
      %v5742 = vpop.f32.mrb[0].mxu0
      %v5743 = vpop.f32.mrb[0].mxu0
      %v5744 = vadd.f32 0.0, %v5743
      %v5745 = vpop.f32.mrb[0].mxu0
      %5746 = vmatprep.mubr.bf16.mxu0 0
      %5747 = vmatmul.mubr.bf16.gmra.mrb[0].mxu0 %v5602
      %v5748 = vpop.f32.mrb[0].mxu0
      %v5749 = vadd.f32 0.0, %v5748
      %v5750 = vpop.f32.mrb[0].mxu0
      %v5751 = vpop.f32.mrb[0].mxu0
      %v5752 = vadd.f32 0.0, %v5751
      %v5753 = vpop.f32.mrb[0].mxu0
      %5754 = vmatprep.mubr.bf16.mxu0 0
      %5755 = vmatmul.mubr.bf16.gmra.mrb[0].mxu0 %v5605
      %v5756 = vpop.f32.mrb[0].mxu0
      %v5757 = vadd.f32 0.0, %v5756
      %v5758 = vpop.f32.mrb[0].mxu0
      %v5759 = vpop.f32.mrb[0].mxu0
      %v5760 = vadd.f32 0.0, %v5759
      %v5761 = vpop.f32.mrb[0].mxu0
      %5762 = vmatprep.mubr.bf16.mxu0 0
      %5763 = vmatmul.mubr.bf16.gmra.mrb[0].mxu0 %v5608
      %v5764 = vpop.f32.mrb[0].mxu0
      %v5765 = vadd.f32 0.0, %v5764
      %v5766 = vpop.f32.mrb[0].mxu0
      %v5767 = vpop.f32.mrb[0].mxu0
      %v5768 = vadd.f32 0.0, %v5767
      %v5769 = vpop.f32.mrb[0].mxu0
      %5770 = vdwg.mxu0
      %v5771 = vadd.f32 %v5481, %v5645
      %v5772 = vadd.f32 %v5482, %v5648
      %v5773 = vadd.f32 %v5483, %v5653
      %v5774 = vadd.f32 %v5484, %v5656
      %v5775 = vadd.f32 %v5485, %v5661
      %v5776 = vadd.f32 %v5486, %v5664
      %v5777 = vadd.f32 %v5487, %v5669
      %v5778 = vadd.f32 %v5488, %v5672
      %v5779 = vadd.f32 %v5489, %v5677
      %v5780 = vadd.f32 %v5490, %v5680
      %v5781 = vadd.f32 %v5491, %v5685
      %v5782 = vadd.f32 %v5492, %v5688
      %v5783 = vadd.f32 %v5493, %v5693
      %v5784 = vadd.f32 %v5494, %v5696
      %v5785 = vadd.f32 %v5495, %v5701
      %v5786 = vadd.f32 %v5496, %v5704
      %v5787 = vadd.f32 %v5497, %v5709
      %v5788 = vadd.f32 %v5498, %v5712
      %v5789 = vadd.f32 %v5499, %v5717
      %v5790 = vadd.f32 %v5500, %v5720
      %v5791 = vadd.f32 %v5501, %v5725
      %v5792 = vadd.f32 %v5502, %v5728
      %v5793 = vadd.f32 %v5503, %v5733
      %v5794 = vadd.f32 %v5504, %v5736
      %v5795 = vadd.f32 %v5505, %v5741
      %v5796 = vadd.f32 %v5506, %v5744
      %v5797 = vadd.f32 %v5507, %v5749
      %v5798 = vadd.f32 %v5508, %v5752
      %v5799 = vadd.f32 %v5509, %v5757
      %v5800 = vadd.f32 %v5510, %v5760
      %v5801 = vadd.f32 %v5511, %v5765
      %v5802 = vadd.f32 %v5512, %v5768
      %v5803 = vld [vmem:[#allocation2 + $0x19] sm:$0xff]
      %v5804 = vld [vmem:[#allocation2 + $0x21] sm:$0xff]
      %v5805 = vld [vmem:[#allocation2 + $0x29] sm:$0xff]
      %v5806 = vld [vmem:[#allocation2 + $0x31] sm:$0xff]
      %v5807 = vld [vmem:[#allocation2 + $0x39] sm:$0xff]
      %v5808 = vld [vmem:[#allocation2 + $0x41] sm:$0xff]
      %v5809 = vld [vmem:[#allocation2 + $0x49] sm:$0xff]
      %v5810 = vld [vmem:[#allocation2 + $0x51] sm:$0xff]
      %v5811 = vld [vmem:[#allocation2 + $0x59] sm:$0xff]
      %v5812 = vld [vmem:[#allocation2 + $0x61] sm:$0xff]
      %v5813 = vld [vmem:[#allocation2 + $0x69] sm:$0xff]
      %v5814 = vld [vmem:[#allocation2 + $0x71] sm:$0xff]
      %v5815 = vld [vmem:[#allocation2 + $0x79] sm:$0xff]
      %v5816 = vld [vmem:[#allocation2 + $0x81] sm:$0xff]
      %v5817 = vld [vmem:[#allocation2 + $0x89] sm:$0xff]
      %v5818 = vld [vmem:[#allocation2 + $0x91] sm:$0xff]
      %v5819 = vld [vmem:[#allocation2 + $0x99] sm:$0xff]
      %v5820 = vld [vmem:[#allocation2 + $0xa1] sm:$0xff]
      %v5821 = vld [vmem:[#allocation2 + $0xa9] sm:$0xff]
      %v5822 = vld [vmem:[#allocation2 + $0xb1] sm:$0xff]
      %v5823 = vld [vmem:[#allocation2 + $0xb9] sm:$0xff]
      %v5824 = vld [vmem:[#allocation2 + $0xc1] sm:$0xff]
      %v5825 = vld [vmem:[#allocation2 + $0xc9] sm:$0xff]
      %v5826 = vld [vmem:[#allocation2 + $0xd1] sm:$0xff]
      %v5827 = vld [vmem:[#allocation2 + $0xd9] sm:$0xff]
      %v5828 = vld [vmem:[#allocation2 + $0xe1] sm:$0xff]
      %v5829 = vld [vmem:[#allocation2 + $0xe9] sm:$0xff]
      %v5830 = vld [vmem:[#allocation2 + $0xf1] sm:$0xff]
      %v5831 = vld [vmem:[#allocation2 + $0xf9] sm:$0xff]
      %v5832 = vld [vmem:[#allocation2 + $0x101] sm:$0xff]
      %v5833 = vld [vmem:[#allocation2 + $0x109] sm:$0xff]
      %v5834 = vld [vmem:[#allocation2 + $0x111] sm:$0xff]
      %v5835 = vmul.f32 %v5803, %v1733
      %v5836 = vmul.f32 %v5804, %v1737
      %v5837 = vmul.f32 %v5805, %v1741
      %v5838 = vmul.f32 %v5806, %v1745
      %v5839 = vmul.f32 %v5807, %v1749
      %v5840 = vmul.f32 %v5808, %v1753
      %v5841 = vmul.f32 %v5809, %v1757
      %v5842 = vmul.f32 %v5810, %v1761
      %v5843 = vmul.f32 %v5811, %v1765
      %v5844 = vmul.f32 %v5812, %v1769
      %v5845 = vmul.f32 %v5813, %v1773
      %v5846 = vmul.f32 %v5814, %v1777
      %v5847 = vmul.f32 %v5815, %v1781
      %v5848 = vmul.f32 %v5816, %v1785
      %v5849 = vmul.f32 %v5817, %v1789
      %v5850 = vmul.f32 %v5818, %v1793
      %v5851 = vmul.f32 %v5819, %v1797
      %v5852 = vmul.f32 %v5820, %v1801
      %v5853 = vmul.f32 %v5821, %v1805
      %v5854 = vmul.f32 %v5822, %v1809
      %v5855 = vmul.f32 %v5823, %v1813
      %v5856 = vmul.f32 %v5824, %v1817
      %v5857 = vmul.f32 %v5825, %v1821
      %v5858 = vmul.f32 %v5826, %v1825
      %v5859 = vmul.f32 %v5827, %v1829
      %v5860 = vmul.f32 %v5828, %v1833
      %v5861 = vmul.f32 %v5829, %v1837
      %v5862 = vmul.f32 %v5830, %v1841
      %v5863 = vmul.f32 %v5831, %v1845
      %v5864 = vmul.f32 %v5832, %v1849
      %v5865 = vmul.f32 %v5833, %v1853
      %v5866 = vmul.f32 %v5834, %v1857
      %v5867 = vpack.c.bf16 %v5836, %v5835
      %v5868 = vpack.c.bf16 %v5838, %v5837
      %v5869 = vpack.c.bf16 %v5840, %v5839
      %v5870 = vpack.c.bf16 %v5842, %v5841
      %v5871 = vpack.c.bf16 %v5844, %v5843
      %v5872 = vpack.c.bf16 %v5846, %v5845
      %v5873 = vpack.c.bf16 %v5848, %v5847
      %v5874 = vpack.c.bf16 %v5850, %v5849
      %v5875 = vpack.c.bf16 %v5852, %v5851
      %v5876 = vpack.c.bf16 %v5854, %v5853
      %v5877 = vpack.c.bf16 %v5856, %v5855
      %v5878 = vpack.c.bf16 %v5858, %v5857
      %v5879 = vpack.c.bf16 %v5860, %v5859
      %v5880 = vpack.c.bf16 %v5862, %v5861
      %v5881 = vpack.c.bf16 %v5864, %v5863
      %v5882 = vpack.c.bf16 %v5866, %v5865
      %s5883 = scalar_lea.vmem %s8, 160
      %v5884 = vld [vmem:[%s5883] sm:$0xf]
      %v5885 = vld [vmem:[%s5883 + $0x4] sm:$0xf]
      %v5886 = vld [vmem:[%s5883 + $0x8] sm:$0xf]
      %v5887 = vld [vmem:[%s5883 + $0xc] sm:$0xf]
      %v5888 = vld [vmem:[%s5883 + $0x10] sm:$0xf]
      %v5889 = vld [vmem:[%s5883 + $0x14] sm:$0xf]
      %v5890 = vld [vmem:[%s5883 + $0x18] sm:$0xf]
      %v5891 = vld [vmem:[%s5883 + $0x1c] sm:$0xf]
      %v5900 = vunpack.c.l.b16 %v5884
      %v5901 = vunpack.c.l.b16 %v5885
      %v5902 = vunpack.c.l.b16 %v5886
      %v5903 = vunpack.c.l.b16 %v5887
      %v5904 = vunpack.c.l.b16 %v5888
      %v5905 = vunpack.c.l.b16 %v5889
      %v5906 = vunpack.c.l.b16 %v5890
      %v5907 = vunpack.c.l.b16 %v5891
      %v5908 = vpack.c.b16 %v5901, %v5900
      %v5909 = vpack.c.b16 %v5903, %v5902
      %v5910 = vpack.c.b16 %v5905, %v5904
      %v5911 = vpack.c.b16 %v5907, %v5906
      %v5917 = vsel %vm577, %v5867, 0
      %v5920 = vsel %vm577, %v5868, 0
      %v5923 = vsel %vm577, %v5869, 0
      %v5926 = vsel %vm577, %v5870, 0
      %v5929 = vsel %vm577, %v5871, 0
      %v5932 = vsel %vm577, %v5872, 0
      %v5935 = vsel %vm577, %v5873, 0
      %v5938 = vsel %vm577, %v5874, 0
      %v5941 = vsel %vm577, %v5875, 0
      %v5944 = vsel %vm577, %v5876, 0
      %v5947 = vsel %vm577, %v5877, 0
      %v5950 = vsel %vm577, %v5878, 0
      %v5953 = vsel %vm577, %v5879, 0
      %v5956 = vsel %vm577, %v5880, 0
      %v5959 = vsel %vm577, %v5881, 0
      %v5962 = vsel %vm577, %v5882, 0
      %5964 = vmatprep.subr.bf16.mxu0 0
      %5965 = vmatpush1.bf16.msra.mxu0 %v5908
      %5966 = vmatprep.subr.bf16.mxu0 0
      %5967 = vmatpush1.bf16.msra.mxu0 %v5909
      %5968 = vmatprep.subr.bf16.mxu0 0
      %5969 = vmatpush1.bf16.msra.mxu0 %v5910
      %5970 = vmatprep.subr.bf16.mxu0 0
      %5971 = vmatpush1.bf16.msra.mxu0 %v5911
      %5972 = vmatprep.subr.bf16.mxu0 0
      %5973 = vmatpush1.bf16.msra.mxu0 0
      %5974 = vmatprep.subr.bf16.mxu0 0
      %5975 = vmatpush1.bf16.msra.mxu0 0
      %5976 = vmatprep.subr.bf16.mxu0 0
      %5977 = vmatpush1.bf16.msra.mxu0 0
      %5978 = vmatprep.subr.bf16.mxu0 0
      %5979 = vmatpush1.bf16.msra.mxu0 0
      %5980 = vmatprep.subr.bf16.mxu0 0
      %5981 = vmatpush1.bf16.msra.mxu0 0
      %5982 = vmatprep.subr.bf16.mxu0 0
      %5983 = vmatpush1.bf16.msra.mxu0 0
      %5984 = vmatprep.subr.bf16.mxu0 0
      %5985 = vmatpush1.bf16.msra.mxu0 0
      %5986 = vmatprep.subr.bf16.mxu0 0
      %5987 = vmatpush1.bf16.msra.mxu0 0
      %5988 = vmatprep.subr.bf16.mxu0 0
      %5989 = vmatpush1.bf16.msra.mxu0 0
      %5990 = vmatprep.subr.bf16.mxu0 0
      %5991 = vmatpush1.bf16.msra.mxu0 0
      %5992 = vmatprep.subr.bf16.mxu0 0
      %5993 = vmatpush1.bf16.msra.mxu0 0
      %5994 = vmatprep.subr.bf16.mxu0 0
      %5995 = vmatpush1.bf16.msra.mxu0 0
      %5996 = vmatprep.mubr.bf16.mxu0 0
      %5997 = vmatmul.mubr.bf16.gmra.mrb[0].mxu0 %v5917
      %v5998 = vpop.f32.mrb[0].mxu0
      %v5999 = vadd.f32 0.0, %v5998
      %v6000 = vpop.f32.mrb[0].mxu0
      %v6001 = vpop.f32.mrb[0].mxu0
      %v6002 = vadd.f32 0.0, %v6001
      %v6003 = vpop.f32.mrb[0].mxu0
      %6004 = vmatprep.mubr.bf16.mxu0 0
      %6005 = vmatmul.mubr.bf16.gmra.mrb[0].mxu0 %v5920
      %v6006 = vpop.f32.mrb[0].mxu0
      %v6007 = vadd.f32 0.0, %v6006
      %v6008 = vpop.f32.mrb[0].mxu0
      %v6009 = vpop.f32.mrb[0].mxu0
      %v6010 = vadd.f32 0.0, %v6009
      %v6011 = vpop.f32.mrb[0].mxu0
      %6012 = vmatprep.mubr.bf16.mxu0 0
      %6013 = vmatmul.mubr.bf16.gmra.mrb[0].mxu0 %v5923
      %v6014 = vpop.f32.mrb[0].mxu0
      %v6015 = vadd.f32 0.0, %v6014
      %v6016 = vpop.f32.mrb[0].mxu0
      %v6017 = vpop.f32.mrb[0].mxu0
      %v6018 = vadd.f32 0.0, %v6017
      %v6019 = vpop.f32.mrb[0].mxu0
      %6020 = vmatprep.mubr.bf16.mxu0 0
      %6021 = vmatmul.mubr.bf16.gmra.mrb[0].mxu0 %v5926
      %v6022 = vpop.f32.mrb[0].mxu0
      %v6023 = vadd.f32 0.0, %v6022
      %v6024 = vpop.f32.mrb[0].mxu0
      %v6025 = vpop.f32.mrb[0].mxu0
      %v6026 = vadd.f32 0.0, %v6025
      %v6027 = vpop.f32.mrb[0].mxu0
      %6028 = vmatprep.mubr.bf16.mxu0 0
      %6029 = vmatmul.mubr.bf16.gmra.mrb[0].mxu0 %v5929
      %v6030 = vpop.f32.mrb[0].mxu0
      %v6031 = vadd.f32 0.0, %v6030
      %v6032 = vpop.f32.mrb[0].mxu0
      %v6033 = vpop.f32.mrb[0].mxu0
      %v6034 = vadd.f32 0.0, %v6033
      %v6035 = vpop.f32.mrb[0].mxu0
      %6036 = vmatprep.mubr.bf16.mxu0 0
      %6037 = vmatmul.mubr.bf16.gmra.mrb[0].mxu0 %v5932
      %v6038 = vpop.f32.mrb[0].mxu0
      %v6039 = vadd.f32 0.0, %v6038
      %v6040 = vpop.f32.mrb[0].mxu0
      %v6041 = vpop.f32.mrb[0].mxu0
      %v6042 = vadd.f32 0.0, %v6041
      %v6043 = vpop.f32.mrb[0].mxu0
      %6044 = vmatprep.mubr.bf16.mxu0 0
      %6045 = vmatmul.mubr.bf16.gmra.mrb[0].mxu0 %v5935
      %v6046 = vpop.f32.mrb[0].mxu0
      %v6047 = vadd.f32 0.0, %v6046
      %v6048 = vpop.f32.mrb[0].mxu0
      %v6049 = vpop.f32.mrb[0].mxu0
      %v6050 = vadd.f32 0.0, %v6049
      %v6051 = vpop.f32.mrb[0].mxu0
      %6052 = vmatprep.mubr.bf16.mxu0 0
      %6053 = vmatmul.mubr.bf16.gmra.mrb[0].mxu0 %v5938
      %v6054 = vpop.f32.mrb[0].mxu0
      %v6055 = vadd.f32 0.0, %v6054
      %v6056 = vpop.f32.mrb[0].mxu0
      %v6057 = vpop.f32.mrb[0].mxu0
      %v6058 = vadd.f32 0.0, %v6057
      %v6059 = vpop.f32.mrb[0].mxu0
      %6060 = vmatprep.mubr.bf16.mxu0 0
      %6061 = vmatmul.mubr.bf16.gmra.mrb[0].mxu0 %v5941
      %v6062 = vpop.f32.mrb[0].mxu0
      %v6063 = vadd.f32 0.0, %v6062
      %v6064 = vpop.f32.mrb[0].mxu0
      %v6065 = vpop.f32.mrb[0].mxu0
      %v6066 = vadd.f32 0.0, %v6065
      %v6067 = vpop.f32.mrb[0].mxu0
      %6068 = vmatprep.mubr.bf16.mxu0 0
      %6069 = vmatmul.mubr.bf16.gmra.mrb[0].mxu0 %v5944
      %v6070 = vpop.f32.mrb[0].mxu0
      %v6071 = vadd.f32 0.0, %v6070
      %v6072 = vpop.f32.mrb[0].mxu0
      %v6073 = vpop.f32.mrb[0].mxu0
      %v6074 = vadd.f32 0.0, %v6073
      %v6075 = vpop.f32.mrb[0].mxu0
      %6076 = vmatprep.mubr.bf16.mxu0 0
      %6077 = vmatmul.mubr.bf16.gmra.mrb[0].mxu0 %v5947
      %v6078 = vpop.f32.mrb[0].mxu0
      %v6079 = vadd.f32 0.0, %v6078
      %v6080 = vpop.f32.mrb[0].mxu0
      %v6081 = vpop.f32.mrb[0].mxu0
      %v6082 = vadd.f32 0.0, %v6081
      %v6083 = vpop.f32.mrb[0].mxu0
      %6084 = vmatprep.mubr.bf16.mxu0 0
      %6085 = vmatmul.mubr.bf16.gmra.mrb[0].mxu0 %v5950
      %v6086 = vpop.f32.mrb[0].mxu0
      %v6087 = vadd.f32 0.0, %v6086
      %v6088 = vpop.f32.mrb[0].mxu0
      %v6089 = vpop.f32.mrb[0].mxu0
      %v6090 = vadd.f32 0.0, %v6089
      %v6091 = vpop.f32.mrb[0].mxu0
      %6092 = vmatprep.mubr.bf16.mxu0 0
      %6093 = vmatmul.mubr.bf16.gmra.mrb[0].mxu0 %v5953
      %v6094 = vpop.f32.mrb[0].mxu0
      %v6095 = vadd.f32 0.0, %v6094
      %v6096 = vpop.f32.mrb[0].mxu0
      %v6097 = vpop.f32.mrb[0].mxu0
      %v6098 = vadd.f32 0.0, %v6097
      %v6099 = vpop.f32.mrb[0].mxu0
      %6100 = vmatprep.mubr.bf16.mxu0 0
      %6101 = vmatmul.mubr.bf16.gmra.mrb[0].mxu0 %v5956
      %v6102 = vpop.f32.mrb[0].mxu0
      %v6103 = vadd.f32 0.0, %v6102
      %v6104 = vpop.f32.mrb[0].mxu0
      %v6105 = vpop.f32.mrb[0].mxu0
      %v6106 = vadd.f32 0.0, %v6105
      %v6107 = vpop.f32.mrb[0].mxu0
      %6108 = vmatprep.mubr.bf16.mxu0 0
      %6109 = vmatmul.mubr.bf16.gmra.mrb[0].mxu0 %v5959
      %v6110 = vpop.f32.mrb[0].mxu0
      %v6111 = vadd.f32 0.0, %v6110
      %v6112 = vpop.f32.mrb[0].mxu0
      %v6113 = vpop.f32.mrb[0].mxu0
      %v6114 = vadd.f32 0.0, %v6113
      %v6115 = vpop.f32.mrb[0].mxu0
      %6116 = vmatprep.mubr.bf16.mxu0 0
      %6117 = vmatmul.mubr.bf16.gmra.mrb[0].mxu0 %v5962
      %v6118 = vpop.f32.mrb[0].mxu0
      %v6119 = vadd.f32 0.0, %v6118
      %v6120 = vpop.f32.mrb[0].mxu0
      %v6121 = vpop.f32.mrb[0].mxu0
      %v6122 = vadd.f32 0.0, %v6121
      %v6123 = vpop.f32.mrb[0].mxu0
      %6124 = vdwg.mxu0
      %v6125 = vadd.f32 %v5771, %v5999
      %v6126 = vadd.f32 %v5772, %v6002
      %v6127 = vadd.f32 %v5773, %v6007
      %v6128 = vadd.f32 %v5774, %v6010
      %v6129 = vadd.f32 %v5775, %v6015
      %v6130 = vadd.f32 %v5776, %v6018
      %v6131 = vadd.f32 %v5777, %v6023
      %v6132 = vadd.f32 %v5778, %v6026
      %v6133 = vadd.f32 %v5779, %v6031
      %v6134 = vadd.f32 %v5780, %v6034
      %v6135 = vadd.f32 %v5781, %v6039
      %v6136 = vadd.f32 %v5782, %v6042
      %v6137 = vadd.f32 %v5783, %v6047
      %v6138 = vadd.f32 %v5784, %v6050
      %v6139 = vadd.f32 %v5785, %v6055
      %v6140 = vadd.f32 %v5786, %v6058
      %v6141 = vadd.f32 %v5787, %v6063
      %v6142 = vadd.f32 %v5788, %v6066
      %v6143 = vadd.f32 %v5789, %v6071
      %v6144 = vadd.f32 %v5790, %v6074
      %v6145 = vadd.f32 %v5791, %v6079
      %v6146 = vadd.f32 %v5792, %v6082
      %v6147 = vadd.f32 %v5793, %v6087
      %v6148 = vadd.f32 %v5794, %v6090
      %v6149 = vadd.f32 %v5795, %v6095
      %v6150 = vadd.f32 %v5796, %v6098
      %v6151 = vadd.f32 %v5797, %v6103
      %v6152 = vadd.f32 %v5798, %v6106
      %v6153 = vadd.f32 %v5799, %v6111
      %v6154 = vadd.f32 %v5800, %v6114
      %v6155 = vadd.f32 %v5801, %v6119
      %v6156 = vadd.f32 %v5802, %v6122
      %v6157 = vld [vmem:[#allocation2 + $0x27] sm:$0xff]
      %v6158 = vld [vmem:[#allocation2 + $0x2f] sm:$0xff]
      %v6159 = vld [vmem:[#allocation2 + $0x37] sm:$0xff]
      %v6160 = vld [vmem:[#allocation2 + $0x3f] sm:$0xff]
      %v6161 = vld [vmem:[#allocation2 + $0x47] sm:$0xff]
      %v6162 = vld [vmem:[#allocation2 + $0x4f] sm:$0xff]
      %v6163 = vld [vmem:[#allocation2 + $0x57] sm:$0xff]
      %v6164 = vld [vmem:[#allocation2 + $0x5f] sm:$0xff]
      %v6165 = vld [vmem:[#allocation2 + $0x67] sm:$0xff]
      %v6166 = vld [vmem:[#allocation2 + $0x6f] sm:$0xff]
      %v6167 = vld [vmem:[#allocation2 + $0x77] sm:$0xff]
      %v6168 = vld [vmem:[#allocation2 + $0x7f] sm:$0xff]
      %v6169 = vld [vmem:[#allocation2 + $0x87] sm:$0xff]
      %v6170 = vld [vmem:[#allocation2 + $0x8f] sm:$0xff]
      %v6171 = vld [vmem:[#allocation2 + $0x97] sm:$0xff]
      %v6172 = vld [vmem:[#allocation2 + $0x9f] sm:$0xff]
      %v6173 = vld [vmem:[#allocation2 + $0xa7] sm:$0xff]
      %v6174 = vld [vmem:[#allocation2 + $0xaf] sm:$0xff]
      %v6175 = vld [vmem:[#allocation2 + $0xb7] sm:$0xff]
      %v6176 = vld [vmem:[#allocation2 + $0xbf] sm:$0xff]
      %v6177 = vld [vmem:[#allocation2 + $0xc7] sm:$0xff]
      %v6178 = vld [vmem:[#allocation2 + $0xcf] sm:$0xff]
      %v6179 = vld [vmem:[#allocation2 + $0xd7] sm:$0xff]
      %v6180 = vld [vmem:[#allocation2 + $0xdf] sm:$0xff]
      %v6181 = vld [vmem:[#allocation2 + $0xe7] sm:$0xff]
      %v6182 = vld [vmem:[#allocation2 + $0xef] sm:$0xff]
      %v6183 = vld [vmem:[#allocation2 + $0xf7] sm:$0xff]
      %v6184 = vld [vmem:[#allocation2 + $0xff] sm:$0xff]
      %v6185 = vld [vmem:[#allocation2 + $0x107] sm:$0xff]
      %v6186 = vld [vmem:[#allocation2 + $0x10f] sm:$0xff]
      %v6187 = vld [vmem:[#allocation2 + $0x117] sm:$0xff]
      %v6188 = vld [vmem:[#allocation2 + $0x11f] sm:$0xff]
      %v6189 = vmul.f32 %v6157, %v1018
      %v6190 = vmul.f32 %v6158, %v1023
      %v6191 = vmul.f32 %v6159, %v1028
      %v6192 = vmul.f32 %v6160, %v1033
      %v6193 = vmul.f32 %v6161, %v1038
      %v6194 = vmul.f32 %v6162, %v1043
      %v6195 = vmul.f32 %v6163, %v1048
      %v6196 = vmul.f32 %v6164, %v1053
      %v6197 = vmul.f32 %v6165, %v1058
      %v6198 = vmul.f32 %v6166, %v1063
      %v6199 = vmul.f32 %v6167, %v1068
      %v6200 = vmul.f32 %v6168, %v1073
      %v6201 = vmul.f32 %v6169, %v1078
      %v6202 = vmul.f32 %v6170, %v1083
      %v6203 = vmul.f32 %v6171, %v1088
      %v6204 = vmul.f32 %v6172, %v1093
      %v6205 = vmul.f32 %v6173, %v1098
      %v6206 = vmul.f32 %v6174, %v1103
      %v6207 = vmul.f32 %v6175, %v1108
      %v6208 = vmul.f32 %v6176, %v1113
      %v6209 = vmul.f32 %v6177, %v1118
      %v6210 = vmul.f32 %v6178, %v1123
      %v6211 = vmul.f32 %v6179, %v1128
      %v6212 = vmul.f32 %v6180, %v1133
      %v6213 = vmul.f32 %v6181, %v1138
      %v6214 = vmul.f32 %v6182, %v1143
      %v6215 = vmul.f32 %v6183, %v1148
      %v6216 = vmul.f32 %v6184, %v1153
      %v6217 = vmul.f32 %v6185, %v1158
      %v6218 = vmul.f32 %v6186, %v1163
      %v6219 = vmul.f32 %v6187, %v1168
      %v6220 = vmul.f32 %v6188, %v1173
      %v6221 = vpack.c.bf16 %v6190, %v6189
      %v6222 = vpack.c.bf16 %v6192, %v6191
      %v6223 = vpack.c.bf16 %v6194, %v6193
      %v6224 = vpack.c.bf16 %v6196, %v6195
      %v6225 = vpack.c.bf16 %v6198, %v6197
      %v6226 = vpack.c.bf16 %v6200, %v6199
      %v6227 = vpack.c.bf16 %v6202, %v6201
      %v6228 = vpack.c.bf16 %v6204, %v6203
      %v6229 = vpack.c.bf16 %v6206, %v6205
      %v6230 = vpack.c.bf16 %v6208, %v6207
      %v6231 = vpack.c.bf16 %v6210, %v6209
      %v6232 = vpack.c.bf16 %v6212, %v6211
      %v6233 = vpack.c.bf16 %v6214, %v6213
      %v6234 = vpack.c.bf16 %v6216, %v6215
      %v6235 = vpack.c.bf16 %v6218, %v6217
      %v6236 = vpack.c.bf16 %v6220, %v6219
      %s6237 = scalar_lea.vmem %s8, 192
      %v6238 = vld [vmem:[%s6237] sm:$0xf]
      %v6239 = vld [vmem:[%s6237 + $0x4] sm:$0xf]
      %v6240 = vld [vmem:[%s6237 + $0x8] sm:$0xf]
      %v6241 = vld [vmem:[%s6237 + $0xc] sm:$0xf]
      %v6242 = vld [vmem:[%s6237 + $0x10] sm:$0xf]
      %v6243 = vld [vmem:[%s6237 + $0x14] sm:$0xf]
      %v6244 = vld [vmem:[%s6237 + $0x18] sm:$0xf]
      %v6245 = vld [vmem:[%s6237 + $0x1c] sm:$0xf]
      %v6254 = vunpack.c.l.b16 %v6238
      %v6255 = vunpack.c.l.b16 %v6239
      %v6256 = vunpack.c.l.b16 %v6240
      %v6257 = vunpack.c.l.b16 %v6241
      %v6258 = vunpack.c.l.b16 %v6242
      %v6259 = vunpack.c.l.b16 %v6243
      %v6260 = vunpack.c.l.b16 %v6244
      %v6261 = vunpack.c.l.b16 %v6245
      %v6262 = vpack.c.b16 %v6255, %v6254
      %v6263 = vpack.c.b16 %v6257, %v6256
      %v6264 = vpack.c.b16 %v6259, %v6258
      %v6265 = vpack.c.b16 %v6261, %v6260
      %v6271 = vsel %vm577, %v6221, 0
      %v6274 = vsel %vm577, %v6222, 0
      %v6277 = vsel %vm577, %v6223, 0
      %v6280 = vsel %vm577, %v6224, 0
      %v6283 = vsel %vm577, %v6225, 0
      %v6286 = vsel %vm577, %v6226, 0
      %v6289 = vsel %vm577, %v6227, 0
      %v6292 = vsel %vm577, %v6228, 0
      %v6295 = vsel %vm577, %v6229, 0
      %v6298 = vsel %vm577, %v6230, 0
      %v6301 = vsel %vm577, %v6231, 0
      %v6304 = vsel %vm577, %v6232, 0
      %v6307 = vsel %vm577, %v6233, 0
      %v6310 = vsel %vm577, %v6234, 0
      %v6313 = vsel %vm577, %v6235, 0
      %v6316 = vsel %vm577, %v6236, 0
      %6318 = vmatprep.subr.bf16.mxu0 0
      %6319 = vmatpush1.bf16.msra.mxu0 %v6262
      %6320 = vmatprep.subr.bf16.mxu0 0
      %6321 = vmatpush1.bf16.msra.mxu0 %v6263
      %6322 = vmatprep.subr.bf16.mxu0 0
      %6323 = vmatpush1.bf16.msra.mxu0 %v6264
      %6324 = vmatprep.subr.bf16.mxu0 0
      %6325 = vmatpush1.bf16.msra.mxu0 %v6265
      %6326 = vmatprep.subr.bf16.mxu0 0
      %6327 = vmatpush1.bf16.msra.mxu0 0
      %6328 = vmatprep.subr.bf16.mxu0 0
      %6329 = vmatpush1.bf16.msra.mxu0 0
      %6330 = vmatprep.subr.bf16.mxu0 0
      %6331 = vmatpush1.bf16.msra.mxu0 0
      %6332 = vmatprep.subr.bf16.mxu0 0
      %6333 = vmatpush1.bf16.msra.mxu0 0
      %6334 = vmatprep.subr.bf16.mxu0 0
      %6335 = vmatpush1.bf16.msra.mxu0 0
      %6336 = vmatprep.subr.bf16.mxu0 0
      %6337 = vmatpush1.bf16.msra.mxu0 0
      %6338 = vmatprep.subr.bf16.mxu0 0
      %6339 = vmatpush1.bf16.msra.mxu0 0
      %6340 = vmatprep.subr.bf16.mxu0 0
      %6341 = vmatpush1.bf16.msra.mxu0 0
      %6342 = vmatprep.subr.bf16.mxu0 0
      %6343 = vmatpush1.bf16.msra.mxu0 0
      %6344 = vmatprep.subr.bf16.mxu0 0
      %6345 = vmatpush1.bf16.msra.mxu0 0
      %6346 = vmatprep.subr.bf16.mxu0 0
      %6347 = vmatpush1.bf16.msra.mxu0 0
      %6348 = vmatprep.subr.bf16.mxu0 0
      %6349 = vmatpush1.bf16.msra.mxu0 0
      %6350 = vmatprep.mubr.bf16.mxu0 0
      %6351 = vmatmul.mubr.bf16.gmra.mrb[0].mxu0 %v6271
      %v6352 = vpop.f32.mrb[0].mxu0
      %v6353 = vadd.f32 0.0, %v6352
      %v6354 = vpop.f32.mrb[0].mxu0
      %v6355 = vpop.f32.mrb[0].mxu0
      %v6356 = vadd.f32 0.0, %v6355
      %v6357 = vpop.f32.mrb[0].mxu0
      %6358 = vmatprep.mubr.bf16.mxu0 0
      %6359 = vmatmul.mubr.bf16.gmra.mrb[0].mxu0 %v6274
      %v6360 = vpop.f32.mrb[0].mxu0
      %v6361 = vadd.f32 0.0, %v6360
      %v6362 = vpop.f32.mrb[0].mxu0
      %v6363 = vpop.f32.mrb[0].mxu0
      %v6364 = vadd.f32 0.0, %v6363
      %v6365 = vpop.f32.mrb[0].mxu0
      %6366 = vmatprep.mubr.bf16.mxu0 0
      %6367 = vmatmul.mubr.bf16.gmra.mrb[0].mxu0 %v6277
      %v6368 = vpop.f32.mrb[0].mxu0
      %v6369 = vadd.f32 0.0, %v6368
      %v6370 = vpop.f32.mrb[0].mxu0
      %v6371 = vpop.f32.mrb[0].mxu0
      %v6372 = vadd.f32 0.0, %v6371
      %v6373 = vpop.f32.mrb[0].mxu0
      %6374 = vmatprep.mubr.bf16.mxu0 0
      %6375 = vmatmul.mubr.bf16.gmra.mrb[0].mxu0 %v6280
      %v6376 = vpop.f32.mrb[0].mxu0
      %v6377 = vadd.f32 0.0, %v6376
      %v6378 = vpop.f32.mrb[0].mxu0
      %v6379 = vpop.f32.mrb[0].mxu0
      %v6380 = vadd.f32 0.0, %v6379
      %v6381 = vpop.f32.mrb[0].mxu0
      %6382 = vmatprep.mubr.bf16.mxu0 0
      %6383 = vmatmul.mubr.bf16.gmra.mrb[0].mxu0 %v6283
      %v6384 = vpop.f32.mrb[0].mxu0
      %v6385 = vadd.f32 0.0, %v6384
      %v6386 = vpop.f32.mrb[0].mxu0
      %v6387 = vpop.f32.mrb[0].mxu0
      %v6388 = vadd.f32 0.0, %v6387
      %v6389 = vpop.f32.mrb[0].mxu0
      %6390 = vmatprep.mubr.bf16.mxu0 0
      %6391 = vmatmul.mubr.bf16.gmra.mrb[0].mxu0 %v6286
      %v6392 = vpop.f32.mrb[0].mxu0
      %v6393 = vadd.f32 0.0, %v6392
      %v6394 = vpop.f32.mrb[0].mxu0
      %v6395 = vpop.f32.mrb[0].mxu0
      %v6396 = vadd.f32 0.0, %v6395
      %v6397 = vpop.f32.mrb[0].mxu0
      %6398 = vmatprep.mubr.bf16.mxu0 0
      %6399 = vmatmul.mubr.bf16.gmra.mrb[0].mxu0 %v6289
      %v6400 = vpop.f32.mrb[0].mxu0
      %v6401 = vadd.f32 0.0, %v6400
      %v6402 = vpop.f32.mrb[0].mxu0
      %v6403 = vpop.f32.mrb[0].mxu0
      %v6404 = vadd.f32 0.0, %v6403
      %v6405 = vpop.f32.mrb[0].mxu0
      %6406 = vmatprep.mubr.bf16.mxu0 0
      %6407 = vmatmul.mubr.bf16.gmra.mrb[0].mxu0 %v6292
      %v6408 = vpop.f32.mrb[0].mxu0
      %v6409 = vadd.f32 0.0, %v6408
      %v6410 = vpop.f32.mrb[0].mxu0
      %v6411 = vpop.f32.mrb[0].mxu0
      %v6412 = vadd.f32 0.0, %v6411
      %v6413 = vpop.f32.mrb[0].mxu0
      %6414 = vmatprep.mubr.bf16.mxu0 0
      %6415 = vmatmul.mubr.bf16.gmra.mrb[0].mxu0 %v6295
      %v6416 = vpop.f32.mrb[0].mxu0
      %v6417 = vadd.f32 0.0, %v6416
      %v6418 = vpop.f32.mrb[0].mxu0
      %v6419 = vpop.f32.mrb[0].mxu0
      %v6420 = vadd.f32 0.0, %v6419
      %v6421 = vpop.f32.mrb[0].mxu0
      %6422 = vmatprep.mubr.bf16.mxu0 0
      %6423 = vmatmul.mubr.bf16.gmra.mrb[0].mxu0 %v6298
      %v6424 = vpop.f32.mrb[0].mxu0
      %v6425 = vadd.f32 0.0, %v6424
      %v6426 = vpop.f32.mrb[0].mxu0
      %v6427 = vpop.f32.mrb[0].mxu0
      %v6428 = vadd.f32 0.0, %v6427
      %v6429 = vpop.f32.mrb[0].mxu0
      %6430 = vmatprep.mubr.bf16.mxu0 0
      %6431 = vmatmul.mubr.bf16.gmra.mrb[0].mxu0 %v6301
      %v6432 = vpop.f32.mrb[0].mxu0
      %v6433 = vadd.f32 0.0, %v6432
      %v6434 = vpop.f32.mrb[0].mxu0
      %v6435 = vpop.f32.mrb[0].mxu0
      %v6436 = vadd.f32 0.0, %v6435
      %v6437 = vpop.f32.mrb[0].mxu0
      %6438 = vmatprep.mubr.bf16.mxu0 0
      %6439 = vmatmul.mubr.bf16.gmra.mrb[0].mxu0 %v6304
      %v6440 = vpop.f32.mrb[0].mxu0
      %v6441 = vadd.f32 0.0, %v6440
      %v6442 = vpop.f32.mrb[0].mxu0
      %v6443 = vpop.f32.mrb[0].mxu0
      %v6444 = vadd.f32 0.0, %v6443
      %v6445 = vpop.f32.mrb[0].mxu0
      %6446 = vmatprep.mubr.bf16.mxu0 0
      %6447 = vmatmul.mubr.bf16.gmra.mrb[0].mxu0 %v6307
      %v6448 = vpop.f32.mrb[0].mxu0
      %v6449 = vadd.f32 0.0, %v6448
      %v6450 = vpop.f32.mrb[0].mxu0
      %v6451 = vpop.f32.mrb[0].mxu0
      %v6452 = vadd.f32 0.0, %v6451
      %v6453 = vpop.f32.mrb[0].mxu0
      %6454 = vmatprep.mubr.bf16.mxu0 0
      %6455 = vmatmul.mubr.bf16.gmra.mrb[0].mxu0 %v6310
      %v6456 = vpop.f32.mrb[0].mxu0
      %v6457 = vadd.f32 0.0, %v6456
      %v6458 = vpop.f32.mrb[0].mxu0
      %v6459 = vpop.f32.mrb[0].mxu0
      %v6460 = vadd.f32 0.0, %v6459
      %v6461 = vpop.f32.mrb[0].mxu0
      %6462 = vmatprep.mubr.bf16.mxu0 0
      %6463 = vmatmul.mubr.bf16.gmra.mrb[0].mxu0 %v6313
      %v6464 = vpop.f32.mrb[0].mxu0
      %v6465 = vadd.f32 0.0, %v6464
      %v6466 = vpop.f32.mrb[0].mxu0
      %v6467 = vpop.f32.mrb[0].mxu0
      %v6468 = vadd.f32 0.0, %v6467
      %v6469 = vpop.f32.mrb[0].mxu0
      %6470 = vmatprep.mubr.bf16.mxu0 0
      %6471 = vmatmul.mubr.bf16.gmra.mrb[0].mxu0 %v6316
      %v6472 = vpop.f32.mrb[0].mxu0
      %v6473 = vadd.f32 0.0, %v6472
      %v6474 = vpop.f32.mrb[0].mxu0
      %v6475 = vpop.f32.mrb[0].mxu0
      %v6476 = vadd.f32 0.0, %v6475
      %v6477 = vpop.f32.mrb[0].mxu0
      %6478 = vdwg.mxu0
      %v6479 = vadd.f32 %v6125, %v6353
      %v6480 = vadd.f32 %v6126, %v6356
      %v6481 = vadd.f32 %v6127, %v6361
      %v6482 = vadd.f32 %v6128, %v6364
      %v6483 = vadd.f32 %v6129, %v6369
      %v6484 = vadd.f32 %v6130, %v6372
      %v6485 = vadd.f32 %v6131, %v6377
      %v6486 = vadd.f32 %v6132, %v6380
      %v6487 = vadd.f32 %v6133, %v6385
      %v6488 = vadd.f32 %v6134, %v6388
      %v6489 = vadd.f32 %v6135, %v6393
      %v6490 = vadd.f32 %v6136, %v6396
      %v6491 = vadd.f32 %v6137, %v6401
      %v6492 = vadd.f32 %v6138, %v6404
      %v6493 = vadd.f32 %v6139, %v6409
      %v6494 = vadd.f32 %v6140, %v6412
      %v6495 = vadd.f32 %v6141, %v6417
      %v6496 = vadd.f32 %v6142, %v6420
      %v6497 = vadd.f32 %v6143, %v6425
      %v6498 = vadd.f32 %v6144, %v6428
      %v6499 = vadd.f32 %v6145, %v6433
      %v6500 = vadd.f32 %v6146, %v6436
      %v6501 = vadd.f32 %v6147, %v6441
      %v6502 = vadd.f32 %v6148, %v6444
      %v6503 = vadd.f32 %v6149, %v6449
      %v6504 = vadd.f32 %v6150, %v6452
      %v6505 = vadd.f32 %v6151, %v6457
      %v6506 = vadd.f32 %v6152, %v6460
      %v6507 = vadd.f32 %v6153, %v6465
      %v6508 = vadd.f32 %v6154, %v6468
      %v6509 = vadd.f32 %v6155, %v6473
      %v6510 = vadd.f32 %v6156, %v6476
      %v6511 = vld [vmem:[#allocation2 + $0x28] sm:$0xff]
      %v6512 = vld [vmem:[#allocation2 + $0x30] sm:$0xff]
      %v6513 = vld [vmem:[#allocation2 + $0x38] sm:$0xff]
      %v6514 = vld [vmem:[#allocation2 + $0x40] sm:$0xff]
      %v6515 = vld [vmem:[#allocation2 + $0x48] sm:$0xff]
      %v6516 = vld [vmem:[#allocation2 + $0x50] sm:$0xff]
      %v6517 = vld [vmem:[#allocation2 + $0x58] sm:$0xff]
      %v6518 = vld [vmem:[#allocation2 + $0x60] sm:$0xff]
      %v6519 = vld [vmem:[#allocation2 + $0x68] sm:$0xff]
      %v6520 = vld [vmem:[#allocation2 + $0x70] sm:$0xff]
      %v6521 = vld [vmem:[#allocation2 + $0x78] sm:$0xff]
      %v6522 = vld [vmem:[#allocation2 + $0x80] sm:$0xff]
      %v6523 = vld [vmem:[#allocation2 + $0x88] sm:$0xff]
      %v6524 = vld [vmem:[#allocation2 + $0x90] sm:$0xff]
      %v6525 = vld [vmem:[#allocation2 + $0x98] sm:$0xff]
      %v6526 = vld [vmem:[#allocation2 + $0xa0] sm:$0xff]
      %v6527 = vld [vmem:[#allocation2 + $0xa8] sm:$0xff]
      %v6528 = vld [vmem:[#allocation2 + $0xb0] sm:$0xff]
      %v6529 = vld [vmem:[#allocation2 + $0xb8] sm:$0xff]
      %v6530 = vld [vmem:[#allocation2 + $0xc0] sm:$0xff]
      %v6531 = vld [vmem:[#allocation2 + $0xc8] sm:$0xff]
      %v6532 = vld [vmem:[#allocation2 + $0xd0] sm:$0xff]
      %v6533 = vld [vmem:[#allocation2 + $0xd8] sm:$0xff]
      %v6534 = vld [vmem:[#allocation2 + $0xe0] sm:$0xff]
      %v6535 = vld [vmem:[#allocation2 + $0xe8] sm:$0xff]
      %v6536 = vld [vmem:[#allocation2 + $0xf0] sm:$0xff]
      %v6537 = vld [vmem:[#allocation2 + $0xf8] sm:$0xff]
      %v6538 = vld [vmem:[#allocation2 + $0x100] sm:$0xff]
      %v6539 = vld [vmem:[#allocation2 + $0x108] sm:$0xff]
      %v6540 = vld [vmem:[#allocation2 + $0x110] sm:$0xff]
      %v6541 = vld [vmem:[#allocation2 + $0x118] sm:$0xff]
      %v6542 = vld [vmem:[#allocation2 + $0x120] sm:$0xff]
      %v6543 = vpack.c.bf16 %v6512, %v6511
      %v6544 = vpack.c.bf16 %v6514, %v6513
      %v6545 = vpack.c.bf16 %v6516, %v6515
      %v6546 = vpack.c.bf16 %v6518, %v6517
      %v6547 = vpack.c.bf16 %v6520, %v6519
      %v6548 = vpack.c.bf16 %v6522, %v6521
      %v6549 = vpack.c.bf16 %v6524, %v6523
      %v6550 = vpack.c.bf16 %v6526, %v6525
      %v6551 = vpack.c.bf16 %v6528, %v6527
      %v6552 = vpack.c.bf16 %v6530, %v6529
      %v6553 = vpack.c.bf16 %v6532, %v6531
      %v6554 = vpack.c.bf16 %v6534, %v6533
      %v6555 = vpack.c.bf16 %v6536, %v6535
      %v6556 = vpack.c.bf16 %v6538, %v6537
      %v6557 = vpack.c.bf16 %v6540, %v6539
      %v6558 = vpack.c.bf16 %v6542, %v6541
      %s6559 = scalar_lea.vmem %s8, 224
      %v6560 = vld [vmem:[%s6559] sm:$0xf]
      %v6561 = vld [vmem:[%s6559 + $0x4] sm:$0xf]
      %v6562 = vld [vmem:[%s6559 + $0x8] sm:$0xf]
      %v6563 = vld [vmem:[%s6559 + $0xc] sm:$0xf]
      %v6564 = vld [vmem:[%s6559 + $0x10] sm:$0xf]
      %v6565 = vld [vmem:[%s6559 + $0x14] sm:$0xf]
      %v6566 = vld [vmem:[%s6559 + $0x18] sm:$0xf]
      %v6567 = vld [vmem:[%s6559 + $0x1c] sm:$0xf]
      %v6576 = vunpack.c.l.b16 %v6560
      %v6577 = vunpack.c.l.b16 %v6561
      %v6578 = vunpack.c.l.b16 %v6562
      %v6579 = vunpack.c.l.b16 %v6563
      %v6580 = vunpack.c.l.b16 %v6564
      %v6581 = vunpack.c.l.b16 %v6565
      %v6582 = vunpack.c.l.b16 %v6566
      %v6583 = vunpack.c.l.b16 %v6567
      %v6584 = vpack.c.b16 %v6577, %v6576
      %v6585 = vpack.c.b16 %v6579, %v6578
      %v6586 = vpack.c.b16 %v6581, %v6580
      %v6587 = vpack.c.b16 %v6583, %v6582
      %v6593 = vsel %vm577, %v6543, 0
      %v6596 = vsel %vm577, %v6544, 0
      %v6599 = vsel %vm577, %v6545, 0
      %v6602 = vsel %vm577, %v6546, 0
      %v6605 = vsel %vm577, %v6547, 0
      %v6608 = vsel %vm577, %v6548, 0
      %v6611 = vsel %vm577, %v6549, 0
      %v6614 = vsel %vm577, %v6550, 0
      %v6617 = vsel %vm577, %v6551, 0
      %v6620 = vsel %vm577, %v6552, 0
      %v6623 = vsel %vm577, %v6553, 0
      %v6626 = vsel %vm577, %v6554, 0
      %v6629 = vsel %vm577, %v6555, 0
      %v6632 = vsel %vm577, %v6556, 0
      %v6635 = vsel %vm577, %v6557, 0
      %v6638 = vsel %vm577, %v6558, 0
      %6640 = vmatprep.subr.bf16.mxu0 0
      %6641 = vmatpush1.bf16.msra.mxu0 %v6584
      %6642 = vmatprep.subr.bf16.mxu0 0
      %6643 = vmatpush1.bf16.msra.mxu0 %v6585
      %6644 = vmatprep.subr.bf16.mxu0 0
      %6645 = vmatpush1.bf16.msra.mxu0 %v6586
      %6646 = vmatprep.subr.bf16.mxu0 0
      %6647 = vmatpush1.bf16.msra.mxu0 %v6587
      %6648 = vmatprep.subr.bf16.mxu0 0
      %6649 = vmatpush1.bf16.msra.mxu0 0
      %6650 = vmatprep.subr.bf16.mxu0 0
      %6651 = vmatpush1.bf16.msra.mxu0 0
      %6652 = vmatprep.subr.bf16.mxu0 0
      %6653 = vmatpush1.bf16.msra.mxu0 0
      %6654 = vmatprep.subr.bf16.mxu0 0
      %6655 = vmatpush1.bf16.msra.mxu0 0
      %6656 = vmatprep.subr.bf16.mxu0 0
      %6657 = vmatpush1.bf16.msra.mxu0 0
      %6658 = vmatprep.subr.bf16.mxu0 0
      %6659 = vmatpush1.bf16.msra.mxu0 0
      %6660 = vmatprep.subr.bf16.mxu0 0
      %6661 = vmatpush1.bf16.msra.mxu0 0
      %6662 = vmatprep.subr.bf16.mxu0 0
      %6663 = vmatpush1.bf16.msra.mxu0 0
      %6664 = vmatprep.subr.bf16.mxu0 0
      %6665 = vmatpush1.bf16.msra.mxu0 0
      %6666 = vmatprep.subr.bf16.mxu0 0
      %6667 = vmatpush1.bf16.msra.mxu0 0
      %6668 = vmatprep.subr.bf16.mxu0 0
      %6669 = vmatpush1.bf16.msra.mxu0 0
      %6670 = vmatprep.subr.bf16.mxu0 0
      %6671 = vmatpush1.bf16.msra.mxu0 0
      %6672 = vmatprep.mubr.bf16.mxu0 0
      %6673 = vmatmul.mubr.bf16.gmra.mrb[0].mxu0 %v6593
      %v6674 = vpop.f32.mrb[0].mxu0
      %v6675 = vadd.f32 0.0, %v6674
      %v6676 = vpop.f32.mrb[0].mxu0
      %v6677 = vpop.f32.mrb[0].mxu0
      %v6678 = vadd.f32 0.0, %v6677
      %v6679 = vpop.f32.mrb[0].mxu0
      %6680 = vmatprep.mubr.bf16.mxu0 0
      %6681 = vmatmul.mubr.bf16.gmra.mrb[0].mxu0 %v6596
      %v6682 = vpop.f32.mrb[0].mxu0
      %v6683 = vadd.f32 0.0, %v6682
      %v6684 = vpop.f32.mrb[0].mxu0
      %v6685 = vpop.f32.mrb[0].mxu0
      %v6686 = vadd.f32 0.0, %v6685
      %v6687 = vpop.f32.mrb[0].mxu0
      %6688 = vmatprep.mubr.bf16.mxu0 0
      %6689 = vmatmul.mubr.bf16.gmra.mrb[0].mxu0 %v6599
      %v6690 = vpop.f32.mrb[0].mxu0
      %v6691 = vadd.f32 0.0, %v6690
      %v6692 = vpop.f32.mrb[0].mxu0
      %v6693 = vpop.f32.mrb[0].mxu0
      %v6694 = vadd.f32 0.0, %v6693
      %v6695 = vpop.f32.mrb[0].mxu0
      %6696 = vmatprep.mubr.bf16.mxu0 0
      %6697 = vmatmul.mubr.bf16.gmra.mrb[0].mxu0 %v6602
      %v6698 = vpop.f32.mrb[0].mxu0
      %v6699 = vadd.f32 0.0, %v6698
      %v6700 = vpop.f32.mrb[0].mxu0
      %v6701 = vpop.f32.mrb[0].mxu0
      %v6702 = vadd.f32 0.0, %v6701
      %v6703 = vpop.f32.mrb[0].mxu0
      %6704 = vmatprep.mubr.bf16.mxu0 0
      %6705 = vmatmul.mubr.bf16.gmra.mrb[0].mxu0 %v6605
      %v6706 = vpop.f32.mrb[0].mxu0
      %v6707 = vadd.f32 0.0, %v6706
      %v6708 = vpop.f32.mrb[0].mxu0
      %v6709 = vpop.f32.mrb[0].mxu0
      %v6710 = vadd.f32 0.0, %v6709
      %v6711 = vpop.f32.mrb[0].mxu0
      %6712 = vmatprep.mubr.bf16.mxu0 0
      %6713 = vmatmul.mubr.bf16.gmra.mrb[0].mxu0 %v6608
      %v6714 = vpop.f32.mrb[0].mxu0
      %v6715 = vadd.f32 0.0, %v6714
      %v6716 = vpop.f32.mrb[0].mxu0
      %v6717 = vpop.f32.mrb[0].mxu0
      %v6718 = vadd.f32 0.0, %v6717
      %v6719 = vpop.f32.mrb[0].mxu0
      %6720 = vmatprep.mubr.bf16.mxu0 0
      %6721 = vmatmul.mubr.bf16.gmra.mrb[0].mxu0 %v6611
      %v6722 = vpop.f32.mrb[0].mxu0
      %v6723 = vadd.f32 0.0, %v6722
      %v6724 = vpop.f32.mrb[0].mxu0
      %v6725 = vpop.f32.mrb[0].mxu0
      %v6726 = vadd.f32 0.0, %v6725
      %v6727 = vpop.f32.mrb[0].mxu0
      %6728 = vmatprep.mubr.bf16.mxu0 0
      %6729 = vmatmul.mubr.bf16.gmra.mrb[0].mxu0 %v6614
      %v6730 = vpop.f32.mrb[0].mxu0
      %v6731 = vadd.f32 0.0, %v6730
      %v6732 = vpop.f32.mrb[0].mxu0
      %v6733 = vpop.f32.mrb[0].mxu0
      %v6734 = vadd.f32 0.0, %v6733
      %v6735 = vpop.f32.mrb[0].mxu0
      %6736 = vmatprep.mubr.bf16.mxu0 0
      %6737 = vmatmul.mubr.bf16.gmra.mrb[0].mxu0 %v6617
      %v6738 = vpop.f32.mrb[0].mxu0
      %v6739 = vadd.f32 0.0, %v6738
      %v6740 = vpop.f32.mrb[0].mxu0
      %v6741 = vpop.f32.mrb[0].mxu0
      %v6742 = vadd.f32 0.0, %v6741
      %v6743 = vpop.f32.mrb[0].mxu0
      %6744 = vmatprep.mubr.bf16.mxu0 0
      %6745 = vmatmul.mubr.bf16.gmra.mrb[0].mxu0 %v6620
      %v6746 = vpop.f32.mrb[0].mxu0
      %v6747 = vadd.f32 0.0, %v6746
      %v6748 = vpop.f32.mrb[0].mxu0
      %v6749 = vpop.f32.mrb[0].mxu0
      %v6750 = vadd.f32 0.0, %v6749
      %v6751 = vpop.f32.mrb[0].mxu0
      %6752 = vmatprep.mubr.bf16.mxu0 0
      %6753 = vmatmul.mubr.bf16.gmra.mrb[0].mxu0 %v6623
      %v6754 = vpop.f32.mrb[0].mxu0
      %v6755 = vadd.f32 0.0, %v6754
      %v6756 = vpop.f32.mrb[0].mxu0
      %v6757 = vpop.f32.mrb[0].mxu0
      %v6758 = vadd.f32 0.0, %v6757
      %v6759 = vpop.f32.mrb[0].mxu0
      %6760 = vmatprep.mubr.bf16.mxu0 0
      %6761 = vmatmul.mubr.bf16.gmra.mrb[0].mxu0 %v6626
      %v6762 = vpop.f32.mrb[0].mxu0
      %v6763 = vadd.f32 0.0, %v6762
      %v6764 = vpop.f32.mrb[0].mxu0
      %v6765 = vpop.f32.mrb[0].mxu0
      %v6766 = vadd.f32 0.0, %v6765
      %v6767 = vpop.f32.mrb[0].mxu0
      %6768 = vmatprep.mubr.bf16.mxu0 0
      %6769 = vmatmul.mubr.bf16.gmra.mrb[0].mxu0 %v6629
      %v6770 = vpop.f32.mrb[0].mxu0
      %v6771 = vadd.f32 0.0, %v6770
      %v6772 = vpop.f32.mrb[0].mxu0
      %v6773 = vpop.f32.mrb[0].mxu0
      %v6774 = vadd.f32 0.0, %v6773
      %v6775 = vpop.f32.mrb[0].mxu0
      %6776 = vmatprep.mubr.bf16.mxu0 0
      %6777 = vmatmul.mubr.bf16.gmra.mrb[0].mxu0 %v6632
      %v6778 = vpop.f32.mrb[0].mxu0
      %v6779 = vadd.f32 0.0, %v6778
      %v6780 = vpop.f32.mrb[0].mxu0
      %v6781 = vpop.f32.mrb[0].mxu0
      %v6782 = vadd.f32 0.0, %v6781
      %v6783 = vpop.f32.mrb[0].mxu0
      %6784 = vmatprep.mubr.bf16.mxu0 0
      %6785 = vmatmul.mubr.bf16.gmra.mrb[0].mxu0 %v6635
      %v6786 = vpop.f32.mrb[0].mxu0
      %v6787 = vadd.f32 0.0, %v6786
      %v6788 = vpop.f32.mrb[0].mxu0
      %v6789 = vpop.f32.mrb[0].mxu0
      %v6790 = vadd.f32 0.0, %v6789
      %v6791 = vpop.f32.mrb[0].mxu0
      %6792 = vmatprep.mubr.bf16.mxu0 0
      %6793 = vmatmul.mubr.bf16.gmra.mrb[0].mxu0 %v6638
      %v6794 = vpop.f32.mrb[0].mxu0
      %v6795 = vadd.f32 0.0, %v6794
      %v6796 = vpop.f32.mrb[0].mxu0
      %v6797 = vpop.f32.mrb[0].mxu0
      %v6798 = vadd.f32 0.0, %v6797
      %v6799 = vpop.f32.mrb[0].mxu0
      %6800 = vdwg.mxu0
      %v6801 = vadd.f32 %v6479, %v6675
      %v6802 = vadd.f32 %v6480, %v6678
      %v6803 = vadd.f32 %v6481, %v6683
      %v6804 = vadd.f32 %v6482, %v6686
      %v6805 = vadd.f32 %v6483, %v6691
      %v6806 = vadd.f32 %v6484, %v6694
      %v6807 = vadd.f32 %v6485, %v6699
      %v6808 = vadd.f32 %v6486, %v6702
      %v6809 = vadd.f32 %v6487, %v6707
      %v6810 = vadd.f32 %v6488, %v6710
      %v6811 = vadd.f32 %v6489, %v6715
      %v6812 = vadd.f32 %v6490, %v6718
      %v6813 = vadd.f32 %v6491, %v6723
      %v6814 = vadd.f32 %v6492, %v6726
      %v6815 = vadd.f32 %v6493, %v6731
      %v6816 = vadd.f32 %v6494, %v6734
      %v6817 = vadd.f32 %v6495, %v6739
      %v6818 = vadd.f32 %v6496, %v6742
      %v6819 = vadd.f32 %v6497, %v6747
      %v6820 = vadd.f32 %v6498, %v6750
      %v6821 = vadd.f32 %v6499, %v6755
      %v6822 = vadd.f32 %v6500, %v6758
      %v6823 = vadd.f32 %v6501, %v6763
      %v6824 = vadd.f32 %v6502, %v6766
      %v6825 = vadd.f32 %v6503, %v6771
      %v6826 = vadd.f32 %v6504, %v6774
      %v6827 = vadd.f32 %v6505, %v6779
      %v6828 = vadd.f32 %v6506, %v6782
      %v6829 = vadd.f32 %v6507, %v6787
      %v6830 = vadd.f32 %v6508, %v6790
      %v6831 = vadd.f32 %v6509, %v6795
      %v6832 = vadd.f32 %v6510, %v6798
      %v6833 = vld [vmem:[#allocation2 + $0x29] sm:$0xff]
      %v6834 = vld [vmem:[#allocation2 + $0x31] sm:$0xff]
      %v6835 = vld [vmem:[#allocation2 + $0x39] sm:$0xff]
      %v6836 = vld [vmem:[#allocation2 + $0x41] sm:$0xff]
      %v6837 = vld [vmem:[#allocation2 + $0x49] sm:$0xff]
      %v6838 = vld [vmem:[#allocation2 + $0x51] sm:$0xff]
      %v6839 = vld [vmem:[#allocation2 + $0x59] sm:$0xff]
      %v6840 = vld [vmem:[#allocation2 + $0x61] sm:$0xff]
      %v6841 = vld [vmem:[#allocation2 + $0x69] sm:$0xff]
      %v6842 = vld [vmem:[#allocation2 + $0x71] sm:$0xff]
      %v6843 = vld [vmem:[#allocation2 + $0x79] sm:$0xff]
      %v6844 = vld [vmem:[#allocation2 + $0x81] sm:$0xff]
      %v6845 = vld [vmem:[#allocation2 + $0x89] sm:$0xff]
      %v6846 = vld [vmem:[#allocation2 + $0x91] sm:$0xff]
      %v6847 = vld [vmem:[#allocation2 + $0x99] sm:$0xff]
      %v6848 = vld [vmem:[#allocation2 + $0xa1] sm:$0xff]
      %v6849 = vld [vmem:[#allocation2 + $0xa9] sm:$0xff]
      %v6850 = vld [vmem:[#allocation2 + $0xb1] sm:$0xff]
      %v6851 = vld [vmem:[#allocation2 + $0xb9] sm:$0xff]
      %v6852 = vld [vmem:[#allocation2 + $0xc1] sm:$0xff]
      %v6853 = vld [vmem:[#allocation2 + $0xc9] sm:$0xff]
      %v6854 = vld [vmem:[#allocation2 + $0xd1] sm:$0xff]
      %v6855 = vld [vmem:[#allocation2 + $0xd9] sm:$0xff]
      %v6856 = vld [vmem:[#allocation2 + $0xe1] sm:$0xff]
      %v6857 = vld [vmem:[#allocation2 + $0xe9] sm:$0xff]
      %v6858 = vld [vmem:[#allocation2 + $0xf1] sm:$0xff]
      %v6859 = vld [vmem:[#allocation2 + $0xf9] sm:$0xff]
      %v6860 = vld [vmem:[#allocation2 + $0x101] sm:$0xff]
      %v6861 = vld [vmem:[#allocation2 + $0x109] sm:$0xff]
      %v6862 = vld [vmem:[#allocation2 + $0x111] sm:$0xff]
      %v6863 = vld [vmem:[#allocation2 + $0x119] sm:$0xff]
      %v6864 = vld [vmem:[#allocation2 + $0x121] sm:$0xff]
      %v6865 = vmul.f32 %v6833, %v1733
      %v6866 = vmul.f32 %v6834, %v1737
      %v6867 = vmul.f32 %v6835, %v1741
      %v6868 = vmul.f32 %v6836, %v1745
      %v6869 = vmul.f32 %v6837, %v1749
      %v6870 = vmul.f32 %v6838, %v1753
      %v6871 = vmul.f32 %v6839, %v1757
      %v6872 = vmul.f32 %v6840, %v1761
      %v6873 = vmul.f32 %v6841, %v1765
      %v6874 = vmul.f32 %v6842, %v1769
      %v6875 = vmul.f32 %v6843, %v1773
      %v6876 = vmul.f32 %v6844, %v1777
      %v6877 = vmul.f32 %v6845, %v1781
      %v6878 = vmul.f32 %v6846, %v1785
      %v6879 = vmul.f32 %v6847, %v1789
      %v6880 = vmul.f32 %v6848, %v1793
      %v6881 = vmul.f32 %v6849, %v1797
      %v6882 = vmul.f32 %v6850, %v1801
      %v6883 = vmul.f32 %v6851, %v1805
      %v6884 = vmul.f32 %v6852, %v1809
      %v6885 = vmul.f32 %v6853, %v1813
      %v6886 = vmul.f32 %v6854, %v1817
      %v6887 = vmul.f32 %v6855, %v1821
      %v6888 = vmul.f32 %v6856, %v1825
      %v6889 = vmul.f32 %v6857, %v1829
      %v6890 = vmul.f32 %v6858, %v1833
      %v6891 = vmul.f32 %v6859, %v1837
      %v6892 = vmul.f32 %v6860, %v1841
      %v6893 = vmul.f32 %v6861, %v1845
      %v6894 = vmul.f32 %v6862, %v1849
      %v6895 = vmul.f32 %v6863, %v1853
      %v6896 = vmul.f32 %v6864, %v1857
      %v6897 = vpack.c.bf16 %v6866, %v6865
      %v6898 = vpack.c.bf16 %v6868, %v6867
      %v6899 = vpack.c.bf16 %v6870, %v6869
      %v6900 = vpack.c.bf16 %v6872, %v6871
      %v6901 = vpack.c.bf16 %v6874, %v6873
      %v6902 = vpack.c.bf16 %v6876, %v6875
      %v6903 = vpack.c.bf16 %v6878, %v6877
      %v6904 = vpack.c.bf16 %v6880, %v6879
      %v6905 = vpack.c.bf16 %v6882, %v6881
      %v6906 = vpack.c.bf16 %v6884, %v6883
      %v6907 = vpack.c.bf16 %v6886, %v6885
      %v6908 = vpack.c.bf16 %v6888, %v6887
      %v6909 = vpack.c.bf16 %v6890, %v6889
      %v6910 = vpack.c.bf16 %v6892, %v6891
      %v6911 = vpack.c.bf16 %v6894, %v6893
      %v6912 = vpack.c.bf16 %v6896, %v6895
      %s6913 = scalar_lea.vmem %s8, 256
      %v6914 = vld [vmem:[%s6913] sm:$0xf]
      %v6915 = vld [vmem:[%s6913 + $0x4] sm:$0xf]
      %v6916 = vld [vmem:[%s6913 + $0x8] sm:$0xf]
      %v6917 = vld [vmem:[%s6913 + $0xc] sm:$0xf]
      %v6918 = vld [vmem:[%s6913 + $0x10] sm:$0xf]
      %v6919 = vld [vmem:[%s6913 + $0x14] sm:$0xf]
      %v6920 = vld [vmem:[%s6913 + $0x18] sm:$0xf]
      %v6921 = vld [vmem:[%s6913 + $0x1c] sm:$0xf]
      %v6930 = vunpack.c.l.b16 %v6914
      %v6931 = vunpack.c.l.b16 %v6915
      %v6932 = vunpack.c.l.b16 %v6916
      %v6933 = vunpack.c.l.b16 %v6917
      %v6934 = vunpack.c.l.b16 %v6918
      %v6935 = vunpack.c.l.b16 %v6919
      %v6936 = vunpack.c.l.b16 %v6920
      %v6937 = vunpack.c.l.b16 %v6921
      %v6938 = vpack.c.b16 %v6931, %v6930
      %v6939 = vpack.c.b16 %v6933, %v6932
      %v6940 = vpack.c.b16 %v6935, %v6934
      %v6941 = vpack.c.b16 %v6937, %v6936
      %v6947 = vsel %vm577, %v6897, 0
      %v6950 = vsel %vm577, %v6898, 0
      %v6953 = vsel %vm577, %v6899, 0
      %v6956 = vsel %vm577, %v6900, 0
      %v6959 = vsel %vm577, %v6901, 0
      %v6962 = vsel %vm577, %v6902, 0
      %v6965 = vsel %vm577, %v6903, 0
      %v6968 = vsel %vm577, %v6904, 0
      %v6971 = vsel %vm577, %v6905, 0
      %v6974 = vsel %vm577, %v6906, 0
      %v6977 = vsel %vm577, %v6907, 0
      %v6980 = vsel %vm577, %v6908, 0
      %v6983 = vsel %vm577, %v6909, 0
      %v6986 = vsel %vm577, %v6910, 0
      %v6989 = vsel %vm577, %v6911, 0
      %v6992 = vsel %vm577, %v6912, 0
      %6994 = vmatprep.subr.bf16.mxu0 0
      %6995 = vmatpush1.bf16.msra.mxu0 %v6938
      %6996 = vmatprep.subr.bf16.mxu0 0
      %6997 = vmatpush1.bf16.msra.mxu0 %v6939
      %6998 = vmatprep.subr.bf16.mxu0 0
      %6999 = vmatpush1.bf16.msra.mxu0 %v6940
      %7000 = vmatprep.subr.bf16.mxu0 0
      %7001 = vmatpush1.bf16.msra.mxu0 %v6941
      %7002 = vmatprep.subr.bf16.mxu0 0
      %7003 = vmatpush1.bf16.msra.mxu0 0
      %7004 = vmatprep.subr.bf16.mxu0 0
      %7005 = vmatpush1.bf16.msra.mxu0 0
      %7006 = vmatprep.subr.bf16.mxu0 0
      %7007 = vmatpush1.bf16.msra.mxu0 0
      %7008 = vmatprep.subr.bf16.mxu0 0
      %7009 = vmatpush1.bf16.msra.mxu0 0
      %7010 = vmatprep.subr.bf16.mxu0 0
      %7011 = vmatpush1.bf16.msra.mxu0 0
      %7012 = vmatprep.subr.bf16.mxu0 0
      %7013 = vmatpush1.bf16.msra.mxu0 0
      %7014 = vmatprep.subr.bf16.mxu0 0
      %7015 = vmatpush1.bf16.msra.mxu0 0
      %7016 = vmatprep.subr.bf16.mxu0 0
      %7017 = vmatpush1.bf16.msra.mxu0 0
      %7018 = vmatprep.subr.bf16.mxu0 0
      %7019 = vmatpush1.bf16.msra.mxu0 0
      %7020 = vmatprep.subr.bf16.mxu0 0
      %7021 = vmatpush1.bf16.msra.mxu0 0
      %7022 = vmatprep.subr.bf16.mxu0 0
      %7023 = vmatpush1.bf16.msra.mxu0 0
      %7024 = vmatprep.subr.bf16.mxu0 0
      %7025 = vmatpush1.bf16.msra.mxu0 0
      %7026 = vmatprep.mubr.bf16.mxu0 0
      %7027 = vmatmul.mubr.bf16.gmra.mrb[0].mxu0 %v6947
      %v7028 = vpop.f32.mrb[0].mxu0
      %v7029 = vadd.f32 0.0, %v7028
      %v7030 = vpop.f32.mrb[0].mxu0
      %v7031 = vpop.f32.mrb[0].mxu0
      %v7032 = vadd.f32 0.0, %v7031
      %v7033 = vpop.f32.mrb[0].mxu0
      %7034 = vmatprep.mubr.bf16.mxu0 0
      %7035 = vmatmul.mubr.bf16.gmra.mrb[0].mxu0 %v6950
      %v7036 = vpop.f32.mrb[0].mxu0
      %v7037 = vadd.f32 0.0, %v7036
      %v7038 = vpop.f32.mrb[0].mxu0
      %v7039 = vpop.f32.mrb[0].mxu0
      %v7040 = vadd.f32 0.0, %v7039
      %v7041 = vpop.f32.mrb[0].mxu0
      %7042 = vmatprep.mubr.bf16.mxu0 0
      %7043 = vmatmul.mubr.bf16.gmra.mrb[0].mxu0 %v6953
      %v7044 = vpop.f32.mrb[0].mxu0
      %v7045 = vadd.f32 0.0, %v7044
      %v7046 = vpop.f32.mrb[0].mxu0
      %v7047 = vpop.f32.mrb[0].mxu0
      %v7048 = vadd.f32 0.0, %v7047
      %v7049 = vpop.f32.mrb[0].mxu0
      %7050 = vmatprep.mubr.bf16.mxu0 0
      %7051 = vmatmul.mubr.bf16.gmra.mrb[0].mxu0 %v6956
      %v7052 = vpop.f32.mrb[0].mxu0
      %v7053 = vadd.f32 0.0, %v7052
      %v7054 = vpop.f32.mrb[0].mxu0
      %v7055 = vpop.f32.mrb[0].mxu0
      %v7056 = vadd.f32 0.0, %v7055
      %v7057 = vpop.f32.mrb[0].mxu0
      %7058 = vmatprep.mubr.bf16.mxu0 0
      %7059 = vmatmul.mubr.bf16.gmra.mrb[0].mxu0 %v6959
      %v7060 = vpop.f32.mrb[0].mxu0
      %v7061 = vadd.f32 0.0, %v7060
      %v7062 = vpop.f32.mrb[0].mxu0
      %v7063 = vpop.f32.mrb[0].mxu0
      %v7064 = vadd.f32 0.0, %v7063
      %v7065 = vpop.f32.mrb[0].mxu0
      %7066 = vmatprep.mubr.bf16.mxu0 0
      %7067 = vmatmul.mubr.bf16.gmra.mrb[0].mxu0 %v6962
      %v7068 = vpop.f32.mrb[0].mxu0
      %v7069 = vadd.f32 0.0, %v7068
      %v7070 = vpop.f32.mrb[0].mxu0
      %v7071 = vpop.f32.mrb[0].mxu0
      %v7072 = vadd.f32 0.0, %v7071
      %v7073 = vpop.f32.mrb[0].mxu0
      %7074 = vmatprep.mubr.bf16.mxu0 0
      %7075 = vmatmul.mubr.bf16.gmra.mrb[0].mxu0 %v6965
      %v7076 = vpop.f32.mrb[0].mxu0
      %v7077 = vadd.f32 0.0, %v7076
      %v7078 = vpop.f32.mrb[0].mxu0
      %v7079 = vpop.f32.mrb[0].mxu0
      %v7080 = vadd.f32 0.0, %v7079
      %v7081 = vpop.f32.mrb[0].mxu0
      %7082 = vmatprep.mubr.bf16.mxu0 0
      %7083 = vmatmul.mubr.bf16.gmra.mrb[0].mxu0 %v6968
      %v7084 = vpop.f32.mrb[0].mxu0
      %v7085 = vadd.f32 0.0, %v7084
      %v7086 = vpop.f32.mrb[0].mxu0
      %v7087 = vpop.f32.mrb[0].mxu0
      %v7088 = vadd.f32 0.0, %v7087
      %v7089 = vpop.f32.mrb[0].mxu0
      %7090 = vmatprep.mubr.bf16.mxu0 0
      %7091 = vmatmul.mubr.bf16.gmra.mrb[0].mxu0 %v6971
      %v7092 = vpop.f32.mrb[0].mxu0
      %v7093 = vadd.f32 0.0, %v7092
      %v7094 = vpop.f32.mrb[0].mxu0
      %v7095 = vpop.f32.mrb[0].mxu0
      %v7096 = vadd.f32 0.0, %v7095
      %v7097 = vpop.f32.mrb[0].mxu0
      %7098 = vmatprep.mubr.bf16.mxu0 0
      %7099 = vmatmul.mubr.bf16.gmra.mrb[0].mxu0 %v6974
      %v7100 = vpop.f32.mrb[0].mxu0
      %v7101 = vadd.f32 0.0, %v7100
      %v7102 = vpop.f32.mrb[0].mxu0
      %v7103 = vpop.f32.mrb[0].mxu0
      %v7104 = vadd.f32 0.0, %v7103
      %v7105 = vpop.f32.mrb[0].mxu0
      %7106 = vmatprep.mubr.bf16.mxu0 0
      %7107 = vmatmul.mubr.bf16.gmra.mrb[0].mxu0 %v6977
      %v7108 = vpop.f32.mrb[0].mxu0
      %v7109 = vadd.f32 0.0, %v7108
      %v7110 = vpop.f32.mrb[0].mxu0
      %v7111 = vpop.f32.mrb[0].mxu0
      %v7112 = vadd.f32 0.0, %v7111
      %v7113 = vpop.f32.mrb[0].mxu0
      %7114 = vmatprep.mubr.bf16.mxu0 0
      %7115 = vmatmul.mubr.bf16.gmra.mrb[0].mxu0 %v6980
      %v7116 = vpop.f32.mrb[0].mxu0
      %v7117 = vadd.f32 0.0, %v7116
      %v7118 = vpop.f32.mrb[0].mxu0
      %v7119 = vpop.f32.mrb[0].mxu0
      %v7120 = vadd.f32 0.0, %v7119
      %v7121 = vpop.f32.mrb[0].mxu0
      %7122 = vmatprep.mubr.bf16.mxu0 0
      %7123 = vmatmul.mubr.bf16.gmra.mrb[0].mxu0 %v6983
      %v7124 = vpop.f32.mrb[0].mxu0
      %v7125 = vadd.f32 0.0, %v7124
      %v7126 = vpop.f32.mrb[0].mxu0
      %v7127 = vpop.f32.mrb[0].mxu0
      %v7128 = vadd.f32 0.0, %v7127
      %v7129 = vpop.f32.mrb[0].mxu0
      %7130 = vmatprep.mubr.bf16.mxu0 0
      %7131 = vmatmul.mubr.bf16.gmra.mrb[0].mxu0 %v6986
      %v7132 = vpop.f32.mrb[0].mxu0
      %v7133 = vadd.f32 0.0, %v7132
      %v7134 = vpop.f32.mrb[0].mxu0
      %v7135 = vpop.f32.mrb[0].mxu0
      %v7136 = vadd.f32 0.0, %v7135
      %v7137 = vpop.f32.mrb[0].mxu0
      %7138 = vmatprep.mubr.bf16.mxu0 0
      %7139 = vmatmul.mubr.bf16.gmra.mrb[0].mxu0 %v6989
      %v7140 = vpop.f32.mrb[0].mxu0
      %v7141 = vadd.f32 0.0, %v7140
      %v7142 = vpop.f32.mrb[0].mxu0
      %v7143 = vpop.f32.mrb[0].mxu0
      %v7144 = vadd.f32 0.0, %v7143
      %v7145 = vpop.f32.mrb[0].mxu0
      %7146 = vmatprep.mubr.bf16.mxu0 0
      %7147 = vmatmul.mubr.bf16.gmra.mrb[0].mxu0 %v6992
      %v7148 = vpop.f32.mrb[0].mxu0
      %v7149 = vadd.f32 0.0, %v7148
      %v7150 = vpop.f32.mrb[0].mxu0
      %v7151 = vpop.f32.mrb[0].mxu0
      %v7152 = vadd.f32 0.0, %v7151
      %v7153 = vpop.f32.mrb[0].mxu0
      %7154 = vdwg.mxu0
      %v7155 = vadd.f32 %v6801, %v7029
      %v7156 = vadd.f32 %v6802, %v7032
      %v7157 = vadd.f32 %v6803, %v7037
      %v7158 = vadd.f32 %v6804, %v7040
      %v7159 = vadd.f32 %v6805, %v7045
      %v7160 = vadd.f32 %v6806, %v7048
      %v7161 = vadd.f32 %v6807, %v7053
      %v7162 = vadd.f32 %v6808, %v7056
      %v7163 = vadd.f32 %v6809, %v7061
      %v7164 = vadd.f32 %v6810, %v7064
      %v7165 = vadd.f32 %v6811, %v7069
      %v7166 = vadd.f32 %v6812, %v7072
      %v7167 = vadd.f32 %v6813, %v7077
      %v7168 = vadd.f32 %v6814, %v7080
      %v7169 = vadd.f32 %v6815, %v7085
      %v7170 = vadd.f32 %v6816, %v7088
      %v7171 = vadd.f32 %v6817, %v7093
      %v7172 = vadd.f32 %v6818, %v7096
      %v7173 = vadd.f32 %v6819, %v7101
      %v7174 = vadd.f32 %v6820, %v7104
      %v7175 = vadd.f32 %v6821, %v7109
      %v7176 = vadd.f32 %v6822, %v7112
      %v7177 = vadd.f32 %v6823, %v7117
      %v7178 = vadd.f32 %v6824, %v7120
      %v7179 = vadd.f32 %v6825, %v7125
      %v7180 = vadd.f32 %v6826, %v7128
      %v7181 = vadd.f32 %v6827, %v7133
      %v7182 = vadd.f32 %v6828, %v7136
      %v7183 = vadd.f32 %v6829, %v7141
      %v7184 = vadd.f32 %v6830, %v7144
      %v7185 = vadd.f32 %v6831, %v7149
      %v7186 = vadd.f32 %v6832, %v7152
      %v7187 = vld [vmem:[%s9] sm:$0x1]
      %v7189 = vlaneseq
      %v7190 = vshrl.u32 %v7189, 7
      %v7191 = vsub.s32 0, %v7190
      %v7192 = vrot.slane %v7187, %v7191
      %v7194 = vadd.f32 %v7155, %v7192
      %v7195 = vadd.f32 %v7156, %v7192
      %v7196 = vadd.f32 %v7157, %v7192
      %v7197 = vadd.f32 %v7158, %v7192
      %v7198 = vadd.f32 %v7159, %v7192
      %v7199 = vadd.f32 %v7160, %v7192
      %v7200 = vadd.f32 %v7161, %v7192
      %v7201 = vadd.f32 %v7162, %v7192
      %v7202 = vadd.f32 %v7163, %v7192
      %v7203 = vadd.f32 %v7164, %v7192
      %v7204 = vadd.f32 %v7165, %v7192
      %v7205 = vadd.f32 %v7166, %v7192
      %v7206 = vadd.f32 %v7167, %v7192
      %v7207 = vadd.f32 %v7168, %v7192
      %v7208 = vadd.f32 %v7169, %v7192
      %v7209 = vadd.f32 %v7170, %v7192
      %v7210 = vadd.f32 %v7171, %v7192
      %v7211 = vadd.f32 %v7172, %v7192
      %v7212 = vadd.f32 %v7173, %v7192
      %v7213 = vadd.f32 %v7174, %v7192
      %v7214 = vadd.f32 %v7175, %v7192
      %v7215 = vadd.f32 %v7176, %v7192
      %v7216 = vadd.f32 %v7177, %v7192
      %v7217 = vadd.f32 %v7178, %v7192
      %v7218 = vadd.f32 %v7179, %v7192
      %v7219 = vadd.f32 %v7180, %v7192
      %v7220 = vadd.f32 %v7181, %v7192
      %v7221 = vadd.f32 %v7182, %v7192
      %v7222 = vadd.f32 %v7183, %v7192
      %v7223 = vadd.f32 %v7184, %v7192
      %v7224 = vadd.f32 %v7185, %v7192
      %v7225 = vadd.f32 %v7186, %v7192
      %v7226 = vmax.f32 %v7194, 0.0
      %v7227 = vmax.f32 %v7195, 0.0
      %v7228 = vmax.f32 %v7196, 0.0
      %v7229 = vmax.f32 %v7197, 0.0
      %v7230 = vmax.f32 %v7198, 0.0
      %v7231 = vmax.f32 %v7199, 0.0
      %v7232 = vmax.f32 %v7200, 0.0
      %v7233 = vmax.f32 %v7201, 0.0
      %v7234 = vmax.f32 %v7202, 0.0
      %v7235 = vmax.f32 %v7203, 0.0
      %v7236 = vmax.f32 %v7204, 0.0
      %v7237 = vmax.f32 %v7205, 0.0
      %v7238 = vmax.f32 %v7206, 0.0
      %v7239 = vmax.f32 %v7207, 0.0
      %v7240 = vmax.f32 %v7208, 0.0
      %v7241 = vmax.f32 %v7209, 0.0
      %v7242 = vmax.f32 %v7210, 0.0
      %v7243 = vmax.f32 %v7211, 0.0
      %v7244 = vmax.f32 %v7212, 0.0
      %v7245 = vmax.f32 %v7213, 0.0
      %v7246 = vmax.f32 %v7214, 0.0
      %v7247 = vmax.f32 %v7215, 0.0
      %v7248 = vmax.f32 %v7216, 0.0
      %v7249 = vmax.f32 %v7217, 0.0
      %v7250 = vmax.f32 %v7218, 0.0
      %v7251 = vmax.f32 %v7219, 0.0
      %v7252 = vmax.f32 %v7220, 0.0
      %v7253 = vmax.f32 %v7221, 0.0
      %v7254 = vmax.f32 %v7222, 0.0
      %v7255 = vmax.f32 %v7223, 0.0
      %v7256 = vmax.f32 %v7224, 0.0
      %v7257 = vmax.f32 %v7225, 0.0
      %v7258 = vld [vmem:[%s10] sm:$0x1]
      %v7260 = vlaneseq
      %v7261 = vshrl.u32 %v7260, 7
      %v7262 = vsub.s32 0, %v7261
      %v7263 = vrot.slane %v7258, %v7262
      %v7265 = vmul.f32 %v7226, %v7263
      %v7266 = vmul.f32 %v7227, %v7263
      %v7267 = vmul.f32 %v7228, %v7263
      %v7268 = vmul.f32 %v7229, %v7263
      %v7269 = vmul.f32 %v7230, %v7263
      %v7270 = vmul.f32 %v7231, %v7263
      %v7271 = vmul.f32 %v7232, %v7263
      %v7272 = vmul.f32 %v7233, %v7263
      %v7273 = vmul.f32 %v7234, %v7263
      %v7274 = vmul.f32 %v7235, %v7263
      %v7275 = vmul.f32 %v7236, %v7263
      %v7276 = vmul.f32 %v7237, %v7263
      %v7277 = vmul.f32 %v7238, %v7263
      %v7278 = vmul.f32 %v7239, %v7263
      %v7279 = vmul.f32 %v7240, %v7263
      %v7280 = vmul.f32 %v7241, %v7263
      %v7281 = vmul.f32 %v7242, %v7263
      %v7282 = vmul.f32 %v7243, %v7263
      %v7283 = vmul.f32 %v7244, %v7263
      %v7284 = vmul.f32 %v7245, %v7263
      %v7285 = vmul.f32 %v7246, %v7263
      %v7286 = vmul.f32 %v7247, %v7263
      %v7287 = vmul.f32 %v7248, %v7263
      %v7288 = vmul.f32 %v7249, %v7263
      %v7289 = vmul.f32 %v7250, %v7263
      %v7290 = vmul.f32 %v7251, %v7263
      %v7291 = vmul.f32 %v7252, %v7263
      %v7292 = vmul.f32 %v7253, %v7263
      %v7293 = vmul.f32 %v7254, %v7263
      %v7294 = vmul.f32 %v7255, %v7263
      %v7295 = vmul.f32 %v7256, %v7263
      %v7296 = vmul.f32 %v7257, %v7263
      %v7297 = vld [vmem:[%s11] sm:$0x1]
      %v7299 = vlaneseq
      %v7300 = vshrl.u32 %v7299, 7
      %v7301 = vsub.s32 0, %v7300
      %v7302 = vrot.slane %v7297, %v7301
      %v7304 = vadd.f32 %v7265, %v7302
      %v7305 = vadd.f32 %v7266, %v7302
      %v7306 = vadd.f32 %v7267, %v7302
      %v7307 = vadd.f32 %v7268, %v7302
      %v7308 = vadd.f32 %v7269, %v7302
      %v7309 = vadd.f32 %v7270, %v7302
      %v7310 = vadd.f32 %v7271, %v7302
      %v7311 = vadd.f32 %v7272, %v7302
      %v7312 = vadd.f32 %v7273, %v7302
      %v7313 = vadd.f32 %v7274, %v7302
      %v7314 = vadd.f32 %v7275, %v7302
      %v7315 = vadd.f32 %v7276, %v7302
      %v7316 = vadd.f32 %v7277, %v7302
      %v7317 = vadd.f32 %v7278, %v7302
      %v7318 = vadd.f32 %v7279, %v7302
      %v7319 = vadd.f32 %v7280, %v7302
      %v7320 = vadd.f32 %v7281, %v7302
      %v7321 = vadd.f32 %v7282, %v7302
      %v7322 = vadd.f32 %v7283, %v7302
      %v7323 = vadd.f32 %v7284, %v7302
      %v7324 = vadd.f32 %v7285, %v7302
      %v7325 = vadd.f32 %v7286, %v7302
      %v7326 = vadd.f32 %v7287, %v7302
      %v7327 = vadd.f32 %v7288, %v7302
      %v7328 = vadd.f32 %v7289, %v7302
      %v7329 = vadd.f32 %v7290, %v7302
      %v7330 = vadd.f32 %v7291, %v7302
      %v7331 = vadd.f32 %v7292, %v7302
      %v7332 = vadd.f32 %v7293, %v7302
      %v7333 = vadd.f32 %v7294, %v7302
      %v7334 = vadd.f32 %v7295, %v7302
      %v7335 = vadd.f32 %v7296, %v7302
      %vm7336 = vcmask 261120
      %7337 = vst.msk [vmem:[#allocation2 + $0x18] sm:$0xff] %vm7336, %v7304
      %7338 = vst.msk [vmem:[#allocation2 + $0x20] sm:$0xff] %vm7336, %v7305
      %7339 = vst.msk [vmem:[#allocation2 + $0x28] sm:$0xff] %vm7336, %v7306
      %7340 = vst.msk [vmem:[#allocation2 + $0x30] sm:$0xff] %vm7336, %v7307
      %7341 = vst.msk [vmem:[#allocation2 + $0x38] sm:$0xff] %vm7336, %v7308
      %7342 = vst.msk [vmem:[#allocation2 + $0x40] sm:$0xff] %vm7336, %v7309
      %7343 = vst.msk [vmem:[#allocation2 + $0x48] sm:$0xff] %vm7336, %v7310
      %7344 = vst.msk [vmem:[#allocation2 + $0x50] sm:$0xff] %vm7336, %v7311
      %7345 = vst.msk [vmem:[#allocation2 + $0x58] sm:$0xff] %vm7336, %v7312
      %7346 = vst.msk [vmem:[#allocation2 + $0x60] sm:$0xff] %vm7336, %v7313
      %7347 = vst.msk [vmem:[#allocation2 + $0x68] sm:$0xff] %vm7336, %v7314
      %7348 = vst.msk [vmem:[#allocation2 + $0x70] sm:$0xff] %vm7336, %v7315
      %7349 = vst.msk [vmem:[#allocation2 + $0x78] sm:$0xff] %vm7336, %v7316
      %7350 = vst.msk [vmem:[#allocation2 + $0x80] sm:$0xff] %vm7336, %v7317
      %7351 = vst.msk [vmem:[#allocation2 + $0x88] sm:$0xff] %vm7336, %v7318
      %7352 = vst.msk [vmem:[#allocation2 + $0x90] sm:$0xff] %vm7336, %v7319
      %7353 = vst.msk [vmem:[#allocation2 + $0x98] sm:$0xff] %vm7336, %v7320
      %7354 = vst.msk [vmem:[#allocation2 + $0xa0] sm:$0xff] %vm7336, %v7321
      %7355 = vst.msk [vmem:[#allocation2 + $0xa8] sm:$0xff] %vm7336, %v7322
      %7356 = vst.msk [vmem:[#allocation2 + $0xb0] sm:$0xff] %vm7336, %v7323
      %7357 = vst.msk [vmem:[#allocation2 + $0xb8] sm:$0xff] %vm7336, %v7324
      %7358 = vst.msk [vmem:[#allocation2 + $0xc0] sm:$0xff] %vm7336, %v7325
      %7359 = vst.msk [vmem:[#allocation2 + $0xc8] sm:$0xff] %vm7336, %v7326
      %7360 = vst.msk [vmem:[#allocation2 + $0xd0] sm:$0xff] %vm7336, %v7327
      %7361 = vst.msk [vmem:[#allocation2 + $0xd8] sm:$0xff] %vm7336, %v7328
      %7362 = vst.msk [vmem:[#allocation2 + $0xe0] sm:$0xff] %vm7336, %v7329
      %7363 = vst.msk [vmem:[#allocation2 + $0xe8] sm:$0xff] %vm7336, %v7330
      %7364 = vst.msk [vmem:[#allocation2 + $0xf0] sm:$0xff] %vm7336, %v7331
      %7365 = vst.msk [vmem:[#allocation2 + $0xf8] sm:$0xff] %vm7336, %v7332
      %7366 = vst.msk [vmem:[#allocation2 + $0x100] sm:$0xff] %vm7336, %v7333
      %7367 = vst.msk [vmem:[#allocation2 + $0x108] sm:$0xff] %vm7336, %v7334
      %7368 = vst.msk [vmem:[#allocation2 + $0x110] sm:$0xff] %vm7336, %v7335
      %v7369 = vld [vmem:[#allocation2 + $0x7] sm:$0xff]
      %v7370 = vld [vmem:[#allocation2 + $0xf] sm:$0xff]
      %v7371 = vld [vmem:[#allocation2 + $0x17] sm:$0xff]
      %v7372 = vld [vmem:[#allocation2 + $0x1f] sm:$0xff]
      %v7373 = vld [vmem:[#allocation2 + $0x27] sm:$0xff]
      %v7374 = vld [vmem:[#allocation2 + $0x2f] sm:$0xff]
      %v7375 = vld [vmem:[#allocation2 + $0x37] sm:$0xff]
      %v7376 = vld [vmem:[#allocation2 + $0x3f] sm:$0xff]
      %v7377 = vld [vmem:[#allocation2 + $0x47] sm:$0xff]
      %v7378 = vld [vmem:[#allocation2 + $0x4f] sm:$0xff]
      %v7379 = vld [vmem:[#allocation2 + $0x57] sm:$0xff]
      %v7380 = vld [vmem:[#allocation2 + $0x5f] sm:$0xff]
      %v7381 = vld [vmem:[#allocation2 + $0x67] sm:$0xff]
      %v7382 = vld [vmem:[#allocation2 + $0x6f] sm:$0xff]
      %v7383 = vld [vmem:[#allocation2 + $0x77] sm:$0xff]
      %v7384 = vld [vmem:[#allocation2 + $0x7f] sm:$0xff]
      %v7385 = vld [vmem:[#allocation2 + $0x87] sm:$0xff]
      %v7386 = vld [vmem:[#allocation2 + $0x8f] sm:$0xff]
      %v7387 = vld [vmem:[#allocation2 + $0x97] sm:$0xff]
      %v7388 = vld [vmem:[#allocation2 + $0x9f] sm:$0xff]
      %v7389 = vld [vmem:[#allocation2 + $0xa7] sm:$0xff]
      %v7390 = vld [vmem:[#allocation2 + $0xaf] sm:$0xff]
      %v7391 = vld [vmem:[#allocation2 + $0xb7] sm:$0xff]
      %v7392 = vld [vmem:[#allocation2 + $0xbf] sm:$0xff]
      %v7393 = vld [vmem:[#allocation2 + $0xc7] sm:$0xff]
      %v7394 = vld [vmem:[#allocation2 + $0xcf] sm:$0xff]
      %v7395 = vld [vmem:[#allocation2 + $0xd7] sm:$0xff]
      %v7396 = vld [vmem:[#allocation2 + $0xdf] sm:$0xff]
      %v7397 = vld [vmem:[#allocation2 + $0xe7] sm:$0xff]
      %v7398 = vld [vmem:[#allocation2 + $0xef] sm:$0xff]
      %v7399 = vld [vmem:[#allocation2 + $0xf7] sm:$0xff]
      %v7400 = vld [vmem:[#allocation2 + $0xff] sm:$0xff]
      %v7401 = vmul.f32 %v7369, %v1018
      %v7402 = vmul.f32 %v7370, %v1023
      %v7403 = vmul.f32 %v7371, %v1028
      %v7404 = vmul.f32 %v7372, %v1033
      %v7405 = vmul.f32 %v7373, %v1038
      %v7406 = vmul.f32 %v7374, %v1043
      %v7407 = vmul.f32 %v7375, %v1048
      %v7408 = vmul.f32 %v7376, %v1053
      %v7409 = vmul.f32 %v7377, %v1058
      %v7410 = vmul.f32 %v7378, %v1063
      %v7411 = vmul.f32 %v7379, %v1068
      %v7412 = vmul.f32 %v7380, %v1073
      %v7413 = vmul.f32 %v7381, %v1078
      %v7414 = vmul.f32 %v7382, %v1083
      %v7415 = vmul.f32 %v7383, %v1088
      %v7416 = vmul.f32 %v7384, %v1093
      %v7417 = vmul.f32 %v7385, %v1098
      %v7418 = vmul.f32 %v7386, %v1103
      %v7419 = vmul.f32 %v7387, %v1108
      %v7420 = vmul.f32 %v7388, %v1113
      %v7421 = vmul.f32 %v7389, %v1118
      %v7422 = vmul.f32 %v7390, %v1123
      %v7423 = vmul.f32 %v7391, %v1128
      %v7424 = vmul.f32 %v7392, %v1133
      %v7425 = vmul.f32 %v7393, %v1138
      %v7426 = vmul.f32 %v7394, %v1143
      %v7427 = vmul.f32 %v7395, %v1148
      %v7428 = vmul.f32 %v7396, %v1153
      %v7429 = vmul.f32 %v7397, %v1158
      %v7430 = vmul.f32 %v7398, %v1163
      %v7431 = vmul.f32 %v7399, %v1168
      %v7432 = vmul.f32 %v7400, %v1173
      %v7433 = vpack.c.bf16 %v7402, %v7401
      %v7434 = vpack.c.bf16 %v7404, %v7403
      %v7435 = vpack.c.bf16 %v7406, %v7405
      %v7436 = vpack.c.bf16 %v7408, %v7407
      %v7437 = vpack.c.bf16 %v7410, %v7409
      %v7438 = vpack.c.bf16 %v7412, %v7411
      %v7439 = vpack.c.bf16 %v7414, %v7413
      %v7440 = vpack.c.bf16 %v7416, %v7415
      %v7441 = vpack.c.bf16 %v7418, %v7417
      %v7442 = vpack.c.bf16 %v7420, %v7419
      %v7443 = vpack.c.bf16 %v7422, %v7421
      %v7444 = vpack.c.bf16 %v7424, %v7423
      %v7445 = vpack.c.bf16 %v7426, %v7425
      %v7446 = vpack.c.bf16 %v7428, %v7427
      %v7447 = vpack.c.bf16 %v7430, %v7429
      %v7448 = vpack.c.bf16 %v7432, %v7431
      %v7449 = vld [vmem:[%s12] sm:$0xf]
      %v7450 = vld [vmem:[%s12 + $0x4] sm:$0xf]
      %v7451 = vld [vmem:[%s12 + $0x8] sm:$0xf]
      %v7452 = vld [vmem:[%s12 + $0xc] sm:$0xf]
      %v7453 = vld [vmem:[#allocation2 + $0x8] sm:$0xff]
      %v7454 = vld [vmem:[#allocation2 + $0x10] sm:$0xff]
      %v7455 = vld [vmem:[#allocation2 + $0x18] sm:$0xff]
      %v7456 = vld [vmem:[#allocation2 + $0x20] sm:$0xff]
      %v7457 = vld [vmem:[#allocation2 + $0x28] sm:$0xff]
      %v7458 = vld [vmem:[#allocation2 + $0x30] sm:$0xff]
      %v7459 = vld [vmem:[#allocation2 + $0x38] sm:$0xff]
      %v7460 = vld [vmem:[#allocation2 + $0x40] sm:$0xff]
      %v7461 = vld [vmem:[#allocation2 + $0x48] sm:$0xff]
      %v7462 = vld [vmem:[#allocation2 + $0x50] sm:$0xff]
      %v7463 = vld [vmem:[#allocation2 + $0x58] sm:$0xff]
      %v7464 = vld [vmem:[#allocation2 + $0x60] sm:$0xff]
      %v7465 = vld [vmem:[#allocation2 + $0x68] sm:$0xff]
      %v7466 = vld [vmem:[#allocation2 + $0x70] sm:$0xff]
      %v7467 = vld [vmem:[#allocation2 + $0x78] sm:$0xff]
      %v7468 = vld [vmem:[#allocation2 + $0x80] sm:$0xff]
      %v7469 = vld [vmem:[#allocation2 + $0x88] sm:$0xff]
      %v7470 = vld [vmem:[#allocation2 + $0x90] sm:$0xff]
      %v7471 = vld [vmem:[#allocation2 + $0x98] sm:$0xff]
      %v7472 = vld [vmem:[#allocation2 + $0xa0] sm:$0xff]
      %v7473 = vld [vmem:[#allocation2 + $0xa8] sm:$0xff]
      %v7474 = vld [vmem:[#allocation2 + $0xb0] sm:$0xff]
      %v7475 = vld [vmem:[#allocation2 + $0xb8] sm:$0xff]
      %v7476 = vld [vmem:[#allocation2 + $0xc0] sm:$0xff]
      %v7477 = vld [vmem:[#allocation2 + $0xc8] sm:$0xff]
      %v7478 = vld [vmem:[#allocation2 + $0xd0] sm:$0xff]
      %v7479 = vld [vmem:[#allocation2 + $0xd8] sm:$0xff]
      %v7480 = vld [vmem:[#allocation2 + $0xe0] sm:$0xff]
      %v7481 = vld [vmem:[#allocation2 + $0xe8] sm:$0xff]
      %v7482 = vld [vmem:[#allocation2 + $0xf0] sm:$0xff]
      %v7483 = vld [vmem:[#allocation2 + $0xf8] sm:$0xff]
      %v7484 = vld [vmem:[#allocation2 + $0x100] sm:$0xff]
      %v7485 = vpack.c.bf16 %v7454, %v7453
      %v7486 = vpack.c.bf16 %v7456, %v7455
      %v7487 = vpack.c.bf16 %v7458, %v7457
      %v7488 = vpack.c.bf16 %v7460, %v7459
      %v7489 = vpack.c.bf16 %v7462, %v7461
      %v7490 = vpack.c.bf16 %v7464, %v7463
      %v7491 = vpack.c.bf16 %v7466, %v7465
      %v7492 = vpack.c.bf16 %v7468, %v7467
      %v7493 = vpack.c.bf16 %v7470, %v7469
      %v7494 = vpack.c.bf16 %v7472, %v7471
      %v7495 = vpack.c.bf16 %v7474, %v7473
      %v7496 = vpack.c.bf16 %v7476, %v7475
      %v7497 = vpack.c.bf16 %v7478, %v7477
      %v7498 = vpack.c.bf16 %v7480, %v7479
      %v7499 = vpack.c.bf16 %v7482, %v7481
      %v7500 = vpack.c.bf16 %v7484, %v7483
      %s7501 = scalar_lea.vmem %s12, 16
      %v7502 = vld [vmem:[%s7501] sm:$0xf]
      %v7503 = vld [vmem:[%s7501 + $0x4] sm:$0xf]
      %v7504 = vld [vmem:[%s7501 + $0x8] sm:$0xf]
      %v7505 = vld [vmem:[%s7501 + $0xc] sm:$0xf]
      %v7510 = vunpack.c.l.b16 %v7502
      %v7511 = vunpack.c.l.b16 %v7503
      %v7512 = vunpack.c.l.b16 %v7504
      %v7513 = vunpack.c.l.b16 %v7505
      %v7514 = vpack.c.b16 %v7511, %v7510
      %v7515 = vpack.c.b16 %v7513, %v7512
      %v7519 = vsel %vm7336, %v7485, 0
      %v7522 = vsel %vm7336, %v7486, 0
      %v7525 = vsel %vm7336, %v7487, 0
      %v7528 = vsel %vm7336, %v7488, 0
      %v7531 = vsel %vm7336, %v7489, 0
      %v7534 = vsel %vm7336, %v7490, 0
      %v7537 = vsel %vm7336, %v7491, 0
      %v7540 = vsel %vm7336, %v7492, 0
      %v7543 = vsel %vm7336, %v7493, 0
      %v7546 = vsel %vm7336, %v7494, 0
      %v7549 = vsel %vm7336, %v7495, 0
      %v7552 = vsel %vm7336, %v7496, 0
      %v7555 = vsel %vm7336, %v7497, 0
      %v7558 = vsel %vm7336, %v7498, 0
      %v7561 = vsel %vm7336, %v7499, 0
      %v7564 = vsel %vm7336, %v7500, 0
      %7566 = vmatprep.subr.bf16.mxu0 0
      %7567 = vmatpush1.bf16.msra.mxu0 %v7514
      %7568 = vmatprep.subr.bf16.mxu0 0
      %7569 = vmatpush1.bf16.msra.mxu0 %v7515
      %7570 = vmatprep.subr.bf16.mxu0 0
      %7571 = vmatpush1.bf16.msra.mxu0 0
      %7572 = vmatprep.subr.bf16.mxu0 0
      %7573 = vmatpush1.bf16.msra.mxu0 0
      %7574 = vmatprep.subr.bf16.mxu0 0
      %7575 = vmatpush1.bf16.msra.mxu0 0
      %7576 = vmatprep.subr.bf16.mxu0 0
      %7577 = vmatpush1.bf16.msra.mxu0 0
      %7578 = vmatprep.subr.bf16.mxu0 0
      %7579 = vmatpush1.bf16.msra.mxu0 0
      %7580 = vmatprep.subr.bf16.mxu0 0
      %7581 = vmatpush1.bf16.msra.mxu0 0
      %7582 = vmatprep.subr.bf16.mxu0 0
      %7583 = vmatpush1.bf16.msra.mxu0 0
      %7584 = vmatprep.subr.bf16.mxu0 0
      %7585 = vmatpush1.bf16.msra.mxu0 0
      %7586 = vmatprep.subr.bf16.mxu0 0
      %7587 = vmatpush1.bf16.msra.mxu0 0
      %7588 = vmatprep.subr.bf16.mxu0 0
      %7589 = vmatpush1.bf16.msra.mxu0 0
      %7590 = vmatprep.subr.bf16.mxu0 0
      %7591 = vmatpush1.bf16.msra.mxu0 0
      %7592 = vmatprep.subr.bf16.mxu0 0
      %7593 = vmatpush1.bf16.msra.mxu0 0
      %7594 = vmatprep.subr.bf16.mxu0 0
      %7595 = vmatpush1.bf16.msra.mxu0 0
      %7596 = vmatprep.subr.bf16.mxu0 0
      %7597 = vmatpush1.bf16.msra.mxu0 0
      %7598 = vmatprep.mubr.bf16.mxu0 0
      %7599 = vmatmul.mubr.bf16.gmra.mrb[0].mxu0 %v7519
      %v7600 = vpop.f32.mrb[0].mxu0
      %v7601 = vadd.f32 0.0, %v7600
      %v7602 = vpop.f32.mrb[0].mxu0
      %v7603 = vpop.f32.mrb[0].mxu0
      %v7604 = vadd.f32 0.0, %v7603
      %v7605 = vpop.f32.mrb[0].mxu0
      %7606 = vmatprep.mubr.bf16.mxu0 0
      %7607 = vmatmul.mubr.bf16.gmra.mrb[0].mxu0 %v7522
      %v7608 = vpop.f32.mrb[0].mxu0
      %v7609 = vadd.f32 0.0, %v7608
      %v7610 = vpop.f32.mrb[0].mxu0
      %v7611 = vpop.f32.mrb[0].mxu0
      %v7612 = vadd.f32 0.0, %v7611
      %v7613 = vpop.f32.mrb[0].mxu0
      %7614 = vmatprep.mubr.bf16.mxu0 0
      %7615 = vmatmul.mubr.bf16.gmra.mrb[0].mxu0 %v7525
      %v7616 = vpop.f32.mrb[0].mxu0
      %v7617 = vadd.f32 0.0, %v7616
      %v7618 = vpop.f32.mrb[0].mxu0
      %v7619 = vpop.f32.mrb[0].mxu0
      %v7620 = vadd.f32 0.0, %v7619
      %v7621 = vpop.f32.mrb[0].mxu0
      %7622 = vmatprep.mubr.bf16.mxu0 0
      %7623 = vmatmul.mubr.bf16.gmra.mrb[0].mxu0 %v7528
      %v7624 = vpop.f32.mrb[0].mxu0
      %v7625 = vadd.f32 0.0, %v7624
      %v7626 = vpop.f32.mrb[0].mxu0
      %v7627 = vpop.f32.mrb[0].mxu0
      %v7628 = vadd.f32 0.0, %v7627
      %v7629 = vpop.f32.mrb[0].mxu0
      %7630 = vmatprep.mubr.bf16.mxu0 0
      %7631 = vmatmul.mubr.bf16.gmra.mrb[0].mxu0 %v7531
      %v7632 = vpop.f32.mrb[0].mxu0
      %v7633 = vadd.f32 0.0, %v7632
      %v7634 = vpop.f32.mrb[0].mxu0
      %v7635 = vpop.f32.mrb[0].mxu0
      %v7636 = vadd.f32 0.0, %v7635
      %v7637 = vpop.f32.mrb[0].mxu0
      %7638 = vmatprep.mubr.bf16.mxu0 0
      %7639 = vmatmul.mubr.bf16.gmra.mrb[0].mxu0 %v7534
      %v7640 = vpop.f32.mrb[0].mxu0
      %v7641 = vadd.f32 0.0, %v7640
      %v7642 = vpop.f32.mrb[0].mxu0
      %v7643 = vpop.f32.mrb[0].mxu0
      %v7644 = vadd.f32 0.0, %v7643
      %v7645 = vpop.f32.mrb[0].mxu0
      %7646 = vmatprep.mubr.bf16.mxu0 0
      %7647 = vmatmul.mubr.bf16.gmra.mrb[0].mxu0 %v7537
      %v7648 = vpop.f32.mrb[0].mxu0
      %v7649 = vadd.f32 0.0, %v7648
      %v7650 = vpop.f32.mrb[0].mxu0
      %v7651 = vpop.f32.mrb[0].mxu0
      %v7652 = vadd.f32 0.0, %v7651
      %v7653 = vpop.f32.mrb[0].mxu0
      %7654 = vmatprep.mubr.bf16.mxu0 0
      %7655 = vmatmul.mubr.bf16.gmra.mrb[0].mxu0 %v7540
      %v7656 = vpop.f32.mrb[0].mxu0
      %v7657 = vadd.f32 0.0, %v7656
      %v7658 = vpop.f32.mrb[0].mxu0
      %v7659 = vpop.f32.mrb[0].mxu0
      %v7660 = vadd.f32 0.0, %v7659
      %v7661 = vpop.f32.mrb[0].mxu0
      %7662 = vmatprep.mubr.bf16.mxu0 0
      %7663 = vmatmul.mubr.bf16.gmra.mrb[0].mxu0 %v7543
      %v7664 = vpop.f32.mrb[0].mxu0
      %v7665 = vadd.f32 0.0, %v7664
      %v7666 = vpop.f32.mrb[0].mxu0
      %v7667 = vpop.f32.mrb[0].mxu0
      %v7668 = vadd.f32 0.0, %v7667
      %v7669 = vpop.f32.mrb[0].mxu0
      %7670 = vmatprep.mubr.bf16.mxu0 0
      %7671 = vmatmul.mubr.bf16.gmra.mrb[0].mxu0 %v7546
      %v7672 = vpop.f32.mrb[0].mxu0
      %v7673 = vadd.f32 0.0, %v7672
      %v7674 = vpop.f32.mrb[0].mxu0
      %v7675 = vpop.f32.mrb[0].mxu0
      %v7676 = vadd.f32 0.0, %v7675
      %v7677 = vpop.f32.mrb[0].mxu0
      %7678 = vmatprep.mubr.bf16.mxu0 0
      %7679 = vmatmul.mubr.bf16.gmra.mrb[0].mxu0 %v7549
      %v7680 = vpop.f32.mrb[0].mxu0
      %v7681 = vadd.f32 0.0, %v7680
      %v7682 = vpop.f32.mrb[0].mxu0
      %v7683 = vpop.f32.mrb[0].mxu0
      %v7684 = vadd.f32 0.0, %v7683
      %v7685 = vpop.f32.mrb[0].mxu0
      %7686 = vmatprep.mubr.bf16.mxu0 0
      %7687 = vmatmul.mubr.bf16.gmra.mrb[0].mxu0 %v7552
      %v7688 = vpop.f32.mrb[0].mxu0
      %v7689 = vadd.f32 0.0, %v7688
      %v7690 = vpop.f32.mrb[0].mxu0
      %v7691 = vpop.f32.mrb[0].mxu0
      %v7692 = vadd.f32 0.0, %v7691
      %v7693 = vpop.f32.mrb[0].mxu0
      %7694 = vmatprep.mubr.bf16.mxu0 0
      %7695 = vmatmul.mubr.bf16.gmra.mrb[0].mxu0 %v7555
      %v7696 = vpop.f32.mrb[0].mxu0
      %v7697 = vadd.f32 0.0, %v7696
      %v7698 = vpop.f32.mrb[0].mxu0
      %v7699 = vpop.f32.mrb[0].mxu0
      %v7700 = vadd.f32 0.0, %v7699
      %v7701 = vpop.f32.mrb[0].mxu0
      %7702 = vmatprep.mubr.bf16.mxu0 0
      %7703 = vmatmul.mubr.bf16.gmra.mrb[0].mxu0 %v7558
      %v7704 = vpop.f32.mrb[0].mxu0
      %v7705 = vadd.f32 0.0, %v7704
      %v7706 = vpop.f32.mrb[0].mxu0
      %v7707 = vpop.f32.mrb[0].mxu0
      %v7708 = vadd.f32 0.0, %v7707
      %v7709 = vpop.f32.mrb[0].mxu0
      %7710 = vmatprep.mubr.bf16.mxu0 0
      %7711 = vmatmul.mubr.bf16.gmra.mrb[0].mxu0 %v7561
      %v7712 = vpop.f32.mrb[0].mxu0
      %v7713 = vadd.f32 0.0, %v7712
      %v7714 = vpop.f32.mrb[0].mxu0
      %v7715 = vpop.f32.mrb[0].mxu0
      %v7716 = vadd.f32 0.0, %v7715
      %v7717 = vpop.f32.mrb[0].mxu0
      %7718 = vmatprep.mubr.bf16.mxu0 0
      %7719 = vmatmul.mubr.bf16.gmra.mrb[0].mxu0 %v7564
      %v7720 = vpop.f32.mrb[0].mxu0
      %v7721 = vadd.f32 0.0, %v7720
      %v7722 = vpop.f32.mrb[0].mxu0
      %v7723 = vpop.f32.mrb[0].mxu0
      %v7724 = vadd.f32 0.0, %v7723
      %v7725 = vpop.f32.mrb[0].mxu0
      %7726 = vdwg.mxu0
      %v7731 = vunpack.c.l.b16 %v7449
      %v7732 = vunpack.c.l.b16 %v7450
      %v7733 = vunpack.c.l.b16 %v7451
      %v7734 = vunpack.c.l.b16 %v7452
      %v7735 = vpack.c.b16 %v7732, %v7731
      %v7736 = vpack.c.b16 %v7734, %v7733
      %v7740 = vsel %vm7336, %v7433, 0
      %v7743 = vsel %vm7336, %v7434, 0
      %v7746 = vsel %vm7336, %v7435, 0
      %v7749 = vsel %vm7336, %v7436, 0
      %v7752 = vsel %vm7336, %v7437, 0
      %v7755 = vsel %vm7336, %v7438, 0
      %v7758 = vsel %vm7336, %v7439, 0
      %v7761 = vsel %vm7336, %v7440, 0
      %v7764 = vsel %vm7336, %v7441, 0
      %v7767 = vsel %vm7336, %v7442, 0
      %v7770 = vsel %vm7336, %v7443, 0
      %v7773 = vsel %vm7336, %v7444, 0
      %v7776 = vsel %vm7336, %v7445, 0
      %v7779 = vsel %vm7336, %v7446, 0
      %v7782 = vsel %vm7336, %v7447, 0
      %v7785 = vsel %vm7336, %v7448, 0
      %7787 = vmatprep.subr.bf16.mxu0 0
      %7788 = vmatpush1.bf16.msra.mxu0 %v7735
      %7789 = vmatprep.subr.bf16.mxu0 0
      %7790 = vmatpush1.bf16.msra.mxu0 %v7736
      %7791 = vmatprep.subr.bf16.mxu0 0
      %7792 = vmatpush1.bf16.msra.mxu0 0
      %7793 = vmatprep.subr.bf16.mxu0 0
      %7794 = vmatpush1.bf16.msra.mxu0 0
      %7795 = vmatprep.subr.bf16.mxu0 0
      %7796 = vmatpush1.bf16.msra.mxu0 0
      %7797 = vmatprep.subr.bf16.mxu0 0
      %7798 = vmatpush1.bf16.msra.mxu0 0
      %7799 = vmatprep.subr.bf16.mxu0 0
      %7800 = vmatpush1.bf16.msra.mxu0 0
      %7801 = vmatprep.subr.bf16.mxu0 0
      %7802 = vmatpush1.bf16.msra.mxu0 0
      %7803 = vmatprep.subr.bf16.mxu0 0
      %7804 = vmatpush1.bf16.msra.mxu0 0
      %7805 = vmatprep.subr.bf16.mxu0 0
      %7806 = vmatpush1.bf16.msra.mxu0 0
      %7807 = vmatprep.subr.bf16.mxu0 0
      %7808 = vmatpush1.bf16.msra.mxu0 0
      %7809 = vmatprep.subr.bf16.mxu0 0
      %7810 = vmatpush1.bf16.msra.mxu0 0
      %7811 = vmatprep.subr.bf16.mxu0 0
      %7812 = vmatpush1.bf16.msra.mxu0 0
      %7813 = vmatprep.subr.bf16.mxu0 0
      %7814 = vmatpush1.bf16.msra.mxu0 0
      %7815 = vmatprep.subr.bf16.mxu0 0
      %7816 = vmatpush1.bf16.msra.mxu0 0
      %7817 = vmatprep.subr.bf16.mxu0 0
      %7818 = vmatpush1.bf16.msra.mxu0 0
      %7819 = vmatprep.mubr.bf16.mxu0 0
      %7820 = vmatmul.mubr.bf16.gmra.mrb[0].mxu0 %v7740
      %v7821 = vpop.f32.mrb[0].mxu0
      %v7822 = vadd.f32 %v7601, %v7821
      %v7823 = vpop.f32.mrb[0].mxu0
      %v7824 = vpop.f32.mrb[0].mxu0
      %v7825 = vadd.f32 %v7604, %v7824
      %v7826 = vpop.f32.mrb[0].mxu0
      %7827 = vmatprep.mubr.bf16.mxu0 0
      %7828 = vmatmul.mubr.bf16.gmra.mrb[0].mxu0 %v7743
      %v7829 = vpop.f32.mrb[0].mxu0
      %v7830 = vadd.f32 %v7609, %v7829
      %v7831 = vpop.f32.mrb[0].mxu0
      %v7832 = vpop.f32.mrb[0].mxu0
      %v7833 = vadd.f32 %v7612, %v7832
      %v7834 = vpop.f32.mrb[0].mxu0
      %7835 = vmatprep.mubr.bf16.mxu0 0
      %7836 = vmatmul.mubr.bf16.gmra.mrb[0].mxu0 %v7746
      %v7837 = vpop.f32.mrb[0].mxu0
      %v7838 = vadd.f32 %v7617, %v7837
      %v7839 = vpop.f32.mrb[0].mxu0
      %v7840 = vpop.f32.mrb[0].mxu0
      %v7841 = vadd.f32 %v7620, %v7840
      %v7842 = vpop.f32.mrb[0].mxu0
      %7843 = vmatprep.mubr.bf16.mxu0 0
      %7844 = vmatmul.mubr.bf16.gmra.mrb[0].mxu0 %v7749
      %v7845 = vpop.f32.mrb[0].mxu0
      %v7846 = vadd.f32 %v7625, %v7845
      %v7847 = vpop.f32.mrb[0].mxu0
      %v7848 = vpop.f32.mrb[0].mxu0
      %v7849 = vadd.f32 %v7628, %v7848
      %v7850 = vpop.f32.mrb[0].mxu0
      %7851 = vmatprep.mubr.bf16.mxu0 0
      %7852 = vmatmul.mubr.bf16.gmra.mrb[0].mxu0 %v7752
      %v7853 = vpop.f32.mrb[0].mxu0
      %v7854 = vadd.f32 %v7633, %v7853
      %v7855 = vpop.f32.mrb[0].mxu0
      %v7856 = vpop.f32.mrb[0].mxu0
      %v7857 = vadd.f32 %v7636, %v7856
      %v7858 = vpop.f32.mrb[0].mxu0
      %7859 = vmatprep.mubr.bf16.mxu0 0
      %7860 = vmatmul.mubr.bf16.gmra.mrb[0].mxu0 %v7755
      %v7861 = vpop.f32.mrb[0].mxu0
      %v7862 = vadd.f32 %v7641, %v7861
      %v7863 = vpop.f32.mrb[0].mxu0
      %v7864 = vpop.f32.mrb[0].mxu0
      %v7865 = vadd.f32 %v7644, %v7864
      %v7866 = vpop.f32.mrb[0].mxu0
      %7867 = vmatprep.mubr.bf16.mxu0 0
      %7868 = vmatmul.mubr.bf16.gmra.mrb[0].mxu0 %v7758
      %v7869 = vpop.f32.mrb[0].mxu0
      %v7870 = vadd.f32 %v7649, %v7869
      %v7871 = vpop.f32.mrb[0].mxu0
      %v7872 = vpop.f32.mrb[0].mxu0
      %v7873 = vadd.f32 %v7652, %v7872
      %v7874 = vpop.f32.mrb[0].mxu0
      %7875 = vmatprep.mubr.bf16.mxu0 0
      %7876 = vmatmul.mubr.bf16.gmra.mrb[0].mxu0 %v7761
      %v7877 = vpop.f32.mrb[0].mxu0
      %v7878 = vadd.f32 %v7657, %v7877
      %v7879 = vpop.f32.mrb[0].mxu0
      %v7880 = vpop.f32.mrb[0].mxu0
      %v7881 = vadd.f32 %v7660, %v7880
      %v7882 = vpop.f32.mrb[0].mxu0
      %7883 = vmatprep.mubr.bf16.mxu0 0
      %7884 = vmatmul.mubr.bf16.gmra.mrb[0].mxu0 %v7764
      %v7885 = vpop.f32.mrb[0].mxu0
      %v7886 = vadd.f32 %v7665, %v7885
      %v7887 = vpop.f32.mrb[0].mxu0
      %v7888 = vpop.f32.mrb[0].mxu0
      %v7889 = vadd.f32 %v7668, %v7888
      %v7890 = vpop.f32.mrb[0].mxu0
      %7891 = vmatprep.mubr.bf16.mxu0 0
      %7892 = vmatmul.mubr.bf16.gmra.mrb[0].mxu0 %v7767
      %v7893 = vpop.f32.mrb[0].mxu0
      %v7894 = vadd.f32 %v7673, %v7893
      %v7895 = vpop.f32.mrb[0].mxu0
      %v7896 = vpop.f32.mrb[0].mxu0
      %v7897 = vadd.f32 %v7676, %v7896
      %v7898 = vpop.f32.mrb[0].mxu0
      %7899 = vmatprep.mubr.bf16.mxu0 0
      %7900 = vmatmul.mubr.bf16.gmra.mrb[0].mxu0 %v7770
      %v7901 = vpop.f32.mrb[0].mxu0
      %v7902 = vadd.f32 %v7681, %v7901
      %v7903 = vpop.f32.mrb[0].mxu0
      %v7904 = vpop.f32.mrb[0].mxu0
      %v7905 = vadd.f32 %v7684, %v7904
      %v7906 = vpop.f32.mrb[0].mxu0
      %7907 = vmatprep.mubr.bf16.mxu0 0
      %7908 = vmatmul.mubr.bf16.gmra.mrb[0].mxu0 %v7773
      %v7909 = vpop.f32.mrb[0].mxu0
      %v7910 = vadd.f32 %v7689, %v7909
      %v7911 = vpop.f32.mrb[0].mxu0
      %v7912 = vpop.f32.mrb[0].mxu0
      %v7913 = vadd.f32 %v7692, %v7912
      %v7914 = vpop.f32.mrb[0].mxu0
      %7915 = vmatprep.mubr.bf16.mxu0 0
      %7916 = vmatmul.mubr.bf16.gmra.mrb[0].mxu0 %v7776
      %v7917 = vpop.f32.mrb[0].mxu0
      %v7918 = vadd.f32 %v7697, %v7917
      %v7919 = vpop.f32.mrb[0].mxu0
      %v7920 = vpop.f32.mrb[0].mxu0
      %v7921 = vadd.f32 %v7700, %v7920
      %v7922 = vpop.f32.mrb[0].mxu0
      %7923 = vmatprep.mubr.bf16.mxu0 0
      %7924 = vmatmul.mubr.bf16.gmra.mrb[0].mxu0 %v7779
      %v7925 = vpop.f32.mrb[0].mxu0
      %v7926 = vadd.f32 %v7705, %v7925
      %v7927 = vpop.f32.mrb[0].mxu0
      %v7928 = vpop.f32.mrb[0].mxu0
      %v7929 = vadd.f32 %v7708, %v7928
      %v7930 = vpop.f32.mrb[0].mxu0
      %7931 = vmatprep.mubr.bf16.mxu0 0
      %7932 = vmatmul.mubr.bf16.gmra.mrb[0].mxu0 %v7782
      %v7933 = vpop.f32.mrb[0].mxu0
      %v7934 = vadd.f32 %v7713, %v7933
      %v7935 = vpop.f32.mrb[0].mxu0
      %v7936 = vpop.f32.mrb[0].mxu0
      %v7937 = vadd.f32 %v7716, %v7936
      %v7938 = vpop.f32.mrb[0].mxu0
      %7939 = vmatprep.mubr.bf16.mxu0 0
      %7940 = vmatmul.mubr.bf16.gmra.mrb[0].mxu0 %v7785
      %v7941 = vpop.f32.mrb[0].mxu0
      %v7942 = vadd.f32 %v7721, %v7941
      %v7943 = vpop.f32.mrb[0].mxu0
      %v7944 = vpop.f32.mrb[0].mxu0
      %v7945 = vadd.f32 %v7724, %v7944
      %v7946 = vpop.f32.mrb[0].mxu0
      %7947 = vdwg.mxu0
      %v7948 = vld [vmem:[#allocation2 + $0x9] sm:$0xff]
      %v7949 = vld [vmem:[#allocation2 + $0x11] sm:$0xff]
      %v7950 = vld [vmem:[#allocation2 + $0x19] sm:$0xff]
      %v7951 = vld [vmem:[#allocation2 + $0x21] sm:$0xff]
      %v7952 = vld [vmem:[#allocation2 + $0x29] sm:$0xff]
      %v7953 = vld [vmem:[#allocation2 + $0x31] sm:$0xff]
      %v7954 = vld [vmem:[#allocation2 + $0x39] sm:$0xff]
      %v7955 = vld [vmem:[#allocation2 + $0x41] sm:$0xff]
      %v7956 = vld [vmem:[#allocation2 + $0x49] sm:$0xff]
      %v7957 = vld [vmem:[#allocation2 + $0x51] sm:$0xff]
      %v7958 = vld [vmem:[#allocation2 + $0x59] sm:$0xff]
      %v7959 = vld [vmem:[#allocation2 + $0x61] sm:$0xff]
      %v7960 = vld [vmem:[#allocation2 + $0x69] sm:$0xff]
      %v7961 = vld [vmem:[#allocation2 + $0x71] sm:$0xff]
      %v7962 = vld [vmem:[#allocation2 + $0x79] sm:$0xff]
      %v7963 = vld [vmem:[#allocation2 + $0x81] sm:$0xff]
      %v7964 = vld [vmem:[#allocation2 + $0x89] sm:$0xff]
      %v7965 = vld [vmem:[#allocation2 + $0x91] sm:$0xff]
      %v7966 = vld [vmem:[#allocation2 + $0x99] sm:$0xff]
      %v7967 = vld [vmem:[#allocation2 + $0xa1] sm:$0xff]
      %v7968 = vld [vmem:[#allocation2 + $0xa9] sm:$0xff]
      %v7969 = vld [vmem:[#allocation2 + $0xb1] sm:$0xff]
      %v7970 = vld [vmem:[#allocation2 + $0xb9] sm:$0xff]
      %v7971 = vld [vmem:[#allocation2 + $0xc1] sm:$0xff]
      %v7972 = vld [vmem:[#allocation2 + $0xc9] sm:$0xff]
      %v7973 = vld [vmem:[#allocation2 + $0xd1] sm:$0xff]
      %v7974 = vld [vmem:[#allocation2 + $0xd9] sm:$0xff]
      %v7975 = vld [vmem:[#allocation2 + $0xe1] sm:$0xff]
      %v7976 = vld [vmem:[#allocation2 + $0xe9] sm:$0xff]
      %v7977 = vld [vmem:[#allocation2 + $0xf1] sm:$0xff]
      %v7978 = vld [vmem:[#allocation2 + $0xf9] sm:$0xff]
      %v7979 = vld [vmem:[#allocation2 + $0x101] sm:$0xff]
      %v7980 = vmul.f32 %v7948, %v1733
      %v7981 = vmul.f32 %v7949, %v1737
      %v7982 = vmul.f32 %v7950, %v1741
      %v7983 = vmul.f32 %v7951, %v1745
      %v7984 = vmul.f32 %v7952, %v1749
      %v7985 = vmul.f32 %v7953, %v1753
      %v7986 = vmul.f32 %v7954, %v1757
      %v7987 = vmul.f32 %v7955, %v1761
      %v7988 = vmul.f32 %v7956, %v1765
      %v7989 = vmul.f32 %v7957, %v1769
      %v7990 = vmul.f32 %v7958, %v1773
      %v7991 = vmul.f32 %v7959, %v1777
      %v7992 = vmul.f32 %v7960, %v1781
      %v7993 = vmul.f32 %v7961, %v1785
      %v7994 = vmul.f32 %v7962, %v1789
      %v7995 = vmul.f32 %v7963, %v1793
      %v7996 = vmul.f32 %v7964, %v1797
      %v7997 = vmul.f32 %v7965, %v1801
      %v7998 = vmul.f32 %v7966, %v1805
      %v7999 = vmul.f32 %v7967, %v1809
      %v8000 = vmul.f32 %v7968, %v1813
      %v8001 = vmul.f32 %v7969, %v1817
      %v8002 = vmul.f32 %v7970, %v1821
      %v8003 = vmul.f32 %v7971, %v1825
      %v8004 = vmul.f32 %v7972, %v1829
      %v8005 = vmul.f32 %v7973, %v1833
      %v8006 = vmul.f32 %v7974, %v1837
      %v8007 = vmul.f32 %v7975, %v1841
      %v8008 = vmul.f32 %v7976, %v1845
      %v8009 = vmul.f32 %v7977, %v1849
      %v8010 = vmul.f32 %v7978, %v1853
      %v8011 = vmul.f32 %v7979, %v1857
      %v8012 = vpack.c.bf16 %v7981, %v7980
      %v8013 = vpack.c.bf16 %v7983, %v7982
      %v8014 = vpack.c.bf16 %v7985, %v7984
      %v8015 = vpack.c.bf16 %v7987, %v7986
      %v8016 = vpack.c.bf16 %v7989, %v7988
      %v8017 = vpack.c.bf16 %v7991, %v7990
      %v8018 = vpack.c.bf16 %v7993, %v7992
      %v8019 = vpack.c.bf16 %v7995, %v7994
      %v8020 = vpack.c.bf16 %v7997, %v7996
      %v8021 = vpack.c.bf16 %v7999, %v7998
      %v8022 = vpack.c.bf16 %v8001, %v8000
      %v8023 = vpack.c.bf16 %v8003, %v8002
      %v8024 = vpack.c.bf16 %v8005, %v8004
      %v8025 = vpack.c.bf16 %v8007, %v8006
      %v8026 = vpack.c.bf16 %v8009, %v8008
      %v8027 = vpack.c.bf16 %v8011, %v8010
      %s8028 = scalar_lea.vmem %s12, 32
      %v8029 = vld [vmem:[%s8028] sm:$0xf]
      %v8030 = vld [vmem:[%s8028 + $0x4] sm:$0xf]
      %v8031 = vld [vmem:[%s8028 + $0x8] sm:$0xf]
      %v8032 = vld [vmem:[%s8028 + $0xc] sm:$0xf]
      %v8037 = vunpack.c.l.b16 %v8029
      %v8038 = vunpack.c.l.b16 %v8030
      %v8039 = vunpack.c.l.b16 %v8031
      %v8040 = vunpack.c.l.b16 %v8032
      %v8041 = vpack.c.b16 %v8038, %v8037
      %v8042 = vpack.c.b16 %v8040, %v8039
      %v8046 = vsel %vm7336, %v8012, 0
      %v8049 = vsel %vm7336, %v8013, 0
      %v8052 = vsel %vm7336, %v8014, 0
      %v8055 = vsel %vm7336, %v8015, 0
      %v8058 = vsel %vm7336, %v8016, 0
      %v8061 = vsel %vm7336, %v8017, 0
      %v8064 = vsel %vm7336, %v8018, 0
      %v8067 = vsel %vm7336, %v8019, 0
      %v8070 = vsel %vm7336, %v8020, 0
      %v8073 = vsel %vm7336, %v8021, 0
      %v8076 = vsel %vm7336, %v8022, 0
      %v8079 = vsel %vm7336, %v8023, 0
      %v8082 = vsel %vm7336, %v8024, 0
      %v8085 = vsel %vm7336, %v8025, 0
      %v8088 = vsel %vm7336, %v8026, 0
      %v8091 = vsel %vm7336, %v8027, 0
      %8093 = vmatprep.subr.bf16.mxu0 0
      %8094 = vmatpush1.bf16.msra.mxu0 %v8041
      %8095 = vmatprep.subr.bf16.mxu0 0
      %8096 = vmatpush1.bf16.msra.mxu0 %v8042
      %8097 = vmatprep.subr.bf16.mxu0 0
      %8098 = vmatpush1.bf16.msra.mxu0 0
      %8099 = vmatprep.subr.bf16.mxu0 0
      %8100 = vmatpush1.bf16.msra.mxu0 0
      %8101 = vmatprep.subr.bf16.mxu0 0
      %8102 = vmatpush1.bf16.msra.mxu0 0
      %8103 = vmatprep.subr.bf16.mxu0 0
      %8104 = vmatpush1.bf16.msra.mxu0 0
      %8105 = vmatprep.subr.bf16.mxu0 0
      %8106 = vmatpush1.bf16.msra.mxu0 0
      %8107 = vmatprep.subr.bf16.mxu0 0
      %8108 = vmatpush1.bf16.msra.mxu0 0
      %8109 = vmatprep.subr.bf16.mxu0 0
      %8110 = vmatpush1.bf16.msra.mxu0 0
      %8111 = vmatprep.subr.bf16.mxu0 0
      %8112 = vmatpush1.bf16.msra.mxu0 0
      %8113 = vmatprep.subr.bf16.mxu0 0
      %8114 = vmatpush1.bf16.msra.mxu0 0
      %8115 = vmatprep.subr.bf16.mxu0 0
      %8116 = vmatpush1.bf16.msra.mxu0 0
      %8117 = vmatprep.subr.bf16.mxu0 0
      %8118 = vmatpush1.bf16.msra.mxu0 0
      %8119 = vmatprep.subr.bf16.mxu0 0
      %8120 = vmatpush1.bf16.msra.mxu0 0
      %8121 = vmatprep.subr.bf16.mxu0 0
      %8122 = vmatpush1.bf16.msra.mxu0 0
      %8123 = vmatprep.subr.bf16.mxu0 0
      %8124 = vmatpush1.bf16.msra.mxu0 0
      %8125 = vmatprep.mubr.bf16.mxu0 0
      %8126 = vmatmul.mubr.bf16.gmra.mrb[0].mxu0 %v8046
      %v8127 = vpop.f32.mrb[0].mxu0
      %v8128 = vadd.f32 0.0, %v8127
      %v8129 = vpop.f32.mrb[0].mxu0
      %v8130 = vpop.f32.mrb[0].mxu0
      %v8131 = vadd.f32 0.0, %v8130
      %v8132 = vpop.f32.mrb[0].mxu0
      %8133 = vmatprep.mubr.bf16.mxu0 0
      %8134 = vmatmul.mubr.bf16.gmra.mrb[0].mxu0 %v8049
      %v8135 = vpop.f32.mrb[0].mxu0
      %v8136 = vadd.f32 0.0, %v8135
      %v8137 = vpop.f32.mrb[0].mxu0
      %v8138 = vpop.f32.mrb[0].mxu0
      %v8139 = vadd.f32 0.0, %v8138
      %v8140 = vpop.f32.mrb[0].mxu0
      %8141 = vmatprep.mubr.bf16.mxu0 0
      %8142 = vmatmul.mubr.bf16.gmra.mrb[0].mxu0 %v8052
      %v8143 = vpop.f32.mrb[0].mxu0
      %v8144 = vadd.f32 0.0, %v8143
      %v8145 = vpop.f32.mrb[0].mxu0
      %v8146 = vpop.f32.mrb[0].mxu0
      %v8147 = vadd.f32 0.0, %v8146
      %v8148 = vpop.f32.mrb[0].mxu0
      %8149 = vmatprep.mubr.bf16.mxu0 0
      %8150 = vmatmul.mubr.bf16.gmra.mrb[0].mxu0 %v8055
      %v8151 = vpop.f32.mrb[0].mxu0
      %v8152 = vadd.f32 0.0, %v8151
      %v8153 = vpop.f32.mrb[0].mxu0
      %v8154 = vpop.f32.mrb[0].mxu0
      %v8155 = vadd.f32 0.0, %v8154
      %v8156 = vpop.f32.mrb[0].mxu0
      %8157 = vmatprep.mubr.bf16.mxu0 0
      %8158 = vmatmul.mubr.bf16.gmra.mrb[0].mxu0 %v8058
      %v8159 = vpop.f32.mrb[0].mxu0
      %v8160 = vadd.f32 0.0, %v8159
      %v8161 = vpop.f32.mrb[0].mxu0
      %v8162 = vpop.f32.mrb[0].mxu0
      %v8163 = vadd.f32 0.0, %v8162
      %v8164 = vpop.f32.mrb[0].mxu0
      %8165 = vmatprep.mubr.bf16.mxu0 0
      %8166 = vmatmul.mubr.bf16.gmra.mrb[0].mxu0 %v8061
      %v8167 = vpop.f32.mrb[0].mxu0
      %v8168 = vadd.f32 0.0, %v8167
      %v8169 = vpop.f32.mrb[0].mxu0
      %v8170 = vpop.f32.mrb[0].mxu0
      %v8171 = vadd.f32 0.0, %v8170
      %v8172 = vpop.f32.mrb[0].mxu0
      %8173 = vmatprep.mubr.bf16.mxu0 0
      %8174 = vmatmul.mubr.bf16.gmra.mrb[0].mxu0 %v8064
      %v8175 = vpop.f32.mrb[0].mxu0
      %v8176 = vadd.f32 0.0, %v8175
      %v8177 = vpop.f32.mrb[0].mxu0
      %v8178 = vpop.f32.mrb[0].mxu0
      %v8179 = vadd.f32 0.0, %v8178
      %v8180 = vpop.f32.mrb[0].mxu0
      %8181 = vmatprep.mubr.bf16.mxu0 0
      %8182 = vmatmul.mubr.bf16.gmra.mrb[0].mxu0 %v8067
      %v8183 = vpop.f32.mrb[0].mxu0
      %v8184 = vadd.f32 0.0, %v8183
      %v8185 = vpop.f32.mrb[0].mxu0
      %v8186 = vpop.f32.mrb[0].mxu0
      %v8187 = vadd.f32 0.0, %v8186
      %v8188 = vpop.f32.mrb[0].mxu0
      %8189 = vmatprep.mubr.bf16.mxu0 0
      %8190 = vmatmul.mubr.bf16.gmra.mrb[0].mxu0 %v8070
      %v8191 = vpop.f32.mrb[0].mxu0
      %v8192 = vadd.f32 0.0, %v8191
      %v8193 = vpop.f32.mrb[0].mxu0
      %v8194 = vpop.f32.mrb[0].mxu0
      %v8195 = vadd.f32 0.0, %v8194
      %v8196 = vpop.f32.mrb[0].mxu0
      %8197 = vmatprep.mubr.bf16.mxu0 0
      %8198 = vmatmul.mubr.bf16.gmra.mrb[0].mxu0 %v8073
      %v8199 = vpop.f32.mrb[0].mxu0
      %v8200 = vadd.f32 0.0, %v8199
      %v8201 = vpop.f32.mrb[0].mxu0
      %v8202 = vpop.f32.mrb[0].mxu0
      %v8203 = vadd.f32 0.0, %v8202
      %v8204 = vpop.f32.mrb[0].mxu0
      %8205 = vmatprep.mubr.bf16.mxu0 0
      %8206 = vmatmul.mubr.bf16.gmra.mrb[0].mxu0 %v8076
      %v8207 = vpop.f32.mrb[0].mxu0
      %v8208 = vadd.f32 0.0, %v8207
      %v8209 = vpop.f32.mrb[0].mxu0
      %v8210 = vpop.f32.mrb[0].mxu0
      %v8211 = vadd.f32 0.0, %v8210
      %v8212 = vpop.f32.mrb[0].mxu0
      %8213 = vmatprep.mubr.bf16.mxu0 0
      %8214 = vmatmul.mubr.bf16.gmra.mrb[0].mxu0 %v8079
      %v8215 = vpop.f32.mrb[0].mxu0
      %v8216 = vadd.f32 0.0, %v8215
      %v8217 = vpop.f32.mrb[0].mxu0
      %v8218 = vpop.f32.mrb[0].mxu0
      %v8219 = vadd.f32 0.0, %v8218
      %v8220 = vpop.f32.mrb[0].mxu0
      %8221 = vmatprep.mubr.bf16.mxu0 0
      %8222 = vmatmul.mubr.bf16.gmra.mrb[0].mxu0 %v8082
      %v8223 = vpop.f32.mrb[0].mxu0
      %v8224 = vadd.f32 0.0, %v8223
      %v8225 = vpop.f32.mrb[0].mxu0
      %v8226 = vpop.f32.mrb[0].mxu0
      %v8227 = vadd.f32 0.0, %v8226
      %v8228 = vpop.f32.mrb[0].mxu0
      %8229 = vmatprep.mubr.bf16.mxu0 0
      %8230 = vmatmul.mubr.bf16.gmra.mrb[0].mxu0 %v8085
      %v8231 = vpop.f32.mrb[0].mxu0
      %v8232 = vadd.f32 0.0, %v8231
      %v8233 = vpop.f32.mrb[0].mxu0
      %v8234 = vpop.f32.mrb[0].mxu0
      %v8235 = vadd.f32 0.0, %v8234
      %v8236 = vpop.f32.mrb[0].mxu0
      %8237 = vmatprep.mubr.bf16.mxu0 0
      %8238 = vmatmul.mubr.bf16.gmra.mrb[0].mxu0 %v8088
      %v8239 = vpop.f32.mrb[0].mxu0
      %v8240 = vadd.f32 0.0, %v8239
      %v8241 = vpop.f32.mrb[0].mxu0
      %v8242 = vpop.f32.mrb[0].mxu0
      %v8243 = vadd.f32 0.0, %v8242
      %v8244 = vpop.f32.mrb[0].mxu0
      %8245 = vmatprep.mubr.bf16.mxu0 0
      %8246 = vmatmul.mubr.bf16.gmra.mrb[0].mxu0 %v8091
      %v8247 = vpop.f32.mrb[0].mxu0
      %v8248 = vadd.f32 0.0, %v8247
      %v8249 = vpop.f32.mrb[0].mxu0
      %v8250 = vpop.f32.mrb[0].mxu0
      %v8251 = vadd.f32 0.0, %v8250
      %v8252 = vpop.f32.mrb[0].mxu0
      %8253 = vdwg.mxu0
      %v8254 = vadd.f32 %v7822, %v8128
      %v8255 = vadd.f32 %v7825, %v8131
      %v8256 = vadd.f32 %v7830, %v8136
      %v8257 = vadd.f32 %v7833, %v8139
      %v8258 = vadd.f32 %v7838, %v8144
      %v8259 = vadd.f32 %v7841, %v8147
      %v8260 = vadd.f32 %v7846, %v8152
      %v8261 = vadd.f32 %v7849, %v8155
      %v8262 = vadd.f32 %v7854, %v8160
      %v8263 = vadd.f32 %v7857, %v8163
      %v8264 = vadd.f32 %v7862, %v8168
      %v8265 = vadd.f32 %v7865, %v8171
      %v8266 = vadd.f32 %v7870, %v8176
      %v8267 = vadd.f32 %v7873, %v8179
      %v8268 = vadd.f32 %v7878, %v8184
      %v8269 = vadd.f32 %v7881, %v8187
      %v8270 = vadd.f32 %v7886, %v8192
      %v8271 = vadd.f32 %v7889, %v8195
      %v8272 = vadd.f32 %v7894, %v8200
      %v8273 = vadd.f32 %v7897, %v8203
      %v8274 = vadd.f32 %v7902, %v8208
      %v8275 = vadd.f32 %v7905, %v8211
      %v8276 = vadd.f32 %v7910, %v8216
      %v8277 = vadd.f32 %v7913, %v8219
      %v8278 = vadd.f32 %v7918, %v8224
      %v8279 = vadd.f32 %v7921, %v8227
      %v8280 = vadd.f32 %v7926, %v8232
      %v8281 = vadd.f32 %v7929, %v8235
      %v8282 = vadd.f32 %v7934, %v8240
      %v8283 = vadd.f32 %v7937, %v8243
      %v8284 = vadd.f32 %v7942, %v8248
      %v8285 = vadd.f32 %v7945, %v8251
      %v8286 = vld [vmem:[#allocation2 + $0x17] sm:$0xff]
      %v8287 = vld [vmem:[#allocation2 + $0x1f] sm:$0xff]
      %v8288 = vld [vmem:[#allocation2 + $0x27] sm:$0xff]
      %v8289 = vld [vmem:[#allocation2 + $0x2f] sm:$0xff]
      %v8290 = vld [vmem:[#allocation2 + $0x37] sm:$0xff]
      %v8291 = vld [vmem:[#allocation2 + $0x3f] sm:$0xff]
      %v8292 = vld [vmem:[#allocation2 + $0x47] sm:$0xff]
      %v8293 = vld [vmem:[#allocation2 + $0x4f] sm:$0xff]
      %v8294 = vld [vmem:[#allocation2 + $0x57] sm:$0xff]
      %v8295 = vld [vmem:[#allocation2 + $0x5f] sm:$0xff]
      %v8296 = vld [vmem:[#allocation2 + $0x67] sm:$0xff]
      %v8297 = vld [vmem:[#allocation2 + $0x6f] sm:$0xff]
      %v8298 = vld [vmem:[#allocation2 + $0x77] sm:$0xff]
      %v8299 = vld [vmem:[#allocation2 + $0x7f] sm:$0xff]
      %v8300 = vld [vmem:[#allocation2 + $0x87] sm:$0xff]
      %v8301 = vld [vmem:[#allocation2 + $0x8f] sm:$0xff]
      %v8302 = vld [vmem:[#allocation2 + $0x97] sm:$0xff]
      %v8303 = vld [vmem:[#allocation2 + $0x9f] sm:$0xff]
      %v8304 = vld [vmem:[#allocation2 + $0xa7] sm:$0xff]
      %v8305 = vld [vmem:[#allocation2 + $0xaf] sm:$0xff]
      %v8306 = vld [vmem:[#allocation2 + $0xb7] sm:$0xff]
      %v8307 = vld [vmem:[#allocation2 + $0xbf] sm:$0xff]
      %v8308 = vld [vmem:[#allocation2 + $0xc7] sm:$0xff]
      %v8309 = vld [vmem:[#allocation2 + $0xcf] sm:$0xff]
      %v8310 = vld [vmem:[#allocation2 + $0xd7] sm:$0xff]
      %v8311 = vld [vmem:[#allocation2 + $0xdf] sm:$0xff]
      %v8312 = vld [vmem:[#allocation2 + $0xe7] sm:$0xff]
      %v8313 = vld [vmem:[#allocation2 + $0xef] sm:$0xff]
      %v8314 = vld [vmem:[#allocation2 + $0xf7] sm:$0xff]
      %v8315 = vld [vmem:[#allocation2 + $0xff] sm:$0xff]
      %v8316 = vld [vmem:[#allocation2 + $0x107] sm:$0xff]
      %v8317 = vld [vmem:[#allocation2 + $0x10f] sm:$0xff]
      %v8318 = vmul.f32 %v8286, %v1018
      %v8319 = vmul.f32 %v8287, %v1023
      %v8320 = vmul.f32 %v8288, %v1028
      %v8321 = vmul.f32 %v8289, %v1033
      %v8322 = vmul.f32 %v8290, %v1038
      %v8323 = vmul.f32 %v8291, %v1043
      %v8324 = vmul.f32 %v8292, %v1048
      %v8325 = vmul.f32 %v8293, %v1053
      %v8326 = vmul.f32 %v8294, %v1058
      %v8327 = vmul.f32 %v8295, %v1063
      %v8328 = vmul.f32 %v8296, %v1068
      %v8329 = vmul.f32 %v8297, %v1073
      %v8330 = vmul.f32 %v8298, %v1078
      %v8331 = vmul.f32 %v8299, %v1083
      %v8332 = vmul.f32 %v8300, %v1088
      %v8333 = vmul.f32 %v8301, %v1093
      %v8334 = vmul.f32 %v8302, %v1098
      %v8335 = vmul.f32 %v8303, %v1103
      %v8336 = vmul.f32 %v8304, %v1108
      %v8337 = vmul.f32 %v8305, %v1113
      %v8338 = vmul.f32 %v8306, %v1118
      %v8339 = vmul.f32 %v8307, %v1123
      %v8340 = vmul.f32 %v8308, %v1128
      %v8341 = vmul.f32 %v8309, %v1133
      %v8342 = vmul.f32 %v8310, %v1138
      %v8343 = vmul.f32 %v8311, %v1143
      %v8344 = vmul.f32 %v8312, %v1148
      %v8345 = vmul.f32 %v8313, %v1153
      %v8346 = vmul.f32 %v8314, %v1158
      %v8347 = vmul.f32 %v8315, %v1163
      %v8348 = vmul.f32 %v8316, %v1168
      %v8349 = vmul.f32 %v8317, %v1173
      %v8350 = vpack.c.bf16 %v8319, %v8318
      %v8351 = vpack.c.bf16 %v8321, %v8320
      %v8352 = vpack.c.bf16 %v8323, %v8322
      %v8353 = vpack.c.bf16 %v8325, %v8324
      %v8354 = vpack.c.bf16 %v8327, %v8326
      %v8355 = vpack.c.bf16 %v8329, %v8328
      %v8356 = vpack.c.bf16 %v8331, %v8330
      %v8357 = vpack.c.bf16 %v8333, %v8332
      %v8358 = vpack.c.bf16 %v8335, %v8334
      %v8359 = vpack.c.bf16 %v8337, %v8336
      %v8360 = vpack.c.bf16 %v8339, %v8338
      %v8361 = vpack.c.bf16 %v8341, %v8340
      %v8362 = vpack.c.bf16 %v8343, %v8342
      %v8363 = vpack.c.bf16 %v8345, %v8344
      %v8364 = vpack.c.bf16 %v8347, %v8346
      %v8365 = vpack.c.bf16 %v8349, %v8348
      %s8366 = scalar_lea.vmem %s12, 48
      %v8367 = vld [vmem:[%s8366] sm:$0xf]
      %v8368 = vld [vmem:[%s8366 + $0x4] sm:$0xf]
      %v8369 = vld [vmem:[%s8366 + $0x8] sm:$0xf]
      %v8370 = vld [vmem:[%s8366 + $0xc] sm:$0xf]
      %v8375 = vunpack.c.l.b16 %v8367
      %v8376 = vunpack.c.l.b16 %v8368
      %v8377 = vunpack.c.l.b16 %v8369
      %v8378 = vunpack.c.l.b16 %v8370
      %v8379 = vpack.c.b16 %v8376, %v8375
      %v8380 = vpack.c.b16 %v8378, %v8377
      %v8384 = vsel %vm7336, %v8350, 0
      %v8387 = vsel %vm7336, %v8351, 0
      %v8390 = vsel %vm7336, %v8352, 0
      %v8393 = vsel %vm7336, %v8353, 0
      %v8396 = vsel %vm7336, %v8354, 0
      %v8399 = vsel %vm7336, %v8355, 0
      %v8402 = vsel %vm7336, %v8356, 0
      %v8405 = vsel %vm7336, %v8357, 0
      %v8408 = vsel %vm7336, %v8358, 0
      %v8411 = vsel %vm7336, %v8359, 0
      %v8414 = vsel %vm7336, %v8360, 0
      %v8417 = vsel %vm7336, %v8361, 0
      %v8420 = vsel %vm7336, %v8362, 0
      %v8423 = vsel %vm7336, %v8363, 0
      %v8426 = vsel %vm7336, %v8364, 0
      %v8429 = vsel %vm7336, %v8365, 0
      %8431 = vmatprep.subr.bf16.mxu0 0
      %8432 = vmatpush1.bf16.msra.mxu0 %v8379
      %8433 = vmatprep.subr.bf16.mxu0 0
      %8434 = vmatpush1.bf16.msra.mxu0 %v8380
      %8435 = vmatprep.subr.bf16.mxu0 0
      %8436 = vmatpush1.bf16.msra.mxu0 0
      %8437 = vmatprep.subr.bf16.mxu0 0
      %8438 = vmatpush1.bf16.msra.mxu0 0
      %8439 = vmatprep.subr.bf16.mxu0 0
      %8440 = vmatpush1.bf16.msra.mxu0 0
      %8441 = vmatprep.subr.bf16.mxu0 0
      %8442 = vmatpush1.bf16.msra.mxu0 0
      %8443 = vmatprep.subr.bf16.mxu0 0
      %8444 = vmatpush1.bf16.msra.mxu0 0
      %8445 = vmatprep.subr.bf16.mxu0 0
      %8446 = vmatpush1.bf16.msra.mxu0 0
      %8447 = vmatprep.subr.bf16.mxu0 0
      %8448 = vmatpush1.bf16.msra.mxu0 0
      %8449 = vmatprep.subr.bf16.mxu0 0
      %8450 = vmatpush1.bf16.msra.mxu0 0
      %8451 = vmatprep.subr.bf16.mxu0 0
      %8452 = vmatpush1.bf16.msra.mxu0 0
      %8453 = vmatprep.subr.bf16.mxu0 0
      %8454 = vmatpush1.bf16.msra.mxu0 0
      %8455 = vmatprep.subr.bf16.mxu0 0
      %8456 = vmatpush1.bf16.msra.mxu0 0
      %8457 = vmatprep.subr.bf16.mxu0 0
      %8458 = vmatpush1.bf16.msra.mxu0 0
      %8459 = vmatprep.subr.bf16.mxu0 0
      %8460 = vmatpush1.bf16.msra.mxu0 0
      %8461 = vmatprep.subr.bf16.mxu0 0
      %8462 = vmatpush1.bf16.msra.mxu0 0
      %8463 = vmatprep.mubr.bf16.mxu0 0
      %8464 = vmatmul.mubr.bf16.gmra.mrb[0].mxu0 %v8384
      %v8465 = vpop.f32.mrb[0].mxu0
      %v8466 = vadd.f32 0.0, %v8465
      %v8467 = vpop.f32.mrb[0].mxu0
      %v8468 = vpop.f32.mrb[0].mxu0
      %v8469 = vadd.f32 0.0, %v8468
      %v8470 = vpop.f32.mrb[0].mxu0
      %8471 = vmatprep.mubr.bf16.mxu0 0
      %8472 = vmatmul.mubr.bf16.gmra.mrb[0].mxu0 %v8387
      %v8473 = vpop.f32.mrb[0].mxu0
      %v8474 = vadd.f32 0.0, %v8473
      %v8475 = vpop.f32.mrb[0].mxu0
      %v8476 = vpop.f32.mrb[0].mxu0
      %v8477 = vadd.f32 0.0, %v8476
      %v8478 = vpop.f32.mrb[0].mxu0
      %8479 = vmatprep.mubr.bf16.mxu0 0
      %8480 = vmatmul.mubr.bf16.gmra.mrb[0].mxu0 %v8390
      %v8481 = vpop.f32.mrb[0].mxu0
      %v8482 = vadd.f32 0.0, %v8481
      %v8483 = vpop.f32.mrb[0].mxu0
      %v8484 = vpop.f32.mrb[0].mxu0
      %v8485 = vadd.f32 0.0, %v8484
      %v8486 = vpop.f32.mrb[0].mxu0
      %8487 = vmatprep.mubr.bf16.mxu0 0
      %8488 = vmatmul.mubr.bf16.gmra.mrb[0].mxu0 %v8393
      %v8489 = vpop.f32.mrb[0].mxu0
      %v8490 = vadd.f32 0.0, %v8489
      %v8491 = vpop.f32.mrb[0].mxu0
      %v8492 = vpop.f32.mrb[0].mxu0
      %v8493 = vadd.f32 0.0, %v8492
      %v8494 = vpop.f32.mrb[0].mxu0
      %8495 = vmatprep.mubr.bf16.mxu0 0
      %8496 = vmatmul.mubr.bf16.gmra.mrb[0].mxu0 %v8396
      %v8497 = vpop.f32.mrb[0].mxu0
      %v8498 = vadd.f32 0.0, %v8497
      %v8499 = vpop.f32.mrb[0].mxu0
      %v8500 = vpop.f32.mrb[0].mxu0
      %v8501 = vadd.f32 0.0, %v8500
      %v8502 = vpop.f32.mrb[0].mxu0
      %8503 = vmatprep.mubr.bf16.mxu0 0
      %8504 = vmatmul.mubr.bf16.gmra.mrb[0].mxu0 %v8399
      %v8505 = vpop.f32.mrb[0].mxu0
      %v8506 = vadd.f32 0.0, %v8505
      %v8507 = vpop.f32.mrb[0].mxu0
      %v8508 = vpop.f32.mrb[0].mxu0
      %v8509 = vadd.f32 0.0, %v8508
      %v8510 = vpop.f32.mrb[0].mxu0
      %8511 = vmatprep.mubr.bf16.mxu0 0
      %8512 = vmatmul.mubr.bf16.gmra.mrb[0].mxu0 %v8402
      %v8513 = vpop.f32.mrb[0].mxu0
      %v8514 = vadd.f32 0.0, %v8513
      %v8515 = vpop.f32.mrb[0].mxu0
      %v8516 = vpop.f32.mrb[0].mxu0
      %v8517 = vadd.f32 0.0, %v8516
      %v8518 = vpop.f32.mrb[0].mxu0
      %8519 = vmatprep.mubr.bf16.mxu0 0
      %8520 = vmatmul.mubr.bf16.gmra.mrb[0].mxu0 %v8405
      %v8521 = vpop.f32.mrb[0].mxu0
      %v8522 = vadd.f32 0.0, %v8521
      %v8523 = vpop.f32.mrb[0].mxu0
      %v8524 = vpop.f32.mrb[0].mxu0
      %v8525 = vadd.f32 0.0, %v8524
      %v8526 = vpop.f32.mrb[0].mxu0
      %8527 = vmatprep.mubr.bf16.mxu0 0
      %8528 = vmatmul.mubr.bf16.gmra.mrb[0].mxu0 %v8408
      %v8529 = vpop.f32.mrb[0].mxu0
      %v8530 = vadd.f32 0.0, %v8529
      %v8531 = vpop.f32.mrb[0].mxu0
      %v8532 = vpop.f32.mrb[0].mxu0
      %v8533 = vadd.f32 0.0, %v8532
      %v8534 = vpop.f32.mrb[0].mxu0
      %8535 = vmatprep.mubr.bf16.mxu0 0
      %8536 = vmatmul.mubr.bf16.gmra.mrb[0].mxu0 %v8411
      %v8537 = vpop.f32.mrb[0].mxu0
      %v8538 = vadd.f32 0.0, %v8537
      %v8539 = vpop.f32.mrb[0].mxu0
      %v8540 = vpop.f32.mrb[0].mxu0
      %v8541 = vadd.f32 0.0, %v8540
      %v8542 = vpop.f32.mrb[0].mxu0
      %8543 = vmatprep.mubr.bf16.mxu0 0
      %8544 = vmatmul.mubr.bf16.gmra.mrb[0].mxu0 %v8414
      %v8545 = vpop.f32.mrb[0].mxu0
      %v8546 = vadd.f32 0.0, %v8545
      %v8547 = vpop.f32.mrb[0].mxu0
      %v8548 = vpop.f32.mrb[0].mxu0
      %v8549 = vadd.f32 0.0, %v8548
      %v8550 = vpop.f32.mrb[0].mxu0
      %8551 = vmatprep.mubr.bf16.mxu0 0
      %8552 = vmatmul.mubr.bf16.gmra.mrb[0].mxu0 %v8417
      %v8553 = vpop.f32.mrb[0].mxu0
      %v8554 = vadd.f32 0.0, %v8553
      %v8555 = vpop.f32.mrb[0].mxu0
      %v8556 = vpop.f32.mrb[0].mxu0
      %v8557 = vadd.f32 0.0, %v8556
      %v8558 = vpop.f32.mrb[0].mxu0
      %8559 = vmatprep.mubr.bf16.mxu0 0
      %8560 = vmatmul.mubr.bf16.gmra.mrb[0].mxu0 %v8420
      %v8561 = vpop.f32.mrb[0].mxu0
      %v8562 = vadd.f32 0.0, %v8561
      %v8563 = vpop.f32.mrb[0].mxu0
      %v8564 = vpop.f32.mrb[0].mxu0
      %v8565 = vadd.f32 0.0, %v8564
      %v8566 = vpop.f32.mrb[0].mxu0
      %8567 = vmatprep.mubr.bf16.mxu0 0
      %8568 = vmatmul.mubr.bf16.gmra.mrb[0].mxu0 %v8423
      %v8569 = vpop.f32.mrb[0].mxu0
      %v8570 = vadd.f32 0.0, %v8569
      %v8571 = vpop.f32.mrb[0].mxu0
      %v8572 = vpop.f32.mrb[0].mxu0
      %v8573 = vadd.f32 0.0, %v8572
      %v8574 = vpop.f32.mrb[0].mxu0
      %8575 = vmatprep.mubr.bf16.mxu0 0
      %8576 = vmatmul.mubr.bf16.gmra.mrb[0].mxu0 %v8426
      %v8577 = vpop.f32.mrb[0].mxu0
      %v8578 = vadd.f32 0.0, %v8577
      %v8579 = vpop.f32.mrb[0].mxu0
      %v8580 = vpop.f32.mrb[0].mxu0
      %v8581 = vadd.f32 0.0, %v8580
      %v8582 = vpop.f32.mrb[0].mxu0
      %8583 = vmatprep.mubr.bf16.mxu0 0
      %8584 = vmatmul.mubr.bf16.gmra.mrb[0].mxu0 %v8429
      %v8585 = vpop.f32.mrb[0].mxu0
      %v8586 = vadd.f32 0.0, %v8585
      %v8587 = vpop.f32.mrb[0].mxu0
      %v8588 = vpop.f32.mrb[0].mxu0
      %v8589 = vadd.f32 0.0, %v8588
      %v8590 = vpop.f32.mrb[0].mxu0
      %8591 = vdwg.mxu0
      %v8592 = vadd.f32 %v8254, %v8466
      %v8593 = vadd.f32 %v8255, %v8469
      %v8594 = vadd.f32 %v8256, %v8474
      %v8595 = vadd.f32 %v8257, %v8477
      %v8596 = vadd.f32 %v8258, %v8482
      %v8597 = vadd.f32 %v8259, %v8485
      %v8598 = vadd.f32 %v8260, %v8490
      %v8599 = vadd.f32 %v8261, %v8493
      %v8600 = vadd.f32 %v8262, %v8498
      %v8601 = vadd.f32 %v8263, %v8501
      %v8602 = vadd.f32 %v8264, %v8506
      %v8603 = vadd.f32 %v8265, %v8509
      %v8604 = vadd.f32 %v8266, %v8514
      %v8605 = vadd.f32 %v8267, %v8517
      %v8606 = vadd.f32 %v8268, %v8522
      %v8607 = vadd.f32 %v8269, %v8525
      %v8608 = vadd.f32 %v8270, %v8530
      %v8609 = vadd.f32 %v8271, %v8533
      %v8610 = vadd.f32 %v8272, %v8538
      %v8611 = vadd.f32 %v8273, %v8541
      %v8612 = vadd.f32 %v8274, %v8546
      %v8613 = vadd.f32 %v8275, %v8549
      %v8614 = vadd.f32 %v8276, %v8554
      %v8615 = vadd.f32 %v8277, %v8557
      %v8616 = vadd.f32 %v8278, %v8562
      %v8617 = vadd.f32 %v8279, %v8565
      %v8618 = vadd.f32 %v8280, %v8570
      %v8619 = vadd.f32 %v8281, %v8573
      %v8620 = vadd.f32 %v8282, %v8578
      %v8621 = vadd.f32 %v8283, %v8581
      %v8622 = vadd.f32 %v8284, %v8586
      %v8623 = vadd.f32 %v8285, %v8589
      %v8624 = vpack.c.bf16 %v7305, %v7304
      %v8625 = vpack.c.bf16 %v7307, %v7306
      %v8626 = vpack.c.bf16 %v7309, %v7308
      %v8627 = vpack.c.bf16 %v7311, %v7310
      %v8628 = vpack.c.bf16 %v7313, %v7312
      %v8629 = vpack.c.bf16 %v7315, %v7314
      %v8630 = vpack.c.bf16 %v7317, %v7316
      %v8631 = vpack.c.bf16 %v7319, %v7318
      %v8632 = vpack.c.bf16 %v7321, %v7320
      %v8633 = vpack.c.bf16 %v7323, %v7322
      %v8634 = vpack.c.bf16 %v7325, %v7324
      %v8635 = vpack.c.bf16 %v7327, %v7326
      %v8636 = vpack.c.bf16 %v7329, %v7328
      %v8637 = vpack.c.bf16 %v7331, %v7330
      %v8638 = vpack.c.bf16 %v7333, %v7332
      %v8639 = vpack.c.bf16 %v7335, %v7334
      %s8640 = scalar_lea.vmem %s12, 64
      %v8641 = vld [vmem:[%s8640] sm:$0xf]
      %v8642 = vld [vmem:[%s8640 + $0x4] sm:$0xf]
      %v8643 = vld [vmem:[%s8640 + $0x8] sm:$0xf]
      %v8644 = vld [vmem:[%s8640 + $0xc] sm:$0xf]
      %v8649 = vunpack.c.l.b16 %v8641
      %v8650 = vunpack.c.l.b16 %v8642
      %v8651 = vunpack.c.l.b16 %v8643
      %v8652 = vunpack.c.l.b16 %v8644
      %v8653 = vpack.c.b16 %v8650, %v8649
      %v8654 = vpack.c.b16 %v8652, %v8651
      %v8658 = vsel %vm7336, %v8624, 0
      %v8661 = vsel %vm7336, %v8625, 0
      %v8664 = vsel %vm7336, %v8626, 0
      %v8667 = vsel %vm7336, %v8627, 0
      %v8670 = vsel %vm7336, %v8628, 0
      %v8673 = vsel %vm7336, %v8629, 0
      %v8676 = vsel %vm7336, %v8630, 0
      %v8679 = vsel %vm7336, %v8631, 0
      %v8682 = vsel %vm7336, %v8632, 0
      %v8685 = vsel %vm7336, %v8633, 0
      %v8688 = vsel %vm7336, %v8634, 0
      %v8691 = vsel %vm7336, %v8635, 0
      %v8694 = vsel %vm7336, %v8636, 0
      %v8697 = vsel %vm7336, %v8637, 0
      %v8700 = vsel %vm7336, %v8638, 0
      %v8703 = vsel %vm7336, %v8639, 0
      %8705 = vmatprep.subr.bf16.mxu0 0
      %8706 = vmatpush1.bf16.msra.mxu0 %v8653
      %8707 = vmatprep.subr.bf16.mxu0 0
      %8708 = vmatpush1.bf16.msra.mxu0 %v8654
      %8709 = vmatprep.subr.bf16.mxu0 0
      %8710 = vmatpush1.bf16.msra.mxu0 0
      %8711 = vmatprep.subr.bf16.mxu0 0
      %8712 = vmatpush1.bf16.msra.mxu0 0
      %8713 = vmatprep.subr.bf16.mxu0 0
      %8714 = vmatpush1.bf16.msra.mxu0 0
      %8715 = vmatprep.subr.bf16.mxu0 0
      %8716 = vmatpush1.bf16.msra.mxu0 0
      %8717 = vmatprep.subr.bf16.mxu0 0
      %8718 = vmatpush1.bf16.msra.mxu0 0
      %8719 = vmatprep.subr.bf16.mxu0 0
      %8720 = vmatpush1.bf16.msra.mxu0 0
      %8721 = vmatprep.subr.bf16.mxu0 0
      %8722 = vmatpush1.bf16.msra.mxu0 0
      %8723 = vmatprep.subr.bf16.mxu0 0
      %8724 = vmatpush1.bf16.msra.mxu0 0
      %8725 = vmatprep.subr.bf16.mxu0 0
      %8726 = vmatpush1.bf16.msra.mxu0 0
      %8727 = vmatprep.subr.bf16.mxu0 0
      %8728 = vmatpush1.bf16.msra.mxu0 0
      %8729 = vmatprep.subr.bf16.mxu0 0
      %8730 = vmatpush1.bf16.msra.mxu0 0
      %8731 = vmatprep.subr.bf16.mxu0 0
      %8732 = vmatpush1.bf16.msra.mxu0 0
      %8733 = vmatprep.subr.bf16.mxu0 0
      %8734 = vmatpush1.bf16.msra.mxu0 0
      %8735 = vmatprep.subr.bf16.mxu0 0
      %8736 = vmatpush1.bf16.msra.mxu0 0
      %8737 = vmatprep.mubr.bf16.mxu0 0
      %8738 = vmatmul.mubr.bf16.gmra.mrb[0].mxu0 %v8658
      %v8739 = vpop.f32.mrb[0].mxu0
      %v8740 = vadd.f32 0.0, %v8739
      %v8741 = vpop.f32.mrb[0].mxu0
      %v8742 = vpop.f32.mrb[0].mxu0
      %v8743 = vadd.f32 0.0, %v8742
      %v8744 = vpop.f32.mrb[0].mxu0
      %8745 = vmatprep.mubr.bf16.mxu0 0
      %8746 = vmatmul.mubr.bf16.gmra.mrb[0].mxu0 %v8661
      %v8747 = vpop.f32.mrb[0].mxu0
      %v8748 = vadd.f32 0.0, %v8747
      %v8749 = vpop.f32.mrb[0].mxu0
      %v8750 = vpop.f32.mrb[0].mxu0
      %v8751 = vadd.f32 0.0, %v8750
      %v8752 = vpop.f32.mrb[0].mxu0
      %8753 = vmatprep.mubr.bf16.mxu0 0
      %8754 = vmatmul.mubr.bf16.gmra.mrb[0].mxu0 %v8664
      %v8755 = vpop.f32.mrb[0].mxu0
      %v8756 = vadd.f32 0.0, %v8755
      %v8757 = vpop.f32.mrb[0].mxu0
      %v8758 = vpop.f32.mrb[0].mxu0
      %v8759 = vadd.f32 0.0, %v8758
      %v8760 = vpop.f32.mrb[0].mxu0
      %8761 = vmatprep.mubr.bf16.mxu0 0
      %8762 = vmatmul.mubr.bf16.gmra.mrb[0].mxu0 %v8667
      %v8763 = vpop.f32.mrb[0].mxu0
      %v8764 = vadd.f32 0.0, %v8763
      %v8765 = vpop.f32.mrb[0].mxu0
      %v8766 = vpop.f32.mrb[0].mxu0
      %v8767 = vadd.f32 0.0, %v8766
      %v8768 = vpop.f32.mrb[0].mxu0
      %8769 = vmatprep.mubr.bf16.mxu0 0
      %8770 = vmatmul.mubr.bf16.gmra.mrb[0].mxu0 %v8670
      %v8771 = vpop.f32.mrb[0].mxu0
      %v8772 = vadd.f32 0.0, %v8771
      %v8773 = vpop.f32.mrb[0].mxu0
      %v8774 = vpop.f32.mrb[0].mxu0
      %v8775 = vadd.f32 0.0, %v8774
      %v8776 = vpop.f32.mrb[0].mxu0
      %8777 = vmatprep.mubr.bf16.mxu0 0
      %8778 = vmatmul.mubr.bf16.gmra.mrb[0].mxu0 %v8673
      %v8779 = vpop.f32.mrb[0].mxu0
      %v8780 = vadd.f32 0.0, %v8779
      %v8781 = vpop.f32.mrb[0].mxu0
      %v8782 = vpop.f32.mrb[0].mxu0
      %v8783 = vadd.f32 0.0, %v8782
      %v8784 = vpop.f32.mrb[0].mxu0
      %8785 = vmatprep.mubr.bf16.mxu0 0
      %8786 = vmatmul.mubr.bf16.gmra.mrb[0].mxu0 %v8676
      %v8787 = vpop.f32.mrb[0].mxu0
      %v8788 = vadd.f32 0.0, %v8787
      %v8789 = vpop.f32.mrb[0].mxu0
      %v8790 = vpop.f32.mrb[0].mxu0
      %v8791 = vadd.f32 0.0, %v8790
      %v8792 = vpop.f32.mrb[0].mxu0
      %8793 = vmatprep.mubr.bf16.mxu0 0
      %8794 = vmatmul.mubr.bf16.gmra.mrb[0].mxu0 %v8679
      %v8795 = vpop.f32.mrb[0].mxu0
      %v8796 = vadd.f32 0.0, %v8795
      %v8797 = vpop.f32.mrb[0].mxu0
      %v8798 = vpop.f32.mrb[0].mxu0
      %v8799 = vadd.f32 0.0, %v8798
      %v8800 = vpop.f32.mrb[0].mxu0
      %8801 = vmatprep.mubr.bf16.mxu0 0
      %8802 = vmatmul.mubr.bf16.gmra.mrb[0].mxu0 %v8682
      %v8803 = vpop.f32.mrb[0].mxu0
      %v8804 = vadd.f32 0.0, %v8803
      %v8805 = vpop.f32.mrb[0].mxu0
      %v8806 = vpop.f32.mrb[0].mxu0
      %v8807 = vadd.f32 0.0, %v8806
      %v8808 = vpop.f32.mrb[0].mxu0
      %8809 = vmatprep.mubr.bf16.mxu0 0
      %8810 = vmatmul.mubr.bf16.gmra.mrb[0].mxu0 %v8685
      %v8811 = vpop.f32.mrb[0].mxu0
      %v8812 = vadd.f32 0.0, %v8811
      %v8813 = vpop.f32.mrb[0].mxu0
      %v8814 = vpop.f32.mrb[0].mxu0
      %v8815 = vadd.f32 0.0, %v8814
      %v8816 = vpop.f32.mrb[0].mxu0
      %8817 = vmatprep.mubr.bf16.mxu0 0
      %8818 = vmatmul.mubr.bf16.gmra.mrb[0].mxu0 %v8688
      %v8819 = vpop.f32.mrb[0].mxu0
      %v8820 = vadd.f32 0.0, %v8819
      %v8821 = vpop.f32.mrb[0].mxu0
      %v8822 = vpop.f32.mrb[0].mxu0
      %v8823 = vadd.f32 0.0, %v8822
      %v8824 = vpop.f32.mrb[0].mxu0
      %8825 = vmatprep.mubr.bf16.mxu0 0
      %8826 = vmatmul.mubr.bf16.gmra.mrb[0].mxu0 %v8691
      %v8827 = vpop.f32.mrb[0].mxu0
      %v8828 = vadd.f32 0.0, %v8827
      %v8829 = vpop.f32.mrb[0].mxu0
      %v8830 = vpop.f32.mrb[0].mxu0
      %v8831 = vadd.f32 0.0, %v8830
      %v8832 = vpop.f32.mrb[0].mxu0
      %8833 = vmatprep.mubr.bf16.mxu0 0
      %8834 = vmatmul.mubr.bf16.gmra.mrb[0].mxu0 %v8694
      %v8835 = vpop.f32.mrb[0].mxu0
      %v8836 = vadd.f32 0.0, %v8835
      %v8837 = vpop.f32.mrb[0].mxu0
      %v8838 = vpop.f32.mrb[0].mxu0
      %v8839 = vadd.f32 0.0, %v8838
      %v8840 = vpop.f32.mrb[0].mxu0
      %8841 = vmatprep.mubr.bf16.mxu0 0
      %8842 = vmatmul.mubr.bf16.gmra.mrb[0].mxu0 %v8697
      %v8843 = vpop.f32.mrb[0].mxu0
      %v8844 = vadd.f32 0.0, %v8843
      %v8845 = vpop.f32.mrb[0].mxu0
      %v8846 = vpop.f32.mrb[0].mxu0
      %v8847 = vadd.f32 0.0, %v8846
      %v8848 = vpop.f32.mrb[0].mxu0
      %8849 = vmatprep.mubr.bf16.mxu0 0
      %8850 = vmatmul.mubr.bf16.gmra.mrb[0].mxu0 %v8700
      %v8851 = vpop.f32.mrb[0].mxu0
      %v8852 = vadd.f32 0.0, %v8851
      %v8853 = vpop.f32.mrb[0].mxu0
      %v8854 = vpop.f32.mrb[0].mxu0
      %v8855 = vadd.f32 0.0, %v8854
      %v8856 = vpop.f32.mrb[0].mxu0
      %8857 = vmatprep.mubr.bf16.mxu0 0
      %8858 = vmatmul.mubr.bf16.gmra.mrb[0].mxu0 %v8703
      %v8859 = vpop.f32.mrb[0].mxu0
      %v8860 = vadd.f32 0.0, %v8859
      %v8861 = vpop.f32.mrb[0].mxu0
      %v8862 = vpop.f32.mrb[0].mxu0
      %v8863 = vadd.f32 0.0, %v8862
      %v8864 = vpop.f32.mrb[0].mxu0
      %8865 = vdwg.mxu0
      %v8866 = vadd.f32 %v8592, %v8740
      %v8867 = vadd.f32 %v8593, %v8743
      %v8868 = vadd.f32 %v8594, %v8748
      %v8869 = vadd.f32 %v8595, %v8751
      %v8870 = vadd.f32 %v8596, %v8756
      %v8871 = vadd.f32 %v8597, %v8759
      %v8872 = vadd.f32 %v8598, %v8764
      %v8873 = vadd.f32 %v8599, %v8767
      %v8874 = vadd.f32 %v8600, %v8772
      %v8875 = vadd.f32 %v8601, %v8775
      %v8876 = vadd.f32 %v8602, %v8780
      %v8877 = vadd.f32 %v8603, %v8783
      %v8878 = vadd.f32 %v8604, %v8788
      %v8879 = vadd.f32 %v8605, %v8791
      %v8880 = vadd.f32 %v8606, %v8796
      %v8881 = vadd.f32 %v8607, %v8799
      %v8882 = vadd.f32 %v8608, %v8804
      %v8883 = vadd.f32 %v8609, %v8807
      %v8884 = vadd.f32 %v8610, %v8812
      %v8885 = vadd.f32 %v8611, %v8815
      %v8886 = vadd.f32 %v8612, %v8820
      %v8887 = vadd.f32 %v8613, %v8823
      %v8888 = vadd.f32 %v8614, %v8828
      %v8889 = vadd.f32 %v8615, %v8831
      %v8890 = vadd.f32 %v8616, %v8836
      %v8891 = vadd.f32 %v8617, %v8839
      %v8892 = vadd.f32 %v8618, %v8844
      %v8893 = vadd.f32 %v8619, %v8847
      %v8894 = vadd.f32 %v8620, %v8852
      %v8895 = vadd.f32 %v8621, %v8855
      %v8896 = vadd.f32 %v8622, %v8860
      %v8897 = vadd.f32 %v8623, %v8863
      %v8898 = vld [vmem:[#allocation2 + $0x19] sm:$0xff]
      %v8899 = vld [vmem:[#allocation2 + $0x21] sm:$0xff]
      %v8900 = vld [vmem:[#allocation2 + $0x29] sm:$0xff]
      %v8901 = vld [vmem:[#allocation2 + $0x31] sm:$0xff]
      %v8902 = vld [vmem:[#allocation2 + $0x39] sm:$0xff]
      %v8903 = vld [vmem:[#allocation2 + $0x41] sm:$0xff]
      %v8904 = vld [vmem:[#allocation2 + $0x49] sm:$0xff]
      %v8905 = vld [vmem:[#allocation2 + $0x51] sm:$0xff]
      %v8906 = vld [vmem:[#allocation2 + $0x59] sm:$0xff]
      %v8907 = vld [vmem:[#allocation2 + $0x61] sm:$0xff]
      %v8908 = vld [vmem:[#allocation2 + $0x69] sm:$0xff]
      %v8909 = vld [vmem:[#allocation2 + $0x71] sm:$0xff]
      %v8910 = vld [vmem:[#allocation2 + $0x79] sm:$0xff]
      %v8911 = vld [vmem:[#allocation2 + $0x81] sm:$0xff]
      %v8912 = vld [vmem:[#allocation2 + $0x89] sm:$0xff]
      %v8913 = vld [vmem:[#allocation2 + $0x91] sm:$0xff]
      %v8914 = vld [vmem:[#allocation2 + $0x99] sm:$0xff]
      %v8915 = vld [vmem:[#allocation2 + $0xa1] sm:$0xff]
      %v8916 = vld [vmem:[#allocation2 + $0xa9] sm:$0xff]
      %v8917 = vld [vmem:[#allocation2 + $0xb1] sm:$0xff]
      %v8918 = vld [vmem:[#allocation2 + $0xb9] sm:$0xff]
      %v8919 = vld [vmem:[#allocation2 + $0xc1] sm:$0xff]
      %v8920 = vld [vmem:[#allocation2 + $0xc9] sm:$0xff]
      %v8921 = vld [vmem:[#allocation2 + $0xd1] sm:$0xff]
      %v8922 = vld [vmem:[#allocation2 + $0xd9] sm:$0xff]
      %v8923 = vld [vmem:[#allocation2 + $0xe1] sm:$0xff]
      %v8924 = vld [vmem:[#allocation2 + $0xe9] sm:$0xff]
      %v8925 = vld [vmem:[#allocation2 + $0xf1] sm:$0xff]
      %v8926 = vld [vmem:[#allocation2 + $0xf9] sm:$0xff]
      %v8927 = vld [vmem:[#allocation2 + $0x101] sm:$0xff]
      %v8928 = vld [vmem:[#allocation2 + $0x109] sm:$0xff]
      %v8929 = vld [vmem:[#allocation2 + $0x111] sm:$0xff]
      %v8930 = vmul.f32 %v8898, %v1733
      %v8931 = vmul.f32 %v8899, %v1737
      %v8932 = vmul.f32 %v8900, %v1741
      %v8933 = vmul.f32 %v8901, %v1745
      %v8934 = vmul.f32 %v8902, %v1749
      %v8935 = vmul.f32 %v8903, %v1753
      %v8936 = vmul.f32 %v8904, %v1757
      %v8937 = vmul.f32 %v8905, %v1761
      %v8938 = vmul.f32 %v8906, %v1765
      %v8939 = vmul.f32 %v8907, %v1769
      %v8940 = vmul.f32 %v8908, %v1773
      %v8941 = vmul.f32 %v8909, %v1777
      %v8942 = vmul.f32 %v8910, %v1781
      %v8943 = vmul.f32 %v8911, %v1785
      %v8944 = vmul.f32 %v8912, %v1789
      %v8945 = vmul.f32 %v8913, %v1793
      %v8946 = vmul.f32 %v8914, %v1797
      %v8947 = vmul.f32 %v8915, %v1801
      %v8948 = vmul.f32 %v8916, %v1805
      %v8949 = vmul.f32 %v8917, %v1809
      %v8950 = vmul.f32 %v8918, %v1813
      %v8951 = vmul.f32 %v8919, %v1817
      %v8952 = vmul.f32 %v8920, %v1821
      %v8953 = vmul.f32 %v8921, %v1825
      %v8954 = vmul.f32 %v8922, %v1829
      %v8955 = vmul.f32 %v8923, %v1833
      %v8956 = vmul.f32 %v8924, %v1837
      %v8957 = vmul.f32 %v8925, %v1841
      %v8958 = vmul.f32 %v8926, %v1845
      %v8959 = vmul.f32 %v8927, %v1849
      %v8960 = vmul.f32 %v8928, %v1853
      %v8961 = vmul.f32 %v8929, %v1857
      %v8962 = vpack.c.bf16 %v8931, %v8930
      %v8963 = vpack.c.bf16 %v8933, %v8932
      %v8964 = vpack.c.bf16 %v8935, %v8934
      %v8965 = vpack.c.bf16 %v8937, %v8936
      %v8966 = vpack.c.bf16 %v8939, %v8938
      %v8967 = vpack.c.bf16 %v8941, %v8940
      %v8968 = vpack.c.bf16 %v8943, %v8942
      %v8969 = vpack.c.bf16 %v8945, %v8944
      %v8970 = vpack.c.bf16 %v8947, %v8946
      %v8971 = vpack.c.bf16 %v8949, %v8948
      %v8972 = vpack.c.bf16 %v8951, %v8950
      %v8973 = vpack.c.bf16 %v8953, %v8952
      %v8974 = vpack.c.bf16 %v8955, %v8954
      %v8975 = vpack.c.bf16 %v8957, %v8956
      %v8976 = vpack.c.bf16 %v8959, %v8958
      %v8977 = vpack.c.bf16 %v8961, %v8960
      %s8978 = scalar_lea.vmem %s12, 80
      %v8979 = vld [vmem:[%s8978] sm:$0xf]
      %v8980 = vld [vmem:[%s8978 + $0x4] sm:$0xf]
      %v8981 = vld [vmem:[%s8978 + $0x8] sm:$0xf]
      %v8982 = vld [vmem:[%s8978 + $0xc] sm:$0xf]
      %v8987 = vunpack.c.l.b16 %v8979
      %v8988 = vunpack.c.l.b16 %v8980
      %v8989 = vunpack.c.l.b16 %v8981
      %v8990 = vunpack.c.l.b16 %v8982
      %v8991 = vpack.c.b16 %v8988, %v8987
      %v8992 = vpack.c.b16 %v8990, %v8989
      %v8996 = vsel %vm7336, %v8962, 0
      %v8999 = vsel %vm7336, %v8963, 0
      %v9002 = vsel %vm7336, %v8964, 0
      %v9005 = vsel %vm7336, %v8965, 0
      %v9008 = vsel %vm7336, %v8966, 0
      %v9011 = vsel %vm7336, %v8967, 0
      %v9014 = vsel %vm7336, %v8968, 0
      %v9017 = vsel %vm7336, %v8969, 0
      %v9020 = vsel %vm7336, %v8970, 0
      %v9023 = vsel %vm7336, %v8971, 0
      %v9026 = vsel %vm7336, %v8972, 0
      %v9029 = vsel %vm7336, %v8973, 0
      %v9032 = vsel %vm7336, %v8974, 0
      %v9035 = vsel %vm7336, %v8975, 0
      %v9038 = vsel %vm7336, %v8976, 0
      %v9041 = vsel %vm7336, %v8977, 0
      %9043 = vmatprep.subr.bf16.mxu0 0
      %9044 = vmatpush1.bf16.msra.mxu0 %v8991
      %9045 = vmatprep.subr.bf16.mxu0 0
      %9046 = vmatpush1.bf16.msra.mxu0 %v8992
      %9047 = vmatprep.subr.bf16.mxu0 0
      %9048 = vmatpush1.bf16.msra.mxu0 0
      %9049 = vmatprep.subr.bf16.mxu0 0
      %9050 = vmatpush1.bf16.msra.mxu0 0
      %9051 = vmatprep.subr.bf16.mxu0 0
      %9052 = vmatpush1.bf16.msra.mxu0 0
      %9053 = vmatprep.subr.bf16.mxu0 0
      %9054 = vmatpush1.bf16.msra.mxu0 0
      %9055 = vmatprep.subr.bf16.mxu0 0
      %9056 = vmatpush1.bf16.msra.mxu0 0
      %9057 = vmatprep.subr.bf16.mxu0 0
      %9058 = vmatpush1.bf16.msra.mxu0 0
      %9059 = vmatprep.subr.bf16.mxu0 0
      %9060 = vmatpush1.bf16.msra.mxu0 0
      %9061 = vmatprep.subr.bf16.mxu0 0
      %9062 = vmatpush1.bf16.msra.mxu0 0
      %9063 = vmatprep.subr.bf16.mxu0 0
      %9064 = vmatpush1.bf16.msra.mxu0 0
      %9065 = vmatprep.subr.bf16.mxu0 0
      %9066 = vmatpush1.bf16.msra.mxu0 0
      %9067 = vmatprep.subr.bf16.mxu0 0
      %9068 = vmatpush1.bf16.msra.mxu0 0
      %9069 = vmatprep.subr.bf16.mxu0 0
      %9070 = vmatpush1.bf16.msra.mxu0 0
      %9071 = vmatprep.subr.bf16.mxu0 0
      %9072 = vmatpush1.bf16.msra.mxu0 0
      %9073 = vmatprep.subr.bf16.mxu0 0
      %9074 = vmatpush1.bf16.msra.mxu0 0
      %9075 = vmatprep.mubr.bf16.mxu0 0
      %9076 = vmatmul.mubr.bf16.gmra.mrb[0].mxu0 %v8996
      %v9077 = vpop.f32.mrb[0].mxu0
      %v9078 = vadd.f32 0.0, %v9077
      %v9079 = vpop.f32.mrb[0].mxu0
      %v9080 = vpop.f32.mrb[0].mxu0
      %v9081 = vadd.f32 0.0, %v9080
      %v9082 = vpop.f32.mrb[0].mxu0
      %9083 = vmatprep.mubr.bf16.mxu0 0
      %9084 = vmatmul.mubr.bf16.gmra.mrb[0].mxu0 %v8999
      %v9085 = vpop.f32.mrb[0].mxu0
      %v9086 = vadd.f32 0.0, %v9085
      %v9087 = vpop.f32.mrb[0].mxu0
      %v9088 = vpop.f32.mrb[0].mxu0
      %v9089 = vadd.f32 0.0, %v9088
      %v9090 = vpop.f32.mrb[0].mxu0
      %9091 = vmatprep.mubr.bf16.mxu0 0
      %9092 = vmatmul.mubr.bf16.gmra.mrb[0].mxu0 %v9002
      %v9093 = vpop.f32.mrb[0].mxu0
      %v9094 = vadd.f32 0.0, %v9093
      %v9095 = vpop.f32.mrb[0].mxu0
      %v9096 = vpop.f32.mrb[0].mxu0
      %v9097 = vadd.f32 0.0, %v9096
      %v9098 = vpop.f32.mrb[0].mxu0
      %9099 = vmatprep.mubr.bf16.mxu0 0
      %9100 = vmatmul.mubr.bf16.gmra.mrb[0].mxu0 %v9005
      %v9101 = vpop.f32.mrb[0].mxu0
      %v9102 = vadd.f32 0.0, %v9101
      %v9103 = vpop.f32.mrb[0].mxu0
      %v9104 = vpop.f32.mrb[0].mxu0
      %v9105 = vadd.f32 0.0, %v9104
      %v9106 = vpop.f32.mrb[0].mxu0
      %9107 = vmatprep.mubr.bf16.mxu0 0
      %9108 = vmatmul.mubr.bf16.gmra.mrb[0].mxu0 %v9008
      %v9109 = vpop.f32.mrb[0].mxu0
      %v9110 = vadd.f32 0.0, %v9109
      %v9111 = vpop.f32.mrb[0].mxu0
      %v9112 = vpop.f32.mrb[0].mxu0
      %v9113 = vadd.f32 0.0, %v9112
      %v9114 = vpop.f32.mrb[0].mxu0
      %9115 = vmatprep.mubr.bf16.mxu0 0
      %9116 = vmatmul.mubr.bf16.gmra.mrb[0].mxu0 %v9011
      %v9117 = vpop.f32.mrb[0].mxu0
      %v9118 = vadd.f32 0.0, %v9117
      %v9119 = vpop.f32.mrb[0].mxu0
      %v9120 = vpop.f32.mrb[0].mxu0
      %v9121 = vadd.f32 0.0, %v9120
      %v9122 = vpop.f32.mrb[0].mxu0
      %9123 = vmatprep.mubr.bf16.mxu0 0
      %9124 = vmatmul.mubr.bf16.gmra.mrb[0].mxu0 %v9014
      %v9125 = vpop.f32.mrb[0].mxu0
      %v9126 = vadd.f32 0.0, %v9125
      %v9127 = vpop.f32.mrb[0].mxu0
      %v9128 = vpop.f32.mrb[0].mxu0
      %v9129 = vadd.f32 0.0, %v9128
      %v9130 = vpop.f32.mrb[0].mxu0
      %9131 = vmatprep.mubr.bf16.mxu0 0
      %9132 = vmatmul.mubr.bf16.gmra.mrb[0].mxu0 %v9017
      %v9133 = vpop.f32.mrb[0].mxu0
      %v9134 = vadd.f32 0.0, %v9133
      %v9135 = vpop.f32.mrb[0].mxu0
      %v9136 = vpop.f32.mrb[0].mxu0
      %v9137 = vadd.f32 0.0, %v9136
      %v9138 = vpop.f32.mrb[0].mxu0
      %9139 = vmatprep.mubr.bf16.mxu0 0
      %9140 = vmatmul.mubr.bf16.gmra.mrb[0].mxu0 %v9020
      %v9141 = vpop.f32.mrb[0].mxu0
      %v9142 = vadd.f32 0.0, %v9141
      %v9143 = vpop.f32.mrb[0].mxu0
      %v9144 = vpop.f32.mrb[0].mxu0
      %v9145 = vadd.f32 0.0, %v9144
      %v9146 = vpop.f32.mrb[0].mxu0
      %9147 = vmatprep.mubr.bf16.mxu0 0
      %9148 = vmatmul.mubr.bf16.gmra.mrb[0].mxu0 %v9023
      %v9149 = vpop.f32.mrb[0].mxu0
      %v9150 = vadd.f32 0.0, %v9149
      %v9151 = vpop.f32.mrb[0].mxu0
      %v9152 = vpop.f32.mrb[0].mxu0
      %v9153 = vadd.f32 0.0, %v9152
      %v9154 = vpop.f32.mrb[0].mxu0
      %9155 = vmatprep.mubr.bf16.mxu0 0
      %9156 = vmatmul.mubr.bf16.gmra.mrb[0].mxu0 %v9026
      %v9157 = vpop.f32.mrb[0].mxu0
      %v9158 = vadd.f32 0.0, %v9157
      %v9159 = vpop.f32.mrb[0].mxu0
      %v9160 = vpop.f32.mrb[0].mxu0
      %v9161 = vadd.f32 0.0, %v9160
      %v9162 = vpop.f32.mrb[0].mxu0
      %9163 = vmatprep.mubr.bf16.mxu0 0
      %9164 = vmatmul.mubr.bf16.gmra.mrb[0].mxu0 %v9029
      %v9165 = vpop.f32.mrb[0].mxu0
      %v9166 = vadd.f32 0.0, %v9165
      %v9167 = vpop.f32.mrb[0].mxu0
      %v9168 = vpop.f32.mrb[0].mxu0
      %v9169 = vadd.f32 0.0, %v9168
      %v9170 = vpop.f32.mrb[0].mxu0
      %9171 = vmatprep.mubr.bf16.mxu0 0
      %9172 = vmatmul.mubr.bf16.gmra.mrb[0].mxu0 %v9032
      %v9173 = vpop.f32.mrb[0].mxu0
      %v9174 = vadd.f32 0.0, %v9173
      %v9175 = vpop.f32.mrb[0].mxu0
      %v9176 = vpop.f32.mrb[0].mxu0
      %v9177 = vadd.f32 0.0, %v9176
      %v9178 = vpop.f32.mrb[0].mxu0
      %9179 = vmatprep.mubr.bf16.mxu0 0
      %9180 = vmatmul.mubr.bf16.gmra.mrb[0].mxu0 %v9035
      %v9181 = vpop.f32.mrb[0].mxu0
      %v9182 = vadd.f32 0.0, %v9181
      %v9183 = vpop.f32.mrb[0].mxu0
      %v9184 = vpop.f32.mrb[0].mxu0
      %v9185 = vadd.f32 0.0, %v9184
      %v9186 = vpop.f32.mrb[0].mxu0
      %9187 = vmatprep.mubr.bf16.mxu0 0
      %9188 = vmatmul.mubr.bf16.gmra.mrb[0].mxu0 %v9038
      %v9189 = vpop.f32.mrb[0].mxu0
      %v9190 = vadd.f32 0.0, %v9189
      %v9191 = vpop.f32.mrb[0].mxu0
      %v9192 = vpop.f32.mrb[0].mxu0
      %v9193 = vadd.f32 0.0, %v9192
      %v9194 = vpop.f32.mrb[0].mxu0
      %9195 = vmatprep.mubr.bf16.mxu0 0
      %9196 = vmatmul.mubr.bf16.gmra.mrb[0].mxu0 %v9041
      %v9197 = vpop.f32.mrb[0].mxu0
      %v9198 = vadd.f32 0.0, %v9197
      %v9199 = vpop.f32.mrb[0].mxu0
      %v9200 = vpop.f32.mrb[0].mxu0
      %v9201 = vadd.f32 0.0, %v9200
      %v9202 = vpop.f32.mrb[0].mxu0
      %9203 = vdwg.mxu0
      %v9204 = vadd.f32 %v8866, %v9078
      %v9205 = vadd.f32 %v8867, %v9081
      %v9206 = vadd.f32 %v8868, %v9086
      %v9207 = vadd.f32 %v8869, %v9089
      %v9208 = vadd.f32 %v8870, %v9094
      %v9209 = vadd.f32 %v8871, %v9097
      %v9210 = vadd.f32 %v8872, %v9102
      %v9211 = vadd.f32 %v8873, %v9105
      %v9212 = vadd.f32 %v8874, %v9110
      %v9213 = vadd.f32 %v8875, %v9113
      %v9214 = vadd.f32 %v8876, %v9118
      %v9215 = vadd.f32 %v8877, %v9121
      %v9216 = vadd.f32 %v8878, %v9126
      %v9217 = vadd.f32 %v8879, %v9129
      %v9218 = vadd.f32 %v8880, %v9134
      %v9219 = vadd.f32 %v8881, %v9137
      %v9220 = vadd.f32 %v8882, %v9142
      %v9221 = vadd.f32 %v8883, %v9145
      %v9222 = vadd.f32 %v8884, %v9150
      %v9223 = vadd.f32 %v8885, %v9153
      %v9224 = vadd.f32 %v8886, %v9158
      %v9225 = vadd.f32 %v8887, %v9161
      %v9226 = vadd.f32 %v8888, %v9166
      %v9227 = vadd.f32 %v8889, %v9169
      %v9228 = vadd.f32 %v8890, %v9174
      %v9229 = vadd.f32 %v8891, %v9177
      %v9230 = vadd.f32 %v8892, %v9182
      %v9231 = vadd.f32 %v8893, %v9185
      %v9232 = vadd.f32 %v8894, %v9190
      %v9233 = vadd.f32 %v8895, %v9193
      %v9234 = vadd.f32 %v8896, %v9198
      %v9235 = vadd.f32 %v8897, %v9201
      %v9236 = vld [vmem:[#allocation2 + $0x27] sm:$0xff]
      %v9237 = vld [vmem:[#allocation2 + $0x2f] sm:$0xff]
      %v9238 = vld [vmem:[#allocation2 + $0x37] sm:$0xff]
      %v9239 = vld [vmem:[#allocation2 + $0x3f] sm:$0xff]
      %v9240 = vld [vmem:[#allocation2 + $0x47] sm:$0xff]
      %v9241 = vld [vmem:[#allocation2 + $0x4f] sm:$0xff]
      %v9242 = vld [vmem:[#allocation2 + $0x57] sm:$0xff]
      %v9243 = vld [vmem:[#allocation2 + $0x5f] sm:$0xff]
      %v9244 = vld [vmem:[#allocation2 + $0x67] sm:$0xff]
      %v9245 = vld [vmem:[#allocation2 + $0x6f] sm:$0xff]
      %v9246 = vld [vmem:[#allocation2 + $0x77] sm:$0xff]
      %v9247 = vld [vmem:[#allocation2 + $0x7f] sm:$0xff]
      %v9248 = vld [vmem:[#allocation2 + $0x87] sm:$0xff]
      %v9249 = vld [vmem:[#allocation2 + $0x8f] sm:$0xff]
      %v9250 = vld [vmem:[#allocation2 + $0x97] sm:$0xff]
      %v9251 = vld [vmem:[#allocation2 + $0x9f] sm:$0xff]
      %v9252 = vld [vmem:[#allocation2 + $0xa7] sm:$0xff]
      %v9253 = vld [vmem:[#allocation2 + $0xaf] sm:$0xff]
      %v9254 = vld [vmem:[#allocation2 + $0xb7] sm:$0xff]
      %v9255 = vld [vmem:[#allocation2 + $0xbf] sm:$0xff]
      %v9256 = vld [vmem:[#allocation2 + $0xc7] sm:$0xff]
      %v9257 = vld [vmem:[#allocation2 + $0xcf] sm:$0xff]
      %v9258 = vld [vmem:[#allocation2 + $0xd7] sm:$0xff]
      %v9259 = vld [vmem:[#allocation2 + $0xdf] sm:$0xff]
      %v9260 = vld [vmem:[#allocation2 + $0xe7] sm:$0xff]
      %v9261 = vld [vmem:[#allocation2 + $0xef] sm:$0xff]
      %v9262 = vld [vmem:[#allocation2 + $0xf7] sm:$0xff]
      %v9263 = vld [vmem:[#allocation2 + $0xff] sm:$0xff]
      %v9264 = vld [vmem:[#allocation2 + $0x107] sm:$0xff]
      %v9265 = vld [vmem:[#allocation2 + $0x10f] sm:$0xff]
      %v9266 = vld [vmem:[#allocation2 + $0x117] sm:$0xff]
      %v9267 = vld [vmem:[#allocation2 + $0x11f] sm:$0xff]
      %v9268 = vmul.f32 %v9236, %v1018
      %v9269 = vmul.f32 %v9237, %v1023
      %v9270 = vmul.f32 %v9238, %v1028
      %v9271 = vmul.f32 %v9239, %v1033
      %v9272 = vmul.f32 %v9240, %v1038
      %v9273 = vmul.f32 %v9241, %v1043
      %v9274 = vmul.f32 %v9242, %v1048
      %v9275 = vmul.f32 %v9243, %v1053
      %v9276 = vmul.f32 %v9244, %v1058
      %v9277 = vmul.f32 %v9245, %v1063
      %v9278 = vmul.f32 %v9246, %v1068
      %v9279 = vmul.f32 %v9247, %v1073
      %v9280 = vmul.f32 %v9248, %v1078
      %v9281 = vmul.f32 %v9249, %v1083
      %v9282 = vmul.f32 %v9250, %v1088
      %v9283 = vmul.f32 %v9251, %v1093
      %v9284 = vmul.f32 %v9252, %v1098
      %v9285 = vmul.f32 %v9253, %v1103
      %v9286 = vmul.f32 %v9254, %v1108
      %v9287 = vmul.f32 %v9255, %v1113
      %v9288 = vmul.f32 %v9256, %v1118
      %v9289 = vmul.f32 %v9257, %v1123
      %v9290 = vmul.f32 %v9258, %v1128
      %v9291 = vmul.f32 %v9259, %v1133
      %v9292 = vmul.f32 %v9260, %v1138
      %v9293 = vmul.f32 %v9261, %v1143
      %v9294 = vmul.f32 %v9262, %v1148
      %v9295 = vmul.f32 %v9263, %v1153
      %v9296 = vmul.f32 %v9264, %v1158
      %v9297 = vmul.f32 %v9265, %v1163
      %v9298 = vmul.f32 %v9266, %v1168
      %v9299 = vmul.f32 %v9267, %v1173
      %v9300 = vpack.c.bf16 %v9269, %v9268
      %v9301 = vpack.c.bf16 %v9271, %v9270
      %v9302 = vpack.c.bf16 %v9273, %v9272
      %v9303 = vpack.c.bf16 %v9275, %v9274
      %v9304 = vpack.c.bf16 %v9277, %v9276
      %v9305 = vpack.c.bf16 %v9279, %v9278
      %v9306 = vpack.c.bf16 %v9281, %v9280
      %v9307 = vpack.c.bf16 %v9283, %v9282
      %v9308 = vpack.c.bf16 %v9285, %v9284
      %v9309 = vpack.c.bf16 %v9287, %v9286
      %v9310 = vpack.c.bf16 %v9289, %v9288
      %v9311 = vpack.c.bf16 %v9291, %v9290
      %v9312 = vpack.c.bf16 %v9293, %v9292
      %v9313 = vpack.c.bf16 %v9295, %v9294
      %v9314 = vpack.c.bf16 %v9297, %v9296
      %v9315 = vpack.c.bf16 %v9299, %v9298
      %s9316 = scalar_lea.vmem %s12, 96
      %v9317 = vld [vmem:[%s9316] sm:$0xf]
      %v9318 = vld [vmem:[%s9316 + $0x4] sm:$0xf]
      %v9319 = vld [vmem:[%s9316 + $0x8] sm:$0xf]
      %v9320 = vld [vmem:[%s9316 + $0xc] sm:$0xf]
      %v9325 = vunpack.c.l.b16 %v9317
      %v9326 = vunpack.c.l.b16 %v9318
      %v9327 = vunpack.c.l.b16 %v9319
      %v9328 = vunpack.c.l.b16 %v9320
      %v9329 = vpack.c.b16 %v9326, %v9325
      %v9330 = vpack.c.b16 %v9328, %v9327
      %v9334 = vsel %vm7336, %v9300, 0
      %v9337 = vsel %vm7336, %v9301, 0
      %v9340 = vsel %vm7336, %v9302, 0
      %v9343 = vsel %vm7336, %v9303, 0
      %v9346 = vsel %vm7336, %v9304, 0
      %v9349 = vsel %vm7336, %v9305, 0
      %v9352 = vsel %vm7336, %v9306, 0
      %v9355 = vsel %vm7336, %v9307, 0
      %v9358 = vsel %vm7336, %v9308, 0
      %v9361 = vsel %vm7336, %v9309, 0
      %v9364 = vsel %vm7336, %v9310, 0
      %v9367 = vsel %vm7336, %v9311, 0
      %v9370 = vsel %vm7336, %v9312, 0
      %v9373 = vsel %vm7336, %v9313, 0
      %v9376 = vsel %vm7336, %v9314, 0
      %v9379 = vsel %vm7336, %v9315, 0
      %9381 = vmatprep.subr.bf16.mxu0 0
      %9382 = vmatpush1.bf16.msra.mxu0 %v9329
      %9383 = vmatprep.subr.bf16.mxu0 0
      %9384 = vmatpush1.bf16.msra.mxu0 %v9330
      %9385 = vmatprep.subr.bf16.mxu0 0
      %9386 = vmatpush1.bf16.msra.mxu0 0
      %9387 = vmatprep.subr.bf16.mxu0 0
      %9388 = vmatpush1.bf16.msra.mxu0 0
      %9389 = vmatprep.subr.bf16.mxu0 0
      %9390 = vmatpush1.bf16.msra.mxu0 0
      %9391 = vmatprep.subr.bf16.mxu0 0
      %9392 = vmatpush1.bf16.msra.mxu0 0
      %9393 = vmatprep.subr.bf16.mxu0 0
      %9394 = vmatpush1.bf16.msra.mxu0 0
      %9395 = vmatprep.subr.bf16.mxu0 0
      %9396 = vmatpush1.bf16.msra.mxu0 0
      %9397 = vmatprep.subr.bf16.mxu0 0
      %9398 = vmatpush1.bf16.msra.mxu0 0
      %9399 = vmatprep.subr.bf16.mxu0 0
      %9400 = vmatpush1.bf16.msra.mxu0 0
      %9401 = vmatprep.subr.bf16.mxu0 0
      %9402 = vmatpush1.bf16.msra.mxu0 0
      %9403 = vmatprep.subr.bf16.mxu0 0
      %9404 = vmatpush1.bf16.msra.mxu0 0
      %9405 = vmatprep.subr.bf16.mxu0 0
      %9406 = vmatpush1.bf16.msra.mxu0 0
      %9407 = vmatprep.subr.bf16.mxu0 0
      %9408 = vmatpush1.bf16.msra.mxu0 0
      %9409 = vmatprep.subr.bf16.mxu0 0
      %9410 = vmatpush1.bf16.msra.mxu0 0
      %9411 = vmatprep.subr.bf16.mxu0 0
      %9412 = vmatpush1.bf16.msra.mxu0 0
      %9413 = vmatprep.mubr.bf16.mxu0 0
      %9414 = vmatmul.mubr.bf16.gmra.mrb[0].mxu0 %v9334
      %v9415 = vpop.f32.mrb[0].mxu0
      %v9416 = vadd.f32 0.0, %v9415
      %v9417 = vpop.f32.mrb[0].mxu0
      %v9418 = vpop.f32.mrb[0].mxu0
      %v9419 = vadd.f32 0.0, %v9418
      %v9420 = vpop.f32.mrb[0].mxu0
      %9421 = vmatprep.mubr.bf16.mxu0 0
      %9422 = vmatmul.mubr.bf16.gmra.mrb[0].mxu0 %v9337
      %v9423 = vpop.f32.mrb[0].mxu0
      %v9424 = vadd.f32 0.0, %v9423
      %v9425 = vpop.f32.mrb[0].mxu0
      %v9426 = vpop.f32.mrb[0].mxu0
      %v9427 = vadd.f32 0.0, %v9426
      %v9428 = vpop.f32.mrb[0].mxu0
      %9429 = vmatprep.mubr.bf16.mxu0 0
      %9430 = vmatmul.mubr.bf16.gmra.mrb[0].mxu0 %v9340
      %v9431 = vpop.f32.mrb[0].mxu0
      %v9432 = vadd.f32 0.0, %v9431
      %v9433 = vpop.f32.mrb[0].mxu0
      %v9434 = vpop.f32.mrb[0].mxu0
      %v9435 = vadd.f32 0.0, %v9434
      %v9436 = vpop.f32.mrb[0].mxu0
      %9437 = vmatprep.mubr.bf16.mxu0 0
      %9438 = vmatmul.mubr.bf16.gmra.mrb[0].mxu0 %v9343
      %v9439 = vpop.f32.mrb[0].mxu0
      %v9440 = vadd.f32 0.0, %v9439
      %v9441 = vpop.f32.mrb[0].mxu0
      %v9442 = vpop.f32.mrb[0].mxu0
      %v9443 = vadd.f32 0.0, %v9442
      %v9444 = vpop.f32.mrb[0].mxu0
      %9445 = vmatprep.mubr.bf16.mxu0 0
      %9446 = vmatmul.mubr.bf16.gmra.mrb[0].mxu0 %v9346
      %v9447 = vpop.f32.mrb[0].mxu0
      %v9448 = vadd.f32 0.0, %v9447
      %v9449 = vpop.f32.mrb[0].mxu0
      %v9450 = vpop.f32.mrb[0].mxu0
      %v9451 = vadd.f32 0.0, %v9450
      %v9452 = vpop.f32.mrb[0].mxu0
      %9453 = vmatprep.mubr.bf16.mxu0 0
      %9454 = vmatmul.mubr.bf16.gmra.mrb[0].mxu0 %v9349
      %v9455 = vpop.f32.mrb[0].mxu0
      %v9456 = vadd.f32 0.0, %v9455
      %v9457 = vpop.f32.mrb[0].mxu0
      %v9458 = vpop.f32.mrb[0].mxu0
      %v9459 = vadd.f32 0.0, %v9458
      %v9460 = vpop.f32.mrb[0].mxu0
      %9461 = vmatprep.mubr.bf16.mxu0 0
      %9462 = vmatmul.mubr.bf16.gmra.mrb[0].mxu0 %v9352
      %v9463 = vpop.f32.mrb[0].mxu0
      %v9464 = vadd.f32 0.0, %v9463
      %v9465 = vpop.f32.mrb[0].mxu0
      %v9466 = vpop.f32.mrb[0].mxu0
      %v9467 = vadd.f32 0.0, %v9466
      %v9468 = vpop.f32.mrb[0].mxu0
      %9469 = vmatprep.mubr.bf16.mxu0 0
      %9470 = vmatmul.mubr.bf16.gmra.mrb[0].mxu0 %v9355
      %v9471 = vpop.f32.mrb[0].mxu0
      %v9472 = vadd.f32 0.0, %v9471
      %v9473 = vpop.f32.mrb[0].mxu0
      %v9474 = vpop.f32.mrb[0].mxu0
      %v9475 = vadd.f32 0.0, %v9474
      %v9476 = vpop.f32.mrb[0].mxu0
      %9477 = vmatprep.mubr.bf16.mxu0 0
      %9478 = vmatmul.mubr.bf16.gmra.mrb[0].mxu0 %v9358
      %v9479 = vpop.f32.mrb[0].mxu0
      %v9480 = vadd.f32 0.0, %v9479
      %v9481 = vpop.f32.mrb[0].mxu0
      %v9482 = vpop.f32.mrb[0].mxu0
      %v9483 = vadd.f32 0.0, %v9482
      %v9484 = vpop.f32.mrb[0].mxu0
      %9485 = vmatprep.mubr.bf16.mxu0 0
      %9486 = vmatmul.mubr.bf16.gmra.mrb[0].mxu0 %v9361
      %v9487 = vpop.f32.mrb[0].mxu0
      %v9488 = vadd.f32 0.0, %v9487
      %v9489 = vpop.f32.mrb[0].mxu0
      %v9490 = vpop.f32.mrb[0].mxu0
      %v9491 = vadd.f32 0.0, %v9490
      %v9492 = vpop.f32.mrb[0].mxu0
      %9493 = vmatprep.mubr.bf16.mxu0 0
      %9494 = vmatmul.mubr.bf16.gmra.mrb[0].mxu0 %v9364
      %v9495 = vpop.f32.mrb[0].mxu0
      %v9496 = vadd.f32 0.0, %v9495
      %v9497 = vpop.f32.mrb[0].mxu0
      %v9498 = vpop.f32.mrb[0].mxu0
      %v9499 = vadd.f32 0.0, %v9498
      %v9500 = vpop.f32.mrb[0].mxu0
      %9501 = vmatprep.mubr.bf16.mxu0 0
      %9502 = vmatmul.mubr.bf16.gmra.mrb[0].mxu0 %v9367
      %v9503 = vpop.f32.mrb[0].mxu0
      %v9504 = vadd.f32 0.0, %v9503
      %v9505 = vpop.f32.mrb[0].mxu0
      %v9506 = vpop.f32.mrb[0].mxu0
      %v9507 = vadd.f32 0.0, %v9506
      %v9508 = vpop.f32.mrb[0].mxu0
      %9509 = vmatprep.mubr.bf16.mxu0 0
      %9510 = vmatmul.mubr.bf16.gmra.mrb[0].mxu0 %v9370
      %v9511 = vpop.f32.mrb[0].mxu0
      %v9512 = vadd.f32 0.0, %v9511
      %v9513 = vpop.f32.mrb[0].mxu0
      %v9514 = vpop.f32.mrb[0].mxu0
      %v9515 = vadd.f32 0.0, %v9514
      %v9516 = vpop.f32.mrb[0].mxu0
      %9517 = vmatprep.mubr.bf16.mxu0 0
      %9518 = vmatmul.mubr.bf16.gmra.mrb[0].mxu0 %v9373
      %v9519 = vpop.f32.mrb[0].mxu0
      %v9520 = vadd.f32 0.0, %v9519
      %v9521 = vpop.f32.mrb[0].mxu0
      %v9522 = vpop.f32.mrb[0].mxu0
      %v9523 = vadd.f32 0.0, %v9522
      %v9524 = vpop.f32.mrb[0].mxu0
      %9525 = vmatprep.mubr.bf16.mxu0 0
      %9526 = vmatmul.mubr.bf16.gmra.mrb[0].mxu0 %v9376
      %v9527 = vpop.f32.mrb[0].mxu0
      %v9528 = vadd.f32 0.0, %v9527
      %v9529 = vpop.f32.mrb[0].mxu0
      %v9530 = vpop.f32.mrb[0].mxu0
      %v9531 = vadd.f32 0.0, %v9530
      %v9532 = vpop.f32.mrb[0].mxu0
      %9533 = vmatprep.mubr.bf16.mxu0 0
      %9534 = vmatmul.mubr.bf16.gmra.mrb[0].mxu0 %v9379
      %v9535 = vpop.f32.mrb[0].mxu0
      %v9536 = vadd.f32 0.0, %v9535
      %v9537 = vpop.f32.mrb[0].mxu0
      %v9538 = vpop.f32.mrb[0].mxu0
      %v9539 = vadd.f32 0.0, %v9538
      %v9540 = vpop.f32.mrb[0].mxu0
      %9541 = vdwg.mxu0
      %v9542 = vadd.f32 %v9204, %v9416
      %v9543 = vadd.f32 %v9205, %v9419
      %v9544 = vadd.f32 %v9206, %v9424
      %v9545 = vadd.f32 %v9207, %v9427
      %v9546 = vadd.f32 %v9208, %v9432
      %v9547 = vadd.f32 %v9209, %v9435
      %v9548 = vadd.f32 %v9210, %v9440
      %v9549 = vadd.f32 %v9211, %v9443
      %v9550 = vadd.f32 %v9212, %v9448
      %v9551 = vadd.f32 %v9213, %v9451
      %v9552 = vadd.f32 %v9214, %v9456
      %v9553 = vadd.f32 %v9215, %v9459
      %v9554 = vadd.f32 %v9216, %v9464
      %v9555 = vadd.f32 %v9217, %v9467
      %v9556 = vadd.f32 %v9218, %v9472
      %v9557 = vadd.f32 %v9219, %v9475
      %v9558 = vadd.f32 %v9220, %v9480
      %v9559 = vadd.f32 %v9221, %v9483
      %v9560 = vadd.f32 %v9222, %v9488
      %v9561 = vadd.f32 %v9223, %v9491
      %v9562 = vadd.f32 %v9224, %v9496
      %v9563 = vadd.f32 %v9225, %v9499
      %v9564 = vadd.f32 %v9226, %v9504
      %v9565 = vadd.f32 %v9227, %v9507
      %v9566 = vadd.f32 %v9228, %v9512
      %v9567 = vadd.f32 %v9229, %v9515
      %v9568 = vadd.f32 %v9230, %v9520
      %v9569 = vadd.f32 %v9231, %v9523
      %v9570 = vadd.f32 %v9232, %v9528
      %v9571 = vadd.f32 %v9233, %v9531
      %v9572 = vadd.f32 %v9234, %v9536
      %v9573 = vadd.f32 %v9235, %v9539
      %v9574 = vld [vmem:[#allocation2 + $0x28] sm:$0xff]
      %v9575 = vld [vmem:[#allocation2 + $0x30] sm:$0xff]
      %v9576 = vld [vmem:[#allocation2 + $0x38] sm:$0xff]
      %v9577 = vld [vmem:[#allocation2 + $0x40] sm:$0xff]
      %v9578 = vld [vmem:[#allocation2 + $0x48] sm:$0xff]
      %v9579 = vld [vmem:[#allocation2 + $0x50] sm:$0xff]
      %v9580 = vld [vmem:[#allocation2 + $0x58] sm:$0xff]
      %v9581 = vld [vmem:[#allocation2 + $0x60] sm:$0xff]
      %v9582 = vld [vmem:[#allocation2 + $0x68] sm:$0xff]
      %v9583 = vld [vmem:[#allocation2 + $0x70] sm:$0xff]
      %v9584 = vld [vmem:[#allocation2 + $0x78] sm:$0xff]
      %v9585 = vld [vmem:[#allocation2 + $0x80] sm:$0xff]
      %v9586 = vld [vmem:[#allocation2 + $0x88] sm:$0xff]
      %v9587 = vld [vmem:[#allocation2 + $0x90] sm:$0xff]
      %v9588 = vld [vmem:[#allocation2 + $0x98] sm:$0xff]
      %v9589 = vld [vmem:[#allocation2 + $0xa0] sm:$0xff]
      %v9590 = vld [vmem:[#allocation2 + $0xa8] sm:$0xff]
      %v9591 = vld [vmem:[#allocation2 + $0xb0] sm:$0xff]
      %v9592 = vld [vmem:[#allocation2 + $0xb8] sm:$0xff]
      %v9593 = vld [vmem:[#allocation2 + $0xc0] sm:$0xff]
      %v9594 = vld [vmem:[#allocation2 + $0xc8] sm:$0xff]
      %v9595 = vld [vmem:[#allocation2 + $0xd0] sm:$0xff]
      %v9596 = vld [vmem:[#allocation2 + $0xd8] sm:$0xff]
      %v9597 = vld [vmem:[#allocation2 + $0xe0] sm:$0xff]
      %v9598 = vld [vmem:[#allocation2 + $0xe8] sm:$0xff]
      %v9599 = vld [vmem:[#allocation2 + $0xf0] sm:$0xff]
      %v9600 = vld [vmem:[#allocation2 + $0xf8] sm:$0xff]
      %v9601 = vld [vmem:[#allocation2 + $0x100] sm:$0xff]
      %v9602 = vld [vmem:[#allocation2 + $0x108] sm:$0xff]
      %v9603 = vld [vmem:[#allocation2 + $0x110] sm:$0xff]
      %v9604 = vld [vmem:[#allocation2 + $0x118] sm:$0xff]
      %v9605 = vld [vmem:[#allocation2 + $0x120] sm:$0xff]
      %v9606 = vpack.c.bf16 %v9575, %v9574
      %v9607 = vpack.c.bf16 %v9577, %v9576
      %v9608 = vpack.c.bf16 %v9579, %v9578
      %v9609 = vpack.c.bf16 %v9581, %v9580
      %v9610 = vpack.c.bf16 %v9583, %v9582
      %v9611 = vpack.c.bf16 %v9585, %v9584
      %v9612 = vpack.c.bf16 %v9587, %v9586
      %v9613 = vpack.c.bf16 %v9589, %v9588
      %v9614 = vpack.c.bf16 %v9591, %v9590
      %v9615 = vpack.c.bf16 %v9593, %v9592
      %v9616 = vpack.c.bf16 %v9595, %v9594
      %v9617 = vpack.c.bf16 %v9597, %v9596
      %v9618 = vpack.c.bf16 %v9599, %v9598
      %v9619 = vpack.c.bf16 %v9601, %v9600
      %v9620 = vpack.c.bf16 %v9603, %v9602
      %v9621 = vpack.c.bf16 %v9605, %v9604
      %s9622 = scalar_lea.vmem %s12, 112
      %v9623 = vld [vmem:[%s9622] sm:$0xf]
      %v9624 = vld [vmem:[%s9622 + $0x4] sm:$0xf]
      %v9625 = vld [vmem:[%s9622 + $0x8] sm:$0xf]
      %v9626 = vld [vmem:[%s9622 + $0xc] sm:$0xf]
      %v9631 = vunpack.c.l.b16 %v9623
      %v9632 = vunpack.c.l.b16 %v9624
      %v9633 = vunpack.c.l.b16 %v9625
      %v9634 = vunpack.c.l.b16 %v9626
      %v9635 = vpack.c.b16 %v9632, %v9631
      %v9636 = vpack.c.b16 %v9634, %v9633
      %v9640 = vsel %vm7336, %v9606, 0
      %v9643 = vsel %vm7336, %v9607, 0
      %v9646 = vsel %vm7336, %v9608, 0
      %v9649 = vsel %vm7336, %v9609, 0
      %v9652 = vsel %vm7336, %v9610, 0
      %v9655 = vsel %vm7336, %v9611, 0
      %v9658 = vsel %vm7336, %v9612, 0
      %v9661 = vsel %vm7336, %v9613, 0
      %v9664 = vsel %vm7336, %v9614, 0
      %v9667 = vsel %vm7336, %v9615, 0
      %v9670 = vsel %vm7336, %v9616, 0
      %v9673 = vsel %vm7336, %v9617, 0
      %v9676 = vsel %vm7336, %v9618, 0
      %v9679 = vsel %vm7336, %v9619, 0
      %v9682 = vsel %vm7336, %v9620, 0
      %v9685 = vsel %vm7336, %v9621, 0
      %9687 = vmatprep.subr.bf16.mxu0 0
      %9688 = vmatpush1.bf16.msra.mxu0 %v9635
      %9689 = vmatprep.subr.bf16.mxu0 0
      %9690 = vmatpush1.bf16.msra.mxu0 %v9636
      %9691 = vmatprep.subr.bf16.mxu0 0
      %9692 = vmatpush1.bf16.msra.mxu0 0
      %9693 = vmatprep.subr.bf16.mxu0 0
      %9694 = vmatpush1.bf16.msra.mxu0 0
      %9695 = vmatprep.subr.bf16.mxu0 0
      %9696 = vmatpush1.bf16.msra.mxu0 0
      %9697 = vmatprep.subr.bf16.mxu0 0
      %9698 = vmatpush1.bf16.msra.mxu0 0
      %9699 = vmatprep.subr.bf16.mxu0 0
      %9700 = vmatpush1.bf16.msra.mxu0 0
      %9701 = vmatprep.subr.bf16.mxu0 0
      %9702 = vmatpush1.bf16.msra.mxu0 0
      %9703 = vmatprep.subr.bf16.mxu0 0
      %9704 = vmatpush1.bf16.msra.mxu0 0
      %9705 = vmatprep.subr.bf16.mxu0 0
      %9706 = vmatpush1.bf16.msra.mxu0 0
      %9707 = vmatprep.subr.bf16.mxu0 0
      %9708 = vmatpush1.bf16.msra.mxu0 0
      %9709 = vmatprep.subr.bf16.mxu0 0
      %9710 = vmatpush1.bf16.msra.mxu0 0
      %9711 = vmatprep.subr.bf16.mxu0 0
      %9712 = vmatpush1.bf16.msra.mxu0 0
      %9713 = vmatprep.subr.bf16.mxu0 0
      %9714 = vmatpush1.bf16.msra.mxu0 0
      %9715 = vmatprep.subr.bf16.mxu0 0
      %9716 = vmatpush1.bf16.msra.mxu0 0
      %9717 = vmatprep.subr.bf16.mxu0 0
      %9718 = vmatpush1.bf16.msra.mxu0 0
      %9719 = vmatprep.mubr.bf16.mxu0 0
      %9720 = vmatmul.mubr.bf16.gmra.mrb[0].mxu0 %v9640
      %v9721 = vpop.f32.mrb[0].mxu0
      %v9722 = vadd.f32 0.0, %v9721
      %v9723 = vpop.f32.mrb[0].mxu0
      %v9724 = vpop.f32.mrb[0].mxu0
      %v9725 = vadd.f32 0.0, %v9724
      %v9726 = vpop.f32.mrb[0].mxu0
      %9727 = vmatprep.mubr.bf16.mxu0 0
      %9728 = vmatmul.mubr.bf16.gmra.mrb[0].mxu0 %v9643
      %v9729 = vpop.f32.mrb[0].mxu0
      %v9730 = vadd.f32 0.0, %v9729
      %v9731 = vpop.f32.mrb[0].mxu0
      %v9732 = vpop.f32.mrb[0].mxu0
      %v9733 = vadd.f32 0.0, %v9732
      %v9734 = vpop.f32.mrb[0].mxu0
      %9735 = vmatprep.mubr.bf16.mxu0 0
      %9736 = vmatmul.mubr.bf16.gmra.mrb[0].mxu0 %v9646
      %v9737 = vpop.f32.mrb[0].mxu0
      %v9738 = vadd.f32 0.0, %v9737
      %v9739 = vpop.f32.mrb[0].mxu0
      %v9740 = vpop.f32.mrb[0].mxu0
      %v9741 = vadd.f32 0.0, %v9740
      %v9742 = vpop.f32.mrb[0].mxu0
      %9743 = vmatprep.mubr.bf16.mxu0 0
      %9744 = vmatmul.mubr.bf16.gmra.mrb[0].mxu0 %v9649
      %v9745 = vpop.f32.mrb[0].mxu0
      %v9746 = vadd.f32 0.0, %v9745
      %v9747 = vpop.f32.mrb[0].mxu0
      %v9748 = vpop.f32.mrb[0].mxu0
      %v9749 = vadd.f32 0.0, %v9748
      %v9750 = vpop.f32.mrb[0].mxu0
      %9751 = vmatprep.mubr.bf16.mxu0 0
      %9752 = vmatmul.mubr.bf16.gmra.mrb[0].mxu0 %v9652
      %v9753 = vpop.f32.mrb[0].mxu0
      %v9754 = vadd.f32 0.0, %v9753
      %v9755 = vpop.f32.mrb[0].mxu0
      %v9756 = vpop.f32.mrb[0].mxu0
      %v9757 = vadd.f32 0.0, %v9756
      %v9758 = vpop.f32.mrb[0].mxu0
      %9759 = vmatprep.mubr.bf16.mxu0 0
      %9760 = vmatmul.mubr.bf16.gmra.mrb[0].mxu0 %v9655
      %v9761 = vpop.f32.mrb[0].mxu0
      %v9762 = vadd.f32 0.0, %v9761
      %v9763 = vpop.f32.mrb[0].mxu0
      %v9764 = vpop.f32.mrb[0].mxu0
      %v9765 = vadd.f32 0.0, %v9764
      %v9766 = vpop.f32.mrb[0].mxu0
      %9767 = vmatprep.mubr.bf16.mxu0 0
      %9768 = vmatmul.mubr.bf16.gmra.mrb[0].mxu0 %v9658
      %v9769 = vpop.f32.mrb[0].mxu0
      %v9770 = vadd.f32 0.0, %v9769
      %v9771 = vpop.f32.mrb[0].mxu0
      %v9772 = vpop.f32.mrb[0].mxu0
      %v9773 = vadd.f32 0.0, %v9772
      %v9774 = vpop.f32.mrb[0].mxu0
      %9775 = vmatprep.mubr.bf16.mxu0 0
      %9776 = vmatmul.mubr.bf16.gmra.mrb[0].mxu0 %v9661
      %v9777 = vpop.f32.mrb[0].mxu0
      %v9778 = vadd.f32 0.0, %v9777
      %v9779 = vpop.f32.mrb[0].mxu0
      %v9780 = vpop.f32.mrb[0].mxu0
      %v9781 = vadd.f32 0.0, %v9780
      %v9782 = vpop.f32.mrb[0].mxu0
      %9783 = vmatprep.mubr.bf16.mxu0 0
      %9784 = vmatmul.mubr.bf16.gmra.mrb[0].mxu0 %v9664
      %v9785 = vpop.f32.mrb[0].mxu0
      %v9786 = vadd.f32 0.0, %v9785
      %v9787 = vpop.f32.mrb[0].mxu0
      %v9788 = vpop.f32.mrb[0].mxu0
      %v9789 = vadd.f32 0.0, %v9788
      %v9790 = vpop.f32.mrb[0].mxu0
      %9791 = vmatprep.mubr.bf16.mxu0 0
      %9792 = vmatmul.mubr.bf16.gmra.mrb[0].mxu0 %v9667
      %v9793 = vpop.f32.mrb[0].mxu0
      %v9794 = vadd.f32 0.0, %v9793
      %v9795 = vpop.f32.mrb[0].mxu0
      %v9796 = vpop.f32.mrb[0].mxu0
      %v9797 = vadd.f32 0.0, %v9796
      %v9798 = vpop.f32.mrb[0].mxu0
      %9799 = vmatprep.mubr.bf16.mxu0 0
      %9800 = vmatmul.mubr.bf16.gmra.mrb[0].mxu0 %v9670
      %v9801 = vpop.f32.mrb[0].mxu0
      %v9802 = vadd.f32 0.0, %v9801
      %v9803 = vpop.f32.mrb[0].mxu0
      %v9804 = vpop.f32.mrb[0].mxu0
      %v9805 = vadd.f32 0.0, %v9804
      %v9806 = vpop.f32.mrb[0].mxu0
      %9807 = vmatprep.mubr.bf16.mxu0 0
      %9808 = vmatmul.mubr.bf16.gmra.mrb[0].mxu0 %v9673
      %v9809 = vpop.f32.mrb[0].mxu0
      %v9810 = vadd.f32 0.0, %v9809
      %v9811 = vpop.f32.mrb[0].mxu0
      %v9812 = vpop.f32.mrb[0].mxu0
      %v9813 = vadd.f32 0.0, %v9812
      %v9814 = vpop.f32.mrb[0].mxu0
      %9815 = vmatprep.mubr.bf16.mxu0 0
      %9816 = vmatmul.mubr.bf16.gmra.mrb[0].mxu0 %v9676
      %v9817 = vpop.f32.mrb[0].mxu0
      %v9818 = vadd.f32 0.0, %v9817
      %v9819 = vpop.f32.mrb[0].mxu0
      %v9820 = vpop.f32.mrb[0].mxu0
      %v9821 = vadd.f32 0.0, %v9820
      %v9822 = vpop.f32.mrb[0].mxu0
      %9823 = vmatprep.mubr.bf16.mxu0 0
      %9824 = vmatmul.mubr.bf16.gmra.mrb[0].mxu0 %v9679
      %v9825 = vpop.f32.mrb[0].mxu0
      %v9826 = vadd.f32 0.0, %v9825
      %v9827 = vpop.f32.mrb[0].mxu0
      %v9828 = vpop.f32.mrb[0].mxu0
      %v9829 = vadd.f32 0.0, %v9828
      %v9830 = vpop.f32.mrb[0].mxu0
      %9831 = vmatprep.mubr.bf16.mxu0 0
      %9832 = vmatmul.mubr.bf16.gmra.mrb[0].mxu0 %v9682
      %v9833 = vpop.f32.mrb[0].mxu0
      %v9834 = vadd.f32 0.0, %v9833
      %v9835 = vpop.f32.mrb[0].mxu0
      %v9836 = vpop.f32.mrb[0].mxu0
      %v9837 = vadd.f32 0.0, %v9836
      %v9838 = vpop.f32.mrb[0].mxu0
      %9839 = vmatprep.mubr.bf16.mxu0 0
      %9840 = vmatmul.mubr.bf16.gmra.mrb[0].mxu0 %v9685
      %v9841 = vpop.f32.mrb[0].mxu0
      %v9842 = vadd.f32 0.0, %v9841
      %v9843 = vpop.f32.mrb[0].mxu0
      %v9844 = vpop.f32.mrb[0].mxu0
      %v9845 = vadd.f32 0.0, %v9844
      %v9846 = vpop.f32.mrb[0].mxu0
      %9847 = vdwg.mxu0
      %v9848 = vadd.f32 %v9542, %v9722
      %v9849 = vadd.f32 %v9543, %v9725
      %v9850 = vadd.f32 %v9544, %v9730
      %v9851 = vadd.f32 %v9545, %v9733
      %v9852 = vadd.f32 %v9546, %v9738
      %v9853 = vadd.f32 %v9547, %v9741
      %v9854 = vadd.f32 %v9548, %v9746
      %v9855 = vadd.f32 %v9549, %v9749
      %v9856 = vadd.f32 %v9550, %v9754
      %v9857 = vadd.f32 %v9551, %v9757
      %v9858 = vadd.f32 %v9552, %v9762
      %v9859 = vadd.f32 %v9553, %v9765
      %v9860 = vadd.f32 %v9554, %v9770
      %v9861 = vadd.f32 %v9555, %v9773
      %v9862 = vadd.f32 %v9556, %v9778
      %v9863 = vadd.f32 %v9557, %v9781
      %v9864 = vadd.f32 %v9558, %v9786
      %v9865 = vadd.f32 %v9559, %v9789
      %v9866 = vadd.f32 %v9560, %v9794
      %v9867 = vadd.f32 %v9561, %v9797
      %v9868 = vadd.f32 %v9562, %v9802
      %v9869 = vadd.f32 %v9563, %v9805
      %v9870 = vadd.f32 %v9564, %v9810
      %v9871 = vadd.f32 %v9565, %v9813
      %v9872 = vadd.f32 %v9566, %v9818
      %v9873 = vadd.f32 %v9567, %v9821
      %v9874 = vadd.f32 %v9568, %v9826
      %v9875 = vadd.f32 %v9569, %v9829
      %v9876 = vadd.f32 %v9570, %v9834
      %v9877 = vadd.f32 %v9571, %v9837
      %v9878 = vadd.f32 %v9572, %v9842
      %v9879 = vadd.f32 %v9573, %v9845
      %v9880 = vld [vmem:[#allocation2 + $0x29] sm:$0xff]
      %v9881 = vld [vmem:[#allocation2 + $0x31] sm:$0xff]
      %v9882 = vld [vmem:[#allocation2 + $0x39] sm:$0xff]
      %v9883 = vld [vmem:[#allocation2 + $0x41] sm:$0xff]
      %v9884 = vld [vmem:[#allocation2 + $0x49] sm:$0xff]
      %v9885 = vld [vmem:[#allocation2 + $0x51] sm:$0xff]
      %v9886 = vld [vmem:[#allocation2 + $0x59] sm:$0xff]
      %v9887 = vld [vmem:[#allocation2 + $0x61] sm:$0xff]
      %v9888 = vld [vmem:[#allocation2 + $0x69] sm:$0xff]
      %v9889 = vld [vmem:[#allocation2 + $0x71] sm:$0xff]
      %v9890 = vld [vmem:[#allocation2 + $0x79] sm:$0xff]
      %v9891 = vld [vmem:[#allocation2 + $0x81] sm:$0xff]
      %v9892 = vld [vmem:[#allocation2 + $0x89] sm:$0xff]
      %v9893 = vld [vmem:[#allocation2 + $0x91] sm:$0xff]
      %v9894 = vld [vmem:[#allocation2 + $0x99] sm:$0xff]
      %v9895 = vld [vmem:[#allocation2 + $0xa1] sm:$0xff]
      %v9896 = vld [vmem:[#allocation2 + $0xa9] sm:$0xff]
      %v9897 = vld [vmem:[#allocation2 + $0xb1] sm:$0xff]
      %v9898 = vld [vmem:[#allocation2 + $0xb9] sm:$0xff]
      %v9899 = vld [vmem:[#allocation2 + $0xc1] sm:$0xff]
      %v9900 = vld [vmem:[#allocation2 + $0xc9] sm:$0xff]
      %v9901 = vld [vmem:[#allocation2 + $0xd1] sm:$0xff]
      %v9902 = vld [vmem:[#allocation2 + $0xd9] sm:$0xff]
      %v9903 = vld [vmem:[#allocation2 + $0xe1] sm:$0xff]
      %v9904 = vld [vmem:[#allocation2 + $0xe9] sm:$0xff]
      %v9905 = vld [vmem:[#allocation2 + $0xf1] sm:$0xff]
      %v9906 = vld [vmem:[#allocation2 + $0xf9] sm:$0xff]
      %v9907 = vld [vmem:[#allocation2 + $0x101] sm:$0xff]
      %v9908 = vld [vmem:[#allocation2 + $0x109] sm:$0xff]
      %v9909 = vld [vmem:[#allocation2 + $0x111] sm:$0xff]
      %v9910 = vld [vmem:[#allocation2 + $0x119] sm:$0xff]
      %v9911 = vld [vmem:[#allocation2 + $0x121] sm:$0xff]
      %v9912 = vmul.f32 %v9880, %v1733
      %v9913 = vmul.f32 %v9881, %v1737
      %v9914 = vmul.f32 %v9882, %v1741
      %v9915 = vmul.f32 %v9883, %v1745
      %v9916 = vmul.f32 %v9884, %v1749
      %v9917 = vmul.f32 %v9885, %v1753
      %v9918 = vmul.f32 %v9886, %v1757
      %v9919 = vmul.f32 %v9887, %v1761
      %v9920 = vmul.f32 %v9888, %v1765
      %v9921 = vmul.f32 %v9889, %v1769
      %v9922 = vmul.f32 %v9890, %v1773
      %v9923 = vmul.f32 %v9891, %v1777
      %v9924 = vmul.f32 %v9892, %v1781
      %v9925 = vmul.f32 %v9893, %v1785
      %v9926 = vmul.f32 %v9894, %v1789
      %v9927 = vmul.f32 %v9895, %v1793
      %v9928 = vmul.f32 %v9896, %v1797
      %v9929 = vmul.f32 %v9897, %v1801
      %v9930 = vmul.f32 %v9898, %v1805
      %v9931 = vmul.f32 %v9899, %v1809
      %v9932 = vmul.f32 %v9900, %v1813
      %v9933 = vmul.f32 %v9901, %v1817
      %v9934 = vmul.f32 %v9902, %v1821
      %v9935 = vmul.f32 %v9903, %v1825
      %v9936 = vmul.f32 %v9904, %v1829
      %v9937 = vmul.f32 %v9905, %v1833
      %v9938 = vmul.f32 %v9906, %v1837
      %v9939 = vmul.f32 %v9907, %v1841
      %v9940 = vmul.f32 %v9908, %v1845
      %v9941 = vmul.f32 %v9909, %v1849
      %v9942 = vmul.f32 %v9910, %v1853
      %v9943 = vmul.f32 %v9911, %v1857
      %v9944 = vpack.c.bf16 %v9913, %v9912
      %v9945 = vpack.c.bf16 %v9915, %v9914
      %v9946 = vpack.c.bf16 %v9917, %v9916
      %v9947 = vpack.c.bf16 %v9919, %v9918
      %v9948 = vpack.c.bf16 %v9921, %v9920
      %v9949 = vpack.c.bf16 %v9923, %v9922
      %v9950 = vpack.c.bf16 %v9925, %v9924
      %v9951 = vpack.c.bf16 %v9927, %v9926
      %v9952 = vpack.c.bf16 %v9929, %v9928
      %v9953 = vpack.c.bf16 %v9931, %v9930
      %v9954 = vpack.c.bf16 %v9933, %v9932
      %v9955 = vpack.c.bf16 %v9935, %v9934
      %v9956 = vpack.c.bf16 %v9937, %v9936
      %v9957 = vpack.c.bf16 %v9939, %v9938
      %v9958 = vpack.c.bf16 %v9941, %v9940
      %v9959 = vpack.c.bf16 %v9943, %v9942
      %s9960 = scalar_lea.vmem %s12, 128
      %v9961 = vld [vmem:[%s9960] sm:$0xf]
      %v9962 = vld [vmem:[%s9960 + $0x4] sm:$0xf]
      %v9963 = vld [vmem:[%s9960 + $0x8] sm:$0xf]
      %v9964 = vld [vmem:[%s9960 + $0xc] sm:$0xf]
      %v9969 = vunpack.c.l.b16 %v9961
      %v9970 = vunpack.c.l.b16 %v9962
      %v9971 = vunpack.c.l.b16 %v9963
      %v9972 = vunpack.c.l.b16 %v9964
      %v9973 = vpack.c.b16 %v9970, %v9969
      %v9974 = vpack.c.b16 %v9972, %v9971
      %v9978 = vsel %vm7336, %v9944, 0
      %v9981 = vsel %vm7336, %v9945, 0
      %v9984 = vsel %vm7336, %v9946, 0
      %v9987 = vsel %vm7336, %v9947, 0
      %v9990 = vsel %vm7336, %v9948, 0
      %v9993 = vsel %vm7336, %v9949, 0
      %v9996 = vsel %vm7336, %v9950, 0
      %v9999 = vsel %vm7336, %v9951, 0
      %v10002 = vsel %vm7336, %v9952, 0
      %v10005 = vsel %vm7336, %v9953, 0
      %v10008 = vsel %vm7336, %v9954, 0
      %v10011 = vsel %vm7336, %v9955, 0
      %v10014 = vsel %vm7336, %v9956, 0
      %v10017 = vsel %vm7336, %v9957, 0
      %v10020 = vsel %vm7336, %v9958, 0
      %v10023 = vsel %vm7336, %v9959, 0
      %10025 = vmatprep.subr.bf16.mxu0 0
      %10026 = vmatpush1.bf16.msra.mxu0 %v9973
      %10027 = vmatprep.subr.bf16.mxu0 0
      %10028 = vmatpush1.bf16.msra.mxu0 %v9974
      %10029 = vmatprep.subr.bf16.mxu0 0
      %10030 = vmatpush1.bf16.msra.mxu0 0
      %10031 = vmatprep.subr.bf16.mxu0 0
      %10032 = vmatpush1.bf16.msra.mxu0 0
      %10033 = vmatprep.subr.bf16.mxu0 0
      %10034 = vmatpush1.bf16.msra.mxu0 0
      %10035 = vmatprep.subr.bf16.mxu0 0
      %10036 = vmatpush1.bf16.msra.mxu0 0
      %10037 = vmatprep.subr.bf16.mxu0 0
      %10038 = vmatpush1.bf16.msra.mxu0 0
      %10039 = vmatprep.subr.bf16.mxu0 0
      %10040 = vmatpush1.bf16.msra.mxu0 0
      %10041 = vmatprep.subr.bf16.mxu0 0
      %10042 = vmatpush1.bf16.msra.mxu0 0
      %10043 = vmatprep.subr.bf16.mxu0 0
      %10044 = vmatpush1.bf16.msra.mxu0 0
      %10045 = vmatprep.subr.bf16.mxu0 0
      %10046 = vmatpush1.bf16.msra.mxu0 0
      %10047 = vmatprep.subr.bf16.mxu0 0
      %10048 = vmatpush1.bf16.msra.mxu0 0
      %10049 = vmatprep.subr.bf16.mxu0 0
      %10050 = vmatpush1.bf16.msra.mxu0 0
      %10051 = vmatprep.subr.bf16.mxu0 0
      %10052 = vmatpush1.bf16.msra.mxu0 0
      %10053 = vmatprep.subr.bf16.mxu0 0
      %10054 = vmatpush1.bf16.msra.mxu0 0
      %10055 = vmatprep.subr.bf16.mxu0 0
      %10056 = vmatpush1.bf16.msra.mxu0 0
      %10057 = vmatprep.mubr.bf16.mxu0 0
      %10058 = vmatmul.mubr.bf16.gmra.mrb[0].mxu0 %v9978
      %v10059 = vpop.f32.mrb[0].mxu0
      %v10060 = vadd.f32 0.0, %v10059
      %v10061 = vpop.f32.mrb[0].mxu0
      %v10062 = vpop.f32.mrb[0].mxu0
      %v10063 = vadd.f32 0.0, %v10062
      %v10064 = vpop.f32.mrb[0].mxu0
      %10065 = vmatprep.mubr.bf16.mxu0 0
      %10066 = vmatmul.mubr.bf16.gmra.mrb[0].mxu0 %v9981
      %v10067 = vpop.f32.mrb[0].mxu0
      %v10068 = vadd.f32 0.0, %v10067
      %v10069 = vpop.f32.mrb[0].mxu0
      %v10070 = vpop.f32.mrb[0].mxu0
      %v10071 = vadd.f32 0.0, %v10070
      %v10072 = vpop.f32.mrb[0].mxu0
      %10073 = vmatprep.mubr.bf16.mxu0 0
      %10074 = vmatmul.mubr.bf16.gmra.mrb[0].mxu0 %v9984
      %v10075 = vpop.f32.mrb[0].mxu0
      %v10076 = vadd.f32 0.0, %v10075
      %v10077 = vpop.f32.mrb[0].mxu0
      %v10078 = vpop.f32.mrb[0].mxu0
      %v10079 = vadd.f32 0.0, %v10078
      %v10080 = vpop.f32.mrb[0].mxu0
      %10081 = vmatprep.mubr.bf16.mxu0 0
      %10082 = vmatmul.mubr.bf16.gmra.mrb[0].mxu0 %v9987
      %v10083 = vpop.f32.mrb[0].mxu0
      %v10084 = vadd.f32 0.0, %v10083
      %v10085 = vpop.f32.mrb[0].mxu0
      %v10086 = vpop.f32.mrb[0].mxu0
      %v10087 = vadd.f32 0.0, %v10086
      %v10088 = vpop.f32.mrb[0].mxu0
      %10089 = vmatprep.mubr.bf16.mxu0 0
      %10090 = vmatmul.mubr.bf16.gmra.mrb[0].mxu0 %v9990
      %v10091 = vpop.f32.mrb[0].mxu0
      %v10092 = vadd.f32 0.0, %v10091
      %v10093 = vpop.f32.mrb[0].mxu0
      %v10094 = vpop.f32.mrb[0].mxu0
      %v10095 = vadd.f32 0.0, %v10094
      %v10096 = vpop.f32.mrb[0].mxu0
      %10097 = vmatprep.mubr.bf16.mxu0 0
      %10098 = vmatmul.mubr.bf16.gmra.mrb[0].mxu0 %v9993
      %v10099 = vpop.f32.mrb[0].mxu0
      %v10100 = vadd.f32 0.0, %v10099
      %v10101 = vpop.f32.mrb[0].mxu0
      %v10102 = vpop.f32.mrb[0].mxu0
      %v10103 = vadd.f32 0.0, %v10102
      %v10104 = vpop.f32.mrb[0].mxu0
      %10105 = vmatprep.mubr.bf16.mxu0 0
      %10106 = vmatmul.mubr.bf16.gmra.mrb[0].mxu0 %v9996
      %v10107 = vpop.f32.mrb[0].mxu0
      %v10108 = vadd.f32 0.0, %v10107
      %v10109 = vpop.f32.mrb[0].mxu0
      %v10110 = vpop.f32.mrb[0].mxu0
      %v10111 = vadd.f32 0.0, %v10110
      %v10112 = vpop.f32.mrb[0].mxu0
      %10113 = vmatprep.mubr.bf16.mxu0 0
      %10114 = vmatmul.mubr.bf16.gmra.mrb[0].mxu0 %v9999
      %v10115 = vpop.f32.mrb[0].mxu0
      %v10116 = vadd.f32 0.0, %v10115
      %v10117 = vpop.f32.mrb[0].mxu0
      %v10118 = vpop.f32.mrb[0].mxu0
      %v10119 = vadd.f32 0.0, %v10118
      %v10120 = vpop.f32.mrb[0].mxu0
      %10121 = vmatprep.mubr.bf16.mxu0 0
      %10122 = vmatmul.mubr.bf16.gmra.mrb[0].mxu0 %v10002
      %v10123 = vpop.f32.mrb[0].mxu0
      %v10124 = vadd.f32 0.0, %v10123
      %v10125 = vpop.f32.mrb[0].mxu0
      %v10126 = vpop.f32.mrb[0].mxu0
      %v10127 = vadd.f32 0.0, %v10126
      %v10128 = vpop.f32.mrb[0].mxu0
      %10129 = vmatprep.mubr.bf16.mxu0 0
      %10130 = vmatmul.mubr.bf16.gmra.mrb[0].mxu0 %v10005
      %v10131 = vpop.f32.mrb[0].mxu0
      %v10132 = vadd.f32 0.0, %v10131
      %v10133 = vpop.f32.mrb[0].mxu0
      %v10134 = vpop.f32.mrb[0].mxu0
      %v10135 = vadd.f32 0.0, %v10134
      %v10136 = vpop.f32.mrb[0].mxu0
      %10137 = vmatprep.mubr.bf16.mxu0 0
      %10138 = vmatmul.mubr.bf16.gmra.mrb[0].mxu0 %v10008
      %v10139 = vpop.f32.mrb[0].mxu0
      %v10140 = vadd.f32 0.0, %v10139
      %v10141 = vpop.f32.mrb[0].mxu0
      %v10142 = vpop.f32.mrb[0].mxu0
      %v10143 = vadd.f32 0.0, %v10142
      %v10144 = vpop.f32.mrb[0].mxu0
      %10145 = vmatprep.mubr.bf16.mxu0 0
      %10146 = vmatmul.mubr.bf16.gmra.mrb[0].mxu0 %v10011
      %v10147 = vpop.f32.mrb[0].mxu0
      %v10148 = vadd.f32 0.0, %v10147
      %v10149 = vpop.f32.mrb[0].mxu0
      %v10150 = vpop.f32.mrb[0].mxu0
      %v10151 = vadd.f32 0.0, %v10150
      %v10152 = vpop.f32.mrb[0].mxu0
      %10153 = vmatprep.mubr.bf16.mxu0 0
      %10154 = vmatmul.mubr.bf16.gmra.mrb[0].mxu0 %v10014
      %v10155 = vpop.f32.mrb[0].mxu0
      %v10156 = vadd.f32 0.0, %v10155
      %v10157 = vpop.f32.mrb[0].mxu0
      %v10158 = vpop.f32.mrb[0].mxu0
      %v10159 = vadd.f32 0.0, %v10158
      %v10160 = vpop.f32.mrb[0].mxu0
      %10161 = vmatprep.mubr.bf16.mxu0 0
      %10162 = vmatmul.mubr.bf16.gmra.mrb[0].mxu0 %v10017
      %v10163 = vpop.f32.mrb[0].mxu0
      %v10164 = vadd.f32 0.0, %v10163
      %v10165 = vpop.f32.mrb[0].mxu0
      %v10166 = vpop.f32.mrb[0].mxu0
      %v10167 = vadd.f32 0.0, %v10166
      %v10168 = vpop.f32.mrb[0].mxu0
      %10169 = vmatprep.mubr.bf16.mxu0 0
      %10170 = vmatmul.mubr.bf16.gmra.mrb[0].mxu0 %v10020
      %v10171 = vpop.f32.mrb[0].mxu0
      %v10172 = vadd.f32 0.0, %v10171
      %v10173 = vpop.f32.mrb[0].mxu0
      %v10174 = vpop.f32.mrb[0].mxu0
      %v10175 = vadd.f32 0.0, %v10174
      %v10176 = vpop.f32.mrb[0].mxu0
      %10177 = vmatprep.mubr.bf16.mxu0 0
      %10178 = vmatmul.mubr.bf16.gmra.mrb[0].mxu0 %v10023
      %v10179 = vpop.f32.mrb[0].mxu0
      %v10180 = vadd.f32 0.0, %v10179
      %v10181 = vpop.f32.mrb[0].mxu0
      %v10182 = vpop.f32.mrb[0].mxu0
      %v10183 = vadd.f32 0.0, %v10182
      %v10184 = vpop.f32.mrb[0].mxu0
      %10185 = vdwg.mxu0
      %v10186 = vadd.f32 %v9848, %v10060
      %v10187 = vadd.f32 %v9849, %v10063
      %v10188 = vadd.f32 %v9850, %v10068
      %v10189 = vadd.f32 %v9851, %v10071
      %v10190 = vadd.f32 %v9852, %v10076
      %v10191 = vadd.f32 %v9853, %v10079
      %v10192 = vadd.f32 %v9854, %v10084
      %v10193 = vadd.f32 %v9855, %v10087
      %v10194 = vadd.f32 %v9856, %v10092
      %v10195 = vadd.f32 %v9857, %v10095
      %v10196 = vadd.f32 %v9858, %v10100
      %v10197 = vadd.f32 %v9859, %v10103
      %v10198 = vadd.f32 %v9860, %v10108
      %v10199 = vadd.f32 %v9861, %v10111
      %v10200 = vadd.f32 %v9862, %v10116
      %v10201 = vadd.f32 %v9863, %v10119
      %v10202 = vadd.f32 %v9864, %v10124
      %v10203 = vadd.f32 %v9865, %v10127
      %v10204 = vadd.f32 %v9866, %v10132
      %v10205 = vadd.f32 %v9867, %v10135
      %v10206 = vadd.f32 %v9868, %v10140
      %v10207 = vadd.f32 %v9869, %v10143
      %v10208 = vadd.f32 %v9870, %v10148
      %v10209 = vadd.f32 %v9871, %v10151
      %v10210 = vadd.f32 %v9872, %v10156
      %v10211 = vadd.f32 %v9873, %v10159
      %v10212 = vadd.f32 %v9874, %v10164
      %v10213 = vadd.f32 %v9875, %v10167
      %v10214 = vadd.f32 %v9876, %v10172
      %v10215 = vadd.f32 %v9877, %v10175
      %v10216 = vadd.f32 %v9878, %v10180
      %v10217 = vadd.f32 %v9879, %v10183
      %v10218 = vld [vmem:[%s13] sm:$0x1]
      %v10220 = vlaneseq
      %v10221 = vshrl.u32 %v10220, 7
      %v10222 = vsub.s32 0, %v10221
      %v10223 = vrot.slane %v10218, %v10222
      %v10225 = vadd.f32 %v10186, %v10223
      %v10226 = vadd.f32 %v10187, %v10223
      %v10227 = vadd.f32 %v10188, %v10223
      %v10228 = vadd.f32 %v10189, %v10223
      %v10229 = vadd.f32 %v10190, %v10223
      %v10230 = vadd.f32 %v10191, %v10223
      %v10231 = vadd.f32 %v10192, %v10223
      %v10232 = vadd.f32 %v10193, %v10223
      %v10233 = vadd.f32 %v10194, %v10223
      %v10234 = vadd.f32 %v10195, %v10223
      %v10235 = vadd.f32 %v10196, %v10223
      %v10236 = vadd.f32 %v10197, %v10223
      %v10237 = vadd.f32 %v10198, %v10223
      %v10238 = vadd.f32 %v10199, %v10223
      %v10239 = vadd.f32 %v10200, %v10223
      %v10240 = vadd.f32 %v10201, %v10223
      %v10241 = vadd.f32 %v10202, %v10223
      %v10242 = vadd.f32 %v10203, %v10223
      %v10243 = vadd.f32 %v10204, %v10223
      %v10244 = vadd.f32 %v10205, %v10223
      %v10245 = vadd.f32 %v10206, %v10223
      %v10246 = vadd.f32 %v10207, %v10223
      %v10247 = vadd.f32 %v10208, %v10223
      %v10248 = vadd.f32 %v10209, %v10223
      %v10249 = vadd.f32 %v10210, %v10223
      %v10250 = vadd.f32 %v10211, %v10223
      %v10251 = vadd.f32 %v10212, %v10223
      %v10252 = vadd.f32 %v10213, %v10223
      %v10253 = vadd.f32 %v10214, %v10223
      %v10254 = vadd.f32 %v10215, %v10223
      %v10255 = vadd.f32 %v10216, %v10223
      %v10256 = vadd.f32 %v10217, %v10223
      %v10257 = vmax.f32 %v10225, 0.0
      %v10258 = vmax.f32 %v10226, 0.0
      %v10259 = vmax.f32 %v10227, 0.0
      %v10260 = vmax.f32 %v10228, 0.0
      %v10261 = vmax.f32 %v10229, 0.0
      %v10262 = vmax.f32 %v10230, 0.0
      %v10263 = vmax.f32 %v10231, 0.0
      %v10264 = vmax.f32 %v10232, 0.0
      %v10265 = vmax.f32 %v10233, 0.0
      %v10266 = vmax.f32 %v10234, 0.0
      %v10267 = vmax.f32 %v10235, 0.0
      %v10268 = vmax.f32 %v10236, 0.0
      %v10269 = vmax.f32 %v10237, 0.0
      %v10270 = vmax.f32 %v10238, 0.0
      %v10271 = vmax.f32 %v10239, 0.0
      %v10272 = vmax.f32 %v10240, 0.0
      %v10273 = vmax.f32 %v10241, 0.0
      %v10274 = vmax.f32 %v10242, 0.0
      %v10275 = vmax.f32 %v10243, 0.0
      %v10276 = vmax.f32 %v10244, 0.0
      %v10277 = vmax.f32 %v10245, 0.0
      %v10278 = vmax.f32 %v10246, 0.0
      %v10279 = vmax.f32 %v10247, 0.0
      %v10280 = vmax.f32 %v10248, 0.0
      %v10281 = vmax.f32 %v10249, 0.0
      %v10282 = vmax.f32 %v10250, 0.0
      %v10283 = vmax.f32 %v10251, 0.0
      %v10284 = vmax.f32 %v10252, 0.0
      %v10285 = vmax.f32 %v10253, 0.0
      %v10286 = vmax.f32 %v10254, 0.0
      %v10287 = vmax.f32 %v10255, 0.0
      %v10288 = vmax.f32 %v10256, 0.0
      %v10289 = vld [vmem:[%s14] sm:$0x1]
      %v10291 = vlaneseq
      %v10292 = vshrl.u32 %v10291, 7
      %v10293 = vsub.s32 0, %v10292
      %v10294 = vrot.slane %v10289, %v10293
      %v10296 = vmul.f32 %v10257, %v10294
      %v10297 = vmul.f32 %v10258, %v10294
      %v10298 = vmul.f32 %v10259, %v10294
      %v10299 = vmul.f32 %v10260, %v10294
      %v10300 = vmul.f32 %v10261, %v10294
      %v10301 = vmul.f32 %v10262, %v10294
      %v10302 = vmul.f32 %v10263, %v10294
      %v10303 = vmul.f32 %v10264, %v10294
      %v10304 = vmul.f32 %v10265, %v10294
      %v10305 = vmul.f32 %v10266, %v10294
      %v10306 = vmul.f32 %v10267, %v10294
      %v10307 = vmul.f32 %v10268, %v10294
      %v10308 = vmul.f32 %v10269, %v10294
      %v10309 = vmul.f32 %v10270, %v10294
      %v10310 = vmul.f32 %v10271, %v10294
      %v10311 = vmul.f32 %v10272, %v10294
      %v10312 = vmul.f32 %v10273, %v10294
      %v10313 = vmul.f32 %v10274, %v10294
      %v10314 = vmul.f32 %v10275, %v10294
      %v10315 = vmul.f32 %v10276, %v10294
      %v10316 = vmul.f32 %v10277, %v10294
      %v10317 = vmul.f32 %v10278, %v10294
      %v10318 = vmul.f32 %v10279, %v10294
      %v10319 = vmul.f32 %v10280, %v10294
      %v10320 = vmul.f32 %v10281, %v10294
      %v10321 = vmul.f32 %v10282, %v10294
      %v10322 = vmul.f32 %v10283, %v10294
      %v10323 = vmul.f32 %v10284, %v10294
      %v10324 = vmul.f32 %v10285, %v10294
      %v10325 = vmul.f32 %v10286, %v10294
      %v10326 = vmul.f32 %v10287, %v10294
      %v10327 = vmul.f32 %v10288, %v10294
      %v10328 = vld [vmem:[%s15] sm:$0x1]
      %v10330 = vlaneseq
      %v10331 = vshrl.u32 %v10330, 7
      %v10332 = vsub.s32 0, %v10331
      %v10333 = vrot.slane %v10328, %v10332
      %v10335 = vadd.f32 %v10296, %v10333
      %v10336 = vadd.f32 %v10297, %v10333
      %v10337 = vadd.f32 %v10298, %v10333
      %v10338 = vadd.f32 %v10299, %v10333
      %v10339 = vadd.f32 %v10300, %v10333
      %v10340 = vadd.f32 %v10301, %v10333
      %v10341 = vadd.f32 %v10302, %v10333
      %v10342 = vadd.f32 %v10303, %v10333
      %v10343 = vadd.f32 %v10304, %v10333
      %v10344 = vadd.f32 %v10305, %v10333
      %v10345 = vadd.f32 %v10306, %v10333
      %v10346 = vadd.f32 %v10307, %v10333
      %v10347 = vadd.f32 %v10308, %v10333
      %v10348 = vadd.f32 %v10309, %v10333
      %v10349 = vadd.f32 %v10310, %v10333
      %v10350 = vadd.f32 %v10311, %v10333
      %v10351 = vadd.f32 %v10312, %v10333
      %v10352 = vadd.f32 %v10313, %v10333
      %v10353 = vadd.f32 %v10314, %v10333
      %v10354 = vadd.f32 %v10315, %v10333
      %v10355 = vadd.f32 %v10316, %v10333
      %v10356 = vadd.f32 %v10317, %v10333
      %v10357 = vadd.f32 %v10318, %v10333
      %v10358 = vadd.f32 %v10319, %v10333
      %v10359 = vadd.f32 %v10320, %v10333
      %v10360 = vadd.f32 %v10321, %v10333
      %v10361 = vadd.f32 %v10322, %v10333
      %v10362 = vadd.f32 %v10323, %v10333
      %v10363 = vadd.f32 %v10324, %v10333
      %v10364 = vadd.f32 %v10325, %v10333
      %v10365 = vadd.f32 %v10326, %v10333
      %v10366 = vadd.f32 %v10327, %v10333
      %v10367 = vpack.c.bf16 %v10336, %v10335
      %v10368 = vpack.c.bf16 %v10338, %v10337
      %v10369 = vpack.c.bf16 %v10340, %v10339
      %v10370 = vpack.c.bf16 %v10342, %v10341
      %v10371 = vpack.c.bf16 %v10344, %v10343
      %v10372 = vpack.c.bf16 %v10346, %v10345
      %v10373 = vpack.c.bf16 %v10348, %v10347
      %v10374 = vpack.c.bf16 %v10350, %v10349
      %v10375 = vpack.c.bf16 %v10352, %v10351
      %v10376 = vpack.c.bf16 %v10354, %v10353
      %v10377 = vpack.c.bf16 %v10356, %v10355
      %v10378 = vpack.c.bf16 %v10358, %v10357
      %v10379 = vpack.c.bf16 %v10360, %v10359
      %v10380 = vpack.c.bf16 %v10362, %v10361
      %v10381 = vpack.c.bf16 %v10364, %v10363
      %v10382 = vpack.c.bf16 %v10366, %v10365
      %v10383 = vld [vmem:[%s16] sm:$0xf]
      %v10384 = vld [vmem:[%s16 + $0x4] sm:$0xf]
      %v10385 = vld [vmem:[%s17] sm:$0x1]
      %v10387 = vlaneseq
      %v10388 = vshrl.u32 %v10387, 7
      %v10389 = vsub.s32 0, %v10388
      %v10390 = vrot.slane %v10385, %v10389
      %v10394 = vunpack.c.l.b16 %v10383
      %v10395 = vunpack.c.l.b16 %v10384
      %v10396 = vpack.c.b16 %v10395, %v10394
      %vm10398 = vcmask 130048
      %v10400 = vsel %vm10398, %v10367, 0
      %v10403 = vsel %vm10398, %v10368, 0
      %v10406 = vsel %vm10398, %v10369, 0
      %v10409 = vsel %vm10398, %v10370, 0
      %v10412 = vsel %vm10398, %v10371, 0
      %v10415 = vsel %vm10398, %v10372, 0
      %v10418 = vsel %vm10398, %v10373, 0
      %v10421 = vsel %vm10398, %v10374, 0
      %v10424 = vsel %vm10398, %v10375, 0
      %v10427 = vsel %vm10398, %v10376, 0
      %v10430 = vsel %vm10398, %v10377, 0
      %v10433 = vsel %vm10398, %v10378, 0
      %v10436 = vsel %vm10398, %v10379, 0
      %v10439 = vsel %vm10398, %v10380, 0
      %v10442 = vsel %vm10398, %v10381, 0
      %v10445 = vsel %vm10398, %v10382, 0
      %10447 = vmatprep.subr.bf16.mxu0 0
      %10448 = vmatpush1.bf16.msra.mxu0 %v10396
      %10449 = vmatprep.subr.bf16.mxu0 0
      %10450 = vmatpush1.bf16.msra.mxu0 0
      %10451 = vmatprep.subr.bf16.mxu0 0
      %10452 = vmatpush1.bf16.msra.mxu0 0
      %10453 = vmatprep.subr.bf16.mxu0 0
      %10454 = vmatpush1.bf16.msra.mxu0 0
      %10455 = vmatprep.subr.bf16.mxu0 0
      %10456 = vmatpush1.bf16.msra.mxu0 0
      %10457 = vmatprep.subr.bf16.mxu0 0
      %10458 = vmatpush1.bf16.msra.mxu0 0
      %10459 = vmatprep.subr.bf16.mxu0 0
      %10460 = vmatpush1.bf16.msra.mxu0 0
      %10461 = vmatprep.subr.bf16.mxu0 0
      %10462 = vmatpush1.bf16.msra.mxu0 0
      %10463 = vmatprep.subr.bf16.mxu0 0
      %10464 = vmatpush1.bf16.msra.mxu0 0
      %10465 = vmatprep.subr.bf16.mxu0 0
      %10466 = vmatpush1.bf16.msra.mxu0 0
      %10467 = vmatprep.subr.bf16.mxu0 0
      %10468 = vmatpush1.bf16.msra.mxu0 0
      %10469 = vmatprep.subr.bf16.mxu0 0
      %10470 = vmatpush1.bf16.msra.mxu0 0
      %10471 = vmatprep.subr.bf16.mxu0 0
      %10472 = vmatpush1.bf16.msra.mxu0 0
      %10473 = vmatprep.subr.bf16.mxu0 0
      %10474 = vmatpush1.bf16.msra.mxu0 0
      %10475 = vmatprep.subr.bf16.mxu0 0
      %10476 = vmatpush1.bf16.msra.mxu0 0
      %10477 = vmatprep.subr.bf16.mxu0 0
      %10478 = vmatpush1.bf16.msra.mxu0 0
      %10479 = vmatprep.mubr.bf16.mxu0 0
      %10480 = vmatmul.mubr.bf16.gmra.mrb[0].mxu0 %v10400
      %v10481 = vpop.f32.mrb[0].mxu0
      %v10482 = vadd.f32 %v10390, %v10481
      %v10483 = vpop.f32.mrb[0].mxu0
      %v10484 = vpop.f32.mrb[0].mxu0
      %v10485 = vadd.f32 %v10390, %v10484
      %v10486 = vpop.f32.mrb[0].mxu0
      %10487 = vmatprep.mubr.bf16.mxu0 0
      %10488 = vmatmul.mubr.bf16.gmra.mrb[0].mxu0 %v10403
      %v10489 = vpop.f32.mrb[0].mxu0
      %v10490 = vadd.f32 %v10390, %v10489
      %v10491 = vpop.f32.mrb[0].mxu0
      %v10492 = vpop.f32.mrb[0].mxu0
      %v10493 = vadd.f32 %v10390, %v10492
      %v10494 = vpop.f32.mrb[0].mxu0
      %10495 = vmatprep.mubr.bf16.mxu0 0
      %10496 = vmatmul.mubr.bf16.gmra.mrb[0].mxu0 %v10406
      %v10497 = vpop.f32.mrb[0].mxu0
      %v10498 = vadd.f32 %v10390, %v10497
      %v10499 = vpop.f32.mrb[0].mxu0
      %v10500 = vpop.f32.mrb[0].mxu0
      %v10501 = vadd.f32 %v10390, %v10500
      %v10502 = vpop.f32.mrb[0].mxu0
      %10503 = vmatprep.mubr.bf16.mxu0 0
      %10504 = vmatmul.mubr.bf16.gmra.mrb[0].mxu0 %v10409
      %v10505 = vpop.f32.mrb[0].mxu0
      %v10506 = vadd.f32 %v10390, %v10505
      %v10507 = vpop.f32.mrb[0].mxu0
      %v10508 = vpop.f32.mrb[0].mxu0
      %v10509 = vadd.f32 %v10390, %v10508
      %v10510 = vpop.f32.mrb[0].mxu0
      %10511 = vmatprep.mubr.bf16.mxu0 0
      %10512 = vmatmul.mubr.bf16.gmra.mrb[0].mxu0 %v10412
      %v10513 = vpop.f32.mrb[0].mxu0
      %v10514 = vadd.f32 %v10390, %v10513
      %v10515 = vpop.f32.mrb[0].mxu0
      %v10516 = vpop.f32.mrb[0].mxu0
      %v10517 = vadd.f32 %v10390, %v10516
      %v10518 = vpop.f32.mrb[0].mxu0
      %10519 = vmatprep.mubr.bf16.mxu0 0
      %10520 = vmatmul.mubr.bf16.gmra.mrb[0].mxu0 %v10415
      %v10521 = vpop.f32.mrb[0].mxu0
      %v10522 = vadd.f32 %v10390, %v10521
      %v10523 = vpop.f32.mrb[0].mxu0
      %v10524 = vpop.f32.mrb[0].mxu0
      %v10525 = vadd.f32 %v10390, %v10524
      %v10526 = vpop.f32.mrb[0].mxu0
      %10527 = vmatprep.mubr.bf16.mxu0 0
      %10528 = vmatmul.mubr.bf16.gmra.mrb[0].mxu0 %v10418
      %v10529 = vpop.f32.mrb[0].mxu0
      %v10530 = vadd.f32 %v10390, %v10529
      %v10531 = vpop.f32.mrb[0].mxu0
      %v10532 = vpop.f32.mrb[0].mxu0
      %v10533 = vadd.f32 %v10390, %v10532
      %v10534 = vpop.f32.mrb[0].mxu0
      %10535 = vmatprep.mubr.bf16.mxu0 0
      %10536 = vmatmul.mubr.bf16.gmra.mrb[0].mxu0 %v10421
      %v10537 = vpop.f32.mrb[0].mxu0
      %v10538 = vadd.f32 %v10390, %v10537
      %v10539 = vpop.f32.mrb[0].mxu0
      %v10540 = vpop.f32.mrb[0].mxu0
      %v10541 = vadd.f32 %v10390, %v10540
      %v10542 = vpop.f32.mrb[0].mxu0
      %10543 = vmatprep.mubr.bf16.mxu0 0
      %10544 = vmatmul.mubr.bf16.gmra.mrb[0].mxu0 %v10424
      %v10545 = vpop.f32.mrb[0].mxu0
      %v10546 = vadd.f32 %v10390, %v10545
      %v10547 = vpop.f32.mrb[0].mxu0
      %v10548 = vpop.f32.mrb[0].mxu0
      %v10549 = vadd.f32 %v10390, %v10548
      %v10550 = vpop.f32.mrb[0].mxu0
      %10551 = vmatprep.mubr.bf16.mxu0 0
      %10552 = vmatmul.mubr.bf16.gmra.mrb[0].mxu0 %v10427
      %v10553 = vpop.f32.mrb[0].mxu0
      %v10554 = vadd.f32 %v10390, %v10553
      %v10555 = vpop.f32.mrb[0].mxu0
      %v10556 = vpop.f32.mrb[0].mxu0
      %v10557 = vadd.f32 %v10390, %v10556
      %v10558 = vpop.f32.mrb[0].mxu0
      %10559 = vmatprep.mubr.bf16.mxu0 0
      %10560 = vmatmul.mubr.bf16.gmra.mrb[0].mxu0 %v10430
      %v10561 = vpop.f32.mrb[0].mxu0
      %v10562 = vadd.f32 %v10390, %v10561
      %v10563 = vpop.f32.mrb[0].mxu0
      %v10564 = vpop.f32.mrb[0].mxu0
      %v10565 = vadd.f32 %v10390, %v10564
      %v10566 = vpop.f32.mrb[0].mxu0
      %10567 = vmatprep.mubr.bf16.mxu0 0
      %10568 = vmatmul.mubr.bf16.gmra.mrb[0].mxu0 %v10433
      %v10569 = vpop.f32.mrb[0].mxu0
      %v10570 = vadd.f32 %v10390, %v10569
      %v10571 = vpop.f32.mrb[0].mxu0
      %v10572 = vpop.f32.mrb[0].mxu0
      %v10573 = vadd.f32 %v10390, %v10572
      %v10574 = vpop.f32.mrb[0].mxu0
      %10575 = vmatprep.mubr.bf16.mxu0 0
      %10576 = vmatmul.mubr.bf16.gmra.mrb[0].mxu0 %v10436
      %v10577 = vpop.f32.mrb[0].mxu0
      %v10578 = vadd.f32 %v10390, %v10577
      %v10579 = vpop.f32.mrb[0].mxu0
      %v10580 = vpop.f32.mrb[0].mxu0
      %v10581 = vadd.f32 %v10390, %v10580
      %v10582 = vpop.f32.mrb[0].mxu0
      %10583 = vmatprep.mubr.bf16.mxu0 0
      %10584 = vmatmul.mubr.bf16.gmra.mrb[0].mxu0 %v10439
      %v10585 = vpop.f32.mrb[0].mxu0
      %v10586 = vadd.f32 %v10390, %v10585
      %v10587 = vpop.f32.mrb[0].mxu0
      %v10588 = vpop.f32.mrb[0].mxu0
      %v10589 = vadd.f32 %v10390, %v10588
      %v10590 = vpop.f32.mrb[0].mxu0
      %10591 = vmatprep.mubr.bf16.mxu0 0
      %10592 = vmatmul.mubr.bf16.gmra.mrb[0].mxu0 %v10442
      %v10593 = vpop.f32.mrb[0].mxu0
      %v10594 = vadd.f32 %v10390, %v10593
      %v10595 = vpop.f32.mrb[0].mxu0
      %v10596 = vpop.f32.mrb[0].mxu0
      %v10597 = vadd.f32 %v10390, %v10596
      %v10598 = vpop.f32.mrb[0].mxu0
      %10599 = vmatprep.mubr.bf16.mxu0 0
      %10600 = vmatmul.mubr.bf16.gmra.mrb[0].mxu0 %v10445
      %v10601 = vpop.f32.mrb[0].mxu0
      %v10602 = vadd.f32 %v10390, %v10601
      %v10603 = vpop.f32.mrb[0].mxu0
      %v10604 = vpop.f32.mrb[0].mxu0
      %v10605 = vadd.f32 %v10390, %v10604
      %v10606 = vpop.f32.mrb[0].mxu0
      %10607 = vdwg.mxu0
      %10608 = vst.msk [vmem:[%s575] sm:$0xff] %vm736, %v10482
      %10609 = vst.msk [vmem:[%s575 + $0x8] sm:$0xff] %vm736, %v10485
      %10610 = vst.msk [vmem:[%s575 + $0x10] sm:$0xff] %vm736, %v10490
      %10611 = vst.msk [vmem:[%s575 + $0x18] sm:$0xff] %vm736, %v10493
      %10612 = vst.msk [vmem:[%s575 + $0x20] sm:$0xff] %vm736, %v10498
      %10613 = vst.msk [vmem:[%s575 + $0x28] sm:$0xff] %vm736, %v10501
      %10614 = vst.msk [vmem:[%s575 + $0x30] sm:$0xff] %vm736, %v10506
      %10615 = vst.msk [vmem:[%s575 + $0x38] sm:$0xff] %vm736, %v10509
      %10616 = vst.msk [vmem:[%s575 + $0x40] sm:$0xff] %vm736, %v10514
      %10617 = vst.msk [vmem:[%s575 + $0x48] sm:$0xff] %vm736, %v10517
      %10618 = vst.msk [vmem:[%s575 + $0x50] sm:$0xff] %vm736, %v10522
      %10619 = vst.msk [vmem:[%s575 + $0x58] sm:$0xff] %vm736, %v10525
      %10620 = vst.msk [vmem:[%s575 + $0x60] sm:$0xff] %vm736, %v10530
      %10621 = vst.msk [vmem:[%s575 + $0x68] sm:$0xff] %vm736, %v10533
      %10622 = vst.msk [vmem:[%s575 + $0x70] sm:$0xff] %vm736, %v10538
      %10623 = vst.msk [vmem:[%s575 + $0x78] sm:$0xff] %vm736, %v10541
      %10624 = vst.msk [vmem:[%s575 + $0x80] sm:$0xff] %vm736, %v10546
      %10625 = vst.msk [vmem:[%s575 + $0x88] sm:$0xff] %vm736, %v10549
      %10626 = vst.msk [vmem:[%s575 + $0x90] sm:$0xff] %vm736, %v10554
      %10627 = vst.msk [vmem:[%s575 + $0x98] sm:$0xff] %vm736, %v10557
      %10628 = vst.msk [vmem:[%s575 + $0xa0] sm:$0xff] %vm736, %v10562
      %10629 = vst.msk [vmem:[%s575 + $0xa8] sm:$0xff] %vm736, %v10565
      %10630 = vst.msk [vmem:[%s575 + $0xb0] sm:$0xff] %vm736, %v10570
      %10631 = vst.msk [vmem:[%s575 + $0xb8] sm:$0xff] %vm736, %v10573
      %10632 = vst.msk [vmem:[%s575 + $0xc0] sm:$0xff] %vm736, %v10578
      %10633 = vst.msk [vmem:[%s575 + $0xc8] sm:$0xff] %vm736, %v10581
      %10634 = vst.msk [vmem:[%s575 + $0xd0] sm:$0xff] %vm736, %v10586
      %10635 = vst.msk [vmem:[%s575 + $0xd8] sm:$0xff] %vm736, %v10589
      %10636 = vst.msk [vmem:[%s575 + $0xe0] sm:$0xff] %vm736, %v10594
      %10637 = vst.msk [vmem:[%s575 + $0xe8] sm:$0xff] %vm736, %v10597
      %10638 = vst.msk [vmem:[%s575 + $0xf0] sm:$0xff] %vm736, %v10602
      %10639 = vst.msk [vmem:[%s575 + $0xf8] sm:$0xff] %vm736, %v10605
      %p10640 = scmp.lt.s32.totalorder %s29, 1
      %s10641 = scalar_select %p10640, %s29, 1
      %s10642 = smul.addr %s10641, 32
      %s10643 = smul.addr %s10642, 8
      %s10644 = scalar_lea.vmem %s18, %s10643
      // Predicated region
      $region93: #{tpu_custom_call.1} parent=91 // pred_check
        %p10645 = pneg %p430
      $region94: #{tpu_custom_call.1} parent=91 // pred_check_branch
        %10647 = sbr.rel (%p10645) target = $region96
      $region95: #{tpu_custom_call.1} parent=91 // pred_region
        _
      $region96: #{tpu_custom_call.1} parent=91 // pred_fallthru
        _
    $region92: #{tpu_custom_call.1} parent=5 // pred_fallthru
      _
    %p10648 = scmp.le.s32.totalorder 2, %s24
    // Predicated region
    $region97: #{tpu_custom_call.1} parent=5 // pred_check
      %p10649 = pneg %p10648
    $region98: #{tpu_custom_call.1} parent=5 // pred_check_branch
      %10651 = sbr.rel (%p10649) target = $region100
    $region99: #{tpu_custom_call.1} parent=5 // pred_region
      %s10652 = ssub.s32 %s24, 2
      // Predicated region
      $region101: #{tpu_custom_call.1} parent=99 // pred_check
        %p10653 = pneg %p436
      $region102: #{tpu_custom_call.1} parent=99 // pred_check_branch
        %10655 = sbr.rel (%p10653) target = $region104
      $region103: #{tpu_custom_call.1} parent=99 // pred_region
        %p10656 = scmp.lt.s32.totalorder %s30, 1
        %s10657 = scalar_select %p10656, %s30, 1
        %s10658 = smul.addr %s10657, 32
        %s10659 = smul.addr %s10658, 8
        %s10660 = scalar_lea.vmem %s18, %s10659
      $region104: #{tpu_custom_call.1} parent=99 // pred_fallthru
        _
    $region100: #{tpu_custom_call.1} parent=5 // pred_fallthru
      _
  $region6: #{tpu_custom_call.1} parent=0 // loop_footer
    %s28 = sadd.s32 1, %s24
  $region7: #{tpu_custom_call.1} parent=0 // loop_footer_branch
    %23 = sbr.rel target = $region3
  $region8: #{tpu_custom_call.1} parent=0 // loop_exit
    _

</llo_original>
